<compile_context>
chip_gen: v5e
topology: v5e:2x2
jax: 0.10.0
libtpu: 0.0.40
codegen_flags: <defaults>
</compile_context>

<pallas_src>
import math

import jax
import jax.numpy as jnp
from jax.experimental import pallas as pl
from jax.experimental.pallas import tpu as pltpu  # noqa: F401  (TPU backend)


# ----------------------------------------------------------------------------
# Pallas kernels
# ----------------------------------------------------------------------------

def _make_conv_kernel(act_in, act_out, apply_in, apply_out, want_stats):
    """Build a fused im2col-matmul kernel variant:
         y = act_out( act_in(a * in_scale + in_shift) @ W + bias )
       Optionally also emits per-output-column sum / sum-of-squares of the raw
       matmul result (BatchNorm statistics). MXU operands bf16, accum f32."""

    def kernel(*refs):
        it = iter(refs)
        a_ref = next(it)
        w_ref = next(it)
        isc_ref = next(it) if apply_in else None
        ish_ref = next(it) if apply_in else None
        bias_ref = next(it) if apply_out else None
        rest = list(it)
        if want_stats:
            o_ref, sum_ref, ssq_ref = rest
        else:
            (o_ref,) = rest

        a = a_ref[...].astype(jnp.float32)
        if apply_in:                       # deferred BatchNorm-apply (producer)
            a = a * isc_ref[...] + ish_ref[...]
        if act_in == "leaky":
            a = jnp.where(a >= 0.0, a, 0.2 * a)
        elif act_in == "relu":
            a = jnp.maximum(a, 0.0)

        raw = jnp.dot(a.astype(jnp.bfloat16), w_ref[...],
                      preferred_element_type=jnp.float32)

        if want_stats:
            sum_ref[...] = jnp.sum(raw, axis=0, keepdims=True)
            ssq_ref[...] = jnp.sum(raw * raw, axis=0, keepdims=True)

        y = raw
        if apply_out:                      # conv bias of the outermost up-conv
            y = y + bias_ref[...]
        if act_out == "tanh":
            y = jnp.tanh(y)
        o_ref[...] = y.astype(o_ref.dtype)

    return kernel


def _axpby_kernel(c1_ref, x_ref, c2_ref, y_ref, o_ref):
    # q_sample: c1/c2 per-batch scalars (B,1); x/y (B, CHW)
    o_ref[...] = c1_ref[...] * x_ref[...] + c2_ref[...] * y_ref[...]


def _posterior_mse_kernel(c1_ref, xt_ref, c2_ref, pred_ref, noise_ref,
                          mean_ref, sse_ref):
    # fused: posterior_mean = c1*x_t + c2*pred_noise ; sse = sum((pred-noise)^2)
    pred = pred_ref[...]
    d = pred - noise_ref[...]
    sse_ref[...] = jnp.sum(d * d, keepdims=True)
    mean_ref[...] = c1_ref[...] * xt_ref[...] + c2_ref[...] * pred


# ----------------------------------------------------------------------------
# Pallas wrappers
# ----------------------------------------------------------------------------

def fused_conv_matmul(a, wm, isc=None, ish=None, bias=None, *, act_in, act_out,
                      apply_in, apply_out, want_stats, out_dtype=jnp.float32):
    """Single gridless Pallas call; full arrays are one VMEM block each."""
    M = a.shape[0]
    Nc = wm.shape[1]
    kernel = _make_conv_kernel(act_in, act_out, apply_in, apply_out, want_stats)
    out_shape = [jax.ShapeDtypeStruct((M, Nc), out_dtype)]
    if want_stats:
        out_shape += [jax.ShapeDtypeStruct((1, Nc), jnp.float32)] * 2
    args = [a.astype(jnp.float32), wm]
    if apply_in:
        args += [isc, ish]
    if apply_out:
        args += [bias]
    outs = pl.pallas_call(kernel, out_shape=out_shape)(*args)
    if not isinstance(outs, (tuple, list)):
        outs = (outs,)
    return tuple(outs)


def axpby(c1, x, c2, y):
    """c1*x + c2*y with c1,c2 of shape (B,1) and x,y of shape (B, CHW)."""
    return pl.pallas_call(
        _axpby_kernel,
        out_shape=jax.ShapeDtypeStruct(x.shape, jnp.float32),
    )(c1.astype(jnp.float32), x.astype(jnp.float32),
      c2.astype(jnp.float32), y.astype(jnp.float32))


def posterior_and_mse(c1, xt, c2, pred, noise):
    """Fused posterior-mean (c1*xt + c2*pred) and squared-error sum."""
    mean, sse = pl.pallas_call(
        _posterior_mse_kernel,
        out_shape=(jax.ShapeDtypeStruct(xt.shape, jnp.float32),
                   jax.ShapeDtypeStruct((1, 1), jnp.float32)),
    )(c1.astype(jnp.float32), xt.astype(jnp.float32),
      c2.astype(jnp.float32), pred.astype(jnp.float32),
      noise.astype(jnp.float32))
    return mean, sse


# ----------------------------------------------------------------------------
# Convolution helpers (im2col glue in JAX, fused matmul in Pallas)
# ----------------------------------------------------------------------------

def _pending_to_arrays(pend, C, taps):
    """Pending per-channel affine (deferred BN) -> per-channel pad value and
       tiled (1, taps*C) scale/shift for the matmul prologue."""
    if pend is None:
        return jnp.zeros((C,), jnp.float32), None, None, False
    sc, sh = pend
    # pad value maps to exactly 0 after the in-kernel affine, preserving the
    # conv zero-padding semantics even though BN-apply is fused into the kernel.
    pad_val = jnp.where(sc == 0.0, 0.0, -sh / sc)
    return (pad_val,
            jnp.tile(sc, taps).reshape(1, -1),
            jnp.tile(sh, taps).reshape(1, -1),
            True)


def _pad_nhwc(x, pad_val_c):
    N, H, W, C = x.shape
    base = jnp.broadcast_to(pad_val_c.astype(x.dtype), (N, H + 2, W + 2, C))
    return base.at[:, 1:H + 1, 1:W + 1, :].set(x)


def _bn_coefs(col_sum, col_ssq, count, gamma, beta, eps=1e-5):
    mean = col_sum / count
    var = jnp.maximum(col_ssq / count - mean * mean, 0.0)
    scale = gamma / jnp.sqrt(var + eps)
    shift = beta - mean * scale
    return scale, shift


def conv_down(x, wm, pend, act_in, bn):
    """Fused act_in(pending_BN(x)) -> Conv2d(k=4,s=2,p=1, no bias).
       Returns the raw conv output (NHWC) and, if `bn` given, the pending
       per-channel (scale, shift) of the following BatchNorm."""
    N, H, W, Cin = x.shape
    Ho, Wo = H // 2, W // 2
    Cout = wm.shape[1]
    pad_val, isc, ish, apply_in = _pending_to_arrays(pend, Cin, 16)
    xp = _pad_nhwc(x, pad_val)
    pats = [xp[:, i:i + 2 * Ho - 1:2, j:j + 2 * Wo - 1:2, :]
            for i in range(4) for j in range(4)]
    a = jnp.stack(pats, axis=3).reshape(N * Ho * Wo, 16 * Cin)
    outs = fused_conv_matmul(a, wm, isc, ish, None,
                             act_in=act_in, act_out="none",
                             apply_in=apply_in, apply_out=False,
                             want_stats=bn is not None)
    y = outs[0].reshape(N, Ho, Wo, Cout)
    if bn is None:
        return y, None
    gamma, beta = bn
    return y, _bn_coefs(outs[1][0], outs[2][0], a.shape[0], gamma, beta)


def conv_up(x, wm, pend, act_in, bn=None, out_bias=None, act_out="none"):
    """Fused act_in(pending_BN(x)) -> ConvTranspose2d(k=4,s=2,p=1) via a
       2x2-subpixel decomposition (9-tap shared window; output columns are
       (parity_y, parity_x, Cout)). Optional fused bias + Tanh epilogue."""
    N, H, W, Cin = x.shape
    Nc4 = wm.shape[1]
    Cout = Nc4 // 4
    pad_val, isc, ish, apply_in = _pending_to_arrays(pend, Cin, 9)
    xp = _pad_nhwc(x, pad_val)
    pats = [xp[:, dy:dy + H, dx:dx + W, :] for dy in range(3) for dx in range(3)]
    a = jnp.stack(pats, axis=3).reshape(N * H * W, 9 * Cin)
    if out_bias is not None:
        bias = jnp.tile(out_bias, 4).reshape(1, -1)
        apply_out = True
    else:
        bias = None
        apply_out = False
    outs = fused_conv_matmul(a, wm, isc, ish, bias,
                             act_in=act_in, act_out=act_out,
                             apply_in=apply_in, apply_out=apply_out,
                             want_stats=bn is not None)
    y = outs[0].reshape(N, H, W, 2, 2, Cout)
    y = y.transpose(0, 1, 3, 2, 4, 5).reshape(N, 2 * H, 2 * W, Cout)
    if bn is None:
        return y, None
    gamma, beta = bn
    col_sum = outs[1][0].reshape(2, 2, Cout).sum(axis=(0, 1))
    col_ssq = outs[2][0].reshape(2, 2, Cout).sum(axis=(0, 1))
    return y, _bn_coefs(col_sum, col_ssq, a.shape[0] * 4, gamma, beta)


# ----------------------------------------------------------------------------
# Weight packing (done once at init)
# ----------------------------------------------------------------------------

def _pack_down_weight(w_pt):
    # PyTorch Conv2d weight (Cout, Cin, 4, 4) -> (16*Cin, Cout) bf16
    Cout, Cin = w_pt.shape[0], w_pt.shape[1]
    return jnp.transpose(w_pt, (2, 3, 1, 0)).reshape(16 * Cin, Cout).astype(jnp.bfloat16)


def _pack_up_weight(w_pt):
    # PyTorch ConvTranspose2d weight (Cin, Cout, 4, 4) -> subpixel-decomposed
    # (9*Cin, 4*Cout) bf16: rows = (dy, dx, ci) of a shared 3x3 window,
    # cols = (py, px, co) over the 2x2 output parities.
    Cin, Cout = w_pt.shape[0], w_pt.shape[1]
    wm = jnp.zeros((3, 3, Cin, 2, 2, Cout), jnp.float32)
    for py in range(2):
        for px in range(2):
            for dy in (py, py + 1):
                for dx in (px, px + 1):
                    ky = 3 - 2 * dy + py
                    kx = 3 - 2 * dx + px
                    wm = wm.at[dy, dx, :, py, px, :].set(w_pt[:, :, ky, kx])
    return wm.reshape(9 * Cin, 4 * Cout).astype(jnp.bfloat16)


def init_unet_params(key, input_nc, output_nc, ngf, num_downs):
    cfgs = [dict(inp=input_nc, inner=ngf, out=output_nc, kind="outer")]
    for (o, inner) in [(ngf, ngf * 2), (ngf * 2, ngf * 4), (ngf * 4, ngf * 8)]:
        cfgs.append(dict(inp=o, inner=inner, out=o, kind="mid"))
    for _ in range(num_downs - 5):
        cfgs.append(dict(inp=ngf * 8, inner=ngf * 8, out=ngf * 8, kind="mid"))
    cfgs.append(dict(inp=ngf * 8, inner=ngf * 8, out=ngf * 8, kind="inner"))

    params = []
    for cfg in cfgs:
        key, k1, k2 = jax.random.split(key, 3)
        p = {"kind": cfg["kind"]}
        dw = 0.02 * jax.random.normal(k1, (cfg["inner"], cfg["inp"], 4, 4), jnp.float32)
        p["down_wm"] = _pack_down_weight(dw)
        if cfg["kind"] == "mid":
            p["dn_gamma"] = jnp.ones((cfg["inner"],), jnp.float32)
            p["dn_beta"] = jnp.zeros((cfg["inner"],), jnp.float32)
        up_in = cfg["inner"] if cfg["kind"] == "inner" else cfg["inner"] * 2
        uw = 0.02 * jax.random.normal(k2, (up_in, cfg["out"], 4, 4), jnp.float32)
        p["up_wm"] = _pack_up_weight(uw)
        if cfg["kind"] == "outer":
            p["up_b"] = jnp.zeros((cfg["out"],), jnp.float32)
        else:
            p["up_gamma"] = jnp.ones((cfg["out"],), jnp.float32)
            p["up_beta"] = jnp.zeros((cfg["out"],), jnp.float32)
        params.append(p)
    return params


# ----------------------------------------------------------------------------
# UnetGenerator (recursive skip blocks; BN-apply deferred to consumer prologue)
# ----------------------------------------------------------------------------

def unet_forward(x_nhwc, params):
    def cat_skip(x, x_pend, y, y_pend):
        def ident(C):
            return (jnp.ones((C,), jnp.float32), jnp.zeros((C,), jnp.float32))
        xs, xh = x_pend if x_pend is not None else ident(x.shape[-1])
        ys, yh = y_pend if y_pend is not None else ident(y.shape[-1])
        return (jnp.concatenate([x, y], axis=-1),
                (jnp.concatenate([xs, ys]), jnp.concatenate([xh, yh])))

    def block(x, pend, level):
        p = params[level]
        kind = p["kind"]
        if kind == "outer":
            h, _ = conv_down(x, p["down_wm"], pend, act_in="none", bn=None)
            inner, inner_pend = block(h, None, level + 1)
            y, _ = conv_up(inner, p["up_wm"], inner_pend, act_in="relu",
                           bn=None, out_bias=p["up_b"], act_out="tanh")
            return y, None
        if kind == "inner":
            h, _ = conv_down(x, p["down_wm"], pend, act_in="leaky", bn=None)
            y, y_pend = conv_up(h, p["up_wm"], None, act_in="relu",
                                bn=(p["up_gamma"], p["up_beta"]))
            return cat_skip(x, pend, y, y_pend)
        # middle block
        h, h_pend = conv_down(x, p["down_wm"], pend, act_in="leaky",
                              bn=(p["dn_gamma"], p["dn_beta"]))
        inner, inner_pend = block(h, h_pend, level + 1)
        y, y_pend = conv_up(inner, p["up_wm"], inner_pend, act_in="relu",
                            bn=(p["up_gamma"], p["up_beta"]))
        return cat_skip(x, pend, y, y_pend)

    out, _ = block(x_nhwc, None, 0)
    return out


# ----------------------------------------------------------------------------
# Diffusion glue (schedule buffers, timestep embedding)
# ----------------------------------------------------------------------------

def beta_schedule_linear(timesteps, beta_start=1e-4, beta_end=0.02):
    return jnp.linspace(beta_start, beta_end, timesteps)


def timestep_embedding(t, emb_dim=128):
    # computed but (as in the reference module) NOT consumed by the U-Net
    div_term = jnp.exp(jnp.arange(0, emb_dim, 2, dtype=jnp.float32)
                       * -(math.log(10000.0) / emb_dim))
    pos = t[:, None].astype(jnp.float32) * div_term[None, :]
    emb = jnp.zeros((t.shape[0], emb_dim), jnp.float32)
    emb = emb.at[:, 0::2].set(jnp.sin(pos)).at[:, 1::2].set(jnp.cos(pos))
    return emb


# ----------------------------------------------------------------------------
# Main
# ----------------------------------------------------------------------------

if __name__ == "__main__":
    B = 2
    img_size, input_nc, output_nc = 32, 3, 3
    ngf, num_downs = 8, 5
    timesteps = 50

    key = jax.random.PRNGKey(0)
    k_par, k_a, k_b, k_t, k_n = jax.random.split(key, 5)

    params = init_unet_params(k_par, output_nc + input_nc, output_nc, ngf, num_downs)

    real_A = jax.random.normal(k_a, (B, input_nc, img_size, img_size), jnp.float32)
    real_B = jax.random.normal(k_b, (B, output_nc, img_size, img_size), jnp.float32)
    t = jax.random.randint(k_t, (B,), 0, timesteps)
    noise = jax.random.normal(k_n, real_B.shape, jnp.float32)

    # registered buffers (diffusion schedule)
    betas = beta_schedule_linear(timesteps)
    alphas = 1.0 - betas
    alphas_cumprod = jnp.cumprod(alphas)
    sqrt_alphas_cumprod = jnp.sqrt(alphas_cumprod)
    sqrt_one_minus_alphas_cumprod = jnp.sqrt(1.0 - alphas_cumprod)
    posterior_mean_coef1 = jnp.sqrt(alphas) * (1.0 - alphas_cumprod) / (1.0 - alphas)
    posterior_mean_coef2 = jnp.sqrt(alphas_cumprod) * betas / (1.0 - alphas_cumprod)

    chw = output_nc * img_size * img_size

    @jax.jit
    def forward(real_A, real_B, noise, t):
        x0_flat = real_B.reshape(B, chw)
        noise_flat = noise.reshape(B, chw)

        # q_sample: x_t = sqrt_ac[t]*x_0 + sqrt_1m_ac[t]*noise   (Pallas axpby)
        xt_flat = axpby(sqrt_alphas_cumprod[t].reshape(B, 1), x0_flat,
                        sqrt_one_minus_alphas_cumprod[t].reshape(B, 1), noise_flat)
        x_t = xt_flat.reshape(real_B.shape)

        # predict_noise: U-Net on cat([x_t, cond], dim=1)
        t_emb = timestep_embedding(t)           # unused by the net (as in ref)
        x_in = jnp.concatenate([x_t, real_A], axis=1)        # NCHW
        x_in_nhwc = jnp.transpose(x_in, (0, 2, 3, 1))        # NCHW -> NHWC
        pred_nhwc = unet_forward(x_in_nhwc, params)
        pred_noise = jnp.transpose(pred_nhwc, (0, 3, 1, 2))  # NHWC -> NCHW

        # fused MSE loss + posterior mean (Pallas)
        post_flat, sse = posterior_and_mse(
            posterior_mean_coef1[t].reshape(B, 1), xt_flat,
            posterior_mean_coef2[t].reshape(B, 1),
            pred_noise.reshape(B, chw), noise_flat)
        loss = sse[0, 0] / (B * chw)
        posterior_mean = post_flat.reshape(real_B.shape)
        return pred_noise, loss, posterior_mean, t_emb

    pred_noise, loss, posterior_mean, t_emb = forward(real_A, real_B, noise, t)
    jax.block_until_ready((pred_noise, loss, posterior_mean, t_emb))
    assert pred_noise.shape == (B, output_nc, img_size, img_size)
    assert posterior_mean.shape == (B, output_nc, img_size, img_size)
    assert bool(jnp.isfinite(loss))
    print("KERNEL_OK")
</pallas_src>

<mosaic_0001>
module attributes {stable_mosaic.version = 11 : i64} {
  func.func @_axpby_kernel(%arg0: memref<2x1xf32, #tpu.memory_space<vmem>>, %arg1: memref<2x3072xf32, #tpu.memory_space<vmem>>, %arg2: memref<2x1xf32, #tpu.memory_space<vmem>>, %arg3: memref<2x3072xf32, #tpu.memory_space<vmem>>, %arg4: memref<2x3072xf32, #tpu.memory_space<vmem>>) attributes {dimension_semantics = [], scalar_prefetch = 0 : i64, scratch_operands = 0 : i64, tpu.core_type = #tpu.core_type<tc>} {
    %c0 = arith.constant 0 : index
    %c0_0 = arith.constant 0 : index
    %0 = vector.load %arg0[%c0, %c0_0] : memref<2x1xf32, #tpu.memory_space<vmem>>, vector<2x1xf32>
    %c0_1 = arith.constant 0 : index
    %c0_2 = arith.constant 0 : index
    %1 = vector.load %arg1[%c0_1, %c0_2] : memref<2x3072xf32, #tpu.memory_space<vmem>>, vector<2x3072xf32>
    %2 = vector.broadcast %0 : vector<2x1xf32> to vector<2x3072xf32>
    %3 = arith.mulf %2, %1 : vector<2x3072xf32>
    %c0_3 = arith.constant 0 : index
    %c0_4 = arith.constant 0 : index
    %4 = vector.load %arg2[%c0_3, %c0_4] : memref<2x1xf32, #tpu.memory_space<vmem>>, vector<2x1xf32>
    %c0_5 = arith.constant 0 : index
    %c0_6 = arith.constant 0 : index
    %5 = vector.load %arg3[%c0_5, %c0_6] : memref<2x3072xf32, #tpu.memory_space<vmem>>, vector<2x3072xf32>
    %6 = vector.broadcast %4 : vector<2x1xf32> to vector<2x3072xf32>
    %7 = arith.mulf %6, %5 : vector<2x3072xf32>
    %8 = arith.addf %3, %7 : vector<2x3072xf32>
    %c0_7 = arith.constant 0 : index
    %c0_8 = arith.constant 0 : index
    %9 = vector.load %arg4[%c0_7, %c0_8] : memref<2x3072xf32, #tpu.memory_space<vmem>>, vector<2x3072xf32>
    tpu.vector_store %arg4[%c0_7, %c0_8], %8 {strides = array<i32>} : memref<2x3072xf32, #tpu.memory_space<vmem>>, vector<2x3072xf32>,
    return
  }
}

module attributes {stable_mosaic.version = 11 : i64} {
  func.func @kernel(%arg0: memref<512x96xf32, #tpu.memory_space<vmem>>, %arg1: memref<96x8xbf16, #tpu.memory_space<vmem>>, %arg2: memref<512x8xf32, #tpu.memory_space<vmem>>) attributes {dimension_semantics = [], scalar_prefetch = 0 : i64, scratch_operands = 0 : i64, tpu.core_type = #tpu.core_type<tc>} {
    %c0 = arith.constant 0 : index
    %c0_0 = arith.constant 0 : index
    %0 = vector.load %arg0[%c0, %c0_0] : memref<512x96xf32, #tpu.memory_space<vmem>>, vector<512x96xf32>
    %1 = arith.truncf %0 : vector<512x96xf32> to vector<512x96xbf16>
    %c0_1 = arith.constant 0 : index
    %c0_2 = arith.constant 0 : index
    %2 = vector.load %arg1[%c0_1, %c0_2] : memref<96x8xbf16, #tpu.memory_space<vmem>>, vector<96x8xbf16>
    %cst = arith.constant dense<0.000000e+00> : vector<512x8xf32>
    %3 = tpu.matmul %1, %2, %cst {dimension_numbers = #tpu.dot_dimension_numbers<[1], [0], [0], [1], [0, 0, 1, 1], [], []>} : vector<512x96xbf16>, vector<96x8xbf16>, vector<512x8xf32> -> vector<512x8xf32>
    %c0_3 = arith.constant 0 : index
    %c0_4 = arith.constant 0 : index
    %4 = vector.load %arg2[%c0_3, %c0_4] : memref<512x8xf32, #tpu.memory_space<vmem>>, vector<512x8xf32>
    tpu.vector_store %arg2[%c0_3, %c0_4], %3 {strides = array<i32>} : memref<512x8xf32, #tpu.memory_space<vmem>>, vector<512x8xf32>,
    return
  }
}

module attributes {stable_mosaic.version = 11 : i64} {
  func.func @kernel(%arg0: memref<128x128xf32, #tpu.memory_space<vmem>>, %arg1: memref<128x16xbf16, #tpu.memory_space<vmem>>, %arg2: memref<128x16xf32, #tpu.memory_space<vmem>>, %arg3: memref<1x16xf32, #tpu.memory_space<vmem>>, %arg4: memref<1x16xf32, #tpu.memory_space<vmem>>) attributes {dimension_semantics = [], scalar_prefetch = 0 : i64, scratch_operands = 0 : i64, tpu.core_type = #tpu.core_type<tc>} {
    %c0 = arith.constant 0 : index
    %c0_0 = arith.constant 0 : index
    %0 = vector.load %arg0[%c0, %c0_0] : memref<128x128xf32, #tpu.memory_space<vmem>>, vector<128x128xf32>
    %cst = arith.constant 0.000000e+00 : f32
    %1 = vector.broadcast %cst : f32 to vector<128x128xf32>
    %2 = arith.cmpf oge, %0, %1 : vector<128x128xf32>
    %cst_1 = arith.constant 2.000000e-01 : f32
    %3 = vector.broadcast %cst_1 : f32 to vector<128x128xf32>
    %4 = arith.mulf %3, %0 : vector<128x128xf32>
    %5 = arith.select %2, %0, %4 : vector<128x128xi1>, vector<128x128xf32>
    %6 = arith.truncf %5 : vector<128x128xf32> to vector<128x128xbf16>
    %c0_2 = arith.constant 0 : index
    %c0_3 = arith.constant 0 : index
    %7 = vector.load %arg1[%c0_2, %c0_3] : memref<128x16xbf16, #tpu.memory_space<vmem>>, vector<128x16xbf16>
    %cst_4 = arith.constant dense<0.000000e+00> : vector<128x16xf32>
    %8 = tpu.matmul %6, %7, %cst_4 {dimension_numbers = #tpu.dot_dimension_numbers<[1], [0], [0], [1], [0, 0, 1, 1], [], []>} : vector<128x128xbf16>, vector<128x16xbf16>, vector<128x16xf32> -> vector<128x16xf32>
    %cst_5 = arith.constant dense<0.000000e+00> : vector<16xf32>
    %9 = vector.multi_reduction <add>, %8, %cst_5 [0] : vector<128x16xf32> to vector<16xf32>
    %10 = vector.shape_cast %9 : vector<16xf32> to vector<1x16xf32>
    %c0_6 = arith.constant 0 : index
    %c0_7 = arith.constant 0 : index
    %11 = vector.load %arg3[%c0_6, %c0_7] : memref<1x16xf32, #tpu.memory_space<vmem>>, vector<1x16xf32>
    tpu.vector_store %arg3[%c0_6, %c0_7], %10 {strides = array<i32>} : memref<1x16xf32, #tpu.memory_space<vmem>>, vector<1x16xf32>,
    %12 = arith.mulf %8, %8 : vector<128x16xf32>
    %cst_8 = arith.constant dense<0.000000e+00> : vector<16xf32>
    %13 = vector.multi_reduction <add>, %12, %cst_8 [0] : vector<128x16xf32> to vector<16xf32>
    %14 = vector.shape_cast %13 : vector<16xf32> to vector<1x16xf32>
    %c0_9 = arith.constant 0 : index
    %c0_10 = arith.constant 0 : index
    %15 = vector.load %arg4[%c0_9, %c0_10] : memref<1x16xf32, #tpu.memory_space<vmem>>, vector<1x16xf32>
    tpu.vector_store %arg4[%c0_9, %c0_10], %14 {strides = array<i32>} : memref<1x16xf32, #tpu.memory_space<vmem>>, vector<1x16xf32>,
    %c0_11 = arith.constant 0 : index
    %c0_12 = arith.constant 0 : index
    %16 = vector.load %arg2[%c0_11, %c0_12] : memref<128x16xf32, #tpu.memory_space<vmem>>, vector<128x16xf32>
    tpu.vector_store %arg2[%c0_11, %c0_12], %8 {strides = array<i32>} : memref<128x16xf32, #tpu.memory_space<vmem>>, vector<128x16xf32>,
    return
  }
}

module attributes {stable_mosaic.version = 11 : i64} {
  func.func @kernel(%arg0: memref<32x256xf32, #tpu.memory_space<vmem>>, %arg1: memref<256x32xbf16, #tpu.memory_space<vmem>>, %arg2: memref<1x256xf32, #tpu.memory_space<vmem>>, %arg3: memref<1x256xf32, #tpu.memory_space<vmem>>, %arg4: memref<32x32xf32, #tpu.memory_space<vmem>>, %arg5: memref<1x32xf32, #tpu.memory_space<vmem>>, %arg6: memref<1x32xf32, #tpu.memory_space<vmem>>) attributes {dimension_semantics = [], scalar_prefetch = 0 : i64, scratch_operands = 0 : i64, tpu.core_type = #tpu.core_type<tc>} {
    %c0 = arith.constant 0 : index
    %c0_0 = arith.constant 0 : index
    %0 = vector.load %arg0[%c0, %c0_0] : memref<32x256xf32, #tpu.memory_space<vmem>>, vector<32x256xf32>
    %c0_1 = arith.constant 0 : index
    %c0_2 = arith.constant 0 : index
    %1 = vector.load %arg2[%c0_1, %c0_2] : memref<1x256xf32, #tpu.memory_space<vmem>>, vector<1x256xf32>
    %2 = vector.broadcast %1 : vector<1x256xf32> to vector<32x256xf32>
    %3 = arith.mulf %0, %2 : vector<32x256xf32>
    %c0_3 = arith.constant 0 : index
    %c0_4 = arith.constant 0 : index
    %4 = vector.load %arg3[%c0_3, %c0_4] : memref<1x256xf32, #tpu.memory_space<vmem>>, vector<1x256xf32>
    %5 = vector.broadcast %4 : vector<1x256xf32> to vector<32x256xf32>
    %6 = arith.addf %3, %5 : vector<32x256xf32>
    %cst = arith.constant 0.000000e+00 : f32
    %7 = vector.broadcast %cst : f32 to vector<32x256xf32>
    %8 = arith.cmpf oge, %6, %7 : vector<32x256xf32>
    %cst_5 = arith.constant 2.000000e-01 : f32
    %9 = vector.broadcast %cst_5 : f32 to vector<32x256xf32>
    %10 = arith.mulf %9, %6 : vector<32x256xf32>
    %11 = arith.select %8, %6, %10 : vector<32x256xi1>, vector<32x256xf32>
    %12 = arith.truncf %11 : vector<32x256xf32> to vector<32x256xbf16>
    %c0_6 = arith.constant 0 : index
    %c0_7 = arith.constant 0 : index
    %13 = vector.load %arg1[%c0_6, %c0_7] : memref<256x32xbf16, #tpu.memory_space<vmem>>, vector<256x32xbf16>
    %cst_8 = arith.constant dense<0.000000e+00> : vector<32x32xf32>
    %14 = tpu.matmul %12, %13, %cst_8 {dimension_numbers = #tpu.dot_dimension_numbers<[1], [0], [0], [1], [0, 0, 1, 1], [], []>} : vector<32x256xbf16>, vector<256x32xbf16>, vector<32x32xf32> -> vector<32x32xf32>
    %cst_9 = arith.constant dense<0.000000e+00> : vector<32xf32>
    %15 = vector.multi_reduction <add>, %14, %cst_9 [0] : vector<32x32xf32> to vector<32xf32>
    %16 = vector.shape_cast %15 : vector<32xf32> to vector<1x32xf32>
    %c0_10 = arith.constant 0 : index
    %c0_11 = arith.constant 0 : index
    %17 = vector.load %arg5[%c0_10, %c0_11] : memref<1x32xf32, #tpu.memory_space<vmem>>, vector<1x32xf32>
    tpu.vector_store %arg5[%c0_10, %c0_11], %16 {strides = array<i32>} : memref<1x32xf32, #tpu.memory_space<vmem>>, vector<1x32xf32>,
    %18 = arith.mulf %14, %14 : vector<32x32xf32>
    %cst_12 = arith.constant dense<0.000000e+00> : vector<32xf32>
    %19 = vector.multi_reduction <add>, %18, %cst_12 [0] : vector<32x32xf32> to vector<32xf32>
    %20 = vector.shape_cast %19 : vector<32xf32> to vector<1x32xf32>
    %c0_13 = arith.constant 0 : index
    %c0_14 = arith.constant 0 : index
    %21 = vector.load %arg6[%c0_13, %c0_14] : memref<1x32xf32, #tpu.memory_space<vmem>>, vector<1x32xf32>
    tpu.vector_store %arg6[%c0_13, %c0_14], %20 {strides = array<i32>} : memref<1x32xf32, #tpu.memory_space<vmem>>, vector<1x32xf32>,
    %c0_15 = arith.constant 0 : index
    %c0_16 = arith.constant 0 : index
    %22 = vector.load %arg4[%c0_15, %c0_16] : memref<32x32xf32, #tpu.memory_space<vmem>>, vector<32x32xf32>
    tpu.vector_store %arg4[%c0_15, %c0_16], %14 {strides = array<i32>} : memref<32x32xf32, #tpu.memory_space<vmem>>, vector<32x32xf32>,
    return
  }
}

module attributes {stable_mosaic.version = 11 : i64} {
  func.func @kernel(%arg0: memref<8x512xf32, #tpu.memory_space<vmem>>, %arg1: memref<512x64xbf16, #tpu.memory_space<vmem>>, %arg2: memref<1x512xf32, #tpu.memory_space<vmem>>, %arg3: memref<1x512xf32, #tpu.memory_space<vmem>>, %arg4: memref<8x64xf32, #tpu.memory_space<vmem>>, %arg5: memref<1x64xf32, #tpu.memory_space<vmem>>, %arg6: memref<1x64xf32, #tpu.memory_space<vmem>>) attributes {dimension_semantics = [], scalar_prefetch = 0 : i64, scratch_operands = 0 : i64, tpu.core_type = #tpu.core_type<tc>} {
    %c0 = arith.constant 0 : index
    %c0_0 = arith.constant 0 : index
    %0 = vector.load %arg0[%c0, %c0_0] : memref<8x512xf32, #tpu.memory_space<vmem>>, vector<8x512xf32>
    %c0_1 = arith.constant 0 : index
    %c0_2 = arith.constant 0 : index
    %1 = vector.load %arg2[%c0_1, %c0_2] : memref<1x512xf32, #tpu.memory_space<vmem>>, vector<1x512xf32>
    %2 = vector.broadcast %1 : vector<1x512xf32> to vector<8x512xf32>
    %3 = arith.mulf %0, %2 : vector<8x512xf32>
    %c0_3 = arith.constant 0 : index
    %c0_4 = arith.constant 0 : index
    %4 = vector.load %arg3[%c0_3, %c0_4] : memref<1x512xf32, #tpu.memory_space<vmem>>, vector<1x512xf32>
    %5 = vector.broadcast %4 : vector<1x512xf32> to vector<8x512xf32>
    %6 = arith.addf %3, %5 : vector<8x512xf32>
    %cst = arith.constant 0.000000e+00 : f32
    %7 = vector.broadcast %cst : f32 to vector<8x512xf32>
    %8 = arith.cmpf oge, %6, %7 : vector<8x512xf32>
    %cst_5 = arith.constant 2.000000e-01 : f32
    %9 = vector.broadcast %cst_5 : f32 to vector<8x512xf32>
    %10 = arith.mulf %9, %6 : vector<8x512xf32>
    %11 = arith.select %8, %6, %10 : vector<8x512xi1>, vector<8x512xf32>
    %12 = arith.truncf %11 : vector<8x512xf32> to vector<8x512xbf16>
    %c0_6 = arith.constant 0 : index
    %c0_7 = arith.constant 0 : index
    %13 = vector.load %arg1[%c0_6, %c0_7] : memref<512x64xbf16, #tpu.memory_space<vmem>>, vector<512x64xbf16>
    %cst_8 = arith.constant dense<0.000000e+00> : vector<8x64xf32>
    %14 = tpu.matmul %12, %13, %cst_8 {dimension_numbers = #tpu.dot_dimension_numbers<[1], [0], [0], [1], [0, 0, 1, 1], [], []>} : vector<8x512xbf16>, vector<512x64xbf16>, vector<8x64xf32> -> vector<8x64xf32>
    %cst_9 = arith.constant dense<0.000000e+00> : vector<64xf32>
    %15 = vector.multi_reduction <add>, %14, %cst_9 [0] : vector<8x64xf32> to vector<64xf32>
    %16 = vector.shape_cast %15 : vector<64xf32> to vector<1x64xf32>
    %c0_10 = arith.constant 0 : index
    %c0_11 = arith.constant 0 : index
    %17 = vector.load %arg5[%c0_10, %c0_11] : memref<1x64xf32, #tpu.memory_space<vmem>>, vector<1x64xf32>
    tpu.vector_store %arg5[%c0_10, %c0_11], %16 {strides = array<i32>} : memref<1x64xf32, #tpu.memory_space<vmem>>, vector<1x64xf32>,
    %18 = arith.mulf %14, %14 : vector<8x64xf32>
    %cst_12 = arith.constant dense<0.000000e+00> : vector<64xf32>
    %19 = vector.multi_reduction <add>, %18, %cst_12 [0] : vector<8x64xf32> to vector<64xf32>
    %20 = vector.shape_cast %19 : vector<64xf32> to vector<1x64xf32>
    %c0_13 = arith.constant 0 : index
    %c0_14 = arith.constant 0 : index
    %21 = vector.load %arg6[%c0_13, %c0_14] : memref<1x64xf32, #tpu.memory_space<vmem>>, vector<1x64xf32>
    tpu.vector_store %arg6[%c0_13, %c0_14], %20 {strides = array<i32>} : memref<1x64xf32, #tpu.memory_space<vmem>>, vector<1x64xf32>,
    %c0_15 = arith.constant 0 : index
    %c0_16 = arith.constant 0 : index
    %22 = vector.load %arg4[%c0_15, %c0_16] : memref<8x64xf32, #tpu.memory_space<vmem>>, vector<8x64xf32>
    tpu.vector_store %arg4[%c0_15, %c0_16], %14 {strides = array<i32>} : memref<8x64xf32, #tpu.memory_space<vmem>>, vector<8x64xf32>,
    return
  }
}

module attributes {stable_mosaic.version = 11 : i64} {
  func.func @kernel(%arg0: memref<2x1024xf32, #tpu.memory_space<vmem>>, %arg1: memref<1024x64xbf16, #tpu.memory_space<vmem>>, %arg2: memref<1x1024xf32, #tpu.memory_space<vmem>>, %arg3: memref<1x1024xf32, #tpu.memory_space<vmem>>, %arg4: memref<2x64xf32, #tpu.memory_space<vmem>>) attributes {dimension_semantics = [], scalar_prefetch = 0 : i64, scratch_operands = 0 : i64, tpu.core_type = #tpu.core_type<tc>} {
    %c0 = arith.constant 0 : index
    %c0_0 = arith.constant 0 : index
    %0 = vector.load %arg0[%c0, %c0_0] : memref<2x1024xf32, #tpu.memory_space<vmem>>, vector<2x1024xf32>
    %c0_1 = arith.constant 0 : index
    %c0_2 = arith.constant 0 : index
    %1 = vector.load %arg2[%c0_1, %c0_2] : memref<1x1024xf32, #tpu.memory_space<vmem>>, vector<1x1024xf32>
    %2 = vector.broadcast %1 : vector<1x1024xf32> to vector<2x1024xf32>
    %3 = arith.mulf %0, %2 : vector<2x1024xf32>
    %c0_3 = arith.constant 0 : index
    %c0_4 = arith.constant 0 : index
    %4 = vector.load %arg3[%c0_3, %c0_4] : memref<1x1024xf32, #tpu.memory_space<vmem>>, vector<1x1024xf32>
    %5 = vector.broadcast %4 : vector<1x1024xf32> to vector<2x1024xf32>
    %6 = arith.addf %3, %5 : vector<2x1024xf32>
    %cst = arith.constant 0.000000e+00 : f32
    %7 = vector.broadcast %cst : f32 to vector<2x1024xf32>
    %8 = arith.cmpf oge, %6, %7 : vector<2x1024xf32>
    %cst_5 = arith.constant 2.000000e-01 : f32
    %9 = vector.broadcast %cst_5 : f32 to vector<2x1024xf32>
    %10 = arith.mulf %9, %6 : vector<2x1024xf32>
    %11 = arith.select %8, %6, %10 : vector<2x1024xi1>, vector<2x1024xf32>
    %12 = arith.truncf %11 : vector<2x1024xf32> to vector<2x1024xbf16>
    %c0_6 = arith.constant 0 : index
    %c0_7 = arith.constant 0 : index
    %13 = vector.load %arg1[%c0_6, %c0_7] : memref<1024x64xbf16, #tpu.memory_space<vmem>>, vector<1024x64xbf16>
    %cst_8 = arith.constant dense<0.000000e+00> : vector<2x64xf32>
    %14 = tpu.matmul %12, %13, %cst_8 {dimension_numbers = #tpu.dot_dimension_numbers<[1], [0], [0], [1], [0, 0, 1, 1], [], []>} : vector<2x1024xbf16>, vector<1024x64xbf16>, vector<2x64xf32> -> vector<2x64xf32>
    %c0_9 = arith.constant 0 : index
    %c0_10 = arith.constant 0 : index
    %15 = vector.load %arg4[%c0_9, %c0_10] : memref<2x64xf32, #tpu.memory_space<vmem>>, vector<2x64xf32>
    tpu.vector_store %arg4[%c0_9, %c0_10], %14 {strides = array<i32>} : memref<2x64xf32, #tpu.memory_space<vmem>>, vector<2x64xf32>,
    return
  }
}

module attributes {stable_mosaic.version = 11 : i64} {
  func.func @kernel(%arg0: memref<2x576xf32, #tpu.memory_space<vmem>>, %arg1: memref<576x256xbf16, #tpu.memory_space<vmem>>, %arg2: memref<2x256xf32, #tpu.memory_space<vmem>>, %arg3: memref<1x256xf32, #tpu.memory_space<vmem>>, %arg4: memref<1x256xf32, #tpu.memory_space<vmem>>) attributes {dimension_semantics = [], scalar_prefetch = 0 : i64, scratch_operands = 0 : i64, tpu.core_type = #tpu.core_type<tc>} {
    %c0 = arith.constant 0 : index
    %c0_0 = arith.constant 0 : index
    %0 = vector.load %arg0[%c0, %c0_0] : memref<2x576xf32, #tpu.memory_space<vmem>>, vector<2x576xf32>
    %cst = arith.constant 0.000000e+00 : f32
    %1 = vector.broadcast %cst : f32 to vector<2x576xf32>
    %2 = arith.maximumf %0, %1 : vector<2x576xf32>
    %3 = arith.truncf %2 : vector<2x576xf32> to vector<2x576xbf16>
    %c0_1 = arith.constant 0 : index
    %c0_2 = arith.constant 0 : index
    %4 = vector.load %arg1[%c0_1, %c0_2] : memref<576x256xbf16, #tpu.memory_space<vmem>>, vector<576x256xbf16>
    %cst_3 = arith.constant dense<0.000000e+00> : vector<2x256xf32>
    %5 = tpu.matmul %3, %4, %cst_3 {dimension_numbers = #tpu.dot_dimension_numbers<[1], [0], [0], [1], [0, 0, 1, 1], [], []>} : vector<2x576xbf16>, vector<576x256xbf16>, vector<2x256xf32> -> vector<2x256xf32>
    %cst_4 = arith.constant dense<0.000000e+00> : vector<256xf32>
    %6 = vector.multi_reduction <add>, %5, %cst_4 [0] : vector<2x256xf32> to vector<256xf32>
    %7 = vector.shape_cast %6 : vector<256xf32> to vector<1x256xf32>
    %c0_5 = arith.constant 0 : index
    %c0_6 = arith.constant 0 : index
    %8 = vector.load %arg3[%c0_5, %c0_6] : memref<1x256xf32, #tpu.memory_space<vmem>>, vector<1x256xf32>
    tpu.vector_store %arg3[%c0_5, %c0_6], %7 {strides = array<i32>} : memref<1x256xf32, #tpu.memory_space<vmem>>, vector<1x256xf32>,
    %9 = arith.mulf %5, %5 : vector<2x256xf32>
    %cst_7 = arith.constant dense<0.000000e+00> : vector<256xf32>
    %10 = vector.multi_reduction <add>, %9, %cst_7 [0] : vector<2x256xf32> to vector<256xf32>
    %11 = vector.shape_cast %10 : vector<256xf32> to vector<1x256xf32>
    %c0_8 = arith.constant 0 : index
    %c0_9 = arith.constant 0 : index
    %12 = vector.load %arg4[%c0_8, %c0_9] : memref<1x256xf32, #tpu.memory_space<vmem>>, vector<1x256xf32>
    tpu.vector_store %arg4[%c0_8, %c0_9], %11 {strides = array<i32>} : memref<1x256xf32, #tpu.memory_space<vmem>>, vector<1x256xf32>,
    %c0_10 = arith.constant 0 : index
    %c0_11 = arith.constant 0 : index
    %13 = vector.load %arg2[%c0_10, %c0_11] : memref<2x256xf32, #tpu.memory_space<vmem>>, vector<2x256xf32>
    tpu.vector_store %arg2[%c0_10, %c0_11], %5 {strides = array<i32>} : memref<2x256xf32, #tpu.memory_space<vmem>>, vector<2x256xf32>,
    return
  }
}

module attributes {stable_mosaic.version = 11 : i64} {
  func.func @kernel(%arg0: memref<8x1152xf32, #tpu.memory_space<vmem>>, %arg1: memref<1152x128xbf16, #tpu.memory_space<vmem>>, %arg2: memref<1x1152xf32, #tpu.memory_space<vmem>>, %arg3: memref<1x1152xf32, #tpu.memory_space<vmem>>, %arg4: memref<8x128xf32, #tpu.memory_space<vmem>>, %arg5: memref<1x128xf32, #tpu.memory_space<vmem>>, %arg6: memref<1x128xf32, #tpu.memory_space<vmem>>) attributes {dimension_semantics = [], scalar_prefetch = 0 : i64, scratch_operands = 0 : i64, tpu.core_type = #tpu.core_type<tc>} {
    %c0 = arith.constant 0 : index
    %c0_0 = arith.constant 0 : index
    %0 = vector.load %arg0[%c0, %c0_0] : memref<8x1152xf32, #tpu.memory_space<vmem>>, vector<8x1152xf32>
    %c0_1 = arith.constant 0 : index
    %c0_2 = arith.constant 0 : index
    %1 = vector.load %arg2[%c0_1, %c0_2] : memref<1x1152xf32, #tpu.memory_space<vmem>>, vector<1x1152xf32>
    %2 = vector.broadcast %1 : vector<1x1152xf32> to vector<8x1152xf32>
    %3 = arith.mulf %0, %2 : vector<8x1152xf32>
    %c0_3 = arith.constant 0 : index
    %c0_4 = arith.constant 0 : index
    %4 = vector.load %arg3[%c0_3, %c0_4] : memref<1x1152xf32, #tpu.memory_space<vmem>>, vector<1x1152xf32>
    %5 = vector.broadcast %4 : vector<1x1152xf32> to vector<8x1152xf32>
    %6 = arith.addf %3, %5 : vector<8x1152xf32>
    %cst = arith.constant 0.000000e+00 : f32
    %7 = vector.broadcast %cst : f32 to vector<8x1152xf32>
    %8 = arith.maximumf %6, %7 : vector<8x1152xf32>
    %9 = arith.truncf %8 : vector<8x1152xf32> to vector<8x1152xbf16>
    %c0_5 = arith.constant 0 : index
    %c0_6 = arith.constant 0 : index
    %10 = vector.load %arg1[%c0_5, %c0_6] : memref<1152x128xbf16, #tpu.memory_space<vmem>>, vector<1152x128xbf16>
    %cst_7 = arith.constant dense<0.000000e+00> : vector<8x128xf32>
    %11 = tpu.matmul %9, %10, %cst_7 {dimension_numbers = #tpu.dot_dimension_numbers<[1], [0], [0], [1], [0, 0, 1, 1], [], []>} : vector<8x1152xbf16>, vector<1152x128xbf16>, vector<8x128xf32> -> vector<8x128xf32>
    %cst_8 = arith.constant dense<0.000000e+00> : vector<128xf32>
    %12 = vector.multi_reduction <add>, %11, %cst_8 [0] : vector<8x128xf32> to vector<128xf32>
    %13 = vector.shape_cast %12 : vector<128xf32> to vector<1x128xf32>
    %c0_9 = arith.constant 0 : index
    %c0_10 = arith.constant 0 : index
    %14 = vector.load %arg5[%c0_9, %c0_10] : memref<1x128xf32, #tpu.memory_space<vmem>>, vector<1x128xf32>
    tpu.vector_store %arg5[%c0_9, %c0_10], %13 {strides = array<i32>} : memref<1x128xf32, #tpu.memory_space<vmem>>, vector<1x128xf32>,
    %15 = arith.mulf %11, %11 : vector<8x128xf32>
    %cst_11 = arith.constant dense<0.000000e+00> : vector<128xf32>
    %16 = vector.multi_reduction <add>, %15, %cst_11 [0] : vector<8x128xf32> to vector<128xf32>
    %17 = vector.shape_cast %16 : vector<128xf32> to vector<1x128xf32>
    %c0_12 = arith.constant 0 : index
    %c0_13 = arith.constant 0 : index
    %18 = vector.load %arg6[%c0_12, %c0_13] : memref<1x128xf32, #tpu.memory_space<vmem>>, vector<1x128xf32>
    tpu.vector_store %arg6[%c0_12, %c0_13], %17 {strides = array<i32>} : memref<1x128xf32, #tpu.memory_space<vmem>>, vector<1x128xf32>,
    %c0_14 = arith.constant 0 : index
    %c0_15 = arith.constant 0 : index
    %19 = vector.load %arg4[%c0_14, %c0_15] : memref<8x128xf32, #tpu.memory_space<vmem>>, vector<8x128xf32>
    tpu.vector_store %arg4[%c0_14, %c0_15], %11 {strides = array<i32>} : memref<8x128xf32, #tpu.memory_space<vmem>>, vector<8x128xf32>,
    return
  }
}

module attributes {stable_mosaic.version = 11 : i64} {
  func.func @kernel(%arg0: memref<32x576xf32, #tpu.memory_space<vmem>>, %arg1: memref<576x64xbf16, #tpu.memory_space<vmem>>, %arg2: memref<1x576xf32, #tpu.memory_space<vmem>>, %arg3: memref<1x576xf32, #tpu.memory_space<vmem>>, %arg4: memref<32x64xf32, #tpu.memory_space<vmem>>, %arg5: memref<1x64xf32, #tpu.memory_space<vmem>>, %arg6: memref<1x64xf32, #tpu.memory_space<vmem>>) attributes {dimension_semantics = [], scalar_prefetch = 0 : i64, scratch_operands = 0 : i64, tpu.core_type = #tpu.core_type<tc>} {
    %c0 = arith.constant 0 : index
    %c0_0 = arith.constant 0 : index
    %0 = vector.load %arg0[%c0, %c0_0] : memref<32x576xf32, #tpu.memory_space<vmem>>, vector<32x576xf32>
    %c0_1 = arith.constant 0 : index
    %c0_2 = arith.constant 0 : index
    %1 = vector.load %arg2[%c0_1, %c0_2] : memref<1x576xf32, #tpu.memory_space<vmem>>, vector<1x576xf32>
    %2 = vector.broadcast %1 : vector<1x576xf32> to vector<32x576xf32>
    %3 = arith.mulf %0, %2 : vector<32x576xf32>
    %c0_3 = arith.constant 0 : index
    %c0_4 = arith.constant 0 : index
    %4 = vector.load %arg3[%c0_3, %c0_4] : memref<1x576xf32, #tpu.memory_space<vmem>>, vector<1x576xf32>
    %5 = vector.broadcast %4 : vector<1x576xf32> to vector<32x576xf32>
    %6 = arith.addf %3, %5 : vector<32x576xf32>
    %cst = arith.constant 0.000000e+00 : f32
    %7 = vector.broadcast %cst : f32 to vector<32x576xf32>
    %8 = arith.maximumf %6, %7 : vector<32x576xf32>
    %9 = arith.truncf %8 : vector<32x576xf32> to vector<32x576xbf16>
    %c0_5 = arith.constant 0 : index
    %c0_6 = arith.constant 0 : index
    %10 = vector.load %arg1[%c0_5, %c0_6] : memref<576x64xbf16, #tpu.memory_space<vmem>>, vector<576x64xbf16>
    %cst_7 = arith.constant dense<0.000000e+00> : vector<32x64xf32>
    %11 = tpu.matmul %9, %10, %cst_7 {dimension_numbers = #tpu.dot_dimension_numbers<[1], [0], [0], [1], [0, 0, 1, 1], [], []>} : vector<32x576xbf16>, vector<576x64xbf16>, vector<32x64xf32> -> vector<32x64xf32>
    %cst_8 = arith.constant dense<0.000000e+00> : vector<64xf32>
    %12 = vector.multi_reduction <add>, %11, %cst_8 [0] : vector<32x64xf32> to vector<64xf32>
    %13 = vector.shape_cast %12 : vector<64xf32> to vector<1x64xf32>
    %c0_9 = arith.constant 0 : index
    %c0_10 = arith.constant 0 : index
    %14 = vector.load %arg5[%c0_9, %c0_10] : memref<1x64xf32, #tpu.memory_space<vmem>>, vector<1x64xf32>
    tpu.vector_store %arg5[%c0_9, %c0_10], %13 {strides = array<i32>} : memref<1x64xf32, #tpu.memory_space<vmem>>, vector<1x64xf32>,
    %15 = arith.mulf %11, %11 : vector<32x64xf32>
    %cst_11 = arith.constant dense<0.000000e+00> : vector<64xf32>
    %16 = vector.multi_reduction <add>, %15, %cst_11 [0] : vector<32x64xf32> to vector<64xf32>
    %17 = vector.shape_cast %16 : vector<64xf32> to vector<1x64xf32>
    %c0_12 = arith.constant 0 : index
    %c0_13 = arith.constant 0 : index
    %18 = vector.load %arg6[%c0_12, %c0_13] : memref<1x64xf32, #tpu.memory_space<vmem>>, vector<1x64xf32>
    tpu.vector_store %arg6[%c0_12, %c0_13], %17 {strides = array<i32>} : memref<1x64xf32, #tpu.memory_space<vmem>>, vector<1x64xf32>,
    %c0_14 = arith.constant 0 : index
    %c0_15 = arith.constant 0 : index
    %19 = vector.load %arg4[%c0_14, %c0_15] : memref<32x64xf32, #tpu.memory_space<vmem>>, vector<32x64xf32>
    tpu.vector_store %arg4[%c0_14, %c0_15], %11 {strides = array<i32>} : memref<32x64xf32, #tpu.memory_space<vmem>>, vector<32x64xf32>,
    return
  }
}

module attributes {stable_mosaic.version = 11 : i64} {
  func.func @kernel(%arg0: memref<128x288xf32, #tpu.memory_space<vmem>>, %arg1: memref<288x32xbf16, #tpu.memory_space<vmem>>, %arg2: memref<1x288xf32, #tpu.memory_space<vmem>>, %arg3: memref<1x288xf32, #tpu.memory_space<vmem>>, %arg4: memref<128x32xf32, #tpu.memory_space<vmem>>, %arg5: memref<1x32xf32, #tpu.memory_space<vmem>>, %arg6: memref<1x32xf32, #tpu.memory_space<vmem>>) attributes {dimension_semantics = [], scalar_prefetch = 0 : i64, scratch_operands = 0 : i64, tpu.core_type = #tpu.core_type<tc>} {
    %c0 = arith.constant 0 : index
    %c0_0 = arith.constant 0 : index
    %0 = vector.load %arg0[%c0, %c0_0] : memref<128x288xf32, #tpu.memory_space<vmem>>, vector<128x288xf32>
    %c0_1 = arith.constant 0 : index
    %c0_2 = arith.constant 0 : index
    %1 = vector.load %arg2[%c0_1, %c0_2] : memref<1x288xf32, #tpu.memory_space<vmem>>, vector<1x288xf32>
    %2 = vector.broadcast %1 : vector<1x288xf32> to vector<128x288xf32>
    %3 = arith.mulf %0, %2 : vector<128x288xf32>
    %c0_3 = arith.constant 0 : index
    %c0_4 = arith.constant 0 : index
    %4 = vector.load %arg3[%c0_3, %c0_4] : memref<1x288xf32, #tpu.memory_space<vmem>>, vector<1x288xf32>
    %5 = vector.broadcast %4 : vector<1x288xf32> to vector<128x288xf32>
    %6 = arith.addf %3, %5 : vector<128x288xf32>
    %cst = arith.constant 0.000000e+00 : f32
    %7 = vector.broadcast %cst : f32 to vector<128x288xf32>
    %8 = arith.maximumf %6, %7 : vector<128x288xf32>
    %9 = arith.truncf %8 : vector<128x288xf32> to vector<128x288xbf16>
    %c0_5 = arith.constant 0 : index
    %c0_6 = arith.constant 0 : index
    %10 = vector.load %arg1[%c0_5, %c0_6] : memref<288x32xbf16, #tpu.memory_space<vmem>>, vector<288x32xbf16>
    %cst_7 = arith.constant dense<0.000000e+00> : vector<128x32xf32>
    %11 = tpu.matmul %9, %10, %cst_7 {dimension_numbers = #tpu.dot_dimension_numbers<[1], [0], [0], [1], [0, 0, 1, 1], [], []>} : vector<128x288xbf16>, vector<288x32xbf16>, vector<128x32xf32> -> vector<128x32xf32>
    %cst_8 = arith.constant dense<0.000000e+00> : vector<32xf32>
    %12 = vector.multi_reduction <add>, %11, %cst_8 [0] : vector<128x32xf32> to vector<32xf32>
    %13 = vector.shape_cast %12 : vector<32xf32> to vector<1x32xf32>
    %c0_9 = arith.constant 0 : index
    %c0_10 = arith.constant 0 : index
    %14 = vector.load %arg5[%c0_9, %c0_10] : memref<1x32xf32, #tpu.memory_space<vmem>>, vector<1x32xf32>
    tpu.vector_store %arg5[%c0_9, %c0_10], %13 {strides = array<i32>} : memref<1x32xf32, #tpu.memory_space<vmem>>, vector<1x32xf32>,
    %15 = arith.mulf %11, %11 : vector<128x32xf32>
    %cst_11 = arith.constant dense<0.000000e+00> : vector<32xf32>
    %16 = vector.multi_reduction <add>, %15, %cst_11 [0] : vector<128x32xf32> to vector<32xf32>
    %17 = vector.shape_cast %16 : vector<32xf32> to vector<1x32xf32>
    %c0_12 = arith.constant 0 : index
    %c0_13 = arith.constant 0 : index
    %18 = vector.load %arg6[%c0_12, %c0_13] : memref<1x32xf32, #tpu.memory_space<vmem>>, vector<1x32xf32>
    tpu.vector_store %arg6[%c0_12, %c0_13], %17 {strides = array<i32>} : memref<1x32xf32, #tpu.memory_space<vmem>>, vector<1x32xf32>,
    %c0_14 = arith.constant 0 : index
    %c0_15 = arith.constant 0 : index
    %19 = vector.load %arg4[%c0_14, %c0_15] : memref<128x32xf32, #tpu.memory_space<vmem>>, vector<128x32xf32>
    tpu.vector_store %arg4[%c0_14, %c0_15], %11 {strides = array<i32>} : memref<128x32xf32, #tpu.memory_space<vmem>>, vector<128x32xf32>,
    return
  }
}

module attributes {stable_mosaic.version = 11 : i64} {
  func.func @kernel(%arg0: memref<512x144xf32, #tpu.memory_space<vmem>>, %arg1: memref<144x12xbf16, #tpu.memory_space<vmem>>, %arg2: memref<1x144xf32, #tpu.memory_space<vmem>>, %arg3: memref<1x144xf32, #tpu.memory_space<vmem>>, %arg4: memref<1x12xf32, #tpu.memory_space<vmem>>, %arg5: memref<512x12xf32, #tpu.memory_space<vmem>>) attributes {dimension_semantics = [], scalar_prefetch = 0 : i64, scratch_operands = 0 : i64, tpu.core_type = #tpu.core_type<tc>} {
    %c0 = arith.constant 0 : index
    %c0_0 = arith.constant 0 : index
    %0 = vector.load %arg0[%c0, %c0_0] : memref<512x144xf32, #tpu.memory_space<vmem>>, vector<512x144xf32>
    %c0_1 = arith.constant 0 : index
    %c0_2 = arith.constant 0 : index
    %1 = vector.load %arg2[%c0_1, %c0_2] : memref<1x144xf32, #tpu.memory_space<vmem>>, vector<1x144xf32>
    %2 = vector.broadcast %1 : vector<1x144xf32> to vector<512x144xf32>
    %3 = arith.mulf %0, %2 : vector<512x144xf32>
    %c0_3 = arith.constant 0 : index
    %c0_4 = arith.constant 0 : index
    %4 = vector.load %arg3[%c0_3, %c0_4] : memref<1x144xf32, #tpu.memory_space<vmem>>, vector<1x144xf32>
    %5 = vector.broadcast %4 : vector<1x144xf32> to vector<512x144xf32>
    %6 = arith.addf %3, %5 : vector<512x144xf32>
    %cst = arith.constant 0.000000e+00 : f32
    %7 = vector.broadcast %cst : f32 to vector<512x144xf32>
    %8 = arith.maximumf %6, %7 : vector<512x144xf32>
    %9 = arith.truncf %8 : vector<512x144xf32> to vector<512x144xbf16>
    %c0_5 = arith.constant 0 : index
    %c0_6 = arith.constant 0 : index
    %10 = vector.load %arg1[%c0_5, %c0_6] : memref<144x12xbf16, #tpu.memory_space<vmem>>, vector<144x12xbf16>
    %cst_7 = arith.constant dense<0.000000e+00> : vector<512x12xf32>
    %11 = tpu.matmul %9, %10, %cst_7 {dimension_numbers = #tpu.dot_dimension_numbers<[1], [0], [0], [1], [0, 0, 1, 1], [], []>} : vector<512x144xbf16>, vector<144x12xbf16>, vector<512x12xf32> -> vector<512x12xf32>
    %c0_8 = arith.constant 0 : index
    %c0_9 = arith.constant 0 : index
    %12 = vector.load %arg4[%c0_8, %c0_9] : memref<1x12xf32, #tpu.memory_space<vmem>>, vector<1x12xf32>
    %13 = vector.broadcast %12 : vector<1x12xf32> to vector<512x12xf32>
    %14 = arith.addf %11, %13 : vector<512x12xf32>
    %15 = math.tanh %14 : vector<512x12xf32>
    %c0_10 = arith.constant 0 : index
    %c0_11 = arith.constant 0 : index
    %16 = vector.load %arg5[%c0_10, %c0_11] : memref<512x12xf32, #tpu.memory_space<vmem>>, vector<512x12xf32>
    tpu.vector_store %arg5[%c0_10, %c0_11], %15 {strides = array<i32>} : memref<512x12xf32, #tpu.memory_space<vmem>>, vector<512x12xf32>,
    return
  }
}

module attributes {stable_mosaic.version = 11 : i64} {
  func.func @_posterior_mse_kernel(%arg0: memref<2x1xf32, #tpu.memory_space<vmem>>, %arg1: memref<2x3072xf32, #tpu.memory_space<vmem>>, %arg2: memref<2x1xf32, #tpu.memory_space<vmem>>, %arg3: memref<2x3072xf32, #tpu.memory_space<vmem>>, %arg4: memref<2x3072xf32, #tpu.memory_space<vmem>>, %arg5: memref<2x3072xf32, #tpu.memory_space<vmem>>, %arg6: memref<1x1xf32, #tpu.memory_space<vmem>>) attributes {dimension_semantics = [], scalar_prefetch = 0 : i64, scratch_operands = 0 : i64, tpu.core_type = #tpu.core_type<tc>} {
    %c0 = arith.constant 0 : index
    %c0_0 = arith.constant 0 : index
    %0 = vector.load %arg3[%c0, %c0_0] : memref<2x3072xf32, #tpu.memory_space<vmem>>, vector<2x3072xf32>
    %c0_1 = arith.constant 0 : index
    %c0_2 = arith.constant 0 : index
    %1 = vector.load %arg4[%c0_1, %c0_2] : memref<2x3072xf32, #tpu.memory_space<vmem>>, vector<2x3072xf32>
    %2 = arith.subf %0, %1 : vector<2x3072xf32>
    %3 = arith.mulf %2, %2 : vector<2x3072xf32>
    %4 = vector.shape_cast %3 : vector<2x3072xf32> to vector<1x2x3072xf32>
    %cst = arith.constant dense<0.000000e+00> : vector<1xf32>
    %5 = vector.multi_reduction <add>, %4, %cst [1, 2] : vector<1x2x3072xf32> to vector<1xf32>
    %6 = vector.shape_cast %5 : vector<1xf32> to vector<1x1x1xf32>
    %7 = vector.extract %6[0, 0, 0] : f32 from vector<1x1x1xf32>
    %8 = vector.broadcast %7 : f32 to vector<1x1xf32>
    %c0_3 = arith.constant 0 : index
    %c0_4 = arith.constant 0 : index
    %9 = vector.load %arg6[%c0_3, %c0_4] : memref<1x1xf32, #tpu.memory_space<vmem>>, vector<1x1xf32>
    tpu.vector_store %arg6[%c0_3, %c0_4], %8 {strides = array<i32>} : memref<1x1xf32, #tpu.memory_space<vmem>>, vector<1x1xf32>,
    %c0_5 = arith.constant 0 : index
    %c0_6 = arith.constant 0 : index
    %10 = vector.load %arg0[%c0_5, %c0_6] : memref<2x1xf32, #tpu.memory_space<vmem>>, vector<2x1xf32>
    %c0_7 = arith.constant 0 : index
    %c0_8 = arith.constant 0 : index
    %11 = vector.load %arg1[%c0_7, %c0_8] : memref<2x3072xf32, #tpu.memory_space<vmem>>, vector<2x3072xf32>
    %12 = vector.broadcast %10 : vector<2x1xf32> to vector<2x3072xf32>
    %13 = arith.mulf %12, %11 : vector<2x3072xf32>
    %c0_9 = arith.constant 0 : index
    %c0_10 = arith.constant 0 : index
    %14 = vector.load %arg2[%c0_9, %c0_10] : memref<2x1xf32, #tpu.memory_space<vmem>>, vector<2x1xf32>
    %15 = vector.broadcast %14 : vector<2x1xf32> to vector<2x3072xf32>
    %16 = arith.mulf %15, %0 : vector<2x3072xf32>
    %17 = arith.addf %13, %16 : vector<2x3072xf32>
    %c0_11 = arith.constant 0 : index
    %c0_12 = arith.constant 0 : index
    %18 = vector.load %arg5[%c0_11, %c0_12] : memref<2x3072xf32, #tpu.memory_space<vmem>>, vector<2x3072xf32>
    tpu.vector_store %arg5[%c0_11, %c0_12], %17 {strides = array<i32>} : memref<2x3072xf32, #tpu.memory_space<vmem>>, vector<2x3072xf32>,
    return
  }
}

</mosaic_0001>

<llo_original>
// kernel: forward.13
$region0: #{forward.13}
  #allocation0 [shape = 'u32[]', space=smem, size = 0x4, offset = 0x4, fixed_abs, tag = 'smem constant byte address 0x4 - core index']
  #allocation1 [shape = 'u32[72,128]{1,0:T(1,128)}', space=vmem, size = 0x9000, scoped, tag = 'internal scratch']
  %s0 = inlined_call_operand.vmem [shape: f32[2,1], index: 0, kind: input, shape index: {}]
  %s1 = inlined_call_operand.vmem [shape: f32[2,3072], index: 1, kind: input, shape index: {}]
  %s2 = inlined_call_operand.vmem [shape: f32[2,1], index: 2, kind: input, shape index: {}]
  %s3 = inlined_call_operand.vmem [shape: f32[2,3072], index: 3, kind: input, shape index: {}]
  %s4 = inlined_call_operand.vmem [shape: f32[2,3072], index: 4, kind: output, shape index: {}]
  %s5 = sld [smem:[#allocation0]]
  $region26: #{forward.13} parent=0
    _
  %s7 = ssub.s32 1, %s5
  %s8 = scalar_select 0, %s7, %s5
  // Predicated region
  $region2: #{forward.13} parent=0 // pred_check
    _
  $region3: #{forward.13} parent=0 // pred_check_branch
    %10 = sbr.rel (0) target = $region5
  $region4: #{forward.13} parent=0 // pred_region
    _
  $region5: #{forward.13} parent=0 // pred_fallthru
    _
  // Predicated region
  $region6: #{forward.13} parent=0 // pred_check
    _
  $region7: #{forward.13} parent=0 // pred_check_branch
    %12 = sbr.rel (0) target = $region9
  $region8: #{forward.13} parent=0 // pred_region
    _
  $region9: #{forward.13} parent=0 // pred_fallthru
    _
  // Predicated region
  $region10: #{forward.13} parent=0 // pred_check
    _
  $region11: #{forward.13} parent=0 // pred_check_branch
    %14 = sbr.rel (0) target = $region13
  $region12: #{forward.13} parent=0 // pred_region
    _
  $region13: #{forward.13} parent=0 // pred_fallthru
    _
  // Predicated region
  $region14: #{forward.13} parent=0 // pred_check
    _
  $region15: #{forward.13} parent=0 // pred_check_branch
    %16 = sbr.rel (0) target = $region17
  $region16: #{forward.13} parent=0 // pred_region
    _
  $region17: #{forward.13} parent=0 // pred_fallthru
    _
  %v17 = vld [vmem:[%s0] sm:$0x3]
  %v18 = vld [vmem:[%s1] sm:$0xff]
  %v19 = vld [vmem:[%s1 + $0x8] sm:$0xff]
  %v20 = vld [vmem:[%s1 + $0x10] sm:$0xff]
  %v21 = vld [vmem:[%s1 + $0x18] sm:$0xff]
  %v22 = vld [vmem:[%s1 + $0x20] sm:$0xff]
  %v23 = vld [vmem:[%s1 + $0x28] sm:$0xff]
  %25 = vset.pattern.permute.xlu0 0
  %26 = vperm.xlu0 %25, %v17
  %v27 = vpop.permute.xlu0 %26
  %35 = vst [vmem:[#allocation1] ss:$4 sm:$0xff] %v18
  %s36 = scalar_lea.vmem [#allocation1], 32
  %37 = vst [vmem:[%s36] ss:$4 sm:$0xff] %v19
  %v38 = vld.sshfl [vmem:[#allocation1] sm:$0xff pattern:$0x73625140]
  %v39 = vld.sshfl [vmem:[#allocation1 + $0x8] sm:$0xff pattern:$0x73625140]
  %v40 = vld.sshfl [vmem:[#allocation1 + $0x10] sm:$0xff pattern:$0x73625140]
  %v41 = vld.sshfl [vmem:[#allocation1 + $0x18] sm:$0xff pattern:$0x73625140]
  %v42 = vld.sshfl [vmem:[#allocation1 + $0x20] sm:$0xff pattern:$0x73625140]
  %v43 = vld.sshfl [vmem:[#allocation1 + $0x28] sm:$0xff pattern:$0x73625140]
  %v44 = vld.sshfl [vmem:[#allocation1 + $0x30] sm:$0xff pattern:$0x73625140]
  %v45 = vld.sshfl [vmem:[#allocation1 + $0x38] sm:$0xff pattern:$0x73625140]
  %46 = vst [vmem:[#allocation1] ss:$4 sm:$0xff] %v20
  %47 = vst [vmem:[%s36] ss:$4 sm:$0xff] %v21
  %v48 = vld.sshfl [vmem:[#allocation1] sm:$0xff pattern:$0x73625140]
  %v49 = vld.sshfl [vmem:[#allocation1 + $0x8] sm:$0xff pattern:$0x73625140]
  %v50 = vld.sshfl [vmem:[#allocation1 + $0x10] sm:$0xff pattern:$0x73625140]
  %v51 = vld.sshfl [vmem:[#allocation1 + $0x18] sm:$0xff pattern:$0x73625140]
  %v52 = vld.sshfl [vmem:[#allocation1 + $0x20] sm:$0xff pattern:$0x73625140]
  %v53 = vld.sshfl [vmem:[#allocation1 + $0x28] sm:$0xff pattern:$0x73625140]
  %v54 = vld.sshfl [vmem:[#allocation1 + $0x30] sm:$0xff pattern:$0x73625140]
  %v55 = vld.sshfl [vmem:[#allocation1 + $0x38] sm:$0xff pattern:$0x73625140]
  %56 = vst [vmem:[#allocation1] ss:$4 sm:$0xff] %v22
  %57 = vst [vmem:[%s36] ss:$4 sm:$0xff] %v23
  %v58 = vld.sshfl [vmem:[#allocation1] sm:$0xff pattern:$0x73625140]
  %v59 = vld.sshfl [vmem:[#allocation1 + $0x8] sm:$0xff pattern:$0x73625140]
  %v60 = vld.sshfl [vmem:[#allocation1 + $0x10] sm:$0xff pattern:$0x73625140]
  %v61 = vld.sshfl [vmem:[#allocation1 + $0x18] sm:$0xff pattern:$0x73625140]
  %v62 = vld.sshfl [vmem:[#allocation1 + $0x20] sm:$0xff pattern:$0x73625140]
  %v63 = vld.sshfl [vmem:[#allocation1 + $0x28] sm:$0xff pattern:$0x73625140]
  %v64 = vld.sshfl [vmem:[#allocation1 + $0x30] sm:$0xff pattern:$0x73625140]
  %v65 = vld.sshfl [vmem:[#allocation1 + $0x38] sm:$0xff pattern:$0x73625140]
  %v90 = vmul.f32 %v27, %v38
  %v91 = vmul.f32 %v27, %v39
  %v92 = vmul.f32 %v27, %v40
  %v93 = vmul.f32 %v27, %v41
  %v94 = vmul.f32 %v27, %v42
  %v95 = vmul.f32 %v27, %v43
  %v96 = vmul.f32 %v27, %v44
  %v97 = vmul.f32 %v27, %v45
  %v98 = vmul.f32 %v27, %v48
  %v99 = vmul.f32 %v27, %v49
  %v100 = vmul.f32 %v27, %v50
  %v101 = vmul.f32 %v27, %v51
  %v102 = vmul.f32 %v27, %v52
  %v103 = vmul.f32 %v27, %v53
  %v104 = vmul.f32 %v27, %v54
  %v105 = vmul.f32 %v27, %v55
  %v106 = vmul.f32 %v27, %v58
  %v107 = vmul.f32 %v27, %v59
  %v108 = vmul.f32 %v27, %v60
  %v109 = vmul.f32 %v27, %v61
  %v110 = vmul.f32 %v27, %v62
  %v111 = vmul.f32 %v27, %v63
  %v112 = vmul.f32 %v27, %v64
  %v113 = vmul.f32 %v27, %v65
  %v114 = vld [vmem:[%s2] sm:$0x3]
  %v115 = vld [vmem:[%s3] sm:$0xff]
  %v116 = vld [vmem:[%s3 + $0x8] sm:$0xff]
  %v117 = vld [vmem:[%s3 + $0x10] sm:$0xff]
  %v118 = vld [vmem:[%s3 + $0x18] sm:$0xff]
  %v119 = vld [vmem:[%s3 + $0x20] sm:$0xff]
  %v120 = vld [vmem:[%s3 + $0x28] sm:$0xff]
  %122 = vset.pattern.permute.xlu0 0
  %123 = vperm.xlu0 %122, %v114
  %v124 = vpop.permute.xlu0 %123
  %132 = vst [vmem:[#allocation1] ss:$4 sm:$0xff] %v115
  %s133 = scalar_lea.vmem [#allocation1], 32
  %134 = vst [vmem:[%s133] ss:$4 sm:$0xff] %v116
  %v135 = vld.sshfl [vmem:[#allocation1] sm:$0xff pattern:$0x73625140]
  %v136 = vld.sshfl [vmem:[#allocation1 + $0x8] sm:$0xff pattern:$0x73625140]
  %v137 = vld.sshfl [vmem:[#allocation1 + $0x10] sm:$0xff pattern:$0x73625140]
  %v138 = vld.sshfl [vmem:[#allocation1 + $0x18] sm:$0xff pattern:$0x73625140]
  %v139 = vld.sshfl [vmem:[#allocation1 + $0x20] sm:$0xff pattern:$0x73625140]
  %v140 = vld.sshfl [vmem:[#allocation1 + $0x28] sm:$0xff pattern:$0x73625140]
  %v141 = vld.sshfl [vmem:[#allocation1 + $0x30] sm:$0xff pattern:$0x73625140]
  %v142 = vld.sshfl [vmem:[#allocation1 + $0x38] sm:$0xff pattern:$0x73625140]
  %143 = vst [vmem:[#allocation1] ss:$4 sm:$0xff] %v117
  %144 = vst [vmem:[%s133] ss:$4 sm:$0xff] %v118
  %v145 = vld.sshfl [vmem:[#allocation1] sm:$0xff pattern:$0x73625140]
  %v146 = vld.sshfl [vmem:[#allocation1 + $0x8] sm:$0xff pattern:$0x73625140]
  %v147 = vld.sshfl [vmem:[#allocation1 + $0x10] sm:$0xff pattern:$0x73625140]
  %v148 = vld.sshfl [vmem:[#allocation1 + $0x18] sm:$0xff pattern:$0x73625140]
  %v149 = vld.sshfl [vmem:[#allocation1 + $0x20] sm:$0xff pattern:$0x73625140]
  %v150 = vld.sshfl [vmem:[#allocation1 + $0x28] sm:$0xff pattern:$0x73625140]
  %v151 = vld.sshfl [vmem:[#allocation1 + $0x30] sm:$0xff pattern:$0x73625140]
  %v152 = vld.sshfl [vmem:[#allocation1 + $0x38] sm:$0xff pattern:$0x73625140]
  %153 = vst [vmem:[#allocation1] ss:$4 sm:$0xff] %v119
  %154 = vst [vmem:[%s133] ss:$4 sm:$0xff] %v120
  %v155 = vld.sshfl [vmem:[#allocation1] sm:$0xff pattern:$0x73625140]
  %v156 = vld.sshfl [vmem:[#allocation1 + $0x8] sm:$0xff pattern:$0x73625140]
  %v157 = vld.sshfl [vmem:[#allocation1 + $0x10] sm:$0xff pattern:$0x73625140]
  %v158 = vld.sshfl [vmem:[#allocation1 + $0x18] sm:$0xff pattern:$0x73625140]
  %v159 = vld.sshfl [vmem:[#allocation1 + $0x20] sm:$0xff pattern:$0x73625140]
  %v160 = vld.sshfl [vmem:[#allocation1 + $0x28] sm:$0xff pattern:$0x73625140]
  %v161 = vld.sshfl [vmem:[#allocation1 + $0x30] sm:$0xff pattern:$0x73625140]
  %v162 = vld.sshfl [vmem:[#allocation1 + $0x38] sm:$0xff pattern:$0x73625140]
  %v187 = vmul.f32 %v124, %v135
  %v188 = vmul.f32 %v124, %v136
  %v189 = vmul.f32 %v124, %v137
  %v190 = vmul.f32 %v124, %v138
  %v191 = vmul.f32 %v124, %v139
  %v192 = vmul.f32 %v124, %v140
  %v193 = vmul.f32 %v124, %v141
  %v194 = vmul.f32 %v124, %v142
  %v195 = vmul.f32 %v124, %v145
  %v196 = vmul.f32 %v124, %v146
  %v197 = vmul.f32 %v124, %v147
  %v198 = vmul.f32 %v124, %v148
  %v199 = vmul.f32 %v124, %v149
  %v200 = vmul.f32 %v124, %v150
  %v201 = vmul.f32 %v124, %v151
  %v202 = vmul.f32 %v124, %v152
  %v203 = vmul.f32 %v124, %v155
  %v204 = vmul.f32 %v124, %v156
  %v205 = vmul.f32 %v124, %v157
  %v206 = vmul.f32 %v124, %v158
  %v207 = vmul.f32 %v124, %v159
  %v208 = vmul.f32 %v124, %v160
  %v209 = vmul.f32 %v124, %v161
  %v210 = vmul.f32 %v124, %v162
  %v211 = vadd.f32 %v90, %v187
  %v212 = vadd.f32 %v91, %v188
  %v213 = vadd.f32 %v92, %v189
  %v214 = vadd.f32 %v93, %v190
  %v215 = vadd.f32 %v94, %v191
  %v216 = vadd.f32 %v95, %v192
  %v217 = vadd.f32 %v96, %v193
  %v218 = vadd.f32 %v97, %v194
  %v219 = vadd.f32 %v98, %v195
  %v220 = vadd.f32 %v99, %v196
  %v221 = vadd.f32 %v100, %v197
  %v222 = vadd.f32 %v101, %v198
  %v223 = vadd.f32 %v102, %v199
  %v224 = vadd.f32 %v103, %v200
  %v225 = vadd.f32 %v104, %v201
  %v226 = vadd.f32 %v105, %v202
  %v227 = vadd.f32 %v106, %v203
  %v228 = vadd.f32 %v107, %v204
  %v229 = vadd.f32 %v108, %v205
  %v230 = vadd.f32 %v109, %v206
  %v231 = vadd.f32 %v110, %v207
  %v232 = vadd.f32 %v111, %v208
  %v233 = vadd.f32 %v112, %v209
  %v234 = vadd.f32 %v113, %v210
  %v259 = vrot.slane %v212, 6
  %v260 = vrot.slane %v213, 4
  %v261 = vrot.slane %v214, 2
  %v262 = vrot.slane %v216, 6
  %v263 = vrot.slane %v217, 4
  %v264 = vrot.slane %v218, 2
  %v265 = vrot.slane %v220, 6
  %v266 = vrot.slane %v221, 4
  %v267 = vrot.slane %v222, 2
  %v268 = vrot.slane %v224, 6
  %v269 = vrot.slane %v225, 4
  %v270 = vrot.slane %v226, 2
  %v271 = vrot.slane %v228, 6
  %v272 = vrot.slane %v229, 4
  %v273 = vrot.slane %v230, 2
  %v274 = vrot.slane %v232, 6
  %v275 = vrot.slane %v233, 4
  %v276 = vrot.slane %v234, 2
  %vm277 = vcmask 1041408
  %v278 = vsel %vm277, %v211, %v259
  %vm279 = vcmask 1045508
  %v280 = vsel %vm279, %v260, %v261
  %vm281 = vcmask 1043456
  %v282 = vsel %vm281, %v278, %v280
  %v283 = vsel %vm277, %v215, %v262
  %v284 = vsel %vm279, %v263, %v264
  %v285 = vsel %vm281, %v283, %v284
  %v286 = vsel %vm277, %v219, %v265
  %v287 = vsel %vm279, %v266, %v267
  %v288 = vsel %vm281, %v286, %v287
  %v289 = vsel %vm277, %v223, %v268
  %v290 = vsel %vm279, %v269, %v270
  %v291 = vsel %vm281, %v289, %v290
  %v292 = vsel %vm277, %v227, %v271
  %v293 = vsel %vm279, %v272, %v273
  %v294 = vsel %vm281, %v292, %v293
  %v295 = vsel %vm277, %v231, %v274
  %v296 = vsel %vm279, %v275, %v276
  %v297 = vsel %vm281, %v295, %v296
  %304 = vst [vmem:[%s4] sm:$0xff] %v282
  %305 = vst [vmem:[%s4 + $0x8] sm:$0xff] %v285
  %306 = vst [vmem:[%s4 + $0x10] sm:$0xff] %v288
  %307 = vst [vmem:[%s4 + $0x18] sm:$0xff] %v291
  %308 = vst [vmem:[%s4 + $0x20] sm:$0xff] %v294
  %309 = vst [vmem:[%s4 + $0x28] sm:$0xff] %v297
  // Predicated region
  $region18: #{forward.13} parent=0 // pred_check
    _
  $region19: #{forward.13} parent=0 // pred_check_branch
    %311 = sbr.rel (0) target = $region21
  $region20: #{forward.13} parent=0 // pred_region
    _
  $region21: #{forward.13} parent=0 // pred_fallthru
    _
  // Predicated region
  $region22: #{forward.13} parent=0 // pred_check
    _
  $region23: #{forward.13} parent=0 // pred_check_branch
    %313 = sbr.rel (0) target = $region25
  $region24: #{forward.13} parent=0 // pred_region
    _
  $region25: #{forward.13} parent=0 // pred_fallthru
    _

// kernel: forward.14
$region0: #{forward.14}
  #allocation0 [shape = 'u32[]', space=smem, size = 0x4, offset = 0x4, fixed_abs, tag = 'smem constant byte address 0x4 - core index']
  #allocation1 [shape = 'u32[72,128]{1,0:T(1,128)}', space=vmem, size = 0x9000, scoped, tag = 'internal scratch']
  %s0 = inlined_call_operand.vmem [shape: f32[512,96], index: 0, kind: input, shape index: {}]
  %s1 = inlined_call_operand.vmem [shape: bf16[96,8], index: 1, kind: input, shape index: {}]
  %s2 = inlined_call_operand.vmem [shape: f32[512,8], index: 2, kind: output, shape index: {}]
  %s3 = sld [smem:[#allocation0]]
  $region18: #{forward.14} parent=0
    _
  %s5 = ssub.s32 1, %s3
  %s6 = scalar_select 0, %s5, %s3
  // Predicated region
  $region2: #{forward.14} parent=0 // pred_check
    _
  $region3: #{forward.14} parent=0 // pred_check_branch
    %8 = sbr.rel (0) target = $region5
  $region4: #{forward.14} parent=0 // pred_region
    _
  $region5: #{forward.14} parent=0 // pred_fallthru
    _
  // Predicated region
  $region6: #{forward.14} parent=0 // pred_check
    _
  $region7: #{forward.14} parent=0 // pred_check_branch
    %10 = sbr.rel (0) target = $region9
  $region8: #{forward.14} parent=0 // pred_region
    _
  $region9: #{forward.14} parent=0 // pred_fallthru
    _
  %v12 = vld [vmem:[%s0] sm:$0xff]
  %v13 = vld [vmem:[%s0 + $0x8] sm:$0xff]
  %v14 = vld [vmem:[%s0 + $0x10] sm:$0xff]
  %v15 = vld [vmem:[%s0 + $0x18] sm:$0xff]
  %v16 = vld [vmem:[%s0 + $0x20] sm:$0xff]
  %v17 = vld [vmem:[%s0 + $0x28] sm:$0xff]
  %v18 = vld [vmem:[%s0 + $0x30] sm:$0xff]
  %v19 = vld [vmem:[%s0 + $0x38] sm:$0xff]
  %v20 = vld [vmem:[%s0 + $0x40] sm:$0xff]
  %v21 = vld [vmem:[%s0 + $0x48] sm:$0xff]
  %v22 = vld [vmem:[%s0 + $0x50] sm:$0xff]
  %v23 = vld [vmem:[%s0 + $0x58] sm:$0xff]
  %v24 = vld [vmem:[%s0 + $0x60] sm:$0xff]
  %v25 = vld [vmem:[%s0 + $0x68] sm:$0xff]
  %v26 = vld [vmem:[%s0 + $0x70] sm:$0xff]
  %v27 = vld [vmem:[%s0 + $0x78] sm:$0xff]
  %v28 = vld [vmem:[%s0 + $0x80] sm:$0xff]
  %v29 = vld [vmem:[%s0 + $0x88] sm:$0xff]
  %v30 = vld [vmem:[%s0 + $0x90] sm:$0xff]
  %v31 = vld [vmem:[%s0 + $0x98] sm:$0xff]
  %v32 = vld [vmem:[%s0 + $0xa0] sm:$0xff]
  %v33 = vld [vmem:[%s0 + $0xa8] sm:$0xff]
  %v34 = vld [vmem:[%s0 + $0xb0] sm:$0xff]
  %v35 = vld [vmem:[%s0 + $0xb8] sm:$0xff]
  %v36 = vld [vmem:[%s0 + $0xc0] sm:$0xff]
  %v37 = vld [vmem:[%s0 + $0xc8] sm:$0xff]
  %v38 = vld [vmem:[%s0 + $0xd0] sm:$0xff]
  %v39 = vld [vmem:[%s0 + $0xd8] sm:$0xff]
  %v40 = vld [vmem:[%s0 + $0xe0] sm:$0xff]
  %v41 = vld [vmem:[%s0 + $0xe8] sm:$0xff]
  %v42 = vld [vmem:[%s0 + $0xf0] sm:$0xff]
  %v43 = vld [vmem:[%s0 + $0xf8] sm:$0xff]
  %v44 = vld [vmem:[%s0 + $0x100] sm:$0xff]
  %v45 = vld [vmem:[%s0 + $0x108] sm:$0xff]
  %v46 = vld [vmem:[%s0 + $0x110] sm:$0xff]
  %v47 = vld [vmem:[%s0 + $0x118] sm:$0xff]
  %v48 = vld [vmem:[%s0 + $0x120] sm:$0xff]
  %v49 = vld [vmem:[%s0 + $0x128] sm:$0xff]
  %v50 = vld [vmem:[%s0 + $0x130] sm:$0xff]
  %v51 = vld [vmem:[%s0 + $0x138] sm:$0xff]
  %v52 = vld [vmem:[%s0 + $0x140] sm:$0xff]
  %v53 = vld [vmem:[%s0 + $0x148] sm:$0xff]
  %v54 = vld [vmem:[%s0 + $0x150] sm:$0xff]
  %v55 = vld [vmem:[%s0 + $0x158] sm:$0xff]
  %v56 = vld [vmem:[%s0 + $0x160] sm:$0xff]
  %v57 = vld [vmem:[%s0 + $0x168] sm:$0xff]
  %v58 = vld [vmem:[%s0 + $0x170] sm:$0xff]
  %v59 = vld [vmem:[%s0 + $0x178] sm:$0xff]
  %v60 = vld [vmem:[%s0 + $0x180] sm:$0xff]
  %v61 = vld [vmem:[%s0 + $0x188] sm:$0xff]
  %v62 = vld [vmem:[%s0 + $0x190] sm:$0xff]
  %v63 = vld [vmem:[%s0 + $0x198] sm:$0xff]
  %v64 = vld [vmem:[%s0 + $0x1a0] sm:$0xff]
  %v65 = vld [vmem:[%s0 + $0x1a8] sm:$0xff]
  %v66 = vld [vmem:[%s0 + $0x1b0] sm:$0xff]
  %v67 = vld [vmem:[%s0 + $0x1b8] sm:$0xff]
  %v68 = vld [vmem:[%s0 + $0x1c0] sm:$0xff]
  %v69 = vld [vmem:[%s0 + $0x1c8] sm:$0xff]
  %v70 = vld [vmem:[%s0 + $0x1d0] sm:$0xff]
  %v71 = vld [vmem:[%s0 + $0x1d8] sm:$0xff]
  %v72 = vld [vmem:[%s0 + $0x1e0] sm:$0xff]
  %v73 = vld [vmem:[%s0 + $0x1e8] sm:$0xff]
  %v74 = vld [vmem:[%s0 + $0x1f0] sm:$0xff]
  %v75 = vld [vmem:[%s0 + $0x1f8] sm:$0xff]
  %v76 = vpack.c.bf16 %v13, %v12
  %v77 = vpack.c.bf16 %v15, %v14
  %v78 = vpack.c.bf16 %v17, %v16
  %v79 = vpack.c.bf16 %v19, %v18
  %v80 = vpack.c.bf16 %v21, %v20
  %v81 = vpack.c.bf16 %v23, %v22
  %v82 = vpack.c.bf16 %v25, %v24
  %v83 = vpack.c.bf16 %v27, %v26
  %v84 = vpack.c.bf16 %v29, %v28
  %v85 = vpack.c.bf16 %v31, %v30
  %v86 = vpack.c.bf16 %v33, %v32
  %v87 = vpack.c.bf16 %v35, %v34
  %v88 = vpack.c.bf16 %v37, %v36
  %v89 = vpack.c.bf16 %v39, %v38
  %v90 = vpack.c.bf16 %v41, %v40
  %v91 = vpack.c.bf16 %v43, %v42
  %v92 = vpack.c.bf16 %v45, %v44
  %v93 = vpack.c.bf16 %v47, %v46
  %v94 = vpack.c.bf16 %v49, %v48
  %v95 = vpack.c.bf16 %v51, %v50
  %v96 = vpack.c.bf16 %v53, %v52
  %v97 = vpack.c.bf16 %v55, %v54
  %v98 = vpack.c.bf16 %v57, %v56
  %v99 = vpack.c.bf16 %v59, %v58
  %v100 = vpack.c.bf16 %v61, %v60
  %v101 = vpack.c.bf16 %v63, %v62
  %v102 = vpack.c.bf16 %v65, %v64
  %v103 = vpack.c.bf16 %v67, %v66
  %v104 = vpack.c.bf16 %v69, %v68
  %v105 = vpack.c.bf16 %v71, %v70
  %v106 = vpack.c.bf16 %v73, %v72
  %v107 = vpack.c.bf16 %v75, %v74
  %v108 = vld [vmem:[%s1] sm:$0xf]
  %v109 = vld [vmem:[%s1 + $0x4] sm:$0xf]
  %v110 = vld [vmem:[%s1 + $0x8] sm:$0xf]
  %v111 = vld [vmem:[%s1 + $0xc] sm:$0xf]
  %v112 = vld [vmem:[%s1 + $0x10] sm:$0xf]
  %v113 = vld [vmem:[%s1 + $0x14] sm:$0xf]
  %v114 = vld [vmem:[%s1 + $0x18] sm:$0xf]
  %v115 = vld [vmem:[%s1 + $0x1c] sm:$0xf]
  %v116 = vld [vmem:[%s1 + $0x20] sm:$0xf]
  %v117 = vld [vmem:[%s1 + $0x24] sm:$0xf]
  %v118 = vld [vmem:[%s1 + $0x28] sm:$0xf]
  %v119 = vld [vmem:[%s1 + $0x2c] sm:$0xf]
  %v132 = vunpack.c.l.b16 %v108
  %v133 = vunpack.c.l.b16 %v109
  %v134 = vunpack.c.l.b16 %v110
  %v135 = vunpack.c.l.b16 %v111
  %v136 = vunpack.c.l.b16 %v112
  %v137 = vunpack.c.l.b16 %v113
  %v138 = vunpack.c.l.b16 %v114
  %v139 = vunpack.c.l.b16 %v115
  %v140 = vunpack.c.l.b16 %v116
  %v141 = vunpack.c.l.b16 %v117
  %v142 = vunpack.c.l.b16 %v118
  %v143 = vunpack.c.l.b16 %v119
  %v144 = vpack.c.b16 %v133, %v132
  %v145 = vpack.c.b16 %v135, %v134
  %v146 = vpack.c.b16 %v137, %v136
  %v147 = vpack.c.b16 %v139, %v138
  %v148 = vpack.c.b16 %v141, %v140
  %v149 = vpack.c.b16 %v143, %v142
  %vm156 = vcmask 785408
  %v158 = vsel %vm156, %v76, 0
  %v161 = vsel %vm156, %v77, 0
  %v164 = vsel %vm156, %v78, 0
  %v167 = vsel %vm156, %v79, 0
  %v170 = vsel %vm156, %v80, 0
  %v173 = vsel %vm156, %v81, 0
  %v176 = vsel %vm156, %v82, 0
  %v179 = vsel %vm156, %v83, 0
  %v182 = vsel %vm156, %v84, 0
  %v185 = vsel %vm156, %v85, 0
  %v188 = vsel %vm156, %v86, 0
  %v191 = vsel %vm156, %v87, 0
  %v194 = vsel %vm156, %v88, 0
  %v197 = vsel %vm156, %v89, 0
  %v200 = vsel %vm156, %v90, 0
  %v203 = vsel %vm156, %v91, 0
  %v206 = vsel %vm156, %v92, 0
  %v209 = vsel %vm156, %v93, 0
  %v212 = vsel %vm156, %v94, 0
  %v215 = vsel %vm156, %v95, 0
  %v218 = vsel %vm156, %v96, 0
  %v221 = vsel %vm156, %v97, 0
  %v224 = vsel %vm156, %v98, 0
  %v227 = vsel %vm156, %v99, 0
  %v230 = vsel %vm156, %v100, 0
  %v233 = vsel %vm156, %v101, 0
  %v236 = vsel %vm156, %v102, 0
  %v239 = vsel %vm156, %v103, 0
  %v242 = vsel %vm156, %v104, 0
  %v245 = vsel %vm156, %v105, 0
  %v248 = vsel %vm156, %v106, 0
  %v251 = vsel %vm156, %v107, 0
  %253 = vmatpush.bf16.msra.mxu0 0
  %254 = vmatpush.bf16.msra.mxu0 0
  %255 = vmatpush.bf16.msra.mxu0 %v149
  %256 = vmatpush.bf16.msra.mxu0 %v148
  %257 = vmatpush.bf16.msra.mxu0 %v147
  %258 = vmatpush.bf16.msra.mxu0 %v146
  %259 = vmatpush.bf16.msra.mxu0 %v145
  %260 = vmatpush.bf16.msra.mxu0 %v144
  %261 = vmatmul.bf16.gmra.mxu0 %v158
  %v262 = vpop.f32.mrf.mxu0
  %v263 = vadd.f32 0.0, %v262
  %v264 = vpop.f32.mrf.mxu0
  %v265 = vadd.f32 0.0, %v264
  %266 = vmatmul.bf16.gmra.mxu0 %v161
  %v267 = vpop.f32.mrf.mxu0
  %v268 = vadd.f32 0.0, %v267
  %v269 = vpop.f32.mrf.mxu0
  %v270 = vadd.f32 0.0, %v269
  %271 = vmatmul.bf16.gmra.mxu0 %v164
  %v272 = vpop.f32.mrf.mxu0
  %v273 = vadd.f32 0.0, %v272
  %v274 = vpop.f32.mrf.mxu0
  %v275 = vadd.f32 0.0, %v274
  %276 = vmatmul.bf16.gmra.mxu0 %v167
  %v277 = vpop.f32.mrf.mxu0
  %v278 = vadd.f32 0.0, %v277
  %v279 = vpop.f32.mrf.mxu0
  %v280 = vadd.f32 0.0, %v279
  %281 = vmatmul.bf16.gmra.mxu0 %v170
  %v282 = vpop.f32.mrf.mxu0
  %v283 = vadd.f32 0.0, %v282
  %v284 = vpop.f32.mrf.mxu0
  %v285 = vadd.f32 0.0, %v284
  %286 = vmatmul.bf16.gmra.mxu0 %v173
  %v287 = vpop.f32.mrf.mxu0
  %v288 = vadd.f32 0.0, %v287
  %v289 = vpop.f32.mrf.mxu0
  %v290 = vadd.f32 0.0, %v289
  %291 = vmatmul.bf16.gmra.mxu0 %v176
  %v292 = vpop.f32.mrf.mxu0
  %v293 = vadd.f32 0.0, %v292
  %v294 = vpop.f32.mrf.mxu0
  %v295 = vadd.f32 0.0, %v294
  %296 = vmatmul.bf16.gmra.mxu0 %v179
  %v297 = vpop.f32.mrf.mxu0
  %v298 = vadd.f32 0.0, %v297
  %v299 = vpop.f32.mrf.mxu0
  %v300 = vadd.f32 0.0, %v299
  %301 = vmatmul.bf16.gmra.mxu0 %v182
  %v302 = vpop.f32.mrf.mxu0
  %v303 = vadd.f32 0.0, %v302
  %v304 = vpop.f32.mrf.mxu0
  %v305 = vadd.f32 0.0, %v304
  %306 = vmatmul.bf16.gmra.mxu0 %v185
  %v307 = vpop.f32.mrf.mxu0
  %v308 = vadd.f32 0.0, %v307
  %v309 = vpop.f32.mrf.mxu0
  %v310 = vadd.f32 0.0, %v309
  %311 = vmatmul.bf16.gmra.mxu0 %v188
  %v312 = vpop.f32.mrf.mxu0
  %v313 = vadd.f32 0.0, %v312
  %v314 = vpop.f32.mrf.mxu0
  %v315 = vadd.f32 0.0, %v314
  %316 = vmatmul.bf16.gmra.mxu0 %v191
  %v317 = vpop.f32.mrf.mxu0
  %v318 = vadd.f32 0.0, %v317
  %v319 = vpop.f32.mrf.mxu0
  %v320 = vadd.f32 0.0, %v319
  %321 = vmatmul.bf16.gmra.mxu0 %v194
  %v322 = vpop.f32.mrf.mxu0
  %v323 = vadd.f32 0.0, %v322
  %v324 = vpop.f32.mrf.mxu0
  %v325 = vadd.f32 0.0, %v324
  %326 = vmatmul.bf16.gmra.mxu0 %v197
  %v327 = vpop.f32.mrf.mxu0
  %v328 = vadd.f32 0.0, %v327
  %v329 = vpop.f32.mrf.mxu0
  %v330 = vadd.f32 0.0, %v329
  %331 = vmatmul.bf16.gmra.mxu0 %v200
  %v332 = vpop.f32.mrf.mxu0
  %v333 = vadd.f32 0.0, %v332
  %v334 = vpop.f32.mrf.mxu0
  %v335 = vadd.f32 0.0, %v334
  %336 = vmatmul.bf16.gmra.mxu0 %v203
  %v337 = vpop.f32.mrf.mxu0
  %v338 = vadd.f32 0.0, %v337
  %v339 = vpop.f32.mrf.mxu0
  %v340 = vadd.f32 0.0, %v339
  %341 = vmatmul.bf16.gmra.mxu0 %v206
  %v342 = vpop.f32.mrf.mxu0
  %v343 = vadd.f32 0.0, %v342
  %v344 = vpop.f32.mrf.mxu0
  %v345 = vadd.f32 0.0, %v344
  %346 = vmatmul.bf16.gmra.mxu0 %v209
  %v347 = vpop.f32.mrf.mxu0
  %v348 = vadd.f32 0.0, %v347
  %v349 = vpop.f32.mrf.mxu0
  %v350 = vadd.f32 0.0, %v349
  %351 = vmatmul.bf16.gmra.mxu0 %v212
  %v352 = vpop.f32.mrf.mxu0
  %v353 = vadd.f32 0.0, %v352
  %v354 = vpop.f32.mrf.mxu0
  %v355 = vadd.f32 0.0, %v354
  %356 = vmatmul.bf16.gmra.mxu0 %v215
  %v357 = vpop.f32.mrf.mxu0
  %v358 = vadd.f32 0.0, %v357
  %v359 = vpop.f32.mrf.mxu0
  %v360 = vadd.f32 0.0, %v359
  %361 = vmatmul.bf16.gmra.mxu0 %v218
  %v362 = vpop.f32.mrf.mxu0
  %v363 = vadd.f32 0.0, %v362
  %v364 = vpop.f32.mrf.mxu0
  %v365 = vadd.f32 0.0, %v364
  %366 = vmatmul.bf16.gmra.mxu0 %v221
  %v367 = vpop.f32.mrf.mxu0
  %v368 = vadd.f32 0.0, %v367
  %v369 = vpop.f32.mrf.mxu0
  %v370 = vadd.f32 0.0, %v369
  %371 = vmatmul.bf16.gmra.mxu0 %v224
  %v372 = vpop.f32.mrf.mxu0
  %v373 = vadd.f32 0.0, %v372
  %v374 = vpop.f32.mrf.mxu0
  %v375 = vadd.f32 0.0, %v374
  %376 = vmatmul.bf16.gmra.mxu0 %v227
  %v377 = vpop.f32.mrf.mxu0
  %v378 = vadd.f32 0.0, %v377
  %v379 = vpop.f32.mrf.mxu0
  %v380 = vadd.f32 0.0, %v379
  %381 = vmatmul.bf16.gmra.mxu0 %v230
  %v382 = vpop.f32.mrf.mxu0
  %v383 = vadd.f32 0.0, %v382
  %v384 = vpop.f32.mrf.mxu0
  %v385 = vadd.f32 0.0, %v384
  %386 = vmatmul.bf16.gmra.mxu0 %v233
  %v387 = vpop.f32.mrf.mxu0
  %v388 = vadd.f32 0.0, %v387
  %v389 = vpop.f32.mrf.mxu0
  %v390 = vadd.f32 0.0, %v389
  %391 = vmatmul.bf16.gmra.mxu0 %v236
  %v392 = vpop.f32.mrf.mxu0
  %v393 = vadd.f32 0.0, %v392
  %v394 = vpop.f32.mrf.mxu0
  %v395 = vadd.f32 0.0, %v394
  %396 = vmatmul.bf16.gmra.mxu0 %v239
  %v397 = vpop.f32.mrf.mxu0
  %v398 = vadd.f32 0.0, %v397
  %v399 = vpop.f32.mrf.mxu0
  %v400 = vadd.f32 0.0, %v399
  %401 = vmatmul.bf16.gmra.mxu0 %v242
  %v402 = vpop.f32.mrf.mxu0
  %v403 = vadd.f32 0.0, %v402
  %v404 = vpop.f32.mrf.mxu0
  %v405 = vadd.f32 0.0, %v404
  %406 = vmatmul.bf16.gmra.mxu0 %v245
  %v407 = vpop.f32.mrf.mxu0
  %v408 = vadd.f32 0.0, %v407
  %v409 = vpop.f32.mrf.mxu0
  %v410 = vadd.f32 0.0, %v409
  %411 = vmatmul.bf16.gmra.mxu0 %v248
  %v412 = vpop.f32.mrf.mxu0
  %v413 = vadd.f32 0.0, %v412
  %v414 = vpop.f32.mrf.mxu0
  %v415 = vadd.f32 0.0, %v414
  %416 = vmatmul.bf16.gmra.mxu0 %v251
  %v417 = vpop.f32.mrf.mxu0
  %v418 = vadd.f32 0.0, %v417
  %v419 = vpop.f32.mrf.mxu0
  %v420 = vadd.f32 0.0, %v419
  %421 = vdwg.mxu0
  %vm422 = vcmask 64512
  %423 = vst.msk [vmem:[%s2] sm:$0xff] %vm422, %v263
  %424 = vst.msk [vmem:[%s2 + $0x8] sm:$0xff] %vm422, %v265
  %425 = vst.msk [vmem:[%s2 + $0x10] sm:$0xff] %vm422, %v268
  %426 = vst.msk [vmem:[%s2 + $0x18] sm:$0xff] %vm422, %v270
  %427 = vst.msk [vmem:[%s2 + $0x20] sm:$0xff] %vm422, %v273
  %428 = vst.msk [vmem:[%s2 + $0x28] sm:$0xff] %vm422, %v275
  %429 = vst.msk [vmem:[%s2 + $0x30] sm:$0xff] %vm422, %v278
  %430 = vst.msk [vmem:[%s2 + $0x38] sm:$0xff] %vm422, %v280
  %431 = vst.msk [vmem:[%s2 + $0x40] sm:$0xff] %vm422, %v283
  %432 = vst.msk [vmem:[%s2 + $0x48] sm:$0xff] %vm422, %v285
  %433 = vst.msk [vmem:[%s2 + $0x50] sm:$0xff] %vm422, %v288
  %434 = vst.msk [vmem:[%s2 + $0x58] sm:$0xff] %vm422, %v290
  %435 = vst.msk [vmem:[%s2 + $0x60] sm:$0xff] %vm422, %v293
  %436 = vst.msk [vmem:[%s2 + $0x68] sm:$0xff] %vm422, %v295
  %437 = vst.msk [vmem:[%s2 + $0x70] sm:$0xff] %vm422, %v298
  %438 = vst.msk [vmem:[%s2 + $0x78] sm:$0xff] %vm422, %v300
  %439 = vst.msk [vmem:[%s2 + $0x80] sm:$0xff] %vm422, %v303
  %440 = vst.msk [vmem:[%s2 + $0x88] sm:$0xff] %vm422, %v305
  %441 = vst.msk [vmem:[%s2 + $0x90] sm:$0xff] %vm422, %v308
  %442 = vst.msk [vmem:[%s2 + $0x98] sm:$0xff] %vm422, %v310
  %443 = vst.msk [vmem:[%s2 + $0xa0] sm:$0xff] %vm422, %v313
  %444 = vst.msk [vmem:[%s2 + $0xa8] sm:$0xff] %vm422, %v315
  %445 = vst.msk [vmem:[%s2 + $0xb0] sm:$0xff] %vm422, %v318
  %446 = vst.msk [vmem:[%s2 + $0xb8] sm:$0xff] %vm422, %v320
  %447 = vst.msk [vmem:[%s2 + $0xc0] sm:$0xff] %vm422, %v323
  %448 = vst.msk [vmem:[%s2 + $0xc8] sm:$0xff] %vm422, %v325
  %449 = vst.msk [vmem:[%s2 + $0xd0] sm:$0xff] %vm422, %v328
  %450 = vst.msk [vmem:[%s2 + $0xd8] sm:$0xff] %vm422, %v330
  %451 = vst.msk [vmem:[%s2 + $0xe0] sm:$0xff] %vm422, %v333
  %452 = vst.msk [vmem:[%s2 + $0xe8] sm:$0xff] %vm422, %v335
  %453 = vst.msk [vmem:[%s2 + $0xf0] sm:$0xff] %vm422, %v338
  %454 = vst.msk [vmem:[%s2 + $0xf8] sm:$0xff] %vm422, %v340
  %455 = vst.msk [vmem:[%s2 + $0x100] sm:$0xff] %vm422, %v343
  %456 = vst.msk [vmem:[%s2 + $0x108] sm:$0xff] %vm422, %v345
  %457 = vst.msk [vmem:[%s2 + $0x110] sm:$0xff] %vm422, %v348
  %458 = vst.msk [vmem:[%s2 + $0x118] sm:$0xff] %vm422, %v350
  %459 = vst.msk [vmem:[%s2 + $0x120] sm:$0xff] %vm422, %v353
  %460 = vst.msk [vmem:[%s2 + $0x128] sm:$0xff] %vm422, %v355
  %461 = vst.msk [vmem:[%s2 + $0x130] sm:$0xff] %vm422, %v358
  %462 = vst.msk [vmem:[%s2 + $0x138] sm:$0xff] %vm422, %v360
  %463 = vst.msk [vmem:[%s2 + $0x140] sm:$0xff] %vm422, %v363
  %464 = vst.msk [vmem:[%s2 + $0x148] sm:$0xff] %vm422, %v365
  %465 = vst.msk [vmem:[%s2 + $0x150] sm:$0xff] %vm422, %v368
  %466 = vst.msk [vmem:[%s2 + $0x158] sm:$0xff] %vm422, %v370
  %467 = vst.msk [vmem:[%s2 + $0x160] sm:$0xff] %vm422, %v373
  %468 = vst.msk [vmem:[%s2 + $0x168] sm:$0xff] %vm422, %v375
  %469 = vst.msk [vmem:[%s2 + $0x170] sm:$0xff] %vm422, %v378
  %470 = vst.msk [vmem:[%s2 + $0x178] sm:$0xff] %vm422, %v380
  %471 = vst.msk [vmem:[%s2 + $0x180] sm:$0xff] %vm422, %v383
  %472 = vst.msk [vmem:[%s2 + $0x188] sm:$0xff] %vm422, %v385
  %473 = vst.msk [vmem:[%s2 + $0x190] sm:$0xff] %vm422, %v388
  %474 = vst.msk [vmem:[%s2 + $0x198] sm:$0xff] %vm422, %v390
  %475 = vst.msk [vmem:[%s2 + $0x1a0] sm:$0xff] %vm422, %v393
  %476 = vst.msk [vmem:[%s2 + $0x1a8] sm:$0xff] %vm422, %v395
  %477 = vst.msk [vmem:[%s2 + $0x1b0] sm:$0xff] %vm422, %v398
  %478 = vst.msk [vmem:[%s2 + $0x1b8] sm:$0xff] %vm422, %v400
  %479 = vst.msk [vmem:[%s2 + $0x1c0] sm:$0xff] %vm422, %v403
  %480 = vst.msk [vmem:[%s2 + $0x1c8] sm:$0xff] %vm422, %v405
  %481 = vst.msk [vmem:[%s2 + $0x1d0] sm:$0xff] %vm422, %v408
  %482 = vst.msk [vmem:[%s2 + $0x1d8] sm:$0xff] %vm422, %v410
  %483 = vst.msk [vmem:[%s2 + $0x1e0] sm:$0xff] %vm422, %v413
  %484 = vst.msk [vmem:[%s2 + $0x1e8] sm:$0xff] %vm422, %v415
  %485 = vst.msk [vmem:[%s2 + $0x1f0] sm:$0xff] %vm422, %v418
  %486 = vst.msk [vmem:[%s2 + $0x1f8] sm:$0xff] %vm422, %v420
  // Predicated region
  $region10: #{forward.14} parent=0 // pred_check
    _
  $region11: #{forward.14} parent=0 // pred_check_branch
    %488 = sbr.rel (0) target = $region13
  $region12: #{forward.14} parent=0 // pred_region
    _
  $region13: #{forward.14} parent=0 // pred_fallthru
    _
  // Predicated region
  $region14: #{forward.14} parent=0 // pred_check
    _
  $region15: #{forward.14} parent=0 // pred_check_branch
    %490 = sbr.rel (0) target = $region17
  $region16: #{forward.14} parent=0 // pred_region
    _
  $region17: #{forward.14} parent=0 // pred_fallthru
    _

// kernel: forward.15
$region0: #{forward.15}
  #allocation0 [shape = 'u32[]', space=smem, size = 0x4, offset = 0x4, fixed_abs, tag = 'smem constant byte address 0x4 - core index']
  #allocation1 [shape = 'u32[72,128]{1,0:T(1,128)}', space=vmem, size = 0x9000, scoped, tag = 'internal scratch']
  %s0 = inlined_call_operand.vmem [shape: f32[128,128], index: 0, kind: input, shape index: {}]
  %s1 = inlined_call_operand.vmem [shape: bf16[128,16], index: 1, kind: input, shape index: {}]
  %s2 = inlined_call_operand.vmem [shape: f32[128,16], index: 2, kind: output, shape index: {0}]
  %s3 = inlined_call_operand.vmem [shape: f32[1,16], index: 3, kind: output, shape index: {1}]
  %s4 = inlined_call_operand.vmem [shape: f32[1,16], index: 4, kind: output, shape index: {2}]
  %5 = xla_tuple %s2, %s3, %s4
  %s6 = sld [smem:[#allocation0]]
  $region34: #{forward.15} parent=0
    _
  %s8 = ssub.s32 1, %s6
  %s9 = scalar_select 0, %s8, %s6
  // Predicated region
  $region2: #{forward.15} parent=0 // pred_check
    _
  $region3: #{forward.15} parent=0 // pred_check_branch
    %11 = sbr.rel (0) target = $region5
  $region4: #{forward.15} parent=0 // pred_region
    _
  $region5: #{forward.15} parent=0 // pred_fallthru
    _
  // Predicated region
  $region6: #{forward.15} parent=0 // pred_check
    _
  $region7: #{forward.15} parent=0 // pred_check_branch
    %13 = sbr.rel (0) target = $region9
  $region8: #{forward.15} parent=0 // pred_region
    _
  $region9: #{forward.15} parent=0 // pred_fallthru
    _
  %v14 = vld [vmem:[%s0] sm:$0xff]
  %v15 = vld [vmem:[%s0 + $0x8] sm:$0xff]
  %v16 = vld [vmem:[%s0 + $0x10] sm:$0xff]
  %v17 = vld [vmem:[%s0 + $0x18] sm:$0xff]
  %v18 = vld [vmem:[%s0 + $0x20] sm:$0xff]
  %v19 = vld [vmem:[%s0 + $0x28] sm:$0xff]
  %v20 = vld [vmem:[%s0 + $0x30] sm:$0xff]
  %v21 = vld [vmem:[%s0 + $0x38] sm:$0xff]
  %v22 = vld [vmem:[%s0 + $0x40] sm:$0xff]
  %v23 = vld [vmem:[%s0 + $0x48] sm:$0xff]
  %v24 = vld [vmem:[%s0 + $0x50] sm:$0xff]
  %v25 = vld [vmem:[%s0 + $0x58] sm:$0xff]
  %v26 = vld [vmem:[%s0 + $0x60] sm:$0xff]
  %v27 = vld [vmem:[%s0 + $0x68] sm:$0xff]
  %v28 = vld [vmem:[%s0 + $0x70] sm:$0xff]
  %v29 = vld [vmem:[%s0 + $0x78] sm:$0xff]
  %vm30 = vcmp.ge.f32.partialorder %v14, 0.0
  %vm31 = vcmp.ge.f32.partialorder %v15, 0.0
  %vm32 = vcmp.ge.f32.partialorder %v16, 0.0
  %vm33 = vcmp.ge.f32.partialorder %v17, 0.0
  %vm34 = vcmp.ge.f32.partialorder %v18, 0.0
  %vm35 = vcmp.ge.f32.partialorder %v19, 0.0
  %vm36 = vcmp.ge.f32.partialorder %v20, 0.0
  %vm37 = vcmp.ge.f32.partialorder %v21, 0.0
  %vm38 = vcmp.ge.f32.partialorder %v22, 0.0
  %vm39 = vcmp.ge.f32.partialorder %v23, 0.0
  %vm40 = vcmp.ge.f32.partialorder %v24, 0.0
  %vm41 = vcmp.ge.f32.partialorder %v25, 0.0
  %vm42 = vcmp.ge.f32.partialorder %v26, 0.0
  %vm43 = vcmp.ge.f32.partialorder %v27, 0.0
  %vm44 = vcmp.ge.f32.partialorder %v28, 0.0
  %vm45 = vcmp.ge.f32.partialorder %v29, 0.0
  %v46 = vmul.f32 %v14, 0.2
  %v47 = vmul.f32 %v15, 0.2
  %v48 = vmul.f32 %v16, 0.2
  %v49 = vmul.f32 %v17, 0.2
  %v50 = vmul.f32 %v18, 0.2
  %v51 = vmul.f32 %v19, 0.2
  %v52 = vmul.f32 %v20, 0.2
  %v53 = vmul.f32 %v21, 0.2
  %v54 = vmul.f32 %v22, 0.2
  %v55 = vmul.f32 %v23, 0.2
  %v56 = vmul.f32 %v24, 0.2
  %v57 = vmul.f32 %v25, 0.2
  %v58 = vmul.f32 %v26, 0.2
  %v59 = vmul.f32 %v27, 0.2
  %v60 = vmul.f32 %v28, 0.2
  %v61 = vmul.f32 %v29, 0.2
  %v62 = vsel %vm30, %v14, %v46
  %v63 = vsel %vm31, %v15, %v47
  %v64 = vsel %vm32, %v16, %v48
  %v65 = vsel %vm33, %v17, %v49
  %v66 = vsel %vm34, %v18, %v50
  %v67 = vsel %vm35, %v19, %v51
  %v68 = vsel %vm36, %v20, %v52
  %v69 = vsel %vm37, %v21, %v53
  %v70 = vsel %vm38, %v22, %v54
  %v71 = vsel %vm39, %v23, %v55
  %v72 = vsel %vm40, %v24, %v56
  %v73 = vsel %vm41, %v25, %v57
  %v74 = vsel %vm42, %v26, %v58
  %v75 = vsel %vm43, %v27, %v59
  %v76 = vsel %vm44, %v28, %v60
  %v77 = vsel %vm45, %v29, %v61
  %v78 = vpack.c.bf16 %v63, %v62
  %v79 = vpack.c.bf16 %v65, %v64
  %v80 = vpack.c.bf16 %v67, %v66
  %v81 = vpack.c.bf16 %v69, %v68
  %v82 = vpack.c.bf16 %v71, %v70
  %v83 = vpack.c.bf16 %v73, %v72
  %v84 = vpack.c.bf16 %v75, %v74
  %v85 = vpack.c.bf16 %v77, %v76
  %v86 = vld [vmem:[%s1] sm:$0xf]
  %v87 = vld [vmem:[%s1 + $0x4] sm:$0xf]
  %v88 = vld [vmem:[%s1 + $0x8] sm:$0xf]
  %v89 = vld [vmem:[%s1 + $0xc] sm:$0xf]
  %v90 = vld [vmem:[%s1 + $0x10] sm:$0xf]
  %v91 = vld [vmem:[%s1 + $0x14] sm:$0xf]
  %v92 = vld [vmem:[%s1 + $0x18] sm:$0xf]
  %v93 = vld [vmem:[%s1 + $0x1c] sm:$0xf]
  %v94 = vld [vmem:[%s1 + $0x20] sm:$0xf]
  %v95 = vld [vmem:[%s1 + $0x24] sm:$0xf]
  %v96 = vld [vmem:[%s1 + $0x28] sm:$0xf]
  %v97 = vld [vmem:[%s1 + $0x2c] sm:$0xf]
  %v98 = vld [vmem:[%s1 + $0x30] sm:$0xf]
  %v99 = vld [vmem:[%s1 + $0x34] sm:$0xf]
  %v100 = vld [vmem:[%s1 + $0x38] sm:$0xf]
  %v101 = vld [vmem:[%s1 + $0x3c] sm:$0xf]
  %v118 = vunpack.c.l.b16 %v86
  %v119 = vunpack.c.l.b16 %v87
  %v120 = vunpack.c.l.b16 %v88
  %v121 = vunpack.c.l.b16 %v89
  %v122 = vunpack.c.l.b16 %v90
  %v123 = vunpack.c.l.b16 %v91
  %v124 = vunpack.c.l.b16 %v92
  %v125 = vunpack.c.l.b16 %v93
  %v126 = vunpack.c.l.b16 %v94
  %v127 = vunpack.c.l.b16 %v95
  %v128 = vunpack.c.l.b16 %v96
  %v129 = vunpack.c.l.b16 %v97
  %v130 = vunpack.c.l.b16 %v98
  %v131 = vunpack.c.l.b16 %v99
  %v132 = vunpack.c.l.b16 %v100
  %v133 = vunpack.c.l.b16 %v101
  %v134 = vpack.c.b16 %v119, %v118
  %v135 = vpack.c.b16 %v121, %v120
  %v136 = vpack.c.b16 %v123, %v122
  %v137 = vpack.c.b16 %v125, %v124
  %v138 = vpack.c.b16 %v127, %v126
  %v139 = vpack.c.b16 %v129, %v128
  %v140 = vpack.c.b16 %v131, %v130
  %v141 = vpack.c.b16 %v133, %v132
  %150 = vmatpush.bf16.msra.mxu0 %v141
  %151 = vmatpush.bf16.msra.mxu0 %v140
  %152 = vmatpush.bf16.msra.mxu0 %v139
  %153 = vmatpush.bf16.msra.mxu0 %v138
  %154 = vmatpush.bf16.msra.mxu0 %v137
  %155 = vmatpush.bf16.msra.mxu0 %v136
  %156 = vmatpush.bf16.msra.mxu0 %v135
  %157 = vmatpush.bf16.msra.mxu0 %v134
  %158 = vmatmul.bf16.gmra.mxu0 %v78
  %v159 = vpop.f32.mrf.mxu0
  %v160 = vadd.f32 0.0, %v159
  %v161 = vpop.f32.mrf.mxu0
  %v162 = vadd.f32 0.0, %v161
  %163 = vmatmul.bf16.gmra.mxu0 %v79
  %v164 = vpop.f32.mrf.mxu0
  %v165 = vadd.f32 0.0, %v164
  %v166 = vpop.f32.mrf.mxu0
  %v167 = vadd.f32 0.0, %v166
  %168 = vmatmul.bf16.gmra.mxu0 %v80
  %v169 = vpop.f32.mrf.mxu0
  %v170 = vadd.f32 0.0, %v169
  %v171 = vpop.f32.mrf.mxu0
  %v172 = vadd.f32 0.0, %v171
  %173 = vmatmul.bf16.gmra.mxu0 %v81
  %v174 = vpop.f32.mrf.mxu0
  %v175 = vadd.f32 0.0, %v174
  %v176 = vpop.f32.mrf.mxu0
  %v177 = vadd.f32 0.0, %v176
  %178 = vmatmul.bf16.gmra.mxu0 %v82
  %v179 = vpop.f32.mrf.mxu0
  %v180 = vadd.f32 0.0, %v179
  %v181 = vpop.f32.mrf.mxu0
  %v182 = vadd.f32 0.0, %v181
  %183 = vmatmul.bf16.gmra.mxu0 %v83
  %v184 = vpop.f32.mrf.mxu0
  %v185 = vadd.f32 0.0, %v184
  %v186 = vpop.f32.mrf.mxu0
  %v187 = vadd.f32 0.0, %v186
  %188 = vmatmul.bf16.gmra.mxu0 %v84
  %v189 = vpop.f32.mrf.mxu0
  %v190 = vadd.f32 0.0, %v189
  %v191 = vpop.f32.mrf.mxu0
  %v192 = vadd.f32 0.0, %v191
  %193 = vmatmul.bf16.gmra.mxu0 %v85
  %v194 = vpop.f32.mrf.mxu0
  %v195 = vadd.f32 0.0, %v194
  %v196 = vpop.f32.mrf.mxu0
  %v197 = vadd.f32 0.0, %v196
  %198 = vdwg.mxu0
  %vm199 = vcmask 130048
  %v200 = vsel %vm199, %v160, 0.0
  %v201 = vsel %vm199, %v162, 0.0
  %v202 = vadd.f32 %v200, %v201
  %v203 = vsel %vm199, %v165, 0.0
  %v204 = vadd.f32 %v202, %v203
  %v205 = vsel %vm199, %v167, 0.0
  %v206 = vadd.f32 %v204, %v205
  %v207 = vsel %vm199, %v170, 0.0
  %v208 = vadd.f32 %v206, %v207
  %v209 = vsel %vm199, %v172, 0.0
  %v210 = vadd.f32 %v208, %v209
  %v211 = vsel %vm199, %v175, 0.0
  %v212 = vadd.f32 %v210, %v211
  %v213 = vsel %vm199, %v177, 0.0
  %v214 = vadd.f32 %v212, %v213
  %v215 = vsel %vm199, %v180, 0.0
  %v216 = vadd.f32 %v214, %v215
  %v217 = vsel %vm199, %v182, 0.0
  %v218 = vadd.f32 %v216, %v217
  %v219 = vsel %vm199, %v185, 0.0
  %v220 = vadd.f32 %v218, %v219
  %v221 = vsel %vm199, %v187, 0.0
  %v222 = vadd.f32 %v220, %v221
  %v223 = vsel %vm199, %v190, 0.0
  %v224 = vadd.f32 %v222, %v223
  %v225 = vsel %vm199, %v192, 0.0
  %v226 = vadd.f32 %v224, %v225
  %v227 = vsel %vm199, %v195, 0.0
  %v228 = vadd.f32 %v226, %v227
  %v229 = vsel %vm199, %v197, 0.0
  %v230 = vadd.f32 %v228, %v229
  %v231 = vrot.slane %v230, 4
  %v232 = vadd.f32 %v230, %v231
  %v233 = vrot.slane %v232, 2
  %v234 = vadd.f32 %v232, %v233
  %v235 = vrot.slane %v234, 1
  %v236 = vadd.f32 %v234, %v235
  %vm237 = vcmask 122880
  %238 = vst.msk [vmem:[%s3] sm:$0x1] %vm237, %v236
  %v239 = vmul.f32 %v160, %v160
  %v240 = vmul.f32 %v162, %v162
  %v241 = vmul.f32 %v165, %v165
  %v242 = vmul.f32 %v167, %v167
  %v243 = vmul.f32 %v170, %v170
  %v244 = vmul.f32 %v172, %v172
  %v245 = vmul.f32 %v175, %v175
  %v246 = vmul.f32 %v177, %v177
  %v247 = vmul.f32 %v180, %v180
  %v248 = vmul.f32 %v182, %v182
  %v249 = vmul.f32 %v185, %v185
  %v250 = vmul.f32 %v187, %v187
  %v251 = vmul.f32 %v190, %v190
  %v252 = vmul.f32 %v192, %v192
  %v253 = vmul.f32 %v195, %v195
  %v254 = vmul.f32 %v197, %v197
  %v255 = vsel %vm199, %v239, 0.0
  %v256 = vsel %vm199, %v240, 0.0
  %v257 = vadd.f32 %v255, %v256
  %v258 = vsel %vm199, %v241, 0.0
  %v259 = vadd.f32 %v257, %v258
  %v260 = vsel %vm199, %v242, 0.0
  %v261 = vadd.f32 %v259, %v260
  %v262 = vsel %vm199, %v243, 0.0
  %v263 = vadd.f32 %v261, %v262
  %v264 = vsel %vm199, %v244, 0.0
  %v265 = vadd.f32 %v263, %v264
  %v266 = vsel %vm199, %v245, 0.0
  %v267 = vadd.f32 %v265, %v266
  %v268 = vsel %vm199, %v246, 0.0
  %v269 = vadd.f32 %v267, %v268
  %v270 = vsel %vm199, %v247, 0.0
  %v271 = vadd.f32 %v269, %v270
  %v272 = vsel %vm199, %v248, 0.0
  %v273 = vadd.f32 %v271, %v272
  %v274 = vsel %vm199, %v249, 0.0
  %v275 = vadd.f32 %v273, %v274
  %v276 = vsel %vm199, %v250, 0.0
  %v277 = vadd.f32 %v275, %v276
  %v278 = vsel %vm199, %v251, 0.0
  %v279 = vadd.f32 %v277, %v278
  %v280 = vsel %vm199, %v252, 0.0
  %v281 = vadd.f32 %v279, %v280
  %v282 = vsel %vm199, %v253, 0.0
  %v283 = vadd.f32 %v281, %v282
  %v284 = vsel %vm199, %v254, 0.0
  %v285 = vadd.f32 %v283, %v284
  %v286 = vrot.slane %v285, 4
  %v287 = vadd.f32 %v285, %v286
  %v288 = vrot.slane %v287, 2
  %v289 = vadd.f32 %v287, %v288
  %v290 = vrot.slane %v289, 1
  %v291 = vadd.f32 %v289, %v290
  %292 = vst.msk [vmem:[%s4] sm:$0x1] %vm237, %v291
  %293 = vst.msk [vmem:[%s2] sm:$0xff] %vm199, %v160
  %294 = vst.msk [vmem:[%s2 + $0x8] sm:$0xff] %vm199, %v162
  %295 = vst.msk [vmem:[%s2 + $0x10] sm:$0xff] %vm199, %v165
  %296 = vst.msk [vmem:[%s2 + $0x18] sm:$0xff] %vm199, %v167
  %297 = vst.msk [vmem:[%s2 + $0x20] sm:$0xff] %vm199, %v170
  %298 = vst.msk [vmem:[%s2 + $0x28] sm:$0xff] %vm199, %v172
  %299 = vst.msk [vmem:[%s2 + $0x30] sm:$0xff] %vm199, %v175
  %300 = vst.msk [vmem:[%s2 + $0x38] sm:$0xff] %vm199, %v177
  %301 = vst.msk [vmem:[%s2 + $0x40] sm:$0xff] %vm199, %v180
  %302 = vst.msk [vmem:[%s2 + $0x48] sm:$0xff] %vm199, %v182
  %303 = vst.msk [vmem:[%s2 + $0x50] sm:$0xff] %vm199, %v185
  %304 = vst.msk [vmem:[%s2 + $0x58] sm:$0xff] %vm199, %v187
  %305 = vst.msk [vmem:[%s2 + $0x60] sm:$0xff] %vm199, %v190
  %306 = vst.msk [vmem:[%s2 + $0x68] sm:$0xff] %vm199, %v192
  %307 = vst.msk [vmem:[%s2 + $0x70] sm:$0xff] %vm199, %v195
  %308 = vst.msk [vmem:[%s2 + $0x78] sm:$0xff] %vm199, %v197
  // Predicated region
  $region10: #{forward.15} parent=0 // pred_check
    _
  $region11: #{forward.15} parent=0 // pred_check_branch
    %310 = sbr.rel (0) target = $region13
  $region12: #{forward.15} parent=0 // pred_region
    _
  $region13: #{forward.15} parent=0 // pred_fallthru
    _
  // Predicated region
  $region14: #{forward.15} parent=0 // pred_check
    _
  $region15: #{forward.15} parent=0 // pred_check_branch
    %312 = sbr.rel (0) target = $region17
  $region16: #{forward.15} parent=0 // pred_region
    _
  $region17: #{forward.15} parent=0 // pred_fallthru
    _
  // Predicated region
  $region18: #{forward.15} parent=0 // pred_check
    _
  $region19: #{forward.15} parent=0 // pred_check_branch
    %314 = sbr.rel (0) target = $region21
  $region20: #{forward.15} parent=0 // pred_region
    _
  $region21: #{forward.15} parent=0 // pred_fallthru
    _
  // Predicated region
  $region22: #{forward.15} parent=0 // pred_check
    _
  $region23: #{forward.15} parent=0 // pred_check_branch
    %316 = sbr.rel (0) target = $region25
  $region24: #{forward.15} parent=0 // pred_region
    _
  $region25: #{forward.15} parent=0 // pred_fallthru
    _
  // Predicated region
  $region26: #{forward.15} parent=0 // pred_check
    _
  $region27: #{forward.15} parent=0 // pred_check_branch
    %318 = sbr.rel (0) target = $region29
  $region28: #{forward.15} parent=0 // pred_region
    _
  $region29: #{forward.15} parent=0 // pred_fallthru
    _
  // Predicated region
  $region30: #{forward.15} parent=0 // pred_check
    _
  $region31: #{forward.15} parent=0 // pred_check_branch
    %320 = sbr.rel (0) target = $region33
  $region32: #{forward.15} parent=0 // pred_region
    _
  $region33: #{forward.15} parent=0 // pred_fallthru
    _

// kernel: tile.78
$region0: #{tile.78}
  #allocation0 [shape = 's32[1]{0}', space=sflag, size = 0x4, scoped, tag = 'scoped memory for tile.78']
  %s0 = inlined_call_operand.vmem [shape: f32[16], index: 0, kind: input, shape index: {}]
  %s1 = inlined_call_operand.vmem [shape: f32[16,16], index: 1, kind: output, shape index: {}]
  // Predicated region
  $region2: #{tile.78} parent=0 // pred_check
    _
  $region3: #{tile.78} parent=0 // pred_check_branch
    %3 = sbr.rel (0) target = $region5
  $region4: #{tile.78} parent=0 // pred_region
    _
  $region5: #{tile.78} parent=0 // pred_fallthru
    _
  %v4 = vld [vmem:[%s0] ss:$0 sm:$0xff]
  %5 = vst [vmem:[%s1] sm:$0xff] %v4
  %s6 = scalar_lea.vmem %s1, 8
  %7 = vst [vmem:[%s6] sm:$0xff] %v4

// kernel: tile.79
$region0: #{tile.79}
  %s0 = inlined_call_operand.vmem [shape: f32[16,16], index: 0, kind: input, shape index: {}]
  %s1 = inlined_call_operand.vmem [shape: f32[1,256], index: 1, kind: output, shape index: {}]
  $region1: #{tile.79} parent=0
    #allocation0 [shape = 'u8[8192]{0}', space=vmem, size = 0x2000, scoped, tag = 'scoped mem for output reshape']
    %s2 = smov 3
    %v3 = vld [vmem:[%s0] ss:$8 sm:%s2]
    %vm4 = vcmask 130048
    %5 = vst.msk [vmem:[#allocation0] ss:$8 sm:$0x3] %vm4, %v3
    %s6 = scalar_lea.vmem %s0, 7
    %s7 = smov 3
    %v8 = vld [vmem:[%s6] ss:$8 sm:%s7]
    %9 = vrot.lane.b32.xlu0 %v8, 112
    %v10 = vpop.permute.xlu0 %9
    %vm11 = vcmask 1048448
    %12 = vst.msk [vmem:[#allocation0] ss:$8 sm:$0x3] %vm11, %v10
    %s13 = scalar_lea.vmem %s0, 6
    %s14 = smov 3
    %v15 = vld [vmem:[%s13] ss:$8 sm:%s14]
    %16 = vrot.lane.b32.xlu0 %v15, 96
    %v17 = vpop.permute.xlu0 %16
    %vm18 = vcmask 917248
    %19 = vst.msk [vmem:[#allocation0] ss:$8 sm:$0x3] %vm18, %v17
    %s20 = scalar_lea.vmem %s0, 5
    %s21 = smov 3
    %v22 = vld [vmem:[%s20] ss:$8 sm:%s21]
    %23 = vrot.lane.b32.xlu0 %v22, 80
    %v24 = vpop.permute.xlu0 %23
    %vm25 = vcmask 786048
    %26 = vst.msk [vmem:[#allocation0] ss:$8 sm:$0x3] %vm25, %v24
    %s27 = scalar_lea.vmem %s0, 4
    %s28 = smov 3
    %v29 = vld [vmem:[%s27] ss:$8 sm:%s28]
    %30 = vrot.lane.b32.xlu0 %v29, 64
    %v31 = vpop.permute.xlu0 %30
    %vm32 = vcmask 654848
    %33 = vst.msk [vmem:[#allocation0] ss:$8 sm:$0x3] %vm32, %v31
    %s34 = scalar_lea.vmem %s0, 3
    %s35 = smov 3
    %v36 = vld [vmem:[%s34] ss:$8 sm:%s35]
    %37 = vrot.lane.b32.xlu0 %v36, 48
    %v38 = vpop.permute.xlu0 %37
    %vm39 = vcmask 523648
    %40 = vst.msk [vmem:[#allocation0] ss:$8 sm:$0x3] %vm39, %v38
    %s41 = scalar_lea.vmem %s0, 2
    %s42 = smov 3
    %v43 = vld [vmem:[%s41] ss:$8 sm:%s42]
    %44 = vrot.lane.b32.xlu0 %v43, 32
    %v45 = vpop.permute.xlu0 %44
    %vm46 = vcmask 392448
    %47 = vst.msk [vmem:[#allocation0] ss:$8 sm:$0x3] %vm46, %v45
    %s48 = scalar_lea.vmem %s0, 1
    %s49 = smov 3
    %v50 = vld [vmem:[%s48] ss:$8 sm:%s49]
    %51 = vrot.lane.b32.xlu0 %v50, 16
    %v52 = vpop.permute.xlu0 %51
    %vm53 = vcmask 261248
    %54 = vst.msk [vmem:[#allocation0] ss:$8 sm:$0x3] %vm53, %v52
    %s56 = ssub.s32 2, 1
    %v57 = vld [vmem:[#allocation0] sm:%s56]
    %s59 = ssub.s32 2, 1
    %60 = vst [vmem:[%s1] sm:%s59] %v57
    %s61 = scalar_lea.vmem [#allocation0], 8
    %v62 = vld [vmem:[%s61] sm:%s56]
    %s64 = ssub.s32 2, 1
    %s65 = scalar_lea.vmem %s1, 1
    %66 = vst [vmem:[%s65] sm:%s64] %v62

// kernel: forward.16
$region0: #{forward.16}
  #allocation0 [shape = 'u32[]', space=smem, size = 0x4, offset = 0x4, fixed_abs, tag = 'smem constant byte address 0x4 - core index']
  #allocation1 [shape = 'u32[72,128]{1,0:T(1,128)}', space=vmem, size = 0x9000, scoped, tag = 'internal scratch']
  %s0 = inlined_call_operand.vmem [shape: f32[32,256], index: 0, kind: input, shape index: {}]
  %s1 = inlined_call_operand.vmem [shape: bf16[256,32], index: 1, kind: input, shape index: {}]
  %s2 = inlined_call_operand.vmem [shape: f32[1,256], index: 2, kind: input, shape index: {}]
  %s3 = inlined_call_operand.vmem [shape: f32[1,256], index: 3, kind: input, shape index: {}]
  %s4 = inlined_call_operand.vmem [shape: f32[32,32], index: 4, kind: output, shape index: {0}]
  %s5 = inlined_call_operand.vmem [shape: f32[1,32], index: 5, kind: output, shape index: {1}]
  %s6 = inlined_call_operand.vmem [shape: f32[1,32], index: 6, kind: output, shape index: {2}]
  %7 = xla_tuple %s4, %s5, %s6
  %s8 = sld [smem:[#allocation0]]
  $region42: #{forward.16} parent=0
    _
  %s10 = ssub.s32 1, %s8
  %s11 = scalar_select 0, %s10, %s8
  // Predicated region
  $region2: #{forward.16} parent=0 // pred_check
    _
  $region3: #{forward.16} parent=0 // pred_check_branch
    %13 = sbr.rel (0) target = $region5
  $region4: #{forward.16} parent=0 // pred_region
    _
  $region5: #{forward.16} parent=0 // pred_fallthru
    _
  // Predicated region
  $region6: #{forward.16} parent=0 // pred_check
    _
  $region7: #{forward.16} parent=0 // pred_check_branch
    %15 = sbr.rel (0) target = $region9
  $region8: #{forward.16} parent=0 // pred_region
    _
  $region9: #{forward.16} parent=0 // pred_fallthru
    _
  // Predicated region
  $region10: #{forward.16} parent=0 // pred_check
    _
  $region11: #{forward.16} parent=0 // pred_check_branch
    %17 = sbr.rel (0) target = $region13
  $region12: #{forward.16} parent=0 // pred_region
    _
  $region13: #{forward.16} parent=0 // pred_fallthru
    _
  // Predicated region
  $region14: #{forward.16} parent=0 // pred_check
    _
  $region15: #{forward.16} parent=0 // pred_check_branch
    %19 = sbr.rel (0) target = $region17
  $region16: #{forward.16} parent=0 // pred_region
    _
  $region17: #{forward.16} parent=0 // pred_fallthru
    _
  %v20 = vld [vmem:[%s0] sm:$0xff]
  %v21 = vld [vmem:[%s0 + $0x8] sm:$0xff]
  %v22 = vld [vmem:[%s0 + $0x10] sm:$0xff]
  %v23 = vld [vmem:[%s0 + $0x18] sm:$0xff]
  %v24 = vld [vmem:[%s0 + $0x20] sm:$0xff]
  %v25 = vld [vmem:[%s0 + $0x28] sm:$0xff]
  %v26 = vld [vmem:[%s0 + $0x30] sm:$0xff]
  %v27 = vld [vmem:[%s0 + $0x38] sm:$0xff]
  %v28 = vld [vmem:[%s2] sm:$0x3]
  %v30 = vperm.slane %v28, 0
  %v31 = vperm.slane %v28, 1
  %v34 = vmul.f32 %v20, %v30
  %v35 = vmul.f32 %v21, %v31
  %v36 = vmul.f32 %v22, %v30
  %v37 = vmul.f32 %v23, %v31
  %v38 = vmul.f32 %v24, %v30
  %v39 = vmul.f32 %v25, %v31
  %v40 = vmul.f32 %v26, %v30
  %v41 = vmul.f32 %v27, %v31
  %v42 = vld [vmem:[%s3] sm:$0x3]
  %v44 = vperm.slane %v42, 0
  %v45 = vperm.slane %v42, 1
  %v48 = vadd.f32 %v34, %v44
  %v49 = vadd.f32 %v35, %v45
  %v50 = vadd.f32 %v36, %v44
  %v51 = vadd.f32 %v37, %v45
  %v52 = vadd.f32 %v38, %v44
  %v53 = vadd.f32 %v39, %v45
  %v54 = vadd.f32 %v40, %v44
  %v55 = vadd.f32 %v41, %v45
  %vm56 = vcmp.ge.f32.partialorder %v48, 0.0
  %vm57 = vcmp.ge.f32.partialorder %v49, 0.0
  %vm58 = vcmp.ge.f32.partialorder %v50, 0.0
  %vm59 = vcmp.ge.f32.partialorder %v51, 0.0
  %vm60 = vcmp.ge.f32.partialorder %v52, 0.0
  %vm61 = vcmp.ge.f32.partialorder %v53, 0.0
  %vm62 = vcmp.ge.f32.partialorder %v54, 0.0
  %vm63 = vcmp.ge.f32.partialorder %v55, 0.0
  %v64 = vmul.f32 %v48, 0.2
  %v65 = vmul.f32 %v49, 0.2
  %v66 = vmul.f32 %v50, 0.2
  %v67 = vmul.f32 %v51, 0.2
  %v68 = vmul.f32 %v52, 0.2
  %v69 = vmul.f32 %v53, 0.2
  %v70 = vmul.f32 %v54, 0.2
  %v71 = vmul.f32 %v55, 0.2
  %v72 = vsel %vm56, %v48, %v64
  %v73 = vsel %vm57, %v49, %v65
  %v74 = vsel %vm58, %v50, %v66
  %v75 = vsel %vm59, %v51, %v67
  %v76 = vsel %vm60, %v52, %v68
  %v77 = vsel %vm61, %v53, %v69
  %v78 = vsel %vm62, %v54, %v70
  %v79 = vsel %vm63, %v55, %v71
  %v80 = vpack.c.bf16 %v74, %v72
  %v81 = vpack.c.bf16 %v75, %v73
  %v82 = vpack.c.bf16 %v78, %v76
  %v83 = vpack.c.bf16 %v79, %v77
  %v84 = vld [vmem:[%s1] sm:$0xf]
  %v85 = vld [vmem:[%s1 + $0x4] sm:$0xf]
  %v86 = vld [vmem:[%s1 + $0x8] sm:$0xf]
  %v87 = vld [vmem:[%s1 + $0xc] sm:$0xf]
  %v88 = vld [vmem:[%s1 + $0x10] sm:$0xf]
  %v89 = vld [vmem:[%s1 + $0x14] sm:$0xf]
  %v90 = vld [vmem:[%s1 + $0x18] sm:$0xf]
  %v91 = vld [vmem:[%s1 + $0x1c] sm:$0xf]
  %v92 = vld [vmem:[%s1 + $0x20] sm:$0xf]
  %v93 = vld [vmem:[%s1 + $0x24] sm:$0xf]
  %v94 = vld [vmem:[%s1 + $0x28] sm:$0xf]
  %v95 = vld [vmem:[%s1 + $0x2c] sm:$0xf]
  %v96 = vld [vmem:[%s1 + $0x30] sm:$0xf]
  %v97 = vld [vmem:[%s1 + $0x34] sm:$0xf]
  %v98 = vld [vmem:[%s1 + $0x38] sm:$0xf]
  %v99 = vld [vmem:[%s1 + $0x3c] sm:$0xf]
  %v100 = vld [vmem:[%s1 + $0x40] sm:$0xf]
  %v101 = vld [vmem:[%s1 + $0x44] sm:$0xf]
  %v102 = vld [vmem:[%s1 + $0x48] sm:$0xf]
  %v103 = vld [vmem:[%s1 + $0x4c] sm:$0xf]
  %v104 = vld [vmem:[%s1 + $0x50] sm:$0xf]
  %v105 = vld [vmem:[%s1 + $0x54] sm:$0xf]
  %v106 = vld [vmem:[%s1 + $0x58] sm:$0xf]
  %v107 = vld [vmem:[%s1 + $0x5c] sm:$0xf]
  %v108 = vld [vmem:[%s1 + $0x60] sm:$0xf]
  %v109 = vld [vmem:[%s1 + $0x64] sm:$0xf]
  %v110 = vld [vmem:[%s1 + $0x68] sm:$0xf]
  %v111 = vld [vmem:[%s1 + $0x6c] sm:$0xf]
  %v112 = vld [vmem:[%s1 + $0x70] sm:$0xf]
  %v113 = vld [vmem:[%s1 + $0x74] sm:$0xf]
  %v114 = vld [vmem:[%s1 + $0x78] sm:$0xf]
  %v115 = vld [vmem:[%s1 + $0x7c] sm:$0xf]
  %v148 = vunpack.c.l.b16 %v84
  %v149 = vunpack.c.l.b16 %v85
  %v150 = vunpack.c.l.b16 %v86
  %v151 = vunpack.c.l.b16 %v87
  %v152 = vunpack.c.l.b16 %v88
  %v153 = vunpack.c.l.b16 %v89
  %v154 = vunpack.c.l.b16 %v90
  %v155 = vunpack.c.l.b16 %v91
  %v156 = vunpack.c.l.b16 %v92
  %v157 = vunpack.c.l.b16 %v93
  %v158 = vunpack.c.l.b16 %v94
  %v159 = vunpack.c.l.b16 %v95
  %v160 = vunpack.c.l.b16 %v96
  %v161 = vunpack.c.l.b16 %v97
  %v162 = vunpack.c.l.b16 %v98
  %v163 = vunpack.c.l.b16 %v99
  %v164 = vunpack.c.l.b16 %v100
  %v165 = vunpack.c.l.b16 %v101
  %v166 = vunpack.c.l.b16 %v102
  %v167 = vunpack.c.l.b16 %v103
  %v168 = vunpack.c.l.b16 %v104
  %v169 = vunpack.c.l.b16 %v105
  %v170 = vunpack.c.l.b16 %v106
  %v171 = vunpack.c.l.b16 %v107
  %v172 = vunpack.c.l.b16 %v108
  %v173 = vunpack.c.l.b16 %v109
  %v174 = vunpack.c.l.b16 %v110
  %v175 = vunpack.c.l.b16 %v111
  %v176 = vunpack.c.l.b16 %v112
  %v177 = vunpack.c.l.b16 %v113
  %v178 = vunpack.c.l.b16 %v114
  %v179 = vunpack.c.l.b16 %v115
  %v180 = vpack.c.b16 %v149, %v148
  %v181 = vpack.c.b16 %v151, %v150
  %v182 = vpack.c.b16 %v153, %v152
  %v183 = vpack.c.b16 %v155, %v154
  %v184 = vpack.c.b16 %v157, %v156
  %v185 = vpack.c.b16 %v159, %v158
  %v186 = vpack.c.b16 %v161, %v160
  %v187 = vpack.c.b16 %v163, %v162
  %v188 = vpack.c.b16 %v165, %v164
  %v189 = vpack.c.b16 %v167, %v166
  %v190 = vpack.c.b16 %v169, %v168
  %v191 = vpack.c.b16 %v171, %v170
  %v192 = vpack.c.b16 %v173, %v172
  %v193 = vpack.c.b16 %v175, %v174
  %v194 = vpack.c.b16 %v177, %v176
  %v195 = vpack.c.b16 %v179, %v178
  %212 = vmatpush.bf16.msra.mxu0 %v187
  %213 = vmatpush.bf16.msra.mxu0 %v186
  %214 = vmatpush.bf16.msra.mxu0 %v185
  %215 = vmatpush.bf16.msra.mxu0 %v184
  %216 = vmatpush.bf16.msra.mxu0 %v183
  %217 = vmatpush.bf16.msra.mxu0 %v182
  %218 = vmatpush.bf16.msra.mxu0 %v181
  %219 = vmatpush.bf16.msra.mxu0 %v180
  %220 = vmatmul.bf16.gmra.mxu0 %v80
  %v221 = vpop.f32.mrf.mxu0
  %v222 = vadd.f32 0.0, %v221
  %v223 = vpop.f32.mrf.mxu0
  %v224 = vadd.f32 0.0, %v223
  %225 = vmatmul.bf16.gmra.mxu0 %v82
  %v226 = vpop.f32.mrf.mxu0
  %v227 = vadd.f32 0.0, %v226
  %v228 = vpop.f32.mrf.mxu0
  %v229 = vadd.f32 0.0, %v228
  %230 = vdwg.mxu0
  %231 = vmatpush.bf16.msra.mxu0 %v195
  %232 = vmatpush.bf16.msra.mxu0 %v194
  %233 = vmatpush.bf16.msra.mxu0 %v193
  %234 = vmatpush.bf16.msra.mxu0 %v192
  %235 = vmatpush.bf16.msra.mxu0 %v191
  %236 = vmatpush.bf16.msra.mxu0 %v190
  %237 = vmatpush.bf16.msra.mxu0 %v189
  %238 = vmatpush.bf16.msra.mxu0 %v188
  %239 = vmatmul.bf16.gmra.mxu0 %v81
  %v240 = vpop.f32.mrf.mxu0
  %v241 = vadd.f32 %v222, %v240
  %v242 = vpop.f32.mrf.mxu0
  %v243 = vadd.f32 %v224, %v242
  %244 = vmatmul.bf16.gmra.mxu0 %v83
  %v245 = vpop.f32.mrf.mxu0
  %v246 = vadd.f32 %v227, %v245
  %v247 = vpop.f32.mrf.mxu0
  %v248 = vadd.f32 %v229, %v247
  %249 = vdwg.mxu0
  %vm250 = vcmask 261120
  %v251 = vsel %vm250, %v241, 0.0
  %v252 = vsel %vm250, %v243, 0.0
  %v253 = vadd.f32 %v251, %v252
  %v254 = vsel %vm250, %v246, 0.0
  %v255 = vadd.f32 %v253, %v254
  %v256 = vsel %vm250, %v248, 0.0
  %v257 = vadd.f32 %v255, %v256
  %v258 = vrot.slane %v257, 4
  %v259 = vadd.f32 %v257, %v258
  %v260 = vrot.slane %v259, 2
  %v261 = vadd.f32 %v259, %v260
  %v262 = vrot.slane %v261, 1
  %v263 = vadd.f32 %v261, %v262
  %vm264 = vcmask 253952
  %265 = vst.msk [vmem:[%s5] sm:$0x1] %vm264, %v263
  %v266 = vmul.f32 %v241, %v241
  %v267 = vmul.f32 %v243, %v243
  %v268 = vmul.f32 %v246, %v246
  %v269 = vmul.f32 %v248, %v248
  %v270 = vsel %vm250, %v266, 0.0
  %v271 = vsel %vm250, %v267, 0.0
  %v272 = vadd.f32 %v270, %v271
  %v273 = vsel %vm250, %v268, 0.0
  %v274 = vadd.f32 %v272, %v273
  %v275 = vsel %vm250, %v269, 0.0
  %v276 = vadd.f32 %v274, %v275
  %v277 = vrot.slane %v276, 4
  %v278 = vadd.f32 %v276, %v277
  %v279 = vrot.slane %v278, 2
  %v280 = vadd.f32 %v278, %v279
  %v281 = vrot.slane %v280, 1
  %v282 = vadd.f32 %v280, %v281
  %283 = vst.msk [vmem:[%s6] sm:$0x1] %vm264, %v282
  %284 = vst.msk [vmem:[%s4] sm:$0xff] %vm250, %v241
  %285 = vst.msk [vmem:[%s4 + $0x8] sm:$0xff] %vm250, %v243
  %286 = vst.msk [vmem:[%s4 + $0x10] sm:$0xff] %vm250, %v246
  %287 = vst.msk [vmem:[%s4 + $0x18] sm:$0xff] %vm250, %v248
  // Predicated region
  $region18: #{forward.16} parent=0 // pred_check
    _
  $region19: #{forward.16} parent=0 // pred_check_branch
    %289 = sbr.rel (0) target = $region21
  $region20: #{forward.16} parent=0 // pred_region
    _
  $region21: #{forward.16} parent=0 // pred_fallthru
    _
  // Predicated region
  $region22: #{forward.16} parent=0 // pred_check
    _
  $region23: #{forward.16} parent=0 // pred_check_branch
    %291 = sbr.rel (0) target = $region25
  $region24: #{forward.16} parent=0 // pred_region
    _
  $region25: #{forward.16} parent=0 // pred_fallthru
    _
  // Predicated region
  $region26: #{forward.16} parent=0 // pred_check
    _
  $region27: #{forward.16} parent=0 // pred_check_branch
    %293 = sbr.rel (0) target = $region29
  $region28: #{forward.16} parent=0 // pred_region
    _
  $region29: #{forward.16} parent=0 // pred_fallthru
    _
  // Predicated region
  $region30: #{forward.16} parent=0 // pred_check
    _
  $region31: #{forward.16} parent=0 // pred_check_branch
    %295 = sbr.rel (0) target = $region33
  $region32: #{forward.16} parent=0 // pred_region
    _
  $region33: #{forward.16} parent=0 // pred_fallthru
    _
  // Predicated region
  $region34: #{forward.16} parent=0 // pred_check
    _
  $region35: #{forward.16} parent=0 // pred_check_branch
    %297 = sbr.rel (0) target = $region37
  $region36: #{forward.16} parent=0 // pred_region
    _
  $region37: #{forward.16} parent=0 // pred_fallthru
    _
  // Predicated region
  $region38: #{forward.16} parent=0 // pred_check
    _
  $region39: #{forward.16} parent=0 // pred_check_branch
    %299 = sbr.rel (0) target = $region41
  $region40: #{forward.16} parent=0 // pred_region
    _
  $region41: #{forward.16} parent=0 // pred_fallthru
    _

// kernel: tile.88
$region0: #{tile.88}
  #allocation0 [shape = 's32[1]{0}', space=sflag, size = 0x4, scoped, tag = 'scoped memory for tile.88']
  %s0 = inlined_call_operand.vmem [shape: f32[32], index: 0, kind: input, shape index: {}]
  %s1 = inlined_call_operand.vmem [shape: f32[16,32], index: 1, kind: output, shape index: {}]
  // Predicated region
  $region2: #{tile.88} parent=0 // pred_check
    _
  $region3: #{tile.88} parent=0 // pred_check_branch
    %3 = sbr.rel (0) target = $region5
  $region4: #{tile.88} parent=0 // pred_region
    _
  $region5: #{tile.88} parent=0 // pred_fallthru
    _
  %v4 = vld [vmem:[%s0] ss:$0 sm:$0xff]
  %5 = vst [vmem:[%s1] sm:$0xff] %v4
  %s6 = scalar_lea.vmem %s1, 8
  %7 = vst [vmem:[%s6] sm:$0xff] %v4

// kernel: tile.89
$region0: #{tile.89}
  %s0 = inlined_call_operand.vmem [shape: f32[16,32], index: 0, kind: input, shape index: {}]
  %s1 = inlined_call_operand.vmem [shape: f32[1,512], index: 1, kind: output, shape index: {}]
  $region1: #{tile.89} parent=0
    #allocation0 [shape = 'u8[16384]{0}', space=vmem, size = 0x4000, scoped, tag = 'scoped mem for output reshape']
    %v2 = vld [vmem:[%s0] ss:$4 sm:$0xf]
    %vm3 = vcmask 261120
    %4 = vst.msk [vmem:[#allocation0] ss:$8 sm:$0xf] %vm3, %v2
    %s5 = scalar_lea.vmem %s0, 3
    %v6 = vld [vmem:[%s5] ss:$4 sm:$0xf]
    %7 = vrot.lane.b32.xlu0 %v6, 96
    %v8 = vpop.permute.xlu0 %7
    %vm9 = vcmask 1048320
    %10 = vst.msk [vmem:[#allocation0] ss:$8 sm:$0xf] %vm9, %v8
    %s11 = scalar_lea.vmem %s0, 2
    %v12 = vld [vmem:[%s11] ss:$4 sm:$0xf]
    %13 = vrot.lane.b32.xlu0 %v12, 64
    %v14 = vpop.permute.xlu0 %13
    %vm15 = vcmask 785920
    %16 = vst.msk [vmem:[#allocation0] ss:$8 sm:$0xf] %vm15, %v14
    %s17 = scalar_lea.vmem %s0, 1
    %v18 = vld [vmem:[%s17] ss:$4 sm:$0xf]
    %19 = vrot.lane.b32.xlu0 %v18, 32
    %v20 = vpop.permute.xlu0 %19
    %vm21 = vcmask 523520
    %22 = vst.msk [vmem:[#allocation0] ss:$8 sm:$0xf] %vm21, %v20
    %s24 = ssub.s32 2, 1
    %v25 = vld [vmem:[#allocation0] sm:%s24]
    %s27 = ssub.s32 2, 1
    %28 = vst [vmem:[%s1] sm:%s27] %v25
    %s29 = scalar_lea.vmem [#allocation0], 8
    %v30 = vld [vmem:[%s29] sm:%s24]
    %s32 = ssub.s32 2, 1
    %s33 = scalar_lea.vmem %s1, 1
    %34 = vst [vmem:[%s33] sm:%s32] %v30
    %s35 = scalar_lea.vmem [#allocation0], 16
    %v36 = vld [vmem:[%s35] sm:%s24]
    %s38 = ssub.s32 2, 1
    %s39 = scalar_lea.vmem %s1, 2
    %40 = vst [vmem:[%s39] sm:%s38] %v36
    %s41 = scalar_lea.vmem [#allocation0], 24
    %v42 = vld [vmem:[%s41] sm:%s24]
    %s44 = ssub.s32 2, 1
    %s45 = scalar_lea.vmem %s1, 3
    %46 = vst [vmem:[%s45] sm:%s44] %v42

// kernel: tile.98
$region0: #{tile.98}
  #allocation0 [shape = 's32[1]{0}', space=sflag, size = 0x4, scoped, tag = 'scoped memory for tile.98']
  %s0 = inlined_call_operand.vmem [shape: f32[64], index: 0, kind: input, shape index: {}]
  %s1 = inlined_call_operand.vmem [shape: f32[16,64], index: 1, kind: output, shape index: {}]
  // Predicated region
  $region2: #{tile.98} parent=0 // pred_check
    _
  $region3: #{tile.98} parent=0 // pred_check_branch
    %3 = sbr.rel (0) target = $region5
  $region4: #{tile.98} parent=0 // pred_region
    _
  $region5: #{tile.98} parent=0 // pred_fallthru
    _
  %v4 = vld [vmem:[%s0] ss:$0 sm:$0xff]
  %5 = vst [vmem:[%s1] sm:$0xff] %v4
  %s6 = scalar_lea.vmem %s1, 8
  %7 = vst [vmem:[%s6] sm:$0xff] %v4

// kernel: tile.99
$region0: #{tile.99}
  %s0 = inlined_call_operand.vmem [shape: f32[16,64], index: 0, kind: input, shape index: {}]
  %s1 = inlined_call_operand.vmem [shape: f32[1,1024], index: 1, kind: output, shape index: {}]
  $region1: #{tile.99} parent=0
    #allocation0 [shape = 'u8[32768]{0}', space=vmem, size = 0x8000, scoped, tag = 'scoped mem for output reshape']
    %v2 = vld [vmem:[%s0] ss:$2 sm:$0xff]
    %vm3 = vcmask 523264
    %4 = vst.msk [vmem:[#allocation0] ss:$8 sm:$0xf] %vm3, %v2
    %5 = vst.msk [vmem:[#allocation0] ss:$8 sm:$0xf0] %vm3, %v2
    %s6 = scalar_lea.vmem %s0, 1
    %v7 = vld [vmem:[%s6] ss:$2 sm:$0xff]
    %8 = vrot.lane.b32.xlu0 %v7, 64
    %v9 = vpop.permute.xlu0 %8
    %vm10 = vcmask 1048064
    %11 = vst.msk [vmem:[#allocation0] ss:$8 sm:$0xf] %vm10, %v9
    %12 = vst.msk [vmem:[#allocation0] ss:$8 sm:$0xf0] %vm10, %v9
    %s14 = ssub.s32 2, 1
    %v15 = vld [vmem:[#allocation0] sm:%s14]
    %s17 = ssub.s32 2, 1
    %18 = vst [vmem:[%s1] sm:%s17] %v15
    %s19 = scalar_lea.vmem [#allocation0], 8
    %v20 = vld [vmem:[%s19] sm:%s14]
    %s22 = ssub.s32 2, 1
    %s23 = scalar_lea.vmem %s1, 1
    %24 = vst [vmem:[%s23] sm:%s22] %v20
    %s25 = scalar_lea.vmem [#allocation0], 16
    %v26 = vld [vmem:[%s25] sm:%s14]
    %s28 = ssub.s32 2, 1
    %s29 = scalar_lea.vmem %s1, 2
    %30 = vst [vmem:[%s29] sm:%s28] %v26
    %s31 = scalar_lea.vmem [#allocation0], 24
    %v32 = vld [vmem:[%s31] sm:%s14]
    %s34 = ssub.s32 2, 1
    %s35 = scalar_lea.vmem %s1, 3
    %36 = vst [vmem:[%s35] sm:%s34] %v32
    %s37 = scalar_lea.vmem [#allocation0], 32
    %v38 = vld [vmem:[%s37] sm:%s14]
    %s40 = ssub.s32 2, 1
    %s41 = scalar_lea.vmem %s1, 4
    %42 = vst [vmem:[%s41] sm:%s40] %v38
    %s43 = scalar_lea.vmem [#allocation0], 40
    %v44 = vld [vmem:[%s43] sm:%s14]
    %s46 = ssub.s32 2, 1
    %s47 = scalar_lea.vmem %s1, 5
    %48 = vst [vmem:[%s47] sm:%s46] %v44
    %s49 = scalar_lea.vmem [#allocation0], 48
    %v50 = vld [vmem:[%s49] sm:%s14]
    %s52 = ssub.s32 2, 1
    %s53 = scalar_lea.vmem %s1, 6
    %54 = vst [vmem:[%s53] sm:%s52] %v50
    %s55 = scalar_lea.vmem [#allocation0], 56
    %v56 = vld [vmem:[%s55] sm:%s14]
    %s58 = ssub.s32 2, 1
    %s59 = scalar_lea.vmem %s1, 7
    %60 = vst [vmem:[%s59] sm:%s58] %v56

// kernel: forward.17
$region0: #{forward.17}
  #allocation0 [shape = 'u32[]', space=smem, size = 0x4, offset = 0x4, fixed_abs, tag = 'smem constant byte address 0x4 - core index']
  #allocation1 [shape = 'u32[72,128]{1,0:T(1,128)}', space=vmem, size = 0x9000, scoped, tag = 'internal scratch']
  %s0 = inlined_call_operand.vmem [shape: f32[8,512], index: 0, kind: input, shape index: {}]
  %s1 = inlined_call_operand.vmem [shape: bf16[512,64], index: 1, kind: input, shape index: {}]
  %s2 = inlined_call_operand.vmem [shape: f32[1,512], index: 2, kind: input, shape index: {}]
  %s3 = inlined_call_operand.vmem [shape: f32[1,512], index: 3, kind: input, shape index: {}]
  %s4 = inlined_call_operand.vmem [shape: f32[8,64], index: 4, kind: output, shape index: {0}]
  %s5 = inlined_call_operand.vmem [shape: f32[1,64], index: 5, kind: output, shape index: {1}]
  %s6 = inlined_call_operand.vmem [shape: f32[1,64], index: 6, kind: output, shape index: {2}]
  %7 = xla_tuple %s4, %s5, %s6
  %s8 = sld [smem:[#allocation0]]
  $region42: #{forward.17} parent=0
    _
  %s10 = ssub.s32 1, %s8
  %s11 = scalar_select 0, %s10, %s8
  // Predicated region
  $region2: #{forward.17} parent=0 // pred_check
    _
  $region3: #{forward.17} parent=0 // pred_check_branch
    %13 = sbr.rel (0) target = $region5
  $region4: #{forward.17} parent=0 // pred_region
    _
  $region5: #{forward.17} parent=0 // pred_fallthru
    _
  // Predicated region
  $region6: #{forward.17} parent=0 // pred_check
    _
  $region7: #{forward.17} parent=0 // pred_check_branch
    %15 = sbr.rel (0) target = $region9
  $region8: #{forward.17} parent=0 // pred_region
    _
  $region9: #{forward.17} parent=0 // pred_fallthru
    _
  // Predicated region
  $region10: #{forward.17} parent=0 // pred_check
    _
  $region11: #{forward.17} parent=0 // pred_check_branch
    %17 = sbr.rel (0) target = $region13
  $region12: #{forward.17} parent=0 // pred_region
    _
  $region13: #{forward.17} parent=0 // pred_fallthru
    _
  // Predicated region
  $region14: #{forward.17} parent=0 // pred_check
    _
  $region15: #{forward.17} parent=0 // pred_check_branch
    %19 = sbr.rel (0) target = $region17
  $region16: #{forward.17} parent=0 // pred_region
    _
  $region17: #{forward.17} parent=0 // pred_fallthru
    _
  %v20 = vld [vmem:[%s0] sm:$0xff]
  %v21 = vld [vmem:[%s0 + $0x8] sm:$0xff]
  %v22 = vld [vmem:[%s0 + $0x10] sm:$0xff]
  %v23 = vld [vmem:[%s0 + $0x18] sm:$0xff]
  %v24 = vld [vmem:[%s2] sm:$0xf]
  %v26 = vperm.slane %v24, 0
  %v27 = vperm.slane %v24, 1
  %v28 = vperm.slane %v24, 2
  %v29 = vperm.slane %v24, 3
  %v34 = vmul.f32 %v20, %v26
  %v35 = vmul.f32 %v21, %v27
  %v36 = vmul.f32 %v22, %v28
  %v37 = vmul.f32 %v23, %v29
  %v38 = vld [vmem:[%s3] sm:$0xf]
  %v40 = vperm.slane %v38, 0
  %v41 = vperm.slane %v38, 1
  %v42 = vperm.slane %v38, 2
  %v43 = vperm.slane %v38, 3
  %v48 = vadd.f32 %v34, %v40
  %v49 = vadd.f32 %v35, %v41
  %v50 = vadd.f32 %v36, %v42
  %v51 = vadd.f32 %v37, %v43
  %vm52 = vcmp.ge.f32.partialorder %v48, 0.0
  %vm53 = vcmp.ge.f32.partialorder %v49, 0.0
  %vm54 = vcmp.ge.f32.partialorder %v50, 0.0
  %vm55 = vcmp.ge.f32.partialorder %v51, 0.0
  %v56 = vmul.f32 %v48, 0.2
  %v57 = vmul.f32 %v49, 0.2
  %v58 = vmul.f32 %v50, 0.2
  %v59 = vmul.f32 %v51, 0.2
  %v60 = vsel %vm52, %v48, %v56
  %v61 = vsel %vm53, %v49, %v57
  %v62 = vsel %vm54, %v50, %v58
  %v63 = vsel %vm55, %v51, %v59
  %v64 = vpack.c.bf16 %v60, %v60
  %v65 = vpack.c.bf16 %v61, %v61
  %v66 = vpack.c.bf16 %v62, %v62
  %v67 = vpack.c.bf16 %v63, %v63
  %v68 = vld [vmem:[%s1] sm:$0xf]
  %v69 = vld [vmem:[%s1 + $0x4] sm:$0xf]
  %v70 = vld [vmem:[%s1 + $0x8] sm:$0xf]
  %v71 = vld [vmem:[%s1 + $0xc] sm:$0xf]
  %v72 = vld [vmem:[%s1 + $0x10] sm:$0xf]
  %v73 = vld [vmem:[%s1 + $0x14] sm:$0xf]
  %v74 = vld [vmem:[%s1 + $0x18] sm:$0xf]
  %v75 = vld [vmem:[%s1 + $0x1c] sm:$0xf]
  %v76 = vld [vmem:[%s1 + $0x20] sm:$0xf]
  %v77 = vld [vmem:[%s1 + $0x24] sm:$0xf]
  %v78 = vld [vmem:[%s1 + $0x28] sm:$0xf]
  %v79 = vld [vmem:[%s1 + $0x2c] sm:$0xf]
  %v80 = vld [vmem:[%s1 + $0x30] sm:$0xf]
  %v81 = vld [vmem:[%s1 + $0x34] sm:$0xf]
  %v82 = vld [vmem:[%s1 + $0x38] sm:$0xf]
  %v83 = vld [vmem:[%s1 + $0x3c] sm:$0xf]
  %v84 = vld [vmem:[%s1 + $0x40] sm:$0xf]
  %v85 = vld [vmem:[%s1 + $0x44] sm:$0xf]
  %v86 = vld [vmem:[%s1 + $0x48] sm:$0xf]
  %v87 = vld [vmem:[%s1 + $0x4c] sm:$0xf]
  %v88 = vld [vmem:[%s1 + $0x50] sm:$0xf]
  %v89 = vld [vmem:[%s1 + $0x54] sm:$0xf]
  %v90 = vld [vmem:[%s1 + $0x58] sm:$0xf]
  %v91 = vld [vmem:[%s1 + $0x5c] sm:$0xf]
  %v92 = vld [vmem:[%s1 + $0x60] sm:$0xf]
  %v93 = vld [vmem:[%s1 + $0x64] sm:$0xf]
  %v94 = vld [vmem:[%s1 + $0x68] sm:$0xf]
  %v95 = vld [vmem:[%s1 + $0x6c] sm:$0xf]
  %v96 = vld [vmem:[%s1 + $0x70] sm:$0xf]
  %v97 = vld [vmem:[%s1 + $0x74] sm:$0xf]
  %v98 = vld [vmem:[%s1 + $0x78] sm:$0xf]
  %v99 = vld [vmem:[%s1 + $0x7c] sm:$0xf]
  %v100 = vld [vmem:[%s1 + $0x80] sm:$0xf]
  %v101 = vld [vmem:[%s1 + $0x84] sm:$0xf]
  %v102 = vld [vmem:[%s1 + $0x88] sm:$0xf]
  %v103 = vld [vmem:[%s1 + $0x8c] sm:$0xf]
  %v104 = vld [vmem:[%s1 + $0x90] sm:$0xf]
  %v105 = vld [vmem:[%s1 + $0x94] sm:$0xf]
  %v106 = vld [vmem:[%s1 + $0x98] sm:$0xf]
  %v107 = vld [vmem:[%s1 + $0x9c] sm:$0xf]
  %v108 = vld [vmem:[%s1 + $0xa0] sm:$0xf]
  %v109 = vld [vmem:[%s1 + $0xa4] sm:$0xf]
  %v110 = vld [vmem:[%s1 + $0xa8] sm:$0xf]
  %v111 = vld [vmem:[%s1 + $0xac] sm:$0xf]
  %v112 = vld [vmem:[%s1 + $0xb0] sm:$0xf]
  %v113 = vld [vmem:[%s1 + $0xb4] sm:$0xf]
  %v114 = vld [vmem:[%s1 + $0xb8] sm:$0xf]
  %v115 = vld [vmem:[%s1 + $0xbc] sm:$0xf]
  %v116 = vld [vmem:[%s1 + $0xc0] sm:$0xf]
  %v117 = vld [vmem:[%s1 + $0xc4] sm:$0xf]
  %v118 = vld [vmem:[%s1 + $0xc8] sm:$0xf]
  %v119 = vld [vmem:[%s1 + $0xcc] sm:$0xf]
  %v120 = vld [vmem:[%s1 + $0xd0] sm:$0xf]
  %v121 = vld [vmem:[%s1 + $0xd4] sm:$0xf]
  %v122 = vld [vmem:[%s1 + $0xd8] sm:$0xf]
  %v123 = vld [vmem:[%s1 + $0xdc] sm:$0xf]
  %v124 = vld [vmem:[%s1 + $0xe0] sm:$0xf]
  %v125 = vld [vmem:[%s1 + $0xe4] sm:$0xf]
  %v126 = vld [vmem:[%s1 + $0xe8] sm:$0xf]
  %v127 = vld [vmem:[%s1 + $0xec] sm:$0xf]
  %v128 = vld [vmem:[%s1 + $0xf0] sm:$0xf]
  %v129 = vld [vmem:[%s1 + $0xf4] sm:$0xf]
  %v130 = vld [vmem:[%s1 + $0xf8] sm:$0xf]
  %v131 = vld [vmem:[%s1 + $0xfc] sm:$0xf]
  %v196 = vunpack.c.l.b16 %v68
  %v197 = vunpack.c.l.b16 %v69
  %v198 = vunpack.c.l.b16 %v70
  %v199 = vunpack.c.l.b16 %v71
  %v200 = vunpack.c.l.b16 %v72
  %v201 = vunpack.c.l.b16 %v73
  %v202 = vunpack.c.l.b16 %v74
  %v203 = vunpack.c.l.b16 %v75
  %v204 = vunpack.c.l.b16 %v76
  %v205 = vunpack.c.l.b16 %v77
  %v206 = vunpack.c.l.b16 %v78
  %v207 = vunpack.c.l.b16 %v79
  %v208 = vunpack.c.l.b16 %v80
  %v209 = vunpack.c.l.b16 %v81
  %v210 = vunpack.c.l.b16 %v82
  %v211 = vunpack.c.l.b16 %v83
  %v212 = vunpack.c.l.b16 %v84
  %v213 = vunpack.c.l.b16 %v85
  %v214 = vunpack.c.l.b16 %v86
  %v215 = vunpack.c.l.b16 %v87
  %v216 = vunpack.c.l.b16 %v88
  %v217 = vunpack.c.l.b16 %v89
  %v218 = vunpack.c.l.b16 %v90
  %v219 = vunpack.c.l.b16 %v91
  %v220 = vunpack.c.l.b16 %v92
  %v221 = vunpack.c.l.b16 %v93
  %v222 = vunpack.c.l.b16 %v94
  %v223 = vunpack.c.l.b16 %v95
  %v224 = vunpack.c.l.b16 %v96
  %v225 = vunpack.c.l.b16 %v97
  %v226 = vunpack.c.l.b16 %v98
  %v227 = vunpack.c.l.b16 %v99
  %v228 = vunpack.c.l.b16 %v100
  %v229 = vunpack.c.l.b16 %v101
  %v230 = vunpack.c.l.b16 %v102
  %v231 = vunpack.c.l.b16 %v103
  %v232 = vunpack.c.l.b16 %v104
  %v233 = vunpack.c.l.b16 %v105
  %v234 = vunpack.c.l.b16 %v106
  %v235 = vunpack.c.l.b16 %v107
  %v236 = vunpack.c.l.b16 %v108
  %v237 = vunpack.c.l.b16 %v109
  %v238 = vunpack.c.l.b16 %v110
  %v239 = vunpack.c.l.b16 %v111
  %v240 = vunpack.c.l.b16 %v112
  %v241 = vunpack.c.l.b16 %v113
  %v242 = vunpack.c.l.b16 %v114
  %v243 = vunpack.c.l.b16 %v115
  %v244 = vunpack.c.l.b16 %v116
  %v245 = vunpack.c.l.b16 %v117
  %v246 = vunpack.c.l.b16 %v118
  %v247 = vunpack.c.l.b16 %v119
  %v248 = vunpack.c.l.b16 %v120
  %v249 = vunpack.c.l.b16 %v121
  %v250 = vunpack.c.l.b16 %v122
  %v251 = vunpack.c.l.b16 %v123
  %v252 = vunpack.c.l.b16 %v124
  %v253 = vunpack.c.l.b16 %v125
  %v254 = vunpack.c.l.b16 %v126
  %v255 = vunpack.c.l.b16 %v127
  %v256 = vunpack.c.l.b16 %v128
  %v257 = vunpack.c.l.b16 %v129
  %v258 = vunpack.c.l.b16 %v130
  %v259 = vunpack.c.l.b16 %v131
  %v260 = vpack.c.b16 %v197, %v196
  %v261 = vpack.c.b16 %v199, %v198
  %v262 = vpack.c.b16 %v201, %v200
  %v263 = vpack.c.b16 %v203, %v202
  %v264 = vpack.c.b16 %v205, %v204
  %v265 = vpack.c.b16 %v207, %v206
  %v266 = vpack.c.b16 %v209, %v208
  %v267 = vpack.c.b16 %v211, %v210
  %v268 = vpack.c.b16 %v213, %v212
  %v269 = vpack.c.b16 %v215, %v214
  %v270 = vpack.c.b16 %v217, %v216
  %v271 = vpack.c.b16 %v219, %v218
  %v272 = vpack.c.b16 %v221, %v220
  %v273 = vpack.c.b16 %v223, %v222
  %v274 = vpack.c.b16 %v225, %v224
  %v275 = vpack.c.b16 %v227, %v226
  %v276 = vpack.c.b16 %v229, %v228
  %v277 = vpack.c.b16 %v231, %v230
  %v278 = vpack.c.b16 %v233, %v232
  %v279 = vpack.c.b16 %v235, %v234
  %v280 = vpack.c.b16 %v237, %v236
  %v281 = vpack.c.b16 %v239, %v238
  %v282 = vpack.c.b16 %v241, %v240
  %v283 = vpack.c.b16 %v243, %v242
  %v284 = vpack.c.b16 %v245, %v244
  %v285 = vpack.c.b16 %v247, %v246
  %v286 = vpack.c.b16 %v249, %v248
  %v287 = vpack.c.b16 %v251, %v250
  %v288 = vpack.c.b16 %v253, %v252
  %v289 = vpack.c.b16 %v255, %v254
  %v290 = vpack.c.b16 %v257, %v256
  %v291 = vpack.c.b16 %v259, %v258
  %324 = vmatpush.bf16.msra.mxu0 %v267
  %325 = vmatpush.bf16.msra.mxu0 %v266
  %326 = vmatpush.bf16.msra.mxu0 %v265
  %327 = vmatpush.bf16.msra.mxu0 %v264
  %328 = vmatpush.bf16.msra.mxu0 %v263
  %329 = vmatpush.bf16.msra.mxu0 %v262
  %330 = vmatpush.bf16.msra.mxu0 %v261
  %331 = vmatpush.bf16.msra.mxu0 %v260
  %332 = vmatmul.bf16.gmra.mxu0 %v64
  %v333 = vpop.f32.mrf.mxu0
  %v334 = vadd.f32 0.0, %v333
  %v335 = vpop.f32.mrf.mxu0
  %336 = vdwg.mxu0
  %337 = vmatpush.bf16.msra.mxu0 %v275
  %338 = vmatpush.bf16.msra.mxu0 %v274
  %339 = vmatpush.bf16.msra.mxu0 %v273
  %340 = vmatpush.bf16.msra.mxu0 %v272
  %341 = vmatpush.bf16.msra.mxu0 %v271
  %342 = vmatpush.bf16.msra.mxu0 %v270
  %343 = vmatpush.bf16.msra.mxu0 %v269
  %344 = vmatpush.bf16.msra.mxu0 %v268
  %345 = vmatmul.bf16.gmra.mxu0 %v65
  %v346 = vpop.f32.mrf.mxu0
  %v347 = vadd.f32 %v334, %v346
  %v348 = vpop.f32.mrf.mxu0
  %349 = vdwg.mxu0
  %350 = vmatpush.bf16.msra.mxu0 %v283
  %351 = vmatpush.bf16.msra.mxu0 %v282
  %352 = vmatpush.bf16.msra.mxu0 %v281
  %353 = vmatpush.bf16.msra.mxu0 %v280
  %354 = vmatpush.bf16.msra.mxu0 %v279
  %355 = vmatpush.bf16.msra.mxu0 %v278
  %356 = vmatpush.bf16.msra.mxu0 %v277
  %357 = vmatpush.bf16.msra.mxu0 %v276
  %358 = vmatmul.bf16.gmra.mxu0 %v66
  %v359 = vpop.f32.mrf.mxu0
  %v360 = vadd.f32 %v347, %v359
  %v361 = vpop.f32.mrf.mxu0
  %362 = vdwg.mxu0
  %363 = vmatpush.bf16.msra.mxu0 %v291
  %364 = vmatpush.bf16.msra.mxu0 %v290
  %365 = vmatpush.bf16.msra.mxu0 %v289
  %366 = vmatpush.bf16.msra.mxu0 %v288
  %367 = vmatpush.bf16.msra.mxu0 %v287
  %368 = vmatpush.bf16.msra.mxu0 %v286
  %369 = vmatpush.bf16.msra.mxu0 %v285
  %370 = vmatpush.bf16.msra.mxu0 %v284
  %371 = vmatmul.bf16.gmra.mxu0 %v67
  %v372 = vpop.f32.mrf.mxu0
  %v373 = vadd.f32 %v360, %v372
  %v374 = vpop.f32.mrf.mxu0
  %375 = vdwg.mxu0
  %vm376 = vcmask 523264
  %v377 = vsel %vm376, %v373, 0.0
  %v378 = vrot.slane %v377, 4
  %v379 = vadd.f32 %v377, %v378
  %v380 = vrot.slane %v379, 2
  %v381 = vadd.f32 %v379, %v380
  %v382 = vrot.slane %v381, 1
  %v383 = vadd.f32 %v381, %v382
  %vm384 = vcmask 516096
  %385 = vst.msk [vmem:[%s5] sm:$0x1] %vm384, %v383
  %v386 = vmul.f32 %v373, %v373
  %v387 = vsel %vm376, %v386, 0.0
  %v388 = vrot.slane %v387, 4
  %v389 = vadd.f32 %v387, %v388
  %v390 = vrot.slane %v389, 2
  %v391 = vadd.f32 %v389, %v390
  %v392 = vrot.slane %v391, 1
  %v393 = vadd.f32 %v391, %v392
  %394 = vst.msk [vmem:[%s6] sm:$0x1] %vm384, %v393
  %395 = vst.msk [vmem:[%s4] sm:$0xff] %vm376, %v373
  // Predicated region
  $region18: #{forward.17} parent=0 // pred_check
    _
  $region19: #{forward.17} parent=0 // pred_check_branch
    %397 = sbr.rel (0) target = $region21
  $region20: #{forward.17} parent=0 // pred_region
    _
  $region21: #{forward.17} parent=0 // pred_fallthru
    _
  // Predicated region
  $region22: #{forward.17} parent=0 // pred_check
    _
  $region23: #{forward.17} parent=0 // pred_check_branch
    %399 = sbr.rel (0) target = $region25
  $region24: #{forward.17} parent=0 // pred_region
    _
  $region25: #{forward.17} parent=0 // pred_fallthru
    _
  // Predicated region
  $region26: #{forward.17} parent=0 // pred_check
    _
  $region27: #{forward.17} parent=0 // pred_check_branch
    %401 = sbr.rel (0) target = $region29
  $region28: #{forward.17} parent=0 // pred_region
    _
  $region29: #{forward.17} parent=0 // pred_fallthru
    _
  // Predicated region
  $region30: #{forward.17} parent=0 // pred_check
    _
  $region31: #{forward.17} parent=0 // pred_check_branch
    %403 = sbr.rel (0) target = $region33
  $region32: #{forward.17} parent=0 // pred_region
    _
  $region33: #{forward.17} parent=0 // pred_fallthru
    _
  // Predicated region
  $region34: #{forward.17} parent=0 // pred_check
    _
  $region35: #{forward.17} parent=0 // pred_check_branch
    %405 = sbr.rel (0) target = $region37
  $region36: #{forward.17} parent=0 // pred_region
    _
  $region37: #{forward.17} parent=0 // pred_fallthru
    _
  // Predicated region
  $region38: #{forward.17} parent=0 // pred_check
    _
  $region39: #{forward.17} parent=0 // pred_check_branch
    %407 = sbr.rel (0) target = $region41
  $region40: #{forward.17} parent=0 // pred_region
    _
  $region41: #{forward.17} parent=0 // pred_fallthru
    _

// kernel: squeeze.22
$region0: #{squeeze.22}
  %s0 = inlined_call_operand.vmem [shape: f32[256], index: 0, kind: input, shape index: {}]
  %s1 = inlined_call_operand.vmem [shape: f32[2,2,64], index: 1, kind: output, shape index: {}]
  $region1: #{squeeze.22} parent=0
    #allocation0 [shape = 'u8[8192]{0}', space=vmem, size = 0x2000, scoped, tag = 'scoped mem for output reshape']
    #allocation1 [shape = 'u8[4096]{0}', space=vmem, size = 0x1000, scoped, tag = 'scoped mem for input reshape']
    %s3 = ssub.s32 4, 1
    %v4 = vld [vmem:[%s0] sm:%s3]
    %5 = vst [vmem:[#allocation1] sm:%s3] %v4
    %v6 = vld [vmem:[#allocation1] sm:$0x3]
    %vm7 = vcmask 523264
    %8 = vst.msk [vmem:[#allocation0] ss:$8 sm:$0x3] %vm7, %v6
    %v9 = vld [vmem:[#allocation1] sm:$0x3]
    %10 = vrot.lane.b32.xlu0 %v9, 64
    %v11 = vpop.permute.xlu0 %10
    %vm12 = vcmask 523264
    %s13 = scalar_lea.vmem [#allocation0], 1
    %14 = vst.msk [vmem:[%s13] ss:$8 sm:$0x3] %vm12, %v11
    %s16 = ssub.s32 4, 1
    %v17 = vld [vmem:[#allocation0] sm:%s16]
    %s19 = ssub.s32 4, 1
    %20 = vst [vmem:[%s1] sm:%s19] %v17
    %s21 = scalar_lea.vmem [#allocation0], 8
    %v22 = vld [vmem:[%s21] sm:%s16]
    %s24 = ssub.s32 4, 1
    %s25 = scalar_lea.vmem %s1, 2
    %26 = vst [vmem:[%s25] sm:%s24] %v22

// kernel: forward.18
$region0: #{forward.18}
  #allocation0 [shape = 'u32[]', space=smem, size = 0x4, offset = 0x4, fixed_abs, tag = 'smem constant byte address 0x4 - core index']
  #allocation1 [shape = 'u32[72,128]{1,0:T(1,128)}', space=vmem, size = 0x9000, scoped, tag = 'internal scratch']
  %s0 = inlined_call_operand.vmem [shape: f32[2,576], index: 0, kind: input, shape index: {}]
  %s1 = inlined_call_operand.vmem [shape: bf16[576,256], index: 1, kind: input, shape index: {}]
  %s2 = inlined_call_operand.vmem [shape: f32[2,256], index: 2, kind: output, shape index: {0}]
  %s3 = inlined_call_operand.vmem [shape: f32[1,256], index: 3, kind: output, shape index: {1}]
  %s4 = inlined_call_operand.vmem [shape: f32[1,256], index: 4, kind: output, shape index: {2}]
  %5 = xla_tuple %s2, %s3, %s4
  %s6 = sld [smem:[#allocation0]]
  $region34: #{forward.18} parent=0
    _
  %s8 = ssub.s32 1, %s6
  %s9 = scalar_select 0, %s8, %s6
  // Predicated region
  $region2: #{forward.18} parent=0 // pred_check
    _
  $region3: #{forward.18} parent=0 // pred_check_branch
    %11 = sbr.rel (0) target = $region5
  $region4: #{forward.18} parent=0 // pred_region
    _
  $region5: #{forward.18} parent=0 // pred_fallthru
    _
  // Predicated region
  $region6: #{forward.18} parent=0 // pred_check
    _
  $region7: #{forward.18} parent=0 // pred_check_branch
    %13 = sbr.rel (0) target = $region9
  $region8: #{forward.18} parent=0 // pred_region
    _
  $region9: #{forward.18} parent=0 // pred_fallthru
    _
  %v15 = vld [vmem:[%s0] sm:$0xff]
  %v16 = vld [vmem:[%s0 + $0x8] sm:$0x3]
  %v17 = vmax.f32 %v15, 0.0
  %v18 = vmax.f32 %v16, 0.0
  %21 = vst [vmem:[#allocation1] ss:$4 sm:$0xff] %v17
  %s22 = scalar_lea.vmem [#allocation1], 32
  %23 = vst [vmem:[%s22] ss:$4 sm:$0xff] %v18
  %v24 = vld.sshfl [vmem:[#allocation1] sm:$0xff pattern:$0x73625140]
  %v25 = vld.sshfl [vmem:[#allocation1 + $0x8] sm:$0xff pattern:$0x73625140]
  %v26 = vld.sshfl [vmem:[#allocation1 + $0x10] sm:$0xff pattern:$0x73625140]
  %v27 = vld.sshfl [vmem:[#allocation1 + $0x18] sm:$0xff pattern:$0x73625140]
  %v28 = vld.sshfl [vmem:[#allocation1 + $0x20] sm:$0xff pattern:$0x73625140]
  %v34 = vpack.c.bf16 %v24, %v24
  %v35 = vpack.c.bf16 %v25, %v25
  %v36 = vpack.c.bf16 %v26, %v26
  %v37 = vpack.c.bf16 %v27, %v27
  %v38 = vpack.c.bf16 %v28, %v28
  %v39 = vld [vmem:[%s1] sm:$0xff]
  %v40 = vld [vmem:[%s1 + $0x8] sm:$0xff]
  %v41 = vld [vmem:[%s1 + $0x10] sm:$0xff]
  %v42 = vld [vmem:[%s1 + $0x18] sm:$0xff]
  %v43 = vld [vmem:[%s1 + $0x20] sm:$0xff]
  %v44 = vld [vmem:[%s1 + $0x28] sm:$0xff]
  %v45 = vld [vmem:[%s1 + $0x30] sm:$0xff]
  %v46 = vld [vmem:[%s1 + $0x38] sm:$0xff]
  %v47 = vld [vmem:[%s1 + $0x40] sm:$0xff]
  %v48 = vld [vmem:[%s1 + $0x48] sm:$0xff]
  %v49 = vld [vmem:[%s1 + $0x50] sm:$0xff]
  %v50 = vld [vmem:[%s1 + $0x58] sm:$0xff]
  %v51 = vld [vmem:[%s1 + $0x60] sm:$0xff]
  %v52 = vld [vmem:[%s1 + $0x68] sm:$0xff]
  %v53 = vld [vmem:[%s1 + $0x70] sm:$0xff]
  %v54 = vld [vmem:[%s1 + $0x78] sm:$0xff]
  %v55 = vld [vmem:[%s1 + $0x80] sm:$0xff]
  %v56 = vld [vmem:[%s1 + $0x88] sm:$0xff]
  %v57 = vld [vmem:[%s1 + $0x90] sm:$0xff]
  %v58 = vld [vmem:[%s1 + $0x98] sm:$0xff]
  %v59 = vld [vmem:[%s1 + $0xa0] sm:$0xff]
  %v60 = vld [vmem:[%s1 + $0xa8] sm:$0xff]
  %v61 = vld [vmem:[%s1 + $0xb0] sm:$0xff]
  %v62 = vld [vmem:[%s1 + $0xb8] sm:$0xff]
  %v63 = vld [vmem:[%s1 + $0xc0] sm:$0xff]
  %v64 = vld [vmem:[%s1 + $0xc8] sm:$0xff]
  %v65 = vld [vmem:[%s1 + $0xd0] sm:$0xff]
  %v66 = vld [vmem:[%s1 + $0xd8] sm:$0xff]
  %v67 = vld [vmem:[%s1 + $0xe0] sm:$0xff]
  %v68 = vld [vmem:[%s1 + $0xe8] sm:$0xff]
  %v69 = vld [vmem:[%s1 + $0xf0] sm:$0xff]
  %v70 = vld [vmem:[%s1 + $0xf8] sm:$0xff]
  %v71 = vld [vmem:[%s1 + $0x100] sm:$0xff]
  %v72 = vld [vmem:[%s1 + $0x108] sm:$0xff]
  %v73 = vld [vmem:[%s1 + $0x110] sm:$0xff]
  %v74 = vld [vmem:[%s1 + $0x118] sm:$0xff]
  %v75 = vld [vmem:[%s1 + $0x120] sm:$0xff]
  %v76 = vld [vmem:[%s1 + $0x128] sm:$0xff]
  %v77 = vld [vmem:[%s1 + $0x130] sm:$0xff]
  %v78 = vld [vmem:[%s1 + $0x138] sm:$0xff]
  %v79 = vld [vmem:[%s1 + $0x140] sm:$0xff]
  %v80 = vld [vmem:[%s1 + $0x148] sm:$0xff]
  %v81 = vld [vmem:[%s1 + $0x150] sm:$0xff]
  %v82 = vld [vmem:[%s1 + $0x158] sm:$0xff]
  %v83 = vld [vmem:[%s1 + $0x160] sm:$0xff]
  %v84 = vld [vmem:[%s1 + $0x168] sm:$0xff]
  %v85 = vld [vmem:[%s1 + $0x170] sm:$0xff]
  %v86 = vld [vmem:[%s1 + $0x178] sm:$0xff]
  %v87 = vld [vmem:[%s1 + $0x180] sm:$0xff]
  %v88 = vld [vmem:[%s1 + $0x188] sm:$0xff]
  %v89 = vld [vmem:[%s1 + $0x190] sm:$0xff]
  %v90 = vld [vmem:[%s1 + $0x198] sm:$0xff]
  %v91 = vld [vmem:[%s1 + $0x1a0] sm:$0xff]
  %v92 = vld [vmem:[%s1 + $0x1a8] sm:$0xff]
  %v93 = vld [vmem:[%s1 + $0x1b0] sm:$0xff]
  %v94 = vld [vmem:[%s1 + $0x1b8] sm:$0xff]
  %v95 = vld [vmem:[%s1 + $0x1c0] sm:$0xff]
  %v96 = vld [vmem:[%s1 + $0x1c8] sm:$0xff]
  %v97 = vld [vmem:[%s1 + $0x1d0] sm:$0xff]
  %v98 = vld [vmem:[%s1 + $0x1d8] sm:$0xff]
  %v99 = vld [vmem:[%s1 + $0x1e0] sm:$0xff]
  %v100 = vld [vmem:[%s1 + $0x1e8] sm:$0xff]
  %v101 = vld [vmem:[%s1 + $0x1f0] sm:$0xff]
  %v102 = vld [vmem:[%s1 + $0x1f8] sm:$0xff]
  %v103 = vld [vmem:[%s1 + $0x200] sm:$0xff]
  %v104 = vld [vmem:[%s1 + $0x208] sm:$0xff]
  %v105 = vld [vmem:[%s1 + $0x210] sm:$0xff]
  %v106 = vld [vmem:[%s1 + $0x218] sm:$0xff]
  %v107 = vld [vmem:[%s1 + $0x220] sm:$0xff]
  %v108 = vld [vmem:[%s1 + $0x228] sm:$0xff]
  %v109 = vld [vmem:[%s1 + $0x230] sm:$0xff]
  %v110 = vld [vmem:[%s1 + $0x238] sm:$0xff]
  %v183 = vunpack.c.l.b16 %v39
  %v184 = vunpack.c.h.b16 %v39
  %v185 = vunpack.c.l.b16 %v40
  %v186 = vunpack.c.h.b16 %v40
  %v187 = vunpack.c.l.b16 %v41
  %v188 = vunpack.c.h.b16 %v41
  %v189 = vunpack.c.l.b16 %v42
  %v190 = vunpack.c.h.b16 %v42
  %v191 = vunpack.c.l.b16 %v43
  %v192 = vunpack.c.h.b16 %v43
  %v193 = vunpack.c.l.b16 %v44
  %v194 = vunpack.c.h.b16 %v44
  %v195 = vunpack.c.l.b16 %v45
  %v196 = vunpack.c.h.b16 %v45
  %v197 = vunpack.c.l.b16 %v46
  %v198 = vunpack.c.h.b16 %v46
  %v199 = vunpack.c.l.b16 %v47
  %v200 = vunpack.c.h.b16 %v47
  %v201 = vunpack.c.l.b16 %v48
  %v202 = vunpack.c.h.b16 %v48
  %v203 = vunpack.c.l.b16 %v49
  %v204 = vunpack.c.h.b16 %v49
  %v205 = vunpack.c.l.b16 %v50
  %v206 = vunpack.c.h.b16 %v50
  %v207 = vunpack.c.l.b16 %v51
  %v208 = vunpack.c.h.b16 %v51
  %v209 = vunpack.c.l.b16 %v52
  %v210 = vunpack.c.h.b16 %v52
  %v211 = vunpack.c.l.b16 %v53
  %v212 = vunpack.c.h.b16 %v53
  %v213 = vunpack.c.l.b16 %v54
  %v214 = vunpack.c.h.b16 %v54
  %v215 = vunpack.c.l.b16 %v55
  %v216 = vunpack.c.h.b16 %v55
  %v217 = vunpack.c.l.b16 %v56
  %v218 = vunpack.c.h.b16 %v56
  %v219 = vunpack.c.l.b16 %v57
  %v220 = vunpack.c.h.b16 %v57
  %v221 = vunpack.c.l.b16 %v58
  %v222 = vunpack.c.h.b16 %v58
  %v223 = vunpack.c.l.b16 %v59
  %v224 = vunpack.c.h.b16 %v59
  %v225 = vunpack.c.l.b16 %v60
  %v226 = vunpack.c.h.b16 %v60
  %v227 = vunpack.c.l.b16 %v61
  %v228 = vunpack.c.h.b16 %v61
  %v229 = vunpack.c.l.b16 %v62
  %v230 = vunpack.c.h.b16 %v62
  %v231 = vunpack.c.l.b16 %v63
  %v232 = vunpack.c.h.b16 %v63
  %v233 = vunpack.c.l.b16 %v64
  %v234 = vunpack.c.h.b16 %v64
  %v235 = vunpack.c.l.b16 %v65
  %v236 = vunpack.c.h.b16 %v65
  %v237 = vunpack.c.l.b16 %v66
  %v238 = vunpack.c.h.b16 %v66
  %v239 = vunpack.c.l.b16 %v67
  %v240 = vunpack.c.h.b16 %v67
  %v241 = vunpack.c.l.b16 %v68
  %v242 = vunpack.c.h.b16 %v68
  %v243 = vunpack.c.l.b16 %v69
  %v244 = vunpack.c.h.b16 %v69
  %v245 = vunpack.c.l.b16 %v70
  %v246 = vunpack.c.h.b16 %v70
  %v247 = vunpack.c.l.b16 %v71
  %v248 = vunpack.c.h.b16 %v71
  %v249 = vunpack.c.l.b16 %v72
  %v250 = vunpack.c.h.b16 %v72
  %v251 = vunpack.c.l.b16 %v73
  %v252 = vunpack.c.h.b16 %v73
  %v253 = vunpack.c.l.b16 %v74
  %v254 = vunpack.c.h.b16 %v74
  %v255 = vunpack.c.l.b16 %v75
  %v256 = vunpack.c.h.b16 %v75
  %v257 = vunpack.c.l.b16 %v76
  %v258 = vunpack.c.h.b16 %v76
  %v259 = vunpack.c.l.b16 %v77
  %v260 = vunpack.c.h.b16 %v77
  %v261 = vunpack.c.l.b16 %v78
  %v262 = vunpack.c.h.b16 %v78
  %v263 = vunpack.c.l.b16 %v79
  %v264 = vunpack.c.h.b16 %v79
  %v265 = vunpack.c.l.b16 %v80
  %v266 = vunpack.c.h.b16 %v80
  %v267 = vunpack.c.l.b16 %v81
  %v268 = vunpack.c.h.b16 %v81
  %v269 = vunpack.c.l.b16 %v82
  %v270 = vunpack.c.h.b16 %v82
  %v271 = vunpack.c.l.b16 %v83
  %v272 = vunpack.c.h.b16 %v83
  %v273 = vunpack.c.l.b16 %v84
  %v274 = vunpack.c.h.b16 %v84
  %v275 = vunpack.c.l.b16 %v85
  %v276 = vunpack.c.h.b16 %v85
  %v277 = vunpack.c.l.b16 %v86
  %v278 = vunpack.c.h.b16 %v86
  %v279 = vunpack.c.l.b16 %v87
  %v280 = vunpack.c.h.b16 %v87
  %v281 = vunpack.c.l.b16 %v88
  %v282 = vunpack.c.h.b16 %v88
  %v283 = vunpack.c.l.b16 %v89
  %v284 = vunpack.c.h.b16 %v89
  %v285 = vunpack.c.l.b16 %v90
  %v286 = vunpack.c.h.b16 %v90
  %v287 = vunpack.c.l.b16 %v91
  %v288 = vunpack.c.h.b16 %v91
  %v289 = vunpack.c.l.b16 %v92
  %v290 = vunpack.c.h.b16 %v92
  %v291 = vunpack.c.l.b16 %v93
  %v292 = vunpack.c.h.b16 %v93
  %v293 = vunpack.c.l.b16 %v94
  %v294 = vunpack.c.h.b16 %v94
  %v295 = vunpack.c.l.b16 %v95
  %v296 = vunpack.c.h.b16 %v95
  %v297 = vunpack.c.l.b16 %v96
  %v298 = vunpack.c.h.b16 %v96
  %v299 = vunpack.c.l.b16 %v97
  %v300 = vunpack.c.h.b16 %v97
  %v301 = vunpack.c.l.b16 %v98
  %v302 = vunpack.c.h.b16 %v98
  %v303 = vunpack.c.l.b16 %v99
  %v304 = vunpack.c.h.b16 %v99
  %v305 = vunpack.c.l.b16 %v100
  %v306 = vunpack.c.h.b16 %v100
  %v307 = vunpack.c.l.b16 %v101
  %v308 = vunpack.c.h.b16 %v101
  %v309 = vunpack.c.l.b16 %v102
  %v310 = vunpack.c.h.b16 %v102
  %v311 = vunpack.c.l.b16 %v103
  %v312 = vunpack.c.h.b16 %v103
  %v313 = vunpack.c.l.b16 %v104
  %v314 = vunpack.c.h.b16 %v104
  %v315 = vunpack.c.l.b16 %v105
  %v316 = vunpack.c.h.b16 %v105
  %v317 = vunpack.c.l.b16 %v106
  %v318 = vunpack.c.h.b16 %v106
  %v319 = vunpack.c.l.b16 %v107
  %v320 = vunpack.c.h.b16 %v107
  %v321 = vunpack.c.l.b16 %v108
  %v322 = vunpack.c.h.b16 %v108
  %v323 = vunpack.c.l.b16 %v109
  %v324 = vunpack.c.h.b16 %v109
  %v325 = vunpack.c.l.b16 %v110
  %v326 = vunpack.c.h.b16 %v110
  %v327 = vpack.c.b16 %v185, %v183
  %v328 = vpack.c.b16 %v186, %v184
  %v329 = vpack.c.b16 %v189, %v187
  %v330 = vpack.c.b16 %v190, %v188
  %v331 = vpack.c.b16 %v193, %v191
  %v332 = vpack.c.b16 %v194, %v192
  %v333 = vpack.c.b16 %v197, %v195
  %v334 = vpack.c.b16 %v198, %v196
  %v335 = vpack.c.b16 %v201, %v199
  %v336 = vpack.c.b16 %v202, %v200
  %v337 = vpack.c.b16 %v205, %v203
  %v338 = vpack.c.b16 %v206, %v204
  %v339 = vpack.c.b16 %v209, %v207
  %v340 = vpack.c.b16 %v210, %v208
  %v341 = vpack.c.b16 %v213, %v211
  %v342 = vpack.c.b16 %v214, %v212
  %v343 = vpack.c.b16 %v217, %v215
  %v344 = vpack.c.b16 %v218, %v216
  %v345 = vpack.c.b16 %v221, %v219
  %v346 = vpack.c.b16 %v222, %v220
  %v347 = vpack.c.b16 %v225, %v223
  %v348 = vpack.c.b16 %v226, %v224
  %v349 = vpack.c.b16 %v229, %v227
  %v350 = vpack.c.b16 %v230, %v228
  %v351 = vpack.c.b16 %v233, %v231
  %v352 = vpack.c.b16 %v234, %v232
  %v353 = vpack.c.b16 %v237, %v235
  %v354 = vpack.c.b16 %v238, %v236
  %v355 = vpack.c.b16 %v241, %v239
  %v356 = vpack.c.b16 %v242, %v240
  %v357 = vpack.c.b16 %v245, %v243
  %v358 = vpack.c.b16 %v246, %v244
  %v359 = vpack.c.b16 %v249, %v247
  %v360 = vpack.c.b16 %v250, %v248
  %v361 = vpack.c.b16 %v253, %v251
  %v362 = vpack.c.b16 %v254, %v252
  %v363 = vpack.c.b16 %v257, %v255
  %v364 = vpack.c.b16 %v258, %v256
  %v365 = vpack.c.b16 %v261, %v259
  %v366 = vpack.c.b16 %v262, %v260
  %v367 = vpack.c.b16 %v265, %v263
  %v368 = vpack.c.b16 %v266, %v264
  %v369 = vpack.c.b16 %v269, %v267
  %v370 = vpack.c.b16 %v270, %v268
  %v371 = vpack.c.b16 %v273, %v271
  %v372 = vpack.c.b16 %v274, %v272
  %v373 = vpack.c.b16 %v277, %v275
  %v374 = vpack.c.b16 %v278, %v276
  %v375 = vpack.c.b16 %v281, %v279
  %v376 = vpack.c.b16 %v282, %v280
  %v377 = vpack.c.b16 %v285, %v283
  %v378 = vpack.c.b16 %v286, %v284
  %v379 = vpack.c.b16 %v289, %v287
  %v380 = vpack.c.b16 %v290, %v288
  %v381 = vpack.c.b16 %v293, %v291
  %v382 = vpack.c.b16 %v294, %v292
  %v383 = vpack.c.b16 %v297, %v295
  %v384 = vpack.c.b16 %v298, %v296
  %v385 = vpack.c.b16 %v301, %v299
  %v386 = vpack.c.b16 %v302, %v300
  %v387 = vpack.c.b16 %v305, %v303
  %v388 = vpack.c.b16 %v306, %v304
  %v389 = vpack.c.b16 %v309, %v307
  %v390 = vpack.c.b16 %v310, %v308
  %v391 = vpack.c.b16 %v313, %v311
  %v392 = vpack.c.b16 %v314, %v312
  %v393 = vpack.c.b16 %v317, %v315
  %v394 = vpack.c.b16 %v318, %v316
  %v395 = vpack.c.b16 %v321, %v319
  %v396 = vpack.c.b16 %v322, %v320
  %v397 = vpack.c.b16 %v325, %v323
  %v398 = vpack.c.b16 %v326, %v324
  %vm471 = vcmask 523264
  %v473 = vsel %vm471, %v38, 0
  %475 = vmatpush.bf16.msra.mxu0 %v341
  %476 = vmatpush.bf16.msra.mxu0 %v339
  %477 = vmatpush.bf16.msra.mxu0 %v337
  %478 = vmatpush.bf16.msra.mxu0 %v335
  %479 = vmatpush.bf16.msra.mxu0 %v333
  %480 = vmatpush.bf16.msra.mxu0 %v331
  %481 = vmatpush.bf16.msra.mxu0 %v329
  %482 = vmatpush.bf16.msra.mxu0 %v327
  %483 = vmatmul.bf16.gmra.mxu0 %v34
  %v484 = vpop.f32.mrf.mxu0
  %v485 = vadd.f32 0.0, %v484
  %v486 = vpop.f32.mrf.mxu0
  %487 = vdwg.mxu0
  %488 = vmatpush.bf16.msra.mxu0 %v357
  %489 = vmatpush.bf16.msra.mxu0 %v355
  %490 = vmatpush.bf16.msra.mxu0 %v353
  %491 = vmatpush.bf16.msra.mxu0 %v351
  %492 = vmatpush.bf16.msra.mxu0 %v349
  %493 = vmatpush.bf16.msra.mxu0 %v347
  %494 = vmatpush.bf16.msra.mxu0 %v345
  %495 = vmatpush.bf16.msra.mxu0 %v343
  %496 = vmatmul.bf16.gmra.mxu0 %v35
  %v497 = vpop.f32.mrf.mxu0
  %v498 = vadd.f32 %v485, %v497
  %v499 = vpop.f32.mrf.mxu0
  %500 = vdwg.mxu0
  %501 = vmatpush.bf16.msra.mxu0 %v373
  %502 = vmatpush.bf16.msra.mxu0 %v371
  %503 = vmatpush.bf16.msra.mxu0 %v369
  %504 = vmatpush.bf16.msra.mxu0 %v367
  %505 = vmatpush.bf16.msra.mxu0 %v365
  %506 = vmatpush.bf16.msra.mxu0 %v363
  %507 = vmatpush.bf16.msra.mxu0 %v361
  %508 = vmatpush.bf16.msra.mxu0 %v359
  %509 = vmatmul.bf16.gmra.mxu0 %v36
  %v510 = vpop.f32.mrf.mxu0
  %v511 = vadd.f32 %v498, %v510
  %v512 = vpop.f32.mrf.mxu0
  %513 = vdwg.mxu0
  %514 = vmatpush.bf16.msra.mxu0 %v389
  %515 = vmatpush.bf16.msra.mxu0 %v387
  %516 = vmatpush.bf16.msra.mxu0 %v385
  %517 = vmatpush.bf16.msra.mxu0 %v383
  %518 = vmatpush.bf16.msra.mxu0 %v381
  %519 = vmatpush.bf16.msra.mxu0 %v379
  %520 = vmatpush.bf16.msra.mxu0 %v377
  %521 = vmatpush.bf16.msra.mxu0 %v375
  %522 = vmatmul.bf16.gmra.mxu0 %v37
  %v523 = vpop.f32.mrf.mxu0
  %v524 = vadd.f32 %v511, %v523
  %v525 = vpop.f32.mrf.mxu0
  %526 = vdwg.mxu0
  %527 = vmatpush.bf16.msra.mxu0 0
  %528 = vmatpush.bf16.msra.mxu0 0
  %529 = vmatpush.bf16.msra.mxu0 0
  %530 = vmatpush.bf16.msra.mxu0 0
  %531 = vmatpush.bf16.msra.mxu0 %v397
  %532 = vmatpush.bf16.msra.mxu0 %v395
  %533 = vmatpush.bf16.msra.mxu0 %v393
  %534 = vmatpush.bf16.msra.mxu0 %v391
  %535 = vmatmul.bf16.gmra.mxu0 %v473
  %v536 = vpop.f32.mrf.mxu0
  %v537 = vadd.f32 %v524, %v536
  %v538 = vpop.f32.mrf.mxu0
  %539 = vdwg.mxu0
  %540 = vmatpush.bf16.msra.mxu0 %v342
  %541 = vmatpush.bf16.msra.mxu0 %v340
  %542 = vmatpush.bf16.msra.mxu0 %v338
  %543 = vmatpush.bf16.msra.mxu0 %v336
  %544 = vmatpush.bf16.msra.mxu0 %v334
  %545 = vmatpush.bf16.msra.mxu0 %v332
  %546 = vmatpush.bf16.msra.mxu0 %v330
  %547 = vmatpush.bf16.msra.mxu0 %v328
  %548 = vmatmul.bf16.gmra.mxu0 %v34
  %v549 = vpop.f32.mrf.mxu0
  %v550 = vadd.f32 0.0, %v549
  %v551 = vpop.f32.mrf.mxu0
  %552 = vdwg.mxu0
  %553 = vmatpush.bf16.msra.mxu0 %v358
  %554 = vmatpush.bf16.msra.mxu0 %v356
  %555 = vmatpush.bf16.msra.mxu0 %v354
  %556 = vmatpush.bf16.msra.mxu0 %v352
  %557 = vmatpush.bf16.msra.mxu0 %v350
  %558 = vmatpush.bf16.msra.mxu0 %v348
  %559 = vmatpush.bf16.msra.mxu0 %v346
  %560 = vmatpush.bf16.msra.mxu0 %v344
  %561 = vmatmul.bf16.gmra.mxu0 %v35
  %v562 = vpop.f32.mrf.mxu0
  %v563 = vadd.f32 %v550, %v562
  %v564 = vpop.f32.mrf.mxu0
  %565 = vdwg.mxu0
  %566 = vmatpush.bf16.msra.mxu0 %v374
  %567 = vmatpush.bf16.msra.mxu0 %v372
  %568 = vmatpush.bf16.msra.mxu0 %v370
  %569 = vmatpush.bf16.msra.mxu0 %v368
  %570 = vmatpush.bf16.msra.mxu0 %v366
  %571 = vmatpush.bf16.msra.mxu0 %v364
  %572 = vmatpush.bf16.msra.mxu0 %v362
  %573 = vmatpush.bf16.msra.mxu0 %v360
  %574 = vmatmul.bf16.gmra.mxu0 %v36
  %v575 = vpop.f32.mrf.mxu0
  %v576 = vadd.f32 %v563, %v575
  %v577 = vpop.f32.mrf.mxu0
  %578 = vdwg.mxu0
  %579 = vmatpush.bf16.msra.mxu0 %v390
  %580 = vmatpush.bf16.msra.mxu0 %v388
  %581 = vmatpush.bf16.msra.mxu0 %v386
  %582 = vmatpush.bf16.msra.mxu0 %v384
  %583 = vmatpush.bf16.msra.mxu0 %v382
  %584 = vmatpush.bf16.msra.mxu0 %v380
  %585 = vmatpush.bf16.msra.mxu0 %v378
  %586 = vmatpush.bf16.msra.mxu0 %v376
  %587 = vmatmul.bf16.gmra.mxu0 %v37
  %v588 = vpop.f32.mrf.mxu0
  %v589 = vadd.f32 %v576, %v588
  %v590 = vpop.f32.mrf.mxu0
  %591 = vdwg.mxu0
  %592 = vmatpush.bf16.msra.mxu0 0
  %593 = vmatpush.bf16.msra.mxu0 0
  %594 = vmatpush.bf16.msra.mxu0 0
  %595 = vmatpush.bf16.msra.mxu0 0
  %596 = vmatpush.bf16.msra.mxu0 %v398
  %597 = vmatpush.bf16.msra.mxu0 %v396
  %598 = vmatpush.bf16.msra.mxu0 %v394
  %599 = vmatpush.bf16.msra.mxu0 %v392
  %600 = vmatmul.bf16.gmra.mxu0 %v473
  %v601 = vpop.f32.mrf.mxu0
  %v602 = vadd.f32 %v589, %v601
  %v603 = vpop.f32.mrf.mxu0
  %604 = vdwg.mxu0
  %vm605 = vcmask 1041408
  %v606 = vsel %vm605, %v537, 0.0
  %v607 = vrot.slane %v606, 4
  %v608 = vadd.f32 %v606, %v607
  %v609 = vrot.slane %v608, 2
  %v610 = vadd.f32 %v608, %v609
  %v611 = vrot.slane %v610, 1
  %v612 = vadd.f32 %v610, %v611
  %v613 = vsel %vm605, %v602, 0.0
  %v614 = vrot.slane %v613, 4
  %v615 = vadd.f32 %v613, %v614
  %v616 = vrot.slane %v615, 2
  %v617 = vadd.f32 %v615, %v616
  %v618 = vrot.slane %v617, 1
  %v619 = vadd.f32 %v617, %v618
  %v622 = vrot.slane %v619, 7
  %vm623 = vcmask 1040384
  %v624 = vsel %vm623, %v612, %v622
  %v626 = vlaneseq
  %vm627 = vcmp.ge.s32.totalorder %v626, 0
  %vm628 = vcmp.lt.s32.totalorder %v626, 256
  %vm629 = vmand %vm627, %vm628
  %630 = vst.msk [vmem:[%s3] sm:$0x3] %vm629, %v624
  %v631 = vmul.f32 %v537, %v537
  %v632 = vmul.f32 %v602, %v602
  %v633 = vsel %vm605, %v631, 0.0
  %v634 = vrot.slane %v633, 4
  %v635 = vadd.f32 %v633, %v634
  %v636 = vrot.slane %v635, 2
  %v637 = vadd.f32 %v635, %v636
  %v638 = vrot.slane %v637, 1
  %v639 = vadd.f32 %v637, %v638
  %v640 = vsel %vm605, %v632, 0.0
  %v641 = vrot.slane %v640, 4
  %v642 = vadd.f32 %v640, %v641
  %v643 = vrot.slane %v642, 2
  %v644 = vadd.f32 %v642, %v643
  %v645 = vrot.slane %v644, 1
  %v646 = vadd.f32 %v644, %v645
  %v649 = vrot.slane %v646, 7
  %v650 = vsel %vm623, %v639, %v649
  %652 = vst.msk [vmem:[%s4] sm:$0x3] %vm629, %v650
  %v655 = vrot.slane %v602, 6
  %v656 = vsel %vm605, %v537, %v655
  %658 = vst [vmem:[%s2] sm:$0xf] %v656
  // Predicated region
  $region10: #{forward.18} parent=0 // pred_check
    _
  $region11: #{forward.18} parent=0 // pred_check_branch
    %660 = sbr.rel (0) target = $region13
  $region12: #{forward.18} parent=0 // pred_region
    _
  $region13: #{forward.18} parent=0 // pred_fallthru
    _
  // Predicated region
  $region14: #{forward.18} parent=0 // pred_check
    _
  $region15: #{forward.18} parent=0 // pred_check_branch
    %662 = sbr.rel (0) target = $region17
  $region16: #{forward.18} parent=0 // pred_region
    _
  $region17: #{forward.18} parent=0 // pred_fallthru
    _
  // Predicated region
  $region18: #{forward.18} parent=0 // pred_check
    _
  $region19: #{forward.18} parent=0 // pred_check_branch
    %664 = sbr.rel (0) target = $region21
  $region20: #{forward.18} parent=0 // pred_region
    _
  $region21: #{forward.18} parent=0 // pred_fallthru
    _
  // Predicated region
  $region22: #{forward.18} parent=0 // pred_check
    _
  $region23: #{forward.18} parent=0 // pred_check_branch
    %666 = sbr.rel (0) target = $region25
  $region24: #{forward.18} parent=0 // pred_region
    _
  $region25: #{forward.18} parent=0 // pred_fallthru
    _
  // Predicated region
  $region26: #{forward.18} parent=0 // pred_check
    _
  $region27: #{forward.18} parent=0 // pred_check_branch
    %668 = sbr.rel (0) target = $region29
  $region28: #{forward.18} parent=0 // pred_region
    _
  $region29: #{forward.18} parent=0 // pred_fallthru
    _
  // Predicated region
  $region30: #{forward.18} parent=0 // pred_check
    _
  $region31: #{forward.18} parent=0 // pred_check_branch
    %670 = sbr.rel (0) target = $region33
  $region32: #{forward.18} parent=0 // pred_region
    _
  $region33: #{forward.18} parent=0 // pred_fallthru
    _

// kernel: forward.24
$region0: #{forward.24}
  #allocation0 [shape = 'u32[]', space=smem, size = 0x4, offset = 0x4, fixed_abs, tag = 'smem constant byte address 0x4 - core index']
  #allocation1 [shape = 'u32[72,128]{1,0:T(1,128)}', space=vmem, size = 0x9000, scoped, tag = 'internal scratch']
  %s0 = inlined_call_operand.vmem [shape: f32[2,1,1,9,64], index: 0, kind: input, shape index: {}, may-alias: {0,5}]
  %s1 = inlined_call_operand.vmem [shape: f32[2,1024], index: 1, kind: input, shape index: {}]
  %s2 = inlined_call_operand.vmem [shape: bf16[1024,64], index: 2, kind: input, shape index: {}]
  %s3 = inlined_call_operand.vmem [shape: f32[1,1024], index: 3, kind: input, shape index: {}]
  %s4 = inlined_call_operand.vmem [shape: f32[1,1024], index: 4, kind: input, shape index: {}]
  %s5 = inlined_call_operand.vmem [shape: f32[2,1,1,9,64], index: 5, kind: output, shape index: {}, may-alias: {0,5}]
  %s6 = scalar_lea.vmem %s5, 8
  %s7 = sld [smem:[#allocation0]]
  $region56: #{forward.24} parent=0
    _
  %s9 = ssub.s32 1, %s7
  %s10 = scalar_select 0, %s9, %s7
  $region1: #{forward.24} parent=0
    #allocation2 [shape = 'u8[1024]{0}', space=vmem, size = 0x400, scoped, tag = 'output window, operand 0, single buffered']
    // Predicated region
    $region2: #{forward.24} parent=1 // pred_check
      _
    $region3: #{forward.24} parent=1 // pred_check_branch
      %12 = sbr.rel (0) target = $region5
    $region4: #{forward.24} parent=1 // pred_region
      _
    $region5: #{forward.24} parent=1 // pred_fallthru
      _
    // Predicated region
    $region6: #{forward.24} parent=1 // pred_check
      _
    $region7: #{forward.24} parent=1 // pred_check_branch
      %14 = sbr.rel (0) target = $region9
    $region8: #{forward.24} parent=1 // pred_region
      _
    $region9: #{forward.24} parent=1 // pred_fallthru
      _
    // Predicated region
    $region10: #{forward.24} parent=1 // pred_check
      _
    $region11: #{forward.24} parent=1 // pred_check_branch
      %16 = sbr.rel (0) target = $region13
    $region12: #{forward.24} parent=1 // pred_region
      _
    $region13: #{forward.24} parent=1 // pred_fallthru
      _
    // Predicated region
    $region14: #{forward.24} parent=1 // pred_check
      _
    $region15: #{forward.24} parent=1 // pred_check_branch
      %18 = sbr.rel (0) target = $region17
    $region16: #{forward.24} parent=1 // pred_region
      _
    $region17: #{forward.24} parent=1 // pred_fallthru
      _
    %v19 = vld [vmem:[%s1] sm:$0xff]
    %v20 = vld [vmem:[%s1 + $0x8] sm:$0xff]
    %v21 = vld [vmem:[%s3] sm:$0xff]
    %v23 = vperm.slane %v21, 0
    %v24 = vperm.slane %v21, 1
    %v25 = vperm.slane %v21, 2
    %v26 = vperm.slane %v21, 3
    %v27 = vperm.slane %v21, 4
    %v28 = vperm.slane %v21, 5
    %v29 = vperm.slane %v21, 6
    %v30 = vperm.slane %v21, 7
    %v31 = vrot.slane %v24, 6
    %v32 = vrot.slane %v25, 4
    %v33 = vrot.slane %v26, 2
    %v34 = vrot.slane %v28, 6
    %v35 = vrot.slane %v29, 4
    %v36 = vrot.slane %v30, 2
    %vm37 = vcmask 1041408
    %v38 = vsel %vm37, %v23, %v31
    %vm39 = vcmask 1045508
    %v40 = vsel %vm39, %v32, %v33
    %vm41 = vcmask 1043456
    %v42 = vsel %vm41, %v38, %v40
    %v43 = vsel %vm37, %v27, %v34
    %v44 = vsel %vm39, %v35, %v36
    %v45 = vsel %vm41, %v43, %v44
    %v48 = vmul.f32 %v19, %v42
    %v49 = vmul.f32 %v20, %v45
    %v50 = vld [vmem:[%s4] sm:$0xff]
    %v52 = vperm.slane %v50, 0
    %v53 = vperm.slane %v50, 1
    %v54 = vperm.slane %v50, 2
    %v55 = vperm.slane %v50, 3
    %v56 = vperm.slane %v50, 4
    %v57 = vperm.slane %v50, 5
    %v58 = vperm.slane %v50, 6
    %v59 = vperm.slane %v50, 7
    %v60 = vrot.slane %v53, 6
    %v61 = vrot.slane %v54, 4
    %v62 = vrot.slane %v55, 2
    %v63 = vrot.slane %v57, 6
    %v64 = vrot.slane %v58, 4
    %v65 = vrot.slane %v59, 2
    %v66 = vsel %vm37, %v52, %v60
    %v67 = vsel %vm39, %v61, %v62
    %v68 = vsel %vm41, %v66, %v67
    %v69 = vsel %vm37, %v56, %v63
    %v70 = vsel %vm39, %v64, %v65
    %v71 = vsel %vm41, %v69, %v70
    %v74 = vadd.f32 %v48, %v68
    %v75 = vadd.f32 %v49, %v71
    %vm76 = vcmp.ge.f32.partialorder %v74, 0.0
    %vm77 = vcmp.ge.f32.partialorder %v75, 0.0
    %v78 = vmul.f32 %v74, 0.2
    %v79 = vmul.f32 %v75, 0.2
    %v80 = vsel %vm76, %v74, %v78
    %v81 = vsel %vm77, %v75, %v79
    %84 = vst [vmem:[#allocation1] ss:$4 sm:$0xff] %v80
    %s85 = scalar_lea.vmem [#allocation1], 32
    %86 = vst [vmem:[%s85] ss:$4 sm:$0xff] %v81
    %v87 = vld.sshfl [vmem:[#allocation1] sm:$0xff pattern:$0x73625140]
    %v88 = vld.sshfl [vmem:[#allocation1 + $0x8] sm:$0xff pattern:$0x73625140]
    %v89 = vld.sshfl [vmem:[#allocation1 + $0x10] sm:$0xff pattern:$0x73625140]
    %v90 = vld.sshfl [vmem:[#allocation1 + $0x18] sm:$0xff pattern:$0x73625140]
    %v91 = vld.sshfl [vmem:[#allocation1 + $0x20] sm:$0xff pattern:$0x73625140]
    %v92 = vld.sshfl [vmem:[#allocation1 + $0x28] sm:$0xff pattern:$0x73625140]
    %v93 = vld.sshfl [vmem:[#allocation1 + $0x30] sm:$0xff pattern:$0x73625140]
    %v94 = vld.sshfl [vmem:[#allocation1 + $0x38] sm:$0xff pattern:$0x73625140]
    %v103 = vpack.c.bf16 %v87, %v87
    %v104 = vpack.c.bf16 %v88, %v88
    %v105 = vpack.c.bf16 %v89, %v89
    %v106 = vpack.c.bf16 %v90, %v90
    %v107 = vpack.c.bf16 %v91, %v91
    %v108 = vpack.c.bf16 %v92, %v92
    %v109 = vpack.c.bf16 %v93, %v93
    %v110 = vpack.c.bf16 %v94, %v94
    %v111 = vld [vmem:[%s2] sm:$0xf]
    %v112 = vld [vmem:[%s2 + $0x4] sm:$0xf]
    %v113 = vld [vmem:[%s2 + $0x8] sm:$0xf]
    %v114 = vld [vmem:[%s2 + $0xc] sm:$0xf]
    %v115 = vld [vmem:[%s2 + $0x10] sm:$0xf]
    %v116 = vld [vmem:[%s2 + $0x14] sm:$0xf]
    %v117 = vld [vmem:[%s2 + $0x18] sm:$0xf]
    %v118 = vld [vmem:[%s2 + $0x1c] sm:$0xf]
    %v119 = vld [vmem:[%s2 + $0x20] sm:$0xf]
    %v120 = vld [vmem:[%s2 + $0x24] sm:$0xf]
    %v121 = vld [vmem:[%s2 + $0x28] sm:$0xf]
    %v122 = vld [vmem:[%s2 + $0x2c] sm:$0xf]
    %v123 = vld [vmem:[%s2 + $0x30] sm:$0xf]
    %v124 = vld [vmem:[%s2 + $0x34] sm:$0xf]
    %v125 = vld [vmem:[%s2 + $0x38] sm:$0xf]
    %v126 = vld [vmem:[%s2 + $0x3c] sm:$0xf]
    %v127 = vld [vmem:[%s2 + $0x40] sm:$0xf]
    %v128 = vld [vmem:[%s2 + $0x44] sm:$0xf]
    %v129 = vld [vmem:[%s2 + $0x48] sm:$0xf]
    %v130 = vld [vmem:[%s2 + $0x4c] sm:$0xf]
    %v131 = vld [vmem:[%s2 + $0x50] sm:$0xf]
    %v132 = vld [vmem:[%s2 + $0x54] sm:$0xf]
    %v133 = vld [vmem:[%s2 + $0x58] sm:$0xf]
    %v134 = vld [vmem:[%s2 + $0x5c] sm:$0xf]
    %v135 = vld [vmem:[%s2 + $0x60] sm:$0xf]
    %v136 = vld [vmem:[%s2 + $0x64] sm:$0xf]
    %v137 = vld [vmem:[%s2 + $0x68] sm:$0xf]
    %v138 = vld [vmem:[%s2 + $0x6c] sm:$0xf]
    %v139 = vld [vmem:[%s2 + $0x70] sm:$0xf]
    %v140 = vld [vmem:[%s2 + $0x74] sm:$0xf]
    %v141 = vld [vmem:[%s2 + $0x78] sm:$0xf]
    %v142 = vld [vmem:[%s2 + $0x7c] sm:$0xf]
    %v143 = vld [vmem:[%s2 + $0x80] sm:$0xf]
    %v144 = vld [vmem:[%s2 + $0x84] sm:$0xf]
    %v145 = vld [vmem:[%s2 + $0x88] sm:$0xf]
    %v146 = vld [vmem:[%s2 + $0x8c] sm:$0xf]
    %v147 = vld [vmem:[%s2 + $0x90] sm:$0xf]
    %v148 = vld [vmem:[%s2 + $0x94] sm:$0xf]
    %v149 = vld [vmem:[%s2 + $0x98] sm:$0xf]
    %v150 = vld [vmem:[%s2 + $0x9c] sm:$0xf]
    %v151 = vld [vmem:[%s2 + $0xa0] sm:$0xf]
    %v152 = vld [vmem:[%s2 + $0xa4] sm:$0xf]
    %v153 = vld [vmem:[%s2 + $0xa8] sm:$0xf]
    %v154 = vld [vmem:[%s2 + $0xac] sm:$0xf]
    %v155 = vld [vmem:[%s2 + $0xb0] sm:$0xf]
    %v156 = vld [vmem:[%s2 + $0xb4] sm:$0xf]
    %v157 = vld [vmem:[%s2 + $0xb8] sm:$0xf]
    %v158 = vld [vmem:[%s2 + $0xbc] sm:$0xf]
    %v159 = vld [vmem:[%s2 + $0xc0] sm:$0xf]
    %v160 = vld [vmem:[%s2 + $0xc4] sm:$0xf]
    %v161 = vld [vmem:[%s2 + $0xc8] sm:$0xf]
    %v162 = vld [vmem:[%s2 + $0xcc] sm:$0xf]
    %v163 = vld [vmem:[%s2 + $0xd0] sm:$0xf]
    %v164 = vld [vmem:[%s2 + $0xd4] sm:$0xf]
    %v165 = vld [vmem:[%s2 + $0xd8] sm:$0xf]
    %v166 = vld [vmem:[%s2 + $0xdc] sm:$0xf]
    %v167 = vld [vmem:[%s2 + $0xe0] sm:$0xf]
    %v168 = vld [vmem:[%s2 + $0xe4] sm:$0xf]
    %v169 = vld [vmem:[%s2 + $0xe8] sm:$0xf]
    %v170 = vld [vmem:[%s2 + $0xec] sm:$0xf]
    %v171 = vld [vmem:[%s2 + $0xf0] sm:$0xf]
    %v172 = vld [vmem:[%s2 + $0xf4] sm:$0xf]
    %v173 = vld [vmem:[%s2 + $0xf8] sm:$0xf]
    %v174 = vld [vmem:[%s2 + $0xfc] sm:$0xf]
    %v175 = vld [vmem:[%s2 + $0x100] sm:$0xf]
    %v176 = vld [vmem:[%s2 + $0x104] sm:$0xf]
    %v177 = vld [vmem:[%s2 + $0x108] sm:$0xf]
    %v178 = vld [vmem:[%s2 + $0x10c] sm:$0xf]
    %v179 = vld [vmem:[%s2 + $0x110] sm:$0xf]
    %v180 = vld [vmem:[%s2 + $0x114] sm:$0xf]
    %v181 = vld [vmem:[%s2 + $0x118] sm:$0xf]
    %v182 = vld [vmem:[%s2 + $0x11c] sm:$0xf]
    %v183 = vld [vmem:[%s2 + $0x120] sm:$0xf]
    %v184 = vld [vmem:[%s2 + $0x124] sm:$0xf]
    %v185 = vld [vmem:[%s2 + $0x128] sm:$0xf]
    %v186 = vld [vmem:[%s2 + $0x12c] sm:$0xf]
    %v187 = vld [vmem:[%s2 + $0x130] sm:$0xf]
    %v188 = vld [vmem:[%s2 + $0x134] sm:$0xf]
    %v189 = vld [vmem:[%s2 + $0x138] sm:$0xf]
    %v190 = vld [vmem:[%s2 + $0x13c] sm:$0xf]
    %v191 = vld [vmem:[%s2 + $0x140] sm:$0xf]
    %v192 = vld [vmem:[%s2 + $0x144] sm:$0xf]
    %v193 = vld [vmem:[%s2 + $0x148] sm:$0xf]
    %v194 = vld [vmem:[%s2 + $0x14c] sm:$0xf]
    %v195 = vld [vmem:[%s2 + $0x150] sm:$0xf]
    %v196 = vld [vmem:[%s2 + $0x154] sm:$0xf]
    %v197 = vld [vmem:[%s2 + $0x158] sm:$0xf]
    %v198 = vld [vmem:[%s2 + $0x15c] sm:$0xf]
    %v199 = vld [vmem:[%s2 + $0x160] sm:$0xf]
    %v200 = vld [vmem:[%s2 + $0x164] sm:$0xf]
    %v201 = vld [vmem:[%s2 + $0x168] sm:$0xf]
    %v202 = vld [vmem:[%s2 + $0x16c] sm:$0xf]
    %v203 = vld [vmem:[%s2 + $0x170] sm:$0xf]
    %v204 = vld [vmem:[%s2 + $0x174] sm:$0xf]
    %v205 = vld [vmem:[%s2 + $0x178] sm:$0xf]
    %v206 = vld [vmem:[%s2 + $0x17c] sm:$0xf]
    %v207 = vld [vmem:[%s2 + $0x180] sm:$0xf]
    %v208 = vld [vmem:[%s2 + $0x184] sm:$0xf]
    %v209 = vld [vmem:[%s2 + $0x188] sm:$0xf]
    %v210 = vld [vmem:[%s2 + $0x18c] sm:$0xf]
    %v211 = vld [vmem:[%s2 + $0x190] sm:$0xf]
    %v212 = vld [vmem:[%s2 + $0x194] sm:$0xf]
    %v213 = vld [vmem:[%s2 + $0x198] sm:$0xf]
    %v214 = vld [vmem:[%s2 + $0x19c] sm:$0xf]
    %v215 = vld [vmem:[%s2 + $0x1a0] sm:$0xf]
    %v216 = vld [vmem:[%s2 + $0x1a4] sm:$0xf]
    %v217 = vld [vmem:[%s2 + $0x1a8] sm:$0xf]
    %v218 = vld [vmem:[%s2 + $0x1ac] sm:$0xf]
    %v219 = vld [vmem:[%s2 + $0x1b0] sm:$0xf]
    %v220 = vld [vmem:[%s2 + $0x1b4] sm:$0xf]
    %v221 = vld [vmem:[%s2 + $0x1b8] sm:$0xf]
    %v222 = vld [vmem:[%s2 + $0x1bc] sm:$0xf]
    %v223 = vld [vmem:[%s2 + $0x1c0] sm:$0xf]
    %v224 = vld [vmem:[%s2 + $0x1c4] sm:$0xf]
    %v225 = vld [vmem:[%s2 + $0x1c8] sm:$0xf]
    %v226 = vld [vmem:[%s2 + $0x1cc] sm:$0xf]
    %v227 = vld [vmem:[%s2 + $0x1d0] sm:$0xf]
    %v228 = vld [vmem:[%s2 + $0x1d4] sm:$0xf]
    %v229 = vld [vmem:[%s2 + $0x1d8] sm:$0xf]
    %v230 = vld [vmem:[%s2 + $0x1dc] sm:$0xf]
    %v231 = vld [vmem:[%s2 + $0x1e0] sm:$0xf]
    %v232 = vld [vmem:[%s2 + $0x1e4] sm:$0xf]
    %v233 = vld [vmem:[%s2 + $0x1e8] sm:$0xf]
    %v234 = vld [vmem:[%s2 + $0x1ec] sm:$0xf]
    %v235 = vld [vmem:[%s2 + $0x1f0] sm:$0xf]
    %v236 = vld [vmem:[%s2 + $0x1f4] sm:$0xf]
    %v237 = vld [vmem:[%s2 + $0x1f8] sm:$0xf]
    %v238 = vld [vmem:[%s2 + $0x1fc] sm:$0xf]
    %v367 = vunpack.c.l.b16 %v111
    %v368 = vunpack.c.l.b16 %v112
    %v369 = vunpack.c.l.b16 %v113
    %v370 = vunpack.c.l.b16 %v114
    %v371 = vunpack.c.l.b16 %v115
    %v372 = vunpack.c.l.b16 %v116
    %v373 = vunpack.c.l.b16 %v117
    %v374 = vunpack.c.l.b16 %v118
    %v375 = vunpack.c.l.b16 %v119
    %v376 = vunpack.c.l.b16 %v120
    %v377 = vunpack.c.l.b16 %v121
    %v378 = vunpack.c.l.b16 %v122
    %v379 = vunpack.c.l.b16 %v123
    %v380 = vunpack.c.l.b16 %v124
    %v381 = vunpack.c.l.b16 %v125
    %v382 = vunpack.c.l.b16 %v126
    %v383 = vunpack.c.l.b16 %v127
    %v384 = vunpack.c.l.b16 %v128
    %v385 = vunpack.c.l.b16 %v129
    %v386 = vunpack.c.l.b16 %v130
    %v387 = vunpack.c.l.b16 %v131
    %v388 = vunpack.c.l.b16 %v132
    %v389 = vunpack.c.l.b16 %v133
    %v390 = vunpack.c.l.b16 %v134
    %v391 = vunpack.c.l.b16 %v135
    %v392 = vunpack.c.l.b16 %v136
    %v393 = vunpack.c.l.b16 %v137
    %v394 = vunpack.c.l.b16 %v138
    %v395 = vunpack.c.l.b16 %v139
    %v396 = vunpack.c.l.b16 %v140
    %v397 = vunpack.c.l.b16 %v141
    %v398 = vunpack.c.l.b16 %v142
    %v399 = vunpack.c.l.b16 %v143
    %v400 = vunpack.c.l.b16 %v144
    %v401 = vunpack.c.l.b16 %v145
    %v402 = vunpack.c.l.b16 %v146
    %v403 = vunpack.c.l.b16 %v147
    %v404 = vunpack.c.l.b16 %v148
    %v405 = vunpack.c.l.b16 %v149
    %v406 = vunpack.c.l.b16 %v150
    %v407 = vunpack.c.l.b16 %v151
    %v408 = vunpack.c.l.b16 %v152
    %v409 = vunpack.c.l.b16 %v153
    %v410 = vunpack.c.l.b16 %v154
    %v411 = vunpack.c.l.b16 %v155
    %v412 = vunpack.c.l.b16 %v156
    %v413 = vunpack.c.l.b16 %v157
    %v414 = vunpack.c.l.b16 %v158
    %v415 = vunpack.c.l.b16 %v159
    %v416 = vunpack.c.l.b16 %v160
    %v417 = vunpack.c.l.b16 %v161
    %v418 = vunpack.c.l.b16 %v162
    %v419 = vunpack.c.l.b16 %v163
    %v420 = vunpack.c.l.b16 %v164
    %v421 = vunpack.c.l.b16 %v165
    %v422 = vunpack.c.l.b16 %v166
    %v423 = vunpack.c.l.b16 %v167
    %v424 = vunpack.c.l.b16 %v168
    %v425 = vunpack.c.l.b16 %v169
    %v426 = vunpack.c.l.b16 %v170
    %v427 = vunpack.c.l.b16 %v171
    %v428 = vunpack.c.l.b16 %v172
    %v429 = vunpack.c.l.b16 %v173
    %v430 = vunpack.c.l.b16 %v174
    %v431 = vunpack.c.l.b16 %v175
    %v432 = vunpack.c.l.b16 %v176
    %v433 = vunpack.c.l.b16 %v177
    %v434 = vunpack.c.l.b16 %v178
    %v435 = vunpack.c.l.b16 %v179
    %v436 = vunpack.c.l.b16 %v180
    %v437 = vunpack.c.l.b16 %v181
    %v438 = vunpack.c.l.b16 %v182
    %v439 = vunpack.c.l.b16 %v183
    %v440 = vunpack.c.l.b16 %v184
    %v441 = vunpack.c.l.b16 %v185
    %v442 = vunpack.c.l.b16 %v186
    %v443 = vunpack.c.l.b16 %v187
    %v444 = vunpack.c.l.b16 %v188
    %v445 = vunpack.c.l.b16 %v189
    %v446 = vunpack.c.l.b16 %v190
    %v447 = vunpack.c.l.b16 %v191
    %v448 = vunpack.c.l.b16 %v192
    %v449 = vunpack.c.l.b16 %v193
    %v450 = vunpack.c.l.b16 %v194
    %v451 = vunpack.c.l.b16 %v195
    %v452 = vunpack.c.l.b16 %v196
    %v453 = vunpack.c.l.b16 %v197
    %v454 = vunpack.c.l.b16 %v198
    %v455 = vunpack.c.l.b16 %v199
    %v456 = vunpack.c.l.b16 %v200
    %v457 = vunpack.c.l.b16 %v201
    %v458 = vunpack.c.l.b16 %v202
    %v459 = vunpack.c.l.b16 %v203
    %v460 = vunpack.c.l.b16 %v204
    %v461 = vunpack.c.l.b16 %v205
    %v462 = vunpack.c.l.b16 %v206
    %v463 = vunpack.c.l.b16 %v207
    %v464 = vunpack.c.l.b16 %v208
    %v465 = vunpack.c.l.b16 %v209
    %v466 = vunpack.c.l.b16 %v210
    %v467 = vunpack.c.l.b16 %v211
    %v468 = vunpack.c.l.b16 %v212
    %v469 = vunpack.c.l.b16 %v213
    %v470 = vunpack.c.l.b16 %v214
    %v471 = vunpack.c.l.b16 %v215
    %v472 = vunpack.c.l.b16 %v216
    %v473 = vunpack.c.l.b16 %v217
    %v474 = vunpack.c.l.b16 %v218
    %v475 = vunpack.c.l.b16 %v219
    %v476 = vunpack.c.l.b16 %v220
    %v477 = vunpack.c.l.b16 %v221
    %v478 = vunpack.c.l.b16 %v222
    %v479 = vunpack.c.l.b16 %v223
    %v480 = vunpack.c.l.b16 %v224
    %v481 = vunpack.c.l.b16 %v225
    %v482 = vunpack.c.l.b16 %v226
    %v483 = vunpack.c.l.b16 %v227
    %v484 = vunpack.c.l.b16 %v228
    %v485 = vunpack.c.l.b16 %v229
    %v486 = vunpack.c.l.b16 %v230
    %v487 = vunpack.c.l.b16 %v231
    %v488 = vunpack.c.l.b16 %v232
    %v489 = vunpack.c.l.b16 %v233
    %v490 = vunpack.c.l.b16 %v234
    %v491 = vunpack.c.l.b16 %v235
    %v492 = vunpack.c.l.b16 %v236
    %v493 = vunpack.c.l.b16 %v237
    %v494 = vunpack.c.l.b16 %v238
    %v495 = vpack.c.b16 %v368, %v367
    %v496 = vpack.c.b16 %v370, %v369
    %v497 = vpack.c.b16 %v372, %v371
    %v498 = vpack.c.b16 %v374, %v373
    %v499 = vpack.c.b16 %v376, %v375
    %v500 = vpack.c.b16 %v378, %v377
    %v501 = vpack.c.b16 %v380, %v379
    %v502 = vpack.c.b16 %v382, %v381
    %v503 = vpack.c.b16 %v384, %v383
    %v504 = vpack.c.b16 %v386, %v385
    %v505 = vpack.c.b16 %v388, %v387
    %v506 = vpack.c.b16 %v390, %v389
    %v507 = vpack.c.b16 %v392, %v391
    %v508 = vpack.c.b16 %v394, %v393
    %v509 = vpack.c.b16 %v396, %v395
    %v510 = vpack.c.b16 %v398, %v397
    %v511 = vpack.c.b16 %v400, %v399
    %v512 = vpack.c.b16 %v402, %v401
    %v513 = vpack.c.b16 %v404, %v403
    %v514 = vpack.c.b16 %v406, %v405
    %v515 = vpack.c.b16 %v408, %v407
    %v516 = vpack.c.b16 %v410, %v409
    %v517 = vpack.c.b16 %v412, %v411
    %v518 = vpack.c.b16 %v414, %v413
    %v519 = vpack.c.b16 %v416, %v415
    %v520 = vpack.c.b16 %v418, %v417
    %v521 = vpack.c.b16 %v420, %v419
    %v522 = vpack.c.b16 %v422, %v421
    %v523 = vpack.c.b16 %v424, %v423
    %v524 = vpack.c.b16 %v426, %v425
    %v525 = vpack.c.b16 %v428, %v427
    %v526 = vpack.c.b16 %v430, %v429
    %v527 = vpack.c.b16 %v432, %v431
    %v528 = vpack.c.b16 %v434, %v433
    %v529 = vpack.c.b16 %v436, %v435
    %v530 = vpack.c.b16 %v438, %v437
    %v531 = vpack.c.b16 %v440, %v439
    %v532 = vpack.c.b16 %v442, %v441
    %v533 = vpack.c.b16 %v444, %v443
    %v534 = vpack.c.b16 %v446, %v445
    %v535 = vpack.c.b16 %v448, %v447
    %v536 = vpack.c.b16 %v450, %v449
    %v537 = vpack.c.b16 %v452, %v451
    %v538 = vpack.c.b16 %v454, %v453
    %v539 = vpack.c.b16 %v456, %v455
    %v540 = vpack.c.b16 %v458, %v457
    %v541 = vpack.c.b16 %v460, %v459
    %v542 = vpack.c.b16 %v462, %v461
    %v543 = vpack.c.b16 %v464, %v463
    %v544 = vpack.c.b16 %v466, %v465
    %v545 = vpack.c.b16 %v468, %v467
    %v546 = vpack.c.b16 %v470, %v469
    %v547 = vpack.c.b16 %v472, %v471
    %v548 = vpack.c.b16 %v474, %v473
    %v549 = vpack.c.b16 %v476, %v475
    %v550 = vpack.c.b16 %v478, %v477
    %v551 = vpack.c.b16 %v480, %v479
    %v552 = vpack.c.b16 %v482, %v481
    %v553 = vpack.c.b16 %v484, %v483
    %v554 = vpack.c.b16 %v486, %v485
    %v555 = vpack.c.b16 %v488, %v487
    %v556 = vpack.c.b16 %v490, %v489
    %v557 = vpack.c.b16 %v492, %v491
    %v558 = vpack.c.b16 %v494, %v493
    %623 = vmatpush.bf16.msra.mxu0 %v502
    %624 = vmatpush.bf16.msra.mxu0 %v501
    %625 = vmatpush.bf16.msra.mxu0 %v500
    %626 = vmatpush.bf16.msra.mxu0 %v499
    %627 = vmatpush.bf16.msra.mxu0 %v498
    %628 = vmatpush.bf16.msra.mxu0 %v497
    %629 = vmatpush.bf16.msra.mxu0 %v496
    %630 = vmatpush.bf16.msra.mxu0 %v495
    %631 = vmatmul.bf16.gmra.mxu0 %v103
    %v632 = vpop.f32.mrf.mxu0
    %v633 = vadd.f32 0.0, %v632
    %v634 = vpop.f32.mrf.mxu0
    %635 = vdwg.mxu0
    %636 = vmatpush.bf16.msra.mxu0 %v510
    %637 = vmatpush.bf16.msra.mxu0 %v509
    %638 = vmatpush.bf16.msra.mxu0 %v508
    %639 = vmatpush.bf16.msra.mxu0 %v507
    %640 = vmatpush.bf16.msra.mxu0 %v506
    %641 = vmatpush.bf16.msra.mxu0 %v505
    %642 = vmatpush.bf16.msra.mxu0 %v504
    %643 = vmatpush.bf16.msra.mxu0 %v503
    %644 = vmatmul.bf16.gmra.mxu0 %v104
    %v645 = vpop.f32.mrf.mxu0
    %v646 = vadd.f32 %v633, %v645
    %v647 = vpop.f32.mrf.mxu0
    %648 = vdwg.mxu0
    %649 = vmatpush.bf16.msra.mxu0 %v518
    %650 = vmatpush.bf16.msra.mxu0 %v517
    %651 = vmatpush.bf16.msra.mxu0 %v516
    %652 = vmatpush.bf16.msra.mxu0 %v515
    %653 = vmatpush.bf16.msra.mxu0 %v514
    %654 = vmatpush.bf16.msra.mxu0 %v513
    %655 = vmatpush.bf16.msra.mxu0 %v512
    %656 = vmatpush.bf16.msra.mxu0 %v511
    %657 = vmatmul.bf16.gmra.mxu0 %v105
    %v658 = vpop.f32.mrf.mxu0
    %v659 = vadd.f32 %v646, %v658
    %v660 = vpop.f32.mrf.mxu0
    %661 = vdwg.mxu0
    %662 = vmatpush.bf16.msra.mxu0 %v526
    %663 = vmatpush.bf16.msra.mxu0 %v525
    %664 = vmatpush.bf16.msra.mxu0 %v524
    %665 = vmatpush.bf16.msra.mxu0 %v523
    %666 = vmatpush.bf16.msra.mxu0 %v522
    %667 = vmatpush.bf16.msra.mxu0 %v521
    %668 = vmatpush.bf16.msra.mxu0 %v520
    %669 = vmatpush.bf16.msra.mxu0 %v519
    %670 = vmatmul.bf16.gmra.mxu0 %v106
    %v671 = vpop.f32.mrf.mxu0
    %v672 = vadd.f32 %v659, %v671
    %v673 = vpop.f32.mrf.mxu0
    %674 = vdwg.mxu0
    %675 = vmatpush.bf16.msra.mxu0 %v534
    %676 = vmatpush.bf16.msra.mxu0 %v533
    %677 = vmatpush.bf16.msra.mxu0 %v532
    %678 = vmatpush.bf16.msra.mxu0 %v531
    %679 = vmatpush.bf16.msra.mxu0 %v530
    %680 = vmatpush.bf16.msra.mxu0 %v529
    %681 = vmatpush.bf16.msra.mxu0 %v528
    %682 = vmatpush.bf16.msra.mxu0 %v527
    %683 = vmatmul.bf16.gmra.mxu0 %v107
    %v684 = vpop.f32.mrf.mxu0
    %v685 = vadd.f32 %v672, %v684
    %v686 = vpop.f32.mrf.mxu0
    %687 = vdwg.mxu0
    %688 = vmatpush.bf16.msra.mxu0 %v542
    %689 = vmatpush.bf16.msra.mxu0 %v541
    %690 = vmatpush.bf16.msra.mxu0 %v540
    %691 = vmatpush.bf16.msra.mxu0 %v539
    %692 = vmatpush.bf16.msra.mxu0 %v538
    %693 = vmatpush.bf16.msra.mxu0 %v537
    %694 = vmatpush.bf16.msra.mxu0 %v536
    %695 = vmatpush.bf16.msra.mxu0 %v535
    %696 = vmatmul.bf16.gmra.mxu0 %v108
    %v697 = vpop.f32.mrf.mxu0
    %v698 = vadd.f32 %v685, %v697
    %v699 = vpop.f32.mrf.mxu0
    %700 = vdwg.mxu0
    %701 = vmatpush.bf16.msra.mxu0 %v550
    %702 = vmatpush.bf16.msra.mxu0 %v549
    %703 = vmatpush.bf16.msra.mxu0 %v548
    %704 = vmatpush.bf16.msra.mxu0 %v547
    %705 = vmatpush.bf16.msra.mxu0 %v546
    %706 = vmatpush.bf16.msra.mxu0 %v545
    %707 = vmatpush.bf16.msra.mxu0 %v544
    %708 = vmatpush.bf16.msra.mxu0 %v543
    %709 = vmatmul.bf16.gmra.mxu0 %v109
    %v710 = vpop.f32.mrf.mxu0
    %v711 = vadd.f32 %v698, %v710
    %v712 = vpop.f32.mrf.mxu0
    %713 = vdwg.mxu0
    %714 = vmatpush.bf16.msra.mxu0 %v558
    %715 = vmatpush.bf16.msra.mxu0 %v557
    %716 = vmatpush.bf16.msra.mxu0 %v556
    %717 = vmatpush.bf16.msra.mxu0 %v555
    %718 = vmatpush.bf16.msra.mxu0 %v554
    %719 = vmatpush.bf16.msra.mxu0 %v553
    %720 = vmatpush.bf16.msra.mxu0 %v552
    %721 = vmatpush.bf16.msra.mxu0 %v551
    %722 = vmatmul.bf16.gmra.mxu0 %v110
    %v723 = vpop.f32.mrf.mxu0
    %v724 = vadd.f32 %v711, %v723
    %v725 = vpop.f32.mrf.mxu0
    %726 = vdwg.mxu0
    %vm727 = vcmask 517120
    %728 = vst.msk [vmem:[#allocation2] sm:$0x3] %vm727, %v724
    // Predicated region
    $region18: #{forward.24} parent=1 // pred_check
      _
    $region19: #{forward.24} parent=1 // pred_check_branch
      %730 = sbr.rel (0) target = $region21
    $region20: #{forward.24} parent=1 // pred_region
      // Predicated region
      $region22: #{forward.24} parent=20 // pred_check
        _
      $region23: #{forward.24} parent=20 // pred_check_branch
        %732 = sbr.rel (0) target = $region25
      $region24: #{forward.24} parent=20 // pred_region
        // Predicated region
        $region26: #{forward.24} parent=24 // pred_check
          _
        $region27: #{forward.24} parent=24 // pred_check_branch
          %734 = sbr.rel target = $region29
        $region28: #{forward.24} parent=24 // pred_region
          // Predicated region
          $region41: #{forward.24} parent=28 // pred_check
            _
          $region42: #{forward.24} parent=28 // pred_check_branch
            %750 = sbr.rel (0) target = $region44
          $region43: #{forward.24} parent=28 // pred_region
            %s752 = ssub.s32 4, 1
            loop: start=0, step=1, limit=1
            $region45: #{forward.24} parent=43 // loop_pre_header
              _
            $region46: #{forward.24} parent=43 // loop_header
              %s754 = sphi 0, %s758
              %p755 = scmp.ge.s32.totalorder %s754, 1
              %s759 = sphi [#allocation2], [#allocation2]
              %s760 = sphi %s6, %s6
            $region47: #{forward.24} parent=43 // loop_header_branch
              %757 = sbr.rel (%p755) target = $region51
            $region48: #{forward.24} parent=43 // loop_body
              %v761 = vld [vmem:[%s759] sm:%s752]
              %762 = vst [vmem:[%s760] sm:%s752] %v761
            $region49: #{forward.24} parent=43 // loop_footer
              %s758 = sadd.s32 1, %s754
            $region50: #{forward.24} parent=43 // loop_footer_branch
              %753 = sbr.rel target = $region46
            $region51: #{forward.24} parent=43 // loop_exit
              _
          $region44: #{forward.24} parent=28 // pred_fallthru
            _
        $region29: #{forward.24} parent=24 // pred_fallthru
          _
        // Predicated region
        $region30: #{forward.24} parent=24 // pred_check
          _
        $region31: #{forward.24} parent=24 // pred_check_branch
          %736 = sbr.rel (0) target = $region33
        $region32: #{forward.24} parent=24 // pred_region
          %s738 = ssub.s32 4, 1
          loop: start=0, step=1, limit=1
          $region34: #{forward.24} parent=32 // loop_pre_header
            _
          $region35: #{forward.24} parent=32 // loop_header
            %s740 = sphi 0, %s744
            %p741 = scmp.ge.s32.totalorder %s740, 1
            %s745 = sphi [#allocation2], [#allocation2]
            %s746 = sphi %s6, %s6
          $region36: #{forward.24} parent=32 // loop_header_branch
            %743 = sbr.rel (%p741) target = $region40
          $region37: #{forward.24} parent=32 // loop_body
            %v747 = vld [vmem:[%s745] sm:%s738]
            %748 = vst [vmem:[%s746] sm:%s738] %v747
          $region38: #{forward.24} parent=32 // loop_footer
            %s744 = sadd.s32 1, %s740
          $region39: #{forward.24} parent=32 // loop_footer_branch
            %739 = sbr.rel target = $region35
          $region40: #{forward.24} parent=32 // loop_exit
            _
        $region33: #{forward.24} parent=24 // pred_fallthru
          _
      $region25: #{forward.24} parent=20 // pred_fallthru
        _
      %763 = vnop
    $region21: #{forward.24} parent=1 // pred_fallthru
      _
    // Predicated region
    $region52: #{forward.24} parent=1 // pred_check
      _
    $region53: #{forward.24} parent=1 // pred_check_branch
      %765 = sbr.rel (0) target = $region55
    $region54: #{forward.24} parent=1 // pred_region
      _
    $region55: #{forward.24} parent=1 // pred_fallthru
      _

// kernel: squeeze.23
$region0: #{squeeze.23}
  %s0 = inlined_call_operand.vmem [shape: f32[128], index: 0, kind: input, shape index: {}]
  %s1 = inlined_call_operand.vmem [shape: f32[2,2,32], index: 1, kind: output, shape index: {}]
  $region1: #{squeeze.23} parent=0
    #allocation0 [shape = 'u8[8192]{0}', space=vmem, size = 0x2000, scoped, tag = 'scoped mem for output reshape']
    #allocation1 [shape = 'u8[4096]{0}', space=vmem, size = 0x1000, scoped, tag = 'scoped mem for input reshape']
    %s3 = ssub.s32 2, 1
    %v4 = vld [vmem:[%s0] sm:%s3]
    %5 = vst [vmem:[#allocation1] sm:%s3] %v4
    %v6 = vld [vmem:[#allocation1] sm:$0x1]
    %vm7 = vcmask 261120
    %8 = vst.msk [vmem:[#allocation0] sm:$0x1] %vm7, %v6
    %v9 = vld [vmem:[#allocation1] sm:$0x1]
    %10 = vrot.lane.b32.xlu0 %v9, 96
    %v11 = vpop.permute.xlu0 %10
    %vm12 = vcmask 261120
    %s13 = scalar_lea.vmem [#allocation0], 1
    %14 = vst.msk [vmem:[%s13] sm:$0x1] %vm12, %v11
    %v15 = vld [vmem:[#allocation1] sm:$0x1]
    %16 = vrot.lane.b32.xlu0 %v15, 64
    %v17 = vpop.permute.xlu0 %16
    %vm18 = vcmask 261120
    %s19 = scalar_lea.vmem [#allocation0], 8
    %20 = vst.msk [vmem:[%s19] sm:$0x1] %vm18, %v17
    %v21 = vld [vmem:[#allocation1] sm:$0x1]
    %22 = vrot.lane.b32.xlu0 %v21, 32
    %v23 = vpop.permute.xlu0 %22
    %vm24 = vcmask 261120
    %s25 = scalar_lea.vmem [#allocation0], 9
    %26 = vst.msk [vmem:[%s25] sm:$0x1] %vm24, %v23
    %s28 = ssub.s32 4, 1
    %v29 = vld [vmem:[#allocation0] sm:%s28]
    %s31 = ssub.s32 4, 1
    %32 = vst [vmem:[%s1] sm:%s31] %v29
    %s33 = scalar_lea.vmem [#allocation0], 8
    %v34 = vld [vmem:[%s33] sm:%s28]
    %s36 = ssub.s32 4, 1
    %s37 = scalar_lea.vmem %s1, 2
    %38 = vst [vmem:[%s37] sm:%s36] %v34

// kernel: tile.118
$region0: #{tile.118}
  #allocation0 [shape = 's32[1]{0}', space=sflag, size = 0x4, scoped, tag = 'scoped memory for tile.118']
  %s0 = inlined_call_operand.vmem [shape: f32[64], index: 0, kind: input, shape index: {}]
  %s1 = inlined_call_operand.vmem [shape: f32[9,64], index: 1, kind: output, shape index: {}]
  // Predicated region
  $region2: #{tile.118} parent=0 // pred_check
    _
  $region3: #{tile.118} parent=0 // pred_check_branch
    %3 = sbr.rel (0) target = $region5
  $region4: #{tile.118} parent=0 // pred_region
    _
  $region5: #{tile.118} parent=0 // pred_fallthru
    _
  %v4 = vld [vmem:[%s0] ss:$0 sm:$0xff]
  %5 = vst [vmem:[%s1] sm:$0xff] %v4
  %s6 = scalar_lea.vmem %s1, 8
  %7 = vst [vmem:[%s6] sm:$0xff] %v4

// kernel: tile.119
$region0: #{tile.119}
  %s0 = inlined_call_operand.vmem [shape: f32[9,64], index: 0, kind: input, shape index: {}]
  %s1 = inlined_call_operand.vmem [shape: f32[1,576], index: 1, kind: output, shape index: {}]
  $region1: #{tile.119} parent=0
    #allocation0 [shape = 'u8[20480]{0}', space=vmem, size = 0x5000, scoped, tag = 'scoped mem for output reshape']
    %v2 = vld [vmem:[%s0] ss:$2 sm:$0x1f]
    %vm3 = vcmask 523264
    %4 = vst.msk [vmem:[#allocation0] ss:$8 sm:$0xf] %vm3, %v2
    %s5 = scalar_lea.vmem [#allocation0], 28
    %6 = vst.msk [vmem:[%s5] sm:$0x10] %vm3, %v2
    %s7 = scalar_lea.vmem %s0, 1
    %v8 = vld [vmem:[%s7] ss:$2 sm:$0xf]
    %9 = vrot.lane.b32.xlu0 %v8, 64
    %v10 = vpop.permute.xlu0 %9
    %vm11 = vcmask 1048064
    %12 = vst.msk [vmem:[#allocation0] ss:$8 sm:$0xf] %vm11, %v10
    %s14 = ssub.s32 2, 1
    %v15 = vld [vmem:[#allocation0] sm:%s14]
    %s17 = ssub.s32 2, 1
    %18 = vst [vmem:[%s1] sm:%s17] %v15
    %s19 = scalar_lea.vmem [#allocation0], 8
    %v20 = vld [vmem:[%s19] sm:%s14]
    %s22 = ssub.s32 2, 1
    %s23 = scalar_lea.vmem %s1, 1
    %24 = vst [vmem:[%s23] sm:%s22] %v20
    %s25 = scalar_lea.vmem [#allocation0], 16
    %v26 = vld [vmem:[%s25] sm:%s14]
    %s28 = ssub.s32 2, 1
    %s29 = scalar_lea.vmem %s1, 2
    %30 = vst [vmem:[%s29] sm:%s28] %v26
    %s31 = scalar_lea.vmem [#allocation0], 24
    %v32 = vld [vmem:[%s31] sm:%s14]
    %s34 = ssub.s32 2, 1
    %s35 = scalar_lea.vmem %s1, 3
    %36 = vst [vmem:[%s35] sm:%s34] %v32
    %s37 = scalar_lea.vmem [#allocation0], 32
    %v38 = vld [vmem:[%s37] sm:%s14]
    %s40 = ssub.s32 2, 1
    %s41 = scalar_lea.vmem %s1, 4
    %42 = vst [vmem:[%s41] sm:%s40] %v38

// kernel: forward.19
$region0: #{forward.19}
  #allocation0 [shape = 'u32[]', space=smem, size = 0x4, offset = 0x4, fixed_abs, tag = 'smem constant byte address 0x4 - core index']
  #allocation1 [shape = 'u32[72,128]{1,0:T(1,128)}', space=vmem, size = 0x9000, scoped, tag = 'internal scratch']
  %s0 = inlined_call_operand.vmem [shape: f32[8,1152], index: 0, kind: input, shape index: {}]
  %s1 = inlined_call_operand.vmem [shape: bf16[1152,128], index: 1, kind: input, shape index: {}]
  %s2 = inlined_call_operand.vmem [shape: f32[1,1152], index: 2, kind: input, shape index: {}]
  %s3 = inlined_call_operand.vmem [shape: f32[1,1152], index: 3, kind: input, shape index: {}]
  %s4 = inlined_call_operand.vmem [shape: f32[8,128], index: 4, kind: output, shape index: {0}]
  %s5 = inlined_call_operand.vmem [shape: f32[1,128], index: 5, kind: output, shape index: {1}]
  %s6 = inlined_call_operand.vmem [shape: f32[1,128], index: 6, kind: output, shape index: {2}]
  %7 = xla_tuple %s4, %s5, %s6
  %s8 = sld [smem:[#allocation0]]
  $region42: #{forward.19} parent=0
    _
  %s10 = ssub.s32 1, %s8
  %s11 = scalar_select 0, %s10, %s8
  // Predicated region
  $region2: #{forward.19} parent=0 // pred_check
    _
  $region3: #{forward.19} parent=0 // pred_check_branch
    %13 = sbr.rel (0) target = $region5
  $region4: #{forward.19} parent=0 // pred_region
    _
  $region5: #{forward.19} parent=0 // pred_fallthru
    _
  // Predicated region
  $region6: #{forward.19} parent=0 // pred_check
    _
  $region7: #{forward.19} parent=0 // pred_check_branch
    %15 = sbr.rel (0) target = $region9
  $region8: #{forward.19} parent=0 // pred_region
    _
  $region9: #{forward.19} parent=0 // pred_fallthru
    _
  // Predicated region
  $region10: #{forward.19} parent=0 // pred_check
    _
  $region11: #{forward.19} parent=0 // pred_check_branch
    %17 = sbr.rel (0) target = $region13
  $region12: #{forward.19} parent=0 // pred_region
    _
  $region13: #{forward.19} parent=0 // pred_fallthru
    _
  // Predicated region
  $region14: #{forward.19} parent=0 // pred_check
    _
  $region15: #{forward.19} parent=0 // pred_check_branch
    %19 = sbr.rel (0) target = $region17
  $region16: #{forward.19} parent=0 // pred_region
    _
  $region17: #{forward.19} parent=0 // pred_fallthru
    _
  %v20 = vld [vmem:[%s0] sm:$0xff]
  %v21 = vld [vmem:[%s0 + $0x8] sm:$0xff]
  %v22 = vld [vmem:[%s0 + $0x10] sm:$0xff]
  %v23 = vld [vmem:[%s0 + $0x18] sm:$0xff]
  %v24 = vld [vmem:[%s0 + $0x20] sm:$0xff]
  %v25 = vld [vmem:[%s0 + $0x28] sm:$0xff]
  %v26 = vld [vmem:[%s0 + $0x30] sm:$0xff]
  %v27 = vld [vmem:[%s0 + $0x38] sm:$0xff]
  %v28 = vld [vmem:[%s0 + $0x40] sm:$0xff]
  %v29 = vld [vmem:[%s2] sm:$0xff]
  %v30 = vld [vmem:[%s2 + $0x8] sm:$0x1]
  %v33 = vperm.slane %v29, 0
  %v34 = vperm.slane %v29, 1
  %v35 = vperm.slane %v29, 2
  %v36 = vperm.slane %v29, 3
  %v37 = vperm.slane %v29, 4
  %v38 = vperm.slane %v29, 5
  %v39 = vperm.slane %v29, 6
  %v40 = vperm.slane %v29, 7
  %v41 = vperm.slane %v30, 0
  %v51 = vmul.f32 %v20, %v33
  %v52 = vmul.f32 %v21, %v34
  %v53 = vmul.f32 %v22, %v35
  %v54 = vmul.f32 %v23, %v36
  %v55 = vmul.f32 %v24, %v37
  %v56 = vmul.f32 %v25, %v38
  %v57 = vmul.f32 %v26, %v39
  %v58 = vmul.f32 %v27, %v40
  %v59 = vmul.f32 %v28, %v41
  %v60 = vld [vmem:[%s3] sm:$0xff]
  %v61 = vld [vmem:[%s3 + $0x8] sm:$0x1]
  %v64 = vperm.slane %v60, 0
  %v65 = vperm.slane %v60, 1
  %v66 = vperm.slane %v60, 2
  %v67 = vperm.slane %v60, 3
  %v68 = vperm.slane %v60, 4
  %v69 = vperm.slane %v60, 5
  %v70 = vperm.slane %v60, 6
  %v71 = vperm.slane %v60, 7
  %v72 = vperm.slane %v61, 0
  %v82 = vadd.f32 %v51, %v64
  %v83 = vadd.f32 %v52, %v65
  %v84 = vadd.f32 %v53, %v66
  %v85 = vadd.f32 %v54, %v67
  %v86 = vadd.f32 %v55, %v68
  %v87 = vadd.f32 %v56, %v69
  %v88 = vadd.f32 %v57, %v70
  %v89 = vadd.f32 %v58, %v71
  %v90 = vadd.f32 %v59, %v72
  %v91 = vmax.f32 %v82, 0.0
  %v92 = vmax.f32 %v83, 0.0
  %v93 = vmax.f32 %v84, 0.0
  %v94 = vmax.f32 %v85, 0.0
  %v95 = vmax.f32 %v86, 0.0
  %v96 = vmax.f32 %v87, 0.0
  %v97 = vmax.f32 %v88, 0.0
  %v98 = vmax.f32 %v89, 0.0
  %v99 = vmax.f32 %v90, 0.0
  %v100 = vpack.c.bf16 %v91, %v91
  %v101 = vpack.c.bf16 %v92, %v92
  %v102 = vpack.c.bf16 %v93, %v93
  %v103 = vpack.c.bf16 %v94, %v94
  %v104 = vpack.c.bf16 %v95, %v95
  %v105 = vpack.c.bf16 %v96, %v96
  %v106 = vpack.c.bf16 %v97, %v97
  %v107 = vpack.c.bf16 %v98, %v98
  %v108 = vpack.c.bf16 %v99, %v99
  %v109 = vld [vmem:[%s1] sm:$0xf]
  %v110 = vld [vmem:[%s1 + $0x4] sm:$0xf]
  %v111 = vld [vmem:[%s1 + $0x8] sm:$0xf]
  %v112 = vld [vmem:[%s1 + $0xc] sm:$0xf]
  %v113 = vld [vmem:[%s1 + $0x10] sm:$0xf]
  %v114 = vld [vmem:[%s1 + $0x14] sm:$0xf]
  %v115 = vld [vmem:[%s1 + $0x18] sm:$0xf]
  %v116 = vld [vmem:[%s1 + $0x1c] sm:$0xf]
  %v117 = vld [vmem:[%s1 + $0x20] sm:$0xf]
  %v118 = vld [vmem:[%s1 + $0x24] sm:$0xf]
  %v119 = vld [vmem:[%s1 + $0x28] sm:$0xf]
  %v120 = vld [vmem:[%s1 + $0x2c] sm:$0xf]
  %v121 = vld [vmem:[%s1 + $0x30] sm:$0xf]
  %v122 = vld [vmem:[%s1 + $0x34] sm:$0xf]
  %v123 = vld [vmem:[%s1 + $0x38] sm:$0xf]
  %v124 = vld [vmem:[%s1 + $0x3c] sm:$0xf]
  %v125 = vld [vmem:[%s1 + $0x40] sm:$0xf]
  %v126 = vld [vmem:[%s1 + $0x44] sm:$0xf]
  %v127 = vld [vmem:[%s1 + $0x48] sm:$0xf]
  %v128 = vld [vmem:[%s1 + $0x4c] sm:$0xf]
  %v129 = vld [vmem:[%s1 + $0x50] sm:$0xf]
  %v130 = vld [vmem:[%s1 + $0x54] sm:$0xf]
  %v131 = vld [vmem:[%s1 + $0x58] sm:$0xf]
  %v132 = vld [vmem:[%s1 + $0x5c] sm:$0xf]
  %v133 = vld [vmem:[%s1 + $0x60] sm:$0xf]
  %v134 = vld [vmem:[%s1 + $0x64] sm:$0xf]
  %v135 = vld [vmem:[%s1 + $0x68] sm:$0xf]
  %v136 = vld [vmem:[%s1 + $0x6c] sm:$0xf]
  %v137 = vld [vmem:[%s1 + $0x70] sm:$0xf]
  %v138 = vld [vmem:[%s1 + $0x74] sm:$0xf]
  %v139 = vld [vmem:[%s1 + $0x78] sm:$0xf]
  %v140 = vld [vmem:[%s1 + $0x7c] sm:$0xf]
  %v141 = vld [vmem:[%s1 + $0x80] sm:$0xf]
  %v142 = vld [vmem:[%s1 + $0x84] sm:$0xf]
  %v143 = vld [vmem:[%s1 + $0x88] sm:$0xf]
  %v144 = vld [vmem:[%s1 + $0x8c] sm:$0xf]
  %v145 = vld [vmem:[%s1 + $0x90] sm:$0xf]
  %v146 = vld [vmem:[%s1 + $0x94] sm:$0xf]
  %v147 = vld [vmem:[%s1 + $0x98] sm:$0xf]
  %v148 = vld [vmem:[%s1 + $0x9c] sm:$0xf]
  %v149 = vld [vmem:[%s1 + $0xa0] sm:$0xf]
  %v150 = vld [vmem:[%s1 + $0xa4] sm:$0xf]
  %v151 = vld [vmem:[%s1 + $0xa8] sm:$0xf]
  %v152 = vld [vmem:[%s1 + $0xac] sm:$0xf]
  %v153 = vld [vmem:[%s1 + $0xb0] sm:$0xf]
  %v154 = vld [vmem:[%s1 + $0xb4] sm:$0xf]
  %v155 = vld [vmem:[%s1 + $0xb8] sm:$0xf]
  %v156 = vld [vmem:[%s1 + $0xbc] sm:$0xf]
  %v157 = vld [vmem:[%s1 + $0xc0] sm:$0xf]
  %v158 = vld [vmem:[%s1 + $0xc4] sm:$0xf]
  %v159 = vld [vmem:[%s1 + $0xc8] sm:$0xf]
  %v160 = vld [vmem:[%s1 + $0xcc] sm:$0xf]
  %v161 = vld [vmem:[%s1 + $0xd0] sm:$0xf]
  %v162 = vld [vmem:[%s1 + $0xd4] sm:$0xf]
  %v163 = vld [vmem:[%s1 + $0xd8] sm:$0xf]
  %v164 = vld [vmem:[%s1 + $0xdc] sm:$0xf]
  %v165 = vld [vmem:[%s1 + $0xe0] sm:$0xf]
  %v166 = vld [vmem:[%s1 + $0xe4] sm:$0xf]
  %v167 = vld [vmem:[%s1 + $0xe8] sm:$0xf]
  %v168 = vld [vmem:[%s1 + $0xec] sm:$0xf]
  %v169 = vld [vmem:[%s1 + $0xf0] sm:$0xf]
  %v170 = vld [vmem:[%s1 + $0xf4] sm:$0xf]
  %v171 = vld [vmem:[%s1 + $0xf8] sm:$0xf]
  %v172 = vld [vmem:[%s1 + $0xfc] sm:$0xf]
  %v173 = vld [vmem:[%s1 + $0x100] sm:$0xf]
  %v174 = vld [vmem:[%s1 + $0x104] sm:$0xf]
  %v175 = vld [vmem:[%s1 + $0x108] sm:$0xf]
  %v176 = vld [vmem:[%s1 + $0x10c] sm:$0xf]
  %v177 = vld [vmem:[%s1 + $0x110] sm:$0xf]
  %v178 = vld [vmem:[%s1 + $0x114] sm:$0xf]
  %v179 = vld [vmem:[%s1 + $0x118] sm:$0xf]
  %v180 = vld [vmem:[%s1 + $0x11c] sm:$0xf]
  %v181 = vld [vmem:[%s1 + $0x120] sm:$0xf]
  %v182 = vld [vmem:[%s1 + $0x124] sm:$0xf]
  %v183 = vld [vmem:[%s1 + $0x128] sm:$0xf]
  %v184 = vld [vmem:[%s1 + $0x12c] sm:$0xf]
  %v185 = vld [vmem:[%s1 + $0x130] sm:$0xf]
  %v186 = vld [vmem:[%s1 + $0x134] sm:$0xf]
  %v187 = vld [vmem:[%s1 + $0x138] sm:$0xf]
  %v188 = vld [vmem:[%s1 + $0x13c] sm:$0xf]
  %v189 = vld [vmem:[%s1 + $0x140] sm:$0xf]
  %v190 = vld [vmem:[%s1 + $0x144] sm:$0xf]
  %v191 = vld [vmem:[%s1 + $0x148] sm:$0xf]
  %v192 = vld [vmem:[%s1 + $0x14c] sm:$0xf]
  %v193 = vld [vmem:[%s1 + $0x150] sm:$0xf]
  %v194 = vld [vmem:[%s1 + $0x154] sm:$0xf]
  %v195 = vld [vmem:[%s1 + $0x158] sm:$0xf]
  %v196 = vld [vmem:[%s1 + $0x15c] sm:$0xf]
  %v197 = vld [vmem:[%s1 + $0x160] sm:$0xf]
  %v198 = vld [vmem:[%s1 + $0x164] sm:$0xf]
  %v199 = vld [vmem:[%s1 + $0x168] sm:$0xf]
  %v200 = vld [vmem:[%s1 + $0x16c] sm:$0xf]
  %v201 = vld [vmem:[%s1 + $0x170] sm:$0xf]
  %v202 = vld [vmem:[%s1 + $0x174] sm:$0xf]
  %v203 = vld [vmem:[%s1 + $0x178] sm:$0xf]
  %v204 = vld [vmem:[%s1 + $0x17c] sm:$0xf]
  %v205 = vld [vmem:[%s1 + $0x180] sm:$0xf]
  %v206 = vld [vmem:[%s1 + $0x184] sm:$0xf]
  %v207 = vld [vmem:[%s1 + $0x188] sm:$0xf]
  %v208 = vld [vmem:[%s1 + $0x18c] sm:$0xf]
  %v209 = vld [vmem:[%s1 + $0x190] sm:$0xf]
  %v210 = vld [vmem:[%s1 + $0x194] sm:$0xf]
  %v211 = vld [vmem:[%s1 + $0x198] sm:$0xf]
  %v212 = vld [vmem:[%s1 + $0x19c] sm:$0xf]
  %v213 = vld [vmem:[%s1 + $0x1a0] sm:$0xf]
  %v214 = vld [vmem:[%s1 + $0x1a4] sm:$0xf]
  %v215 = vld [vmem:[%s1 + $0x1a8] sm:$0xf]
  %v216 = vld [vmem:[%s1 + $0x1ac] sm:$0xf]
  %v217 = vld [vmem:[%s1 + $0x1b0] sm:$0xf]
  %v218 = vld [vmem:[%s1 + $0x1b4] sm:$0xf]
  %v219 = vld [vmem:[%s1 + $0x1b8] sm:$0xf]
  %v220 = vld [vmem:[%s1 + $0x1bc] sm:$0xf]
  %v221 = vld [vmem:[%s1 + $0x1c0] sm:$0xf]
  %v222 = vld [vmem:[%s1 + $0x1c4] sm:$0xf]
  %v223 = vld [vmem:[%s1 + $0x1c8] sm:$0xf]
  %v224 = vld [vmem:[%s1 + $0x1cc] sm:$0xf]
  %v225 = vld [vmem:[%s1 + $0x1d0] sm:$0xf]
  %v226 = vld [vmem:[%s1 + $0x1d4] sm:$0xf]
  %v227 = vld [vmem:[%s1 + $0x1d8] sm:$0xf]
  %v228 = vld [vmem:[%s1 + $0x1dc] sm:$0xf]
  %v229 = vld [vmem:[%s1 + $0x1e0] sm:$0xf]
  %v230 = vld [vmem:[%s1 + $0x1e4] sm:$0xf]
  %v231 = vld [vmem:[%s1 + $0x1e8] sm:$0xf]
  %v232 = vld [vmem:[%s1 + $0x1ec] sm:$0xf]
  %v233 = vld [vmem:[%s1 + $0x1f0] sm:$0xf]
  %v234 = vld [vmem:[%s1 + $0x1f4] sm:$0xf]
  %v235 = vld [vmem:[%s1 + $0x1f8] sm:$0xf]
  %v236 = vld [vmem:[%s1 + $0x1fc] sm:$0xf]
  %v237 = vld [vmem:[%s1 + $0x200] sm:$0xf]
  %v238 = vld [vmem:[%s1 + $0x204] sm:$0xf]
  %v239 = vld [vmem:[%s1 + $0x208] sm:$0xf]
  %v240 = vld [vmem:[%s1 + $0x20c] sm:$0xf]
  %v241 = vld [vmem:[%s1 + $0x210] sm:$0xf]
  %v242 = vld [vmem:[%s1 + $0x214] sm:$0xf]
  %v243 = vld [vmem:[%s1 + $0x218] sm:$0xf]
  %v244 = vld [vmem:[%s1 + $0x21c] sm:$0xf]
  %v245 = vld [vmem:[%s1 + $0x220] sm:$0xf]
  %v246 = vld [vmem:[%s1 + $0x224] sm:$0xf]
  %v247 = vld [vmem:[%s1 + $0x228] sm:$0xf]
  %v248 = vld [vmem:[%s1 + $0x22c] sm:$0xf]
  %v249 = vld [vmem:[%s1 + $0x230] sm:$0xf]
  %v250 = vld [vmem:[%s1 + $0x234] sm:$0xf]
  %v251 = vld [vmem:[%s1 + $0x238] sm:$0xf]
  %v252 = vld [vmem:[%s1 + $0x23c] sm:$0xf]
  %v397 = vunpack.c.l.b16 %v109
  %v398 = vunpack.c.l.b16 %v110
  %v399 = vunpack.c.l.b16 %v111
  %v400 = vunpack.c.l.b16 %v112
  %v401 = vunpack.c.l.b16 %v113
  %v402 = vunpack.c.l.b16 %v114
  %v403 = vunpack.c.l.b16 %v115
  %v404 = vunpack.c.l.b16 %v116
  %v405 = vunpack.c.l.b16 %v117
  %v406 = vunpack.c.l.b16 %v118
  %v407 = vunpack.c.l.b16 %v119
  %v408 = vunpack.c.l.b16 %v120
  %v409 = vunpack.c.l.b16 %v121
  %v410 = vunpack.c.l.b16 %v122
  %v411 = vunpack.c.l.b16 %v123
  %v412 = vunpack.c.l.b16 %v124
  %v413 = vunpack.c.l.b16 %v125
  %v414 = vunpack.c.l.b16 %v126
  %v415 = vunpack.c.l.b16 %v127
  %v416 = vunpack.c.l.b16 %v128
  %v417 = vunpack.c.l.b16 %v129
  %v418 = vunpack.c.l.b16 %v130
  %v419 = vunpack.c.l.b16 %v131
  %v420 = vunpack.c.l.b16 %v132
  %v421 = vunpack.c.l.b16 %v133
  %v422 = vunpack.c.l.b16 %v134
  %v423 = vunpack.c.l.b16 %v135
  %v424 = vunpack.c.l.b16 %v136
  %v425 = vunpack.c.l.b16 %v137
  %v426 = vunpack.c.l.b16 %v138
  %v427 = vunpack.c.l.b16 %v139
  %v428 = vunpack.c.l.b16 %v140
  %v429 = vunpack.c.l.b16 %v141
  %v430 = vunpack.c.l.b16 %v142
  %v431 = vunpack.c.l.b16 %v143
  %v432 = vunpack.c.l.b16 %v144
  %v433 = vunpack.c.l.b16 %v145
  %v434 = vunpack.c.l.b16 %v146
  %v435 = vunpack.c.l.b16 %v147
  %v436 = vunpack.c.l.b16 %v148
  %v437 = vunpack.c.l.b16 %v149
  %v438 = vunpack.c.l.b16 %v150
  %v439 = vunpack.c.l.b16 %v151
  %v440 = vunpack.c.l.b16 %v152
  %v441 = vunpack.c.l.b16 %v153
  %v442 = vunpack.c.l.b16 %v154
  %v443 = vunpack.c.l.b16 %v155
  %v444 = vunpack.c.l.b16 %v156
  %v445 = vunpack.c.l.b16 %v157
  %v446 = vunpack.c.l.b16 %v158
  %v447 = vunpack.c.l.b16 %v159
  %v448 = vunpack.c.l.b16 %v160
  %v449 = vunpack.c.l.b16 %v161
  %v450 = vunpack.c.l.b16 %v162
  %v451 = vunpack.c.l.b16 %v163
  %v452 = vunpack.c.l.b16 %v164
  %v453 = vunpack.c.l.b16 %v165
  %v454 = vunpack.c.l.b16 %v166
  %v455 = vunpack.c.l.b16 %v167
  %v456 = vunpack.c.l.b16 %v168
  %v457 = vunpack.c.l.b16 %v169
  %v458 = vunpack.c.l.b16 %v170
  %v459 = vunpack.c.l.b16 %v171
  %v460 = vunpack.c.l.b16 %v172
  %v461 = vunpack.c.l.b16 %v173
  %v462 = vunpack.c.l.b16 %v174
  %v463 = vunpack.c.l.b16 %v175
  %v464 = vunpack.c.l.b16 %v176
  %v465 = vunpack.c.l.b16 %v177
  %v466 = vunpack.c.l.b16 %v178
  %v467 = vunpack.c.l.b16 %v179
  %v468 = vunpack.c.l.b16 %v180
  %v469 = vunpack.c.l.b16 %v181
  %v470 = vunpack.c.l.b16 %v182
  %v471 = vunpack.c.l.b16 %v183
  %v472 = vunpack.c.l.b16 %v184
  %v473 = vunpack.c.l.b16 %v185
  %v474 = vunpack.c.l.b16 %v186
  %v475 = vunpack.c.l.b16 %v187
  %v476 = vunpack.c.l.b16 %v188
  %v477 = vunpack.c.l.b16 %v189
  %v478 = vunpack.c.l.b16 %v190
  %v479 = vunpack.c.l.b16 %v191
  %v480 = vunpack.c.l.b16 %v192
  %v481 = vunpack.c.l.b16 %v193
  %v482 = vunpack.c.l.b16 %v194
  %v483 = vunpack.c.l.b16 %v195
  %v484 = vunpack.c.l.b16 %v196
  %v485 = vunpack.c.l.b16 %v197
  %v486 = vunpack.c.l.b16 %v198
  %v487 = vunpack.c.l.b16 %v199
  %v488 = vunpack.c.l.b16 %v200
  %v489 = vunpack.c.l.b16 %v201
  %v490 = vunpack.c.l.b16 %v202
  %v491 = vunpack.c.l.b16 %v203
  %v492 = vunpack.c.l.b16 %v204
  %v493 = vunpack.c.l.b16 %v205
  %v494 = vunpack.c.l.b16 %v206
  %v495 = vunpack.c.l.b16 %v207
  %v496 = vunpack.c.l.b16 %v208
  %v497 = vunpack.c.l.b16 %v209
  %v498 = vunpack.c.l.b16 %v210
  %v499 = vunpack.c.l.b16 %v211
  %v500 = vunpack.c.l.b16 %v212
  %v501 = vunpack.c.l.b16 %v213
  %v502 = vunpack.c.l.b16 %v214
  %v503 = vunpack.c.l.b16 %v215
  %v504 = vunpack.c.l.b16 %v216
  %v505 = vunpack.c.l.b16 %v217
  %v506 = vunpack.c.l.b16 %v218
  %v507 = vunpack.c.l.b16 %v219
  %v508 = vunpack.c.l.b16 %v220
  %v509 = vunpack.c.l.b16 %v221
  %v510 = vunpack.c.l.b16 %v222
  %v511 = vunpack.c.l.b16 %v223
  %v512 = vunpack.c.l.b16 %v224
  %v513 = vunpack.c.l.b16 %v225
  %v514 = vunpack.c.l.b16 %v226
  %v515 = vunpack.c.l.b16 %v227
  %v516 = vunpack.c.l.b16 %v228
  %v517 = vunpack.c.l.b16 %v229
  %v518 = vunpack.c.l.b16 %v230
  %v519 = vunpack.c.l.b16 %v231
  %v520 = vunpack.c.l.b16 %v232
  %v521 = vunpack.c.l.b16 %v233
  %v522 = vunpack.c.l.b16 %v234
  %v523 = vunpack.c.l.b16 %v235
  %v524 = vunpack.c.l.b16 %v236
  %v525 = vunpack.c.l.b16 %v237
  %v526 = vunpack.c.l.b16 %v238
  %v527 = vunpack.c.l.b16 %v239
  %v528 = vunpack.c.l.b16 %v240
  %v529 = vunpack.c.l.b16 %v241
  %v530 = vunpack.c.l.b16 %v242
  %v531 = vunpack.c.l.b16 %v243
  %v532 = vunpack.c.l.b16 %v244
  %v533 = vunpack.c.l.b16 %v245
  %v534 = vunpack.c.l.b16 %v246
  %v535 = vunpack.c.l.b16 %v247
  %v536 = vunpack.c.l.b16 %v248
  %v537 = vunpack.c.l.b16 %v249
  %v538 = vunpack.c.l.b16 %v250
  %v539 = vunpack.c.l.b16 %v251
  %v540 = vunpack.c.l.b16 %v252
  %v541 = vpack.c.b16 %v398, %v397
  %v542 = vpack.c.b16 %v400, %v399
  %v543 = vpack.c.b16 %v402, %v401
  %v544 = vpack.c.b16 %v404, %v403
  %v545 = vpack.c.b16 %v406, %v405
  %v546 = vpack.c.b16 %v408, %v407
  %v547 = vpack.c.b16 %v410, %v409
  %v548 = vpack.c.b16 %v412, %v411
  %v549 = vpack.c.b16 %v414, %v413
  %v550 = vpack.c.b16 %v416, %v415
  %v551 = vpack.c.b16 %v418, %v417
  %v552 = vpack.c.b16 %v420, %v419
  %v553 = vpack.c.b16 %v422, %v421
  %v554 = vpack.c.b16 %v424, %v423
  %v555 = vpack.c.b16 %v426, %v425
  %v556 = vpack.c.b16 %v428, %v427
  %v557 = vpack.c.b16 %v430, %v429
  %v558 = vpack.c.b16 %v432, %v431
  %v559 = vpack.c.b16 %v434, %v433
  %v560 = vpack.c.b16 %v436, %v435
  %v561 = vpack.c.b16 %v438, %v437
  %v562 = vpack.c.b16 %v440, %v439
  %v563 = vpack.c.b16 %v442, %v441
  %v564 = vpack.c.b16 %v444, %v443
  %v565 = vpack.c.b16 %v446, %v445
  %v566 = vpack.c.b16 %v448, %v447
  %v567 = vpack.c.b16 %v450, %v449
  %v568 = vpack.c.b16 %v452, %v451
  %v569 = vpack.c.b16 %v454, %v453
  %v570 = vpack.c.b16 %v456, %v455
  %v571 = vpack.c.b16 %v458, %v457
  %v572 = vpack.c.b16 %v460, %v459
  %v573 = vpack.c.b16 %v462, %v461
  %v574 = vpack.c.b16 %v464, %v463
  %v575 = vpack.c.b16 %v466, %v465
  %v576 = vpack.c.b16 %v468, %v467
  %v577 = vpack.c.b16 %v470, %v469
  %v578 = vpack.c.b16 %v472, %v471
  %v579 = vpack.c.b16 %v474, %v473
  %v580 = vpack.c.b16 %v476, %v475
  %v581 = vpack.c.b16 %v478, %v477
  %v582 = vpack.c.b16 %v480, %v479
  %v583 = vpack.c.b16 %v482, %v481
  %v584 = vpack.c.b16 %v484, %v483
  %v585 = vpack.c.b16 %v486, %v485
  %v586 = vpack.c.b16 %v488, %v487
  %v587 = vpack.c.b16 %v490, %v489
  %v588 = vpack.c.b16 %v492, %v491
  %v589 = vpack.c.b16 %v494, %v493
  %v590 = vpack.c.b16 %v496, %v495
  %v591 = vpack.c.b16 %v498, %v497
  %v592 = vpack.c.b16 %v500, %v499
  %v593 = vpack.c.b16 %v502, %v501
  %v594 = vpack.c.b16 %v504, %v503
  %v595 = vpack.c.b16 %v506, %v505
  %v596 = vpack.c.b16 %v508, %v507
  %v597 = vpack.c.b16 %v510, %v509
  %v598 = vpack.c.b16 %v512, %v511
  %v599 = vpack.c.b16 %v514, %v513
  %v600 = vpack.c.b16 %v516, %v515
  %v601 = vpack.c.b16 %v518, %v517
  %v602 = vpack.c.b16 %v520, %v519
  %v603 = vpack.c.b16 %v522, %v521
  %v604 = vpack.c.b16 %v524, %v523
  %v605 = vpack.c.b16 %v526, %v525
  %v606 = vpack.c.b16 %v528, %v527
  %v607 = vpack.c.b16 %v530, %v529
  %v608 = vpack.c.b16 %v532, %v531
  %v609 = vpack.c.b16 %v534, %v533
  %v610 = vpack.c.b16 %v536, %v535
  %v611 = vpack.c.b16 %v538, %v537
  %v612 = vpack.c.b16 %v540, %v539
  %685 = vmatpush.bf16.msra.mxu0 %v548
  %686 = vmatpush.bf16.msra.mxu0 %v547
  %687 = vmatpush.bf16.msra.mxu0 %v546
  %688 = vmatpush.bf16.msra.mxu0 %v545
  %689 = vmatpush.bf16.msra.mxu0 %v544
  %690 = vmatpush.bf16.msra.mxu0 %v543
  %691 = vmatpush.bf16.msra.mxu0 %v542
  %692 = vmatpush.bf16.msra.mxu0 %v541
  %693 = vmatmul.bf16.gmra.mxu0 %v100
  %v694 = vpop.f32.mrf.mxu0
  %v695 = vadd.f32 0.0, %v694
  %v696 = vpop.f32.mrf.mxu0
  %697 = vdwg.mxu0
  %698 = vmatpush.bf16.msra.mxu0 %v556
  %699 = vmatpush.bf16.msra.mxu0 %v555
  %700 = vmatpush.bf16.msra.mxu0 %v554
  %701 = vmatpush.bf16.msra.mxu0 %v553
  %702 = vmatpush.bf16.msra.mxu0 %v552
  %703 = vmatpush.bf16.msra.mxu0 %v551
  %704 = vmatpush.bf16.msra.mxu0 %v550
  %705 = vmatpush.bf16.msra.mxu0 %v549
  %706 = vmatmul.bf16.gmra.mxu0 %v101
  %v707 = vpop.f32.mrf.mxu0
  %v708 = vadd.f32 %v695, %v707
  %v709 = vpop.f32.mrf.mxu0
  %710 = vdwg.mxu0
  %711 = vmatpush.bf16.msra.mxu0 %v564
  %712 = vmatpush.bf16.msra.mxu0 %v563
  %713 = vmatpush.bf16.msra.mxu0 %v562
  %714 = vmatpush.bf16.msra.mxu0 %v561
  %715 = vmatpush.bf16.msra.mxu0 %v560
  %716 = vmatpush.bf16.msra.mxu0 %v559
  %717 = vmatpush.bf16.msra.mxu0 %v558
  %718 = vmatpush.bf16.msra.mxu0 %v557
  %719 = vmatmul.bf16.gmra.mxu0 %v102
  %v720 = vpop.f32.mrf.mxu0
  %v721 = vadd.f32 %v708, %v720
  %v722 = vpop.f32.mrf.mxu0
  %723 = vdwg.mxu0
  %724 = vmatpush.bf16.msra.mxu0 %v572
  %725 = vmatpush.bf16.msra.mxu0 %v571
  %726 = vmatpush.bf16.msra.mxu0 %v570
  %727 = vmatpush.bf16.msra.mxu0 %v569
  %728 = vmatpush.bf16.msra.mxu0 %v568
  %729 = vmatpush.bf16.msra.mxu0 %v567
  %730 = vmatpush.bf16.msra.mxu0 %v566
  %731 = vmatpush.bf16.msra.mxu0 %v565
  %732 = vmatmul.bf16.gmra.mxu0 %v103
  %v733 = vpop.f32.mrf.mxu0
  %v734 = vadd.f32 %v721, %v733
  %v735 = vpop.f32.mrf.mxu0
  %736 = vdwg.mxu0
  %737 = vmatpush.bf16.msra.mxu0 %v580
  %738 = vmatpush.bf16.msra.mxu0 %v579
  %739 = vmatpush.bf16.msra.mxu0 %v578
  %740 = vmatpush.bf16.msra.mxu0 %v577
  %741 = vmatpush.bf16.msra.mxu0 %v576
  %742 = vmatpush.bf16.msra.mxu0 %v575
  %743 = vmatpush.bf16.msra.mxu0 %v574
  %744 = vmatpush.bf16.msra.mxu0 %v573
  %745 = vmatmul.bf16.gmra.mxu0 %v104
  %v746 = vpop.f32.mrf.mxu0
  %v747 = vadd.f32 %v734, %v746
  %v748 = vpop.f32.mrf.mxu0
  %749 = vdwg.mxu0
  %750 = vmatpush.bf16.msra.mxu0 %v588
  %751 = vmatpush.bf16.msra.mxu0 %v587
  %752 = vmatpush.bf16.msra.mxu0 %v586
  %753 = vmatpush.bf16.msra.mxu0 %v585
  %754 = vmatpush.bf16.msra.mxu0 %v584
  %755 = vmatpush.bf16.msra.mxu0 %v583
  %756 = vmatpush.bf16.msra.mxu0 %v582
  %757 = vmatpush.bf16.msra.mxu0 %v581
  %758 = vmatmul.bf16.gmra.mxu0 %v105
  %v759 = vpop.f32.mrf.mxu0
  %v760 = vadd.f32 %v747, %v759
  %v761 = vpop.f32.mrf.mxu0
  %762 = vdwg.mxu0
  %763 = vmatpush.bf16.msra.mxu0 %v596
  %764 = vmatpush.bf16.msra.mxu0 %v595
  %765 = vmatpush.bf16.msra.mxu0 %v594
  %766 = vmatpush.bf16.msra.mxu0 %v593
  %767 = vmatpush.bf16.msra.mxu0 %v592
  %768 = vmatpush.bf16.msra.mxu0 %v591
  %769 = vmatpush.bf16.msra.mxu0 %v590
  %770 = vmatpush.bf16.msra.mxu0 %v589
  %771 = vmatmul.bf16.gmra.mxu0 %v106
  %v772 = vpop.f32.mrf.mxu0
  %v773 = vadd.f32 %v760, %v772
  %v774 = vpop.f32.mrf.mxu0
  %775 = vdwg.mxu0
  %776 = vmatpush.bf16.msra.mxu0 %v604
  %777 = vmatpush.bf16.msra.mxu0 %v603
  %778 = vmatpush.bf16.msra.mxu0 %v602
  %779 = vmatpush.bf16.msra.mxu0 %v601
  %780 = vmatpush.bf16.msra.mxu0 %v600
  %781 = vmatpush.bf16.msra.mxu0 %v599
  %782 = vmatpush.bf16.msra.mxu0 %v598
  %783 = vmatpush.bf16.msra.mxu0 %v597
  %784 = vmatmul.bf16.gmra.mxu0 %v107
  %v785 = vpop.f32.mrf.mxu0
  %v786 = vadd.f32 %v773, %v785
  %v787 = vpop.f32.mrf.mxu0
  %788 = vdwg.mxu0
  %789 = vmatpush.bf16.msra.mxu0 %v612
  %790 = vmatpush.bf16.msra.mxu0 %v611
  %791 = vmatpush.bf16.msra.mxu0 %v610
  %792 = vmatpush.bf16.msra.mxu0 %v609
  %793 = vmatpush.bf16.msra.mxu0 %v608
  %794 = vmatpush.bf16.msra.mxu0 %v607
  %795 = vmatpush.bf16.msra.mxu0 %v606
  %796 = vmatpush.bf16.msra.mxu0 %v605
  %797 = vmatmul.bf16.gmra.mxu0 %v108
  %v798 = vpop.f32.mrf.mxu0
  %v799 = vadd.f32 %v786, %v798
  %v800 = vpop.f32.mrf.mxu0
  %801 = vdwg.mxu0
  %v802 = vrot.slane %v799, 4
  %v803 = vadd.f32 %v799, %v802
  %v804 = vrot.slane %v803, 2
  %v805 = vadd.f32 %v803, %v804
  %v806 = vrot.slane %v805, 1
  %v807 = vadd.f32 %v805, %v806
  %808 = vst [vmem:[%s5] sm:$0x1] %v807
  %v809 = vmul.f32 %v799, %v799
  %v810 = vrot.slane %v809, 4
  %v811 = vadd.f32 %v809, %v810
  %v812 = vrot.slane %v811, 2
  %v813 = vadd.f32 %v811, %v812
  %v814 = vrot.slane %v813, 1
  %v815 = vadd.f32 %v813, %v814
  %816 = vst [vmem:[%s6] sm:$0x1] %v815
  %817 = vst [vmem:[%s4] sm:$0xff] %v799
  // Predicated region
  $region18: #{forward.19} parent=0 // pred_check
    _
  $region19: #{forward.19} parent=0 // pred_check_branch
    %819 = sbr.rel (0) target = $region21
  $region20: #{forward.19} parent=0 // pred_region
    _
  $region21: #{forward.19} parent=0 // pred_fallthru
    _
  // Predicated region
  $region22: #{forward.19} parent=0 // pred_check
    _
  $region23: #{forward.19} parent=0 // pred_check_branch
    %821 = sbr.rel (0) target = $region25
  $region24: #{forward.19} parent=0 // pred_region
    _
  $region25: #{forward.19} parent=0 // pred_fallthru
    _
  // Predicated region
  $region26: #{forward.19} parent=0 // pred_check
    _
  $region27: #{forward.19} parent=0 // pred_check_branch
    %823 = sbr.rel (0) target = $region29
  $region28: #{forward.19} parent=0 // pred_region
    _
  $region29: #{forward.19} parent=0 // pred_fallthru
    _
  // Predicated region
  $region30: #{forward.19} parent=0 // pred_check
    _
  $region31: #{forward.19} parent=0 // pred_check_branch
    %825 = sbr.rel (0) target = $region33
  $region32: #{forward.19} parent=0 // pred_region
    _
  $region33: #{forward.19} parent=0 // pred_fallthru
    _
  // Predicated region
  $region34: #{forward.19} parent=0 // pred_check
    _
  $region35: #{forward.19} parent=0 // pred_check_branch
    %827 = sbr.rel (0) target = $region37
  $region36: #{forward.19} parent=0 // pred_region
    _
  $region37: #{forward.19} parent=0 // pred_fallthru
    _
  // Predicated region
  $region38: #{forward.19} parent=0 // pred_check
    _
  $region39: #{forward.19} parent=0 // pred_check_branch
    %829 = sbr.rel (0) target = $region41
  $region40: #{forward.19} parent=0 // pred_region
    _
  $region41: #{forward.19} parent=0 // pred_fallthru
    _

// kernel: squeeze.25
$region0: #{squeeze.25}
  %s0 = inlined_call_operand.vmem [shape: f32[64], index: 0, kind: input, shape index: {}]
  %s1 = inlined_call_operand.vmem [shape: f32[2,2,16], index: 1, kind: output, shape index: {}]
  $region1: #{squeeze.25} parent=0
    #allocation0 [shape = 'u8[8192]{0}', space=vmem, size = 0x2000, scoped, tag = 'scoped mem for output reshape']
    #allocation1 [shape = 'u8[4096]{0}', space=vmem, size = 0x1000, scoped, tag = 'scoped mem for input reshape']
    %s3 = ssub.s32 2, 1
    %v4 = vld [vmem:[%s0] sm:%s3]
    %5 = vst [vmem:[#allocation1] sm:%s3] %v4
    %v6 = vld [vmem:[#allocation1] sm:$0x1]
    %vm7 = vcmask 130048
    %8 = vst.msk [vmem:[#allocation0] sm:$0x1] %vm7, %v6
    %v9 = vld [vmem:[#allocation1] sm:$0x1]
    %10 = vrot.lane.b32.xlu0 %v9, 112
    %v11 = vpop.permute.xlu0 %10
    %vm12 = vcmask 130048
    %s13 = scalar_lea.vmem [#allocation0], 1
    %14 = vst.msk [vmem:[%s13] sm:$0x1] %vm12, %v11
    %v15 = vld [vmem:[#allocation1] sm:$0x1]
    %16 = vrot.lane.b32.xlu0 %v15, 96
    %v17 = vpop.permute.xlu0 %16
    %vm18 = vcmask 130048
    %s19 = scalar_lea.vmem [#allocation0], 8
    %20 = vst.msk [vmem:[%s19] sm:$0x1] %vm18, %v17
    %v21 = vld [vmem:[#allocation1] sm:$0x1]
    %22 = vrot.lane.b32.xlu0 %v21, 80
    %v23 = vpop.permute.xlu0 %22
    %vm24 = vcmask 130048
    %s25 = scalar_lea.vmem [#allocation0], 9
    %26 = vst.msk [vmem:[%s25] sm:$0x1] %vm24, %v23
    %s28 = ssub.s32 4, 1
    %v29 = vld [vmem:[#allocation0] sm:%s28]
    %s31 = ssub.s32 4, 1
    %32 = vst [vmem:[%s1] sm:%s31] %v29
    %s33 = scalar_lea.vmem [#allocation0], 8
    %v34 = vld [vmem:[%s33] sm:%s28]
    %s36 = ssub.s32 4, 1
    %s37 = scalar_lea.vmem %s1, 2
    %38 = vst [vmem:[%s37] sm:%s36] %v34

// kernel: tile.128
$region0: #{tile.128}
  #allocation0 [shape = 's32[1]{0}', space=sflag, size = 0x4, scoped, tag = 'scoped memory for tile.128']
  %s0 = inlined_call_operand.vmem [shape: f32[32], index: 0, kind: input, shape index: {}]
  %s1 = inlined_call_operand.vmem [shape: f32[9,32], index: 1, kind: output, shape index: {}]
  // Predicated region
  $region2: #{tile.128} parent=0 // pred_check
    _
  $region3: #{tile.128} parent=0 // pred_check_branch
    %3 = sbr.rel (0) target = $region5
  $region4: #{tile.128} parent=0 // pred_region
    _
  $region5: #{tile.128} parent=0 // pred_fallthru
    _
  %v4 = vld [vmem:[%s0] ss:$0 sm:$0xff]
  %5 = vst [vmem:[%s1] sm:$0xff] %v4
  %s6 = scalar_lea.vmem %s1, 8
  %7 = vst [vmem:[%s6] sm:$0xff] %v4

// kernel: tile.129
$region0: #{tile.129}
  %s0 = inlined_call_operand.vmem [shape: f32[9,32], index: 0, kind: input, shape index: {}]
  %s1 = inlined_call_operand.vmem [shape: f32[1,288], index: 1, kind: output, shape index: {}]
  $region1: #{tile.129} parent=0
    #allocation0 [shape = 'u8[12288]{0}', space=vmem, size = 0x3000, scoped, tag = 'scoped mem for output reshape']
    %v2 = vld [vmem:[%s0] ss:$4 sm:$0x7]
    %vm3 = vcmask 261120
    %4 = vst.msk [vmem:[#allocation0] ss:$8 sm:$0x7] %vm3, %v2
    %s5 = scalar_lea.vmem %s0, 3
    %s6 = smov 3
    %v7 = vld [vmem:[%s5] ss:$4 sm:%s6]
    %8 = vrot.lane.b32.xlu0 %v7, 96
    %v9 = vpop.permute.xlu0 %8
    %vm10 = vcmask 1048320
    %11 = vst.msk [vmem:[#allocation0] ss:$8 sm:$0x3] %vm10, %v9
    %s12 = scalar_lea.vmem %s0, 2
    %s13 = smov 3
    %v14 = vld [vmem:[%s12] ss:$4 sm:%s13]
    %15 = vrot.lane.b32.xlu0 %v14, 64
    %v16 = vpop.permute.xlu0 %15
    %vm17 = vcmask 785920
    %18 = vst.msk [vmem:[#allocation0] ss:$8 sm:$0x3] %vm17, %v16
    %s19 = scalar_lea.vmem %s0, 1
    %s20 = smov 3
    %v21 = vld [vmem:[%s19] ss:$4 sm:%s20]
    %22 = vrot.lane.b32.xlu0 %v21, 32
    %v23 = vpop.permute.xlu0 %22
    %vm24 = vcmask 523520
    %25 = vst.msk [vmem:[#allocation0] ss:$8 sm:$0x3] %vm24, %v23
    %s27 = ssub.s32 2, 1
    %v28 = vld [vmem:[#allocation0] sm:%s27]
    %s30 = ssub.s32 2, 1
    %31 = vst [vmem:[%s1] sm:%s30] %v28
    %s32 = scalar_lea.vmem [#allocation0], 8
    %v33 = vld [vmem:[%s32] sm:%s27]
    %s35 = ssub.s32 2, 1
    %s36 = scalar_lea.vmem %s1, 1
    %37 = vst [vmem:[%s36] sm:%s35] %v33
    %s38 = scalar_lea.vmem [#allocation0], 16
    %v39 = vld [vmem:[%s38] sm:%s27]
    %s41 = ssub.s32 2, 1
    %s42 = scalar_lea.vmem %s1, 2
    %43 = vst [vmem:[%s42] sm:%s41] %v39

// kernel: forward.20
$region0: #{forward.20}
  #allocation0 [shape = 'u32[]', space=smem, size = 0x4, offset = 0x4, fixed_abs, tag = 'smem constant byte address 0x4 - core index']
  #allocation1 [shape = 'u32[72,128]{1,0:T(1,128)}', space=vmem, size = 0x9000, scoped, tag = 'internal scratch']
  %s0 = inlined_call_operand.vmem [shape: f32[32,576], index: 0, kind: input, shape index: {}]
  %s1 = inlined_call_operand.vmem [shape: bf16[576,64], index: 1, kind: input, shape index: {}]
  %s2 = inlined_call_operand.vmem [shape: f32[1,576], index: 2, kind: input, shape index: {}]
  %s3 = inlined_call_operand.vmem [shape: f32[1,576], index: 3, kind: input, shape index: {}]
  %s4 = inlined_call_operand.vmem [shape: f32[32,64], index: 4, kind: output, shape index: {0}]
  %s5 = inlined_call_operand.vmem [shape: f32[1,64], index: 5, kind: output, shape index: {1}]
  %s6 = inlined_call_operand.vmem [shape: f32[1,64], index: 6, kind: output, shape index: {2}]
  %7 = xla_tuple %s4, %s5, %s6
  %s8 = sld [smem:[#allocation0]]
  $region42: #{forward.20} parent=0
    _
  %s10 = ssub.s32 1, %s8
  %s11 = scalar_select 0, %s10, %s8
  // Predicated region
  $region2: #{forward.20} parent=0 // pred_check
    _
  $region3: #{forward.20} parent=0 // pred_check_branch
    %13 = sbr.rel (0) target = $region5
  $region4: #{forward.20} parent=0 // pred_region
    _
  $region5: #{forward.20} parent=0 // pred_fallthru
    _
  // Predicated region
  $region6: #{forward.20} parent=0 // pred_check
    _
  $region7: #{forward.20} parent=0 // pred_check_branch
    %15 = sbr.rel (0) target = $region9
  $region8: #{forward.20} parent=0 // pred_region
    _
  $region9: #{forward.20} parent=0 // pred_fallthru
    _
  // Predicated region
  $region10: #{forward.20} parent=0 // pred_check
    _
  $region11: #{forward.20} parent=0 // pred_check_branch
    %17 = sbr.rel (0) target = $region13
  $region12: #{forward.20} parent=0 // pred_region
    _
  $region13: #{forward.20} parent=0 // pred_fallthru
    _
  // Predicated region
  $region14: #{forward.20} parent=0 // pred_check
    _
  $region15: #{forward.20} parent=0 // pred_check_branch
    %19 = sbr.rel (0) target = $region17
  $region16: #{forward.20} parent=0 // pred_region
    _
  $region17: #{forward.20} parent=0 // pred_fallthru
    _
  %v21 = vld [vmem:[%s0] sm:$0xff]
  %v22 = vld [vmem:[%s0 + $0x8] sm:$0xff]
  %v23 = vld [vmem:[%s0 + $0x10] sm:$0xff]
  %v24 = vld [vmem:[%s0 + $0x18] sm:$0xff]
  %v25 = vld [vmem:[%s0 + $0x20] sm:$0xff]
  %v26 = vld [vmem:[%s0 + $0x28] sm:$0xff]
  %v27 = vld [vmem:[%s0 + $0x30] sm:$0xff]
  %v28 = vld [vmem:[%s0 + $0x38] sm:$0xff]
  %v29 = vld [vmem:[%s0 + $0x40] sm:$0xff]
  %v30 = vld [vmem:[%s0 + $0x48] sm:$0xff]
  %v31 = vld [vmem:[%s0 + $0x50] sm:$0xff]
  %v32 = vld [vmem:[%s0 + $0x58] sm:$0xff]
  %v33 = vld [vmem:[%s0 + $0x60] sm:$0xff]
  %v34 = vld [vmem:[%s0 + $0x68] sm:$0xff]
  %v35 = vld [vmem:[%s0 + $0x70] sm:$0xff]
  %v36 = vld [vmem:[%s0 + $0x78] sm:$0xff]
  %v37 = vld [vmem:[%s0 + $0x80] sm:$0xff]
  %v38 = vld [vmem:[%s0 + $0x88] sm:$0xff]
  %v39 = vld [vmem:[%s0 + $0x90] sm:$0xff]
  %v40 = vld [vmem:[%s0 + $0x98] sm:$0xff]
  %v41 = vld [vmem:[%s2] sm:$0x1f]
  %v43 = vperm.slane %v41, 0
  %v44 = vperm.slane %v41, 1
  %v45 = vperm.slane %v41, 2
  %v46 = vperm.slane %v41, 3
  %v47 = vperm.slane %v41, 4
  %v53 = vmul.f32 %v21, %v43
  %v54 = vmul.f32 %v22, %v44
  %v55 = vmul.f32 %v23, %v45
  %v56 = vmul.f32 %v24, %v46
  %v57 = vmul.f32 %v25, %v47
  %v58 = vmul.f32 %v26, %v43
  %v59 = vmul.f32 %v27, %v44
  %v60 = vmul.f32 %v28, %v45
  %v61 = vmul.f32 %v29, %v46
  %v62 = vmul.f32 %v30, %v47
  %v63 = vmul.f32 %v31, %v43
  %v64 = vmul.f32 %v32, %v44
  %v65 = vmul.f32 %v33, %v45
  %v66 = vmul.f32 %v34, %v46
  %v67 = vmul.f32 %v35, %v47
  %v68 = vmul.f32 %v36, %v43
  %v69 = vmul.f32 %v37, %v44
  %v70 = vmul.f32 %v38, %v45
  %v71 = vmul.f32 %v39, %v46
  %v72 = vmul.f32 %v40, %v47
  %v73 = vld [vmem:[%s3] sm:$0x1f]
  %v75 = vperm.slane %v73, 0
  %v76 = vperm.slane %v73, 1
  %v77 = vperm.slane %v73, 2
  %v78 = vperm.slane %v73, 3
  %v79 = vperm.slane %v73, 4
  %v85 = vadd.f32 %v53, %v75
  %v86 = vadd.f32 %v54, %v76
  %v87 = vadd.f32 %v55, %v77
  %v88 = vadd.f32 %v56, %v78
  %v89 = vadd.f32 %v57, %v79
  %v90 = vadd.f32 %v58, %v75
  %v91 = vadd.f32 %v59, %v76
  %v92 = vadd.f32 %v60, %v77
  %v93 = vadd.f32 %v61, %v78
  %v94 = vadd.f32 %v62, %v79
  %v95 = vadd.f32 %v63, %v75
  %v96 = vadd.f32 %v64, %v76
  %v97 = vadd.f32 %v65, %v77
  %v98 = vadd.f32 %v66, %v78
  %v99 = vadd.f32 %v67, %v79
  %v100 = vadd.f32 %v68, %v75
  %v101 = vadd.f32 %v69, %v76
  %v102 = vadd.f32 %v70, %v77
  %v103 = vadd.f32 %v71, %v78
  %v104 = vadd.f32 %v72, %v79
  %v105 = vmax.f32 %v85, 0.0
  %v106 = vmax.f32 %v86, 0.0
  %v107 = vmax.f32 %v87, 0.0
  %v108 = vmax.f32 %v88, 0.0
  %v109 = vmax.f32 %v89, 0.0
  %v110 = vmax.f32 %v90, 0.0
  %v111 = vmax.f32 %v91, 0.0
  %v112 = vmax.f32 %v92, 0.0
  %v113 = vmax.f32 %v93, 0.0
  %v114 = vmax.f32 %v94, 0.0
  %v115 = vmax.f32 %v95, 0.0
  %v116 = vmax.f32 %v96, 0.0
  %v117 = vmax.f32 %v97, 0.0
  %v118 = vmax.f32 %v98, 0.0
  %v119 = vmax.f32 %v99, 0.0
  %v120 = vmax.f32 %v100, 0.0
  %v121 = vmax.f32 %v101, 0.0
  %v122 = vmax.f32 %v102, 0.0
  %v123 = vmax.f32 %v103, 0.0
  %v124 = vmax.f32 %v104, 0.0
  %v125 = vpack.c.bf16 %v110, %v105
  %v126 = vpack.c.bf16 %v111, %v106
  %v127 = vpack.c.bf16 %v112, %v107
  %v128 = vpack.c.bf16 %v113, %v108
  %v129 = vpack.c.bf16 %v114, %v109
  %v130 = vpack.c.bf16 %v120, %v115
  %v131 = vpack.c.bf16 %v121, %v116
  %v132 = vpack.c.bf16 %v122, %v117
  %v133 = vpack.c.bf16 %v123, %v118
  %v134 = vpack.c.bf16 %v124, %v119
  %v135 = vld [vmem:[%s1] sm:$0xf]
  %v136 = vld [vmem:[%s1 + $0x4] sm:$0xf]
  %v137 = vld [vmem:[%s1 + $0x8] sm:$0xf]
  %v138 = vld [vmem:[%s1 + $0xc] sm:$0xf]
  %v139 = vld [vmem:[%s1 + $0x10] sm:$0xf]
  %v140 = vld [vmem:[%s1 + $0x14] sm:$0xf]
  %v141 = vld [vmem:[%s1 + $0x18] sm:$0xf]
  %v142 = vld [vmem:[%s1 + $0x1c] sm:$0xf]
  %v143 = vld [vmem:[%s1 + $0x20] sm:$0xf]
  %v144 = vld [vmem:[%s1 + $0x24] sm:$0xf]
  %v145 = vld [vmem:[%s1 + $0x28] sm:$0xf]
  %v146 = vld [vmem:[%s1 + $0x2c] sm:$0xf]
  %v147 = vld [vmem:[%s1 + $0x30] sm:$0xf]
  %v148 = vld [vmem:[%s1 + $0x34] sm:$0xf]
  %v149 = vld [vmem:[%s1 + $0x38] sm:$0xf]
  %v150 = vld [vmem:[%s1 + $0x3c] sm:$0xf]
  %v151 = vld [vmem:[%s1 + $0x40] sm:$0xf]
  %v152 = vld [vmem:[%s1 + $0x44] sm:$0xf]
  %v153 = vld [vmem:[%s1 + $0x48] sm:$0xf]
  %v154 = vld [vmem:[%s1 + $0x4c] sm:$0xf]
  %v155 = vld [vmem:[%s1 + $0x50] sm:$0xf]
  %v156 = vld [vmem:[%s1 + $0x54] sm:$0xf]
  %v157 = vld [vmem:[%s1 + $0x58] sm:$0xf]
  %v158 = vld [vmem:[%s1 + $0x5c] sm:$0xf]
  %v159 = vld [vmem:[%s1 + $0x60] sm:$0xf]
  %v160 = vld [vmem:[%s1 + $0x64] sm:$0xf]
  %v161 = vld [vmem:[%s1 + $0x68] sm:$0xf]
  %v162 = vld [vmem:[%s1 + $0x6c] sm:$0xf]
  %v163 = vld [vmem:[%s1 + $0x70] sm:$0xf]
  %v164 = vld [vmem:[%s1 + $0x74] sm:$0xf]
  %v165 = vld [vmem:[%s1 + $0x78] sm:$0xf]
  %v166 = vld [vmem:[%s1 + $0x7c] sm:$0xf]
  %v167 = vld [vmem:[%s1 + $0x80] sm:$0xf]
  %v168 = vld [vmem:[%s1 + $0x84] sm:$0xf]
  %v169 = vld [vmem:[%s1 + $0x88] sm:$0xf]
  %v170 = vld [vmem:[%s1 + $0x8c] sm:$0xf]
  %v171 = vld [vmem:[%s1 + $0x90] sm:$0xf]
  %v172 = vld [vmem:[%s1 + $0x94] sm:$0xf]
  %v173 = vld [vmem:[%s1 + $0x98] sm:$0xf]
  %v174 = vld [vmem:[%s1 + $0x9c] sm:$0xf]
  %v175 = vld [vmem:[%s1 + $0xa0] sm:$0xf]
  %v176 = vld [vmem:[%s1 + $0xa4] sm:$0xf]
  %v177 = vld [vmem:[%s1 + $0xa8] sm:$0xf]
  %v178 = vld [vmem:[%s1 + $0xac] sm:$0xf]
  %v179 = vld [vmem:[%s1 + $0xb0] sm:$0xf]
  %v180 = vld [vmem:[%s1 + $0xb4] sm:$0xf]
  %v181 = vld [vmem:[%s1 + $0xb8] sm:$0xf]
  %v182 = vld [vmem:[%s1 + $0xbc] sm:$0xf]
  %v183 = vld [vmem:[%s1 + $0xc0] sm:$0xf]
  %v184 = vld [vmem:[%s1 + $0xc4] sm:$0xf]
  %v185 = vld [vmem:[%s1 + $0xc8] sm:$0xf]
  %v186 = vld [vmem:[%s1 + $0xcc] sm:$0xf]
  %v187 = vld [vmem:[%s1 + $0xd0] sm:$0xf]
  %v188 = vld [vmem:[%s1 + $0xd4] sm:$0xf]
  %v189 = vld [vmem:[%s1 + $0xd8] sm:$0xf]
  %v190 = vld [vmem:[%s1 + $0xdc] sm:$0xf]
  %v191 = vld [vmem:[%s1 + $0xe0] sm:$0xf]
  %v192 = vld [vmem:[%s1 + $0xe4] sm:$0xf]
  %v193 = vld [vmem:[%s1 + $0xe8] sm:$0xf]
  %v194 = vld [vmem:[%s1 + $0xec] sm:$0xf]
  %v195 = vld [vmem:[%s1 + $0xf0] sm:$0xf]
  %v196 = vld [vmem:[%s1 + $0xf4] sm:$0xf]
  %v197 = vld [vmem:[%s1 + $0xf8] sm:$0xf]
  %v198 = vld [vmem:[%s1 + $0xfc] sm:$0xf]
  %v199 = vld [vmem:[%s1 + $0x100] sm:$0xf]
  %v200 = vld [vmem:[%s1 + $0x104] sm:$0xf]
  %v201 = vld [vmem:[%s1 + $0x108] sm:$0xf]
  %v202 = vld [vmem:[%s1 + $0x10c] sm:$0xf]
  %v203 = vld [vmem:[%s1 + $0x110] sm:$0xf]
  %v204 = vld [vmem:[%s1 + $0x114] sm:$0xf]
  %v205 = vld [vmem:[%s1 + $0x118] sm:$0xf]
  %v206 = vld [vmem:[%s1 + $0x11c] sm:$0xf]
  %v279 = vunpack.c.l.b16 %v135
  %v280 = vunpack.c.l.b16 %v136
  %v281 = vunpack.c.l.b16 %v137
  %v282 = vunpack.c.l.b16 %v138
  %v283 = vunpack.c.l.b16 %v139
  %v284 = vunpack.c.l.b16 %v140
  %v285 = vunpack.c.l.b16 %v141
  %v286 = vunpack.c.l.b16 %v142
  %v287 = vunpack.c.l.b16 %v143
  %v288 = vunpack.c.l.b16 %v144
  %v289 = vunpack.c.l.b16 %v145
  %v290 = vunpack.c.l.b16 %v146
  %v291 = vunpack.c.l.b16 %v147
  %v292 = vunpack.c.l.b16 %v148
  %v293 = vunpack.c.l.b16 %v149
  %v294 = vunpack.c.l.b16 %v150
  %v295 = vunpack.c.l.b16 %v151
  %v296 = vunpack.c.l.b16 %v152
  %v297 = vunpack.c.l.b16 %v153
  %v298 = vunpack.c.l.b16 %v154
  %v299 = vunpack.c.l.b16 %v155
  %v300 = vunpack.c.l.b16 %v156
  %v301 = vunpack.c.l.b16 %v157
  %v302 = vunpack.c.l.b16 %v158
  %v303 = vunpack.c.l.b16 %v159
  %v304 = vunpack.c.l.b16 %v160
  %v305 = vunpack.c.l.b16 %v161
  %v306 = vunpack.c.l.b16 %v162
  %v307 = vunpack.c.l.b16 %v163
  %v308 = vunpack.c.l.b16 %v164
  %v309 = vunpack.c.l.b16 %v165
  %v310 = vunpack.c.l.b16 %v166
  %v311 = vunpack.c.l.b16 %v167
  %v312 = vunpack.c.l.b16 %v168
  %v313 = vunpack.c.l.b16 %v169
  %v314 = vunpack.c.l.b16 %v170
  %v315 = vunpack.c.l.b16 %v171
  %v316 = vunpack.c.l.b16 %v172
  %v317 = vunpack.c.l.b16 %v173
  %v318 = vunpack.c.l.b16 %v174
  %v319 = vunpack.c.l.b16 %v175
  %v320 = vunpack.c.l.b16 %v176
  %v321 = vunpack.c.l.b16 %v177
  %v322 = vunpack.c.l.b16 %v178
  %v323 = vunpack.c.l.b16 %v179
  %v324 = vunpack.c.l.b16 %v180
  %v325 = vunpack.c.l.b16 %v181
  %v326 = vunpack.c.l.b16 %v182
  %v327 = vunpack.c.l.b16 %v183
  %v328 = vunpack.c.l.b16 %v184
  %v329 = vunpack.c.l.b16 %v185
  %v330 = vunpack.c.l.b16 %v186
  %v331 = vunpack.c.l.b16 %v187
  %v332 = vunpack.c.l.b16 %v188
  %v333 = vunpack.c.l.b16 %v189
  %v334 = vunpack.c.l.b16 %v190
  %v335 = vunpack.c.l.b16 %v191
  %v336 = vunpack.c.l.b16 %v192
  %v337 = vunpack.c.l.b16 %v193
  %v338 = vunpack.c.l.b16 %v194
  %v339 = vunpack.c.l.b16 %v195
  %v340 = vunpack.c.l.b16 %v196
  %v341 = vunpack.c.l.b16 %v197
  %v342 = vunpack.c.l.b16 %v198
  %v343 = vunpack.c.l.b16 %v199
  %v344 = vunpack.c.l.b16 %v200
  %v345 = vunpack.c.l.b16 %v201
  %v346 = vunpack.c.l.b16 %v202
  %v347 = vunpack.c.l.b16 %v203
  %v348 = vunpack.c.l.b16 %v204
  %v349 = vunpack.c.l.b16 %v205
  %v350 = vunpack.c.l.b16 %v206
  %v351 = vpack.c.b16 %v280, %v279
  %v352 = vpack.c.b16 %v282, %v281
  %v353 = vpack.c.b16 %v284, %v283
  %v354 = vpack.c.b16 %v286, %v285
  %v355 = vpack.c.b16 %v288, %v287
  %v356 = vpack.c.b16 %v290, %v289
  %v357 = vpack.c.b16 %v292, %v291
  %v358 = vpack.c.b16 %v294, %v293
  %v359 = vpack.c.b16 %v296, %v295
  %v360 = vpack.c.b16 %v298, %v297
  %v361 = vpack.c.b16 %v300, %v299
  %v362 = vpack.c.b16 %v302, %v301
  %v363 = vpack.c.b16 %v304, %v303
  %v364 = vpack.c.b16 %v306, %v305
  %v365 = vpack.c.b16 %v308, %v307
  %v366 = vpack.c.b16 %v310, %v309
  %v367 = vpack.c.b16 %v312, %v311
  %v368 = vpack.c.b16 %v314, %v313
  %v369 = vpack.c.b16 %v316, %v315
  %v370 = vpack.c.b16 %v318, %v317
  %v371 = vpack.c.b16 %v320, %v319
  %v372 = vpack.c.b16 %v322, %v321
  %v373 = vpack.c.b16 %v324, %v323
  %v374 = vpack.c.b16 %v326, %v325
  %v375 = vpack.c.b16 %v328, %v327
  %v376 = vpack.c.b16 %v330, %v329
  %v377 = vpack.c.b16 %v332, %v331
  %v378 = vpack.c.b16 %v334, %v333
  %v379 = vpack.c.b16 %v336, %v335
  %v380 = vpack.c.b16 %v338, %v337
  %v381 = vpack.c.b16 %v340, %v339
  %v382 = vpack.c.b16 %v342, %v341
  %v383 = vpack.c.b16 %v344, %v343
  %v384 = vpack.c.b16 %v346, %v345
  %v385 = vpack.c.b16 %v348, %v347
  %v386 = vpack.c.b16 %v350, %v349
  %vm423 = vcmask 523264
  %v425 = vsel %vm423, %v129, 0
  %v428 = vsel %vm423, %v134, 0
  %430 = vmatpush.bf16.msra.mxu0 %v358
  %431 = vmatpush.bf16.msra.mxu0 %v357
  %432 = vmatpush.bf16.msra.mxu0 %v356
  %433 = vmatpush.bf16.msra.mxu0 %v355
  %434 = vmatpush.bf16.msra.mxu0 %v354
  %435 = vmatpush.bf16.msra.mxu0 %v353
  %436 = vmatpush.bf16.msra.mxu0 %v352
  %437 = vmatpush.bf16.msra.mxu0 %v351
  %438 = vmatmul.bf16.gmra.mxu0 %v125
  %v439 = vpop.f32.mrf.mxu0
  %v440 = vadd.f32 0.0, %v439
  %v441 = vpop.f32.mrf.mxu0
  %v442 = vadd.f32 0.0, %v441
  %443 = vmatmul.bf16.gmra.mxu0 %v130
  %v444 = vpop.f32.mrf.mxu0
  %v445 = vadd.f32 0.0, %v444
  %v446 = vpop.f32.mrf.mxu0
  %v447 = vadd.f32 0.0, %v446
  %448 = vdwg.mxu0
  %449 = vmatpush.bf16.msra.mxu0 %v366
  %450 = vmatpush.bf16.msra.mxu0 %v365
  %451 = vmatpush.bf16.msra.mxu0 %v364
  %452 = vmatpush.bf16.msra.mxu0 %v363
  %453 = vmatpush.bf16.msra.mxu0 %v362
  %454 = vmatpush.bf16.msra.mxu0 %v361
  %455 = vmatpush.bf16.msra.mxu0 %v360
  %456 = vmatpush.bf16.msra.mxu0 %v359
  %457 = vmatmul.bf16.gmra.mxu0 %v126
  %v458 = vpop.f32.mrf.mxu0
  %v459 = vadd.f32 %v440, %v458
  %v460 = vpop.f32.mrf.mxu0
  %v461 = vadd.f32 %v442, %v460
  %462 = vmatmul.bf16.gmra.mxu0 %v131
  %v463 = vpop.f32.mrf.mxu0
  %v464 = vadd.f32 %v445, %v463
  %v465 = vpop.f32.mrf.mxu0
  %v466 = vadd.f32 %v447, %v465
  %467 = vdwg.mxu0
  %468 = vmatpush.bf16.msra.mxu0 %v374
  %469 = vmatpush.bf16.msra.mxu0 %v373
  %470 = vmatpush.bf16.msra.mxu0 %v372
  %471 = vmatpush.bf16.msra.mxu0 %v371
  %472 = vmatpush.bf16.msra.mxu0 %v370
  %473 = vmatpush.bf16.msra.mxu0 %v369
  %474 = vmatpush.bf16.msra.mxu0 %v368
  %475 = vmatpush.bf16.msra.mxu0 %v367
  %476 = vmatmul.bf16.gmra.mxu0 %v127
  %v477 = vpop.f32.mrf.mxu0
  %v478 = vadd.f32 %v459, %v477
  %v479 = vpop.f32.mrf.mxu0
  %v480 = vadd.f32 %v461, %v479
  %481 = vmatmul.bf16.gmra.mxu0 %v132
  %v482 = vpop.f32.mrf.mxu0
  %v483 = vadd.f32 %v464, %v482
  %v484 = vpop.f32.mrf.mxu0
  %v485 = vadd.f32 %v466, %v484
  %486 = vdwg.mxu0
  %487 = vmatpush.bf16.msra.mxu0 %v382
  %488 = vmatpush.bf16.msra.mxu0 %v381
  %489 = vmatpush.bf16.msra.mxu0 %v380
  %490 = vmatpush.bf16.msra.mxu0 %v379
  %491 = vmatpush.bf16.msra.mxu0 %v378
  %492 = vmatpush.bf16.msra.mxu0 %v377
  %493 = vmatpush.bf16.msra.mxu0 %v376
  %494 = vmatpush.bf16.msra.mxu0 %v375
  %495 = vmatmul.bf16.gmra.mxu0 %v128
  %v496 = vpop.f32.mrf.mxu0
  %v497 = vadd.f32 %v478, %v496
  %v498 = vpop.f32.mrf.mxu0
  %v499 = vadd.f32 %v480, %v498
  %500 = vmatmul.bf16.gmra.mxu0 %v133
  %v501 = vpop.f32.mrf.mxu0
  %v502 = vadd.f32 %v483, %v501
  %v503 = vpop.f32.mrf.mxu0
  %v504 = vadd.f32 %v485, %v503
  %505 = vdwg.mxu0
  %506 = vmatpush.bf16.msra.mxu0 0
  %507 = vmatpush.bf16.msra.mxu0 0
  %508 = vmatpush.bf16.msra.mxu0 0
  %509 = vmatpush.bf16.msra.mxu0 0
  %510 = vmatpush.bf16.msra.mxu0 %v386
  %511 = vmatpush.bf16.msra.mxu0 %v385
  %512 = vmatpush.bf16.msra.mxu0 %v384
  %513 = vmatpush.bf16.msra.mxu0 %v383
  %514 = vmatmul.bf16.gmra.mxu0 %v425
  %v515 = vpop.f32.mrf.mxu0
  %v516 = vadd.f32 %v497, %v515
  %v517 = vpop.f32.mrf.mxu0
  %v518 = vadd.f32 %v499, %v517
  %519 = vmatmul.bf16.gmra.mxu0 %v428
  %v520 = vpop.f32.mrf.mxu0
  %v521 = vadd.f32 %v502, %v520
  %v522 = vpop.f32.mrf.mxu0
  %v523 = vadd.f32 %v504, %v522
  %524 = vdwg.mxu0
  %v525 = vsel %vm423, %v516, 0.0
  %v526 = vsel %vm423, %v518, 0.0
  %v527 = vadd.f32 %v525, %v526
  %v528 = vsel %vm423, %v521, 0.0
  %v529 = vadd.f32 %v527, %v528
  %v530 = vsel %vm423, %v523, 0.0
  %v531 = vadd.f32 %v529, %v530
  %v532 = vrot.slane %v531, 4
  %v533 = vadd.f32 %v531, %v532
  %v534 = vrot.slane %v533, 2
  %v535 = vadd.f32 %v533, %v534
  %v536 = vrot.slane %v535, 1
  %v537 = vadd.f32 %v535, %v536
  %vm538 = vcmask 516096
  %539 = vst.msk [vmem:[%s5] sm:$0x1] %vm538, %v537
  %v540 = vmul.f32 %v516, %v516
  %v541 = vmul.f32 %v518, %v518
  %v542 = vmul.f32 %v521, %v521
  %v543 = vmul.f32 %v523, %v523
  %v544 = vsel %vm423, %v540, 0.0
  %v545 = vsel %vm423, %v541, 0.0
  %v546 = vadd.f32 %v544, %v545
  %v547 = vsel %vm423, %v542, 0.0
  %v548 = vadd.f32 %v546, %v547
  %v549 = vsel %vm423, %v543, 0.0
  %v550 = vadd.f32 %v548, %v549
  %v551 = vrot.slane %v550, 4
  %v552 = vadd.f32 %v550, %v551
  %v553 = vrot.slane %v552, 2
  %v554 = vadd.f32 %v552, %v553
  %v555 = vrot.slane %v554, 1
  %v556 = vadd.f32 %v554, %v555
  %557 = vst.msk [vmem:[%s6] sm:$0x1] %vm538, %v556
  %558 = vst.msk [vmem:[%s4] sm:$0xff] %vm423, %v516
  %559 = vst.msk [vmem:[%s4 + $0x8] sm:$0xff] %vm423, %v518
  %560 = vst.msk [vmem:[%s4 + $0x10] sm:$0xff] %vm423, %v521
  %561 = vst.msk [vmem:[%s4 + $0x18] sm:$0xff] %vm423, %v523
  // Predicated region
  $region18: #{forward.20} parent=0 // pred_check
    _
  $region19: #{forward.20} parent=0 // pred_check_branch
    %563 = sbr.rel (0) target = $region21
  $region20: #{forward.20} parent=0 // pred_region
    _
  $region21: #{forward.20} parent=0 // pred_fallthru
    _
  // Predicated region
  $region22: #{forward.20} parent=0 // pred_check
    _
  $region23: #{forward.20} parent=0 // pred_check_branch
    %565 = sbr.rel (0) target = $region25
  $region24: #{forward.20} parent=0 // pred_region
    _
  $region25: #{forward.20} parent=0 // pred_fallthru
    _
  // Predicated region
  $region26: #{forward.20} parent=0 // pred_check
    _
  $region27: #{forward.20} parent=0 // pred_check_branch
    %567 = sbr.rel (0) target = $region29
  $region28: #{forward.20} parent=0 // pred_region
    _
  $region29: #{forward.20} parent=0 // pred_fallthru
    _
  // Predicated region
  $region30: #{forward.20} parent=0 // pred_check
    _
  $region31: #{forward.20} parent=0 // pred_check_branch
    %569 = sbr.rel (0) target = $region33
  $region32: #{forward.20} parent=0 // pred_region
    _
  $region33: #{forward.20} parent=0 // pred_fallthru
    _
  // Predicated region
  $region34: #{forward.20} parent=0 // pred_check
    _
  $region35: #{forward.20} parent=0 // pred_check_branch
    %571 = sbr.rel (0) target = $region37
  $region36: #{forward.20} parent=0 // pred_region
    _
  $region37: #{forward.20} parent=0 // pred_fallthru
    _
  // Predicated region
  $region38: #{forward.20} parent=0 // pred_check
    _
  $region39: #{forward.20} parent=0 // pred_check_branch
    %573 = sbr.rel (0) target = $region41
  $region40: #{forward.20} parent=0 // pred_region
    _
  $region41: #{forward.20} parent=0 // pred_fallthru
    _

// kernel: squeeze.27
$region0: #{squeeze.27}
  %s0 = inlined_call_operand.vmem [shape: f32[32], index: 0, kind: input, shape index: {}]
  %s1 = inlined_call_operand.vmem [shape: f32[2,2,8], index: 1, kind: output, shape index: {}]
  $region1: #{squeeze.27} parent=0
    #allocation0 [shape = 'u8[8192]{0}', space=vmem, size = 0x2000, scoped, tag = 'scoped mem for output reshape']
    #allocation1 [shape = 'u8[4096]{0}', space=vmem, size = 0x1000, scoped, tag = 'scoped mem for input reshape']
    %s3 = ssub.s32 2, 1
    %v4 = vld [vmem:[%s0] sm:%s3]
    %5 = vst [vmem:[#allocation1] sm:%s3] %v4
    %v6 = vld [vmem:[#allocation1] sm:$0x1]
    %vm7 = vcmask 64512
    %8 = vst.msk [vmem:[#allocation0] sm:$0x1] %vm7, %v6
    %v9 = vld [vmem:[#allocation1] sm:$0x1]
    %10 = vrot.lane.b32.xlu0 %v9, 120
    %v11 = vpop.permute.xlu0 %10
    %vm12 = vcmask 64512
    %s13 = scalar_lea.vmem [#allocation0], 1
    %14 = vst.msk [vmem:[%s13] sm:$0x1] %vm12, %v11
    %v15 = vld [vmem:[#allocation1] sm:$0x1]
    %16 = vrot.lane.b32.xlu0 %v15, 112
    %v17 = vpop.permute.xlu0 %16
    %vm18 = vcmask 64512
    %s19 = scalar_lea.vmem [#allocation0], 8
    %20 = vst.msk [vmem:[%s19] sm:$0x1] %vm18, %v17
    %v21 = vld [vmem:[#allocation1] sm:$0x1]
    %22 = vrot.lane.b32.xlu0 %v21, 104
    %v23 = vpop.permute.xlu0 %22
    %vm24 = vcmask 64512
    %s25 = scalar_lea.vmem [#allocation0], 9
    %26 = vst.msk [vmem:[%s25] sm:$0x1] %vm24, %v23
    %s28 = ssub.s32 4, 1
    %v29 = vld [vmem:[#allocation0] sm:%s28]
    %s31 = ssub.s32 4, 1
    %32 = vst [vmem:[%s1] sm:%s31] %v29
    %s33 = scalar_lea.vmem [#allocation0], 8
    %v34 = vld [vmem:[%s33] sm:%s28]
    %s36 = ssub.s32 4, 1
    %s37 = scalar_lea.vmem %s1, 2
    %38 = vst [vmem:[%s37] sm:%s36] %v34

// kernel: tile.138
$region0: #{tile.138}
  #allocation0 [shape = 's32[1]{0}', space=sflag, size = 0x4, scoped, tag = 'scoped memory for tile.138']
  %s0 = inlined_call_operand.vmem [shape: f32[16], index: 0, kind: input, shape index: {}]
  %s1 = inlined_call_operand.vmem [shape: f32[9,16], index: 1, kind: output, shape index: {}]
  // Predicated region
  $region2: #{tile.138} parent=0 // pred_check
    _
  $region3: #{tile.138} parent=0 // pred_check_branch
    %3 = sbr.rel (0) target = $region5
  $region4: #{tile.138} parent=0 // pred_region
    _
  $region5: #{tile.138} parent=0 // pred_fallthru
    _
  %v4 = vld [vmem:[%s0] ss:$0 sm:$0xff]
  %5 = vst [vmem:[%s1] sm:$0xff] %v4
  %s6 = scalar_lea.vmem %s1, 8
  %7 = vst [vmem:[%s6] sm:$0xff] %v4

// kernel: tile.139
$region0: #{tile.139}
  %s0 = inlined_call_operand.vmem [shape: f32[9,16], index: 0, kind: input, shape index: {}]
  %s1 = inlined_call_operand.vmem [shape: f32[1,144], index: 1, kind: output, shape index: {}]
  $region1: #{tile.139} parent=0
    #allocation0 [shape = 'u8[8192]{0}', space=vmem, size = 0x2000, scoped, tag = 'scoped mem for output reshape']
    %s2 = smov 3
    %v3 = vld [vmem:[%s0] ss:$8 sm:%s2]
    %vm4 = vcmask 130048
    %5 = vst.msk [vmem:[#allocation0] ss:$8 sm:$0x3] %vm4, %v3
    %s6 = scalar_lea.vmem %s0, 7
    %v7 = vld [vmem:[%s6] sm:$0x1]
    %8 = vrot.lane.b32.xlu0 %v7, 112
    %v9 = vpop.permute.xlu0 %8
    %vm10 = vcmask 1048448
    %11 = vst.msk [vmem:[#allocation0] sm:$0x1] %vm10, %v9
    %s12 = scalar_lea.vmem %s0, 6
    %v13 = vld [vmem:[%s12] sm:$0x1]
    %14 = vrot.lane.b32.xlu0 %v13, 96
    %v15 = vpop.permute.xlu0 %14
    %vm16 = vcmask 917248
    %17 = vst.msk [vmem:[#allocation0] sm:$0x1] %vm16, %v15
    %s18 = scalar_lea.vmem %s0, 5
    %v19 = vld [vmem:[%s18] sm:$0x1]
    %20 = vrot.lane.b32.xlu0 %v19, 80
    %v21 = vpop.permute.xlu0 %20
    %vm22 = vcmask 786048
    %23 = vst.msk [vmem:[#allocation0] sm:$0x1] %vm22, %v21
    %s24 = scalar_lea.vmem %s0, 4
    %v25 = vld [vmem:[%s24] sm:$0x1]
    %26 = vrot.lane.b32.xlu0 %v25, 64
    %v27 = vpop.permute.xlu0 %26
    %vm28 = vcmask 654848
    %29 = vst.msk [vmem:[#allocation0] sm:$0x1] %vm28, %v27
    %s30 = scalar_lea.vmem %s0, 3
    %v31 = vld [vmem:[%s30] sm:$0x1]
    %32 = vrot.lane.b32.xlu0 %v31, 48
    %v33 = vpop.permute.xlu0 %32
    %vm34 = vcmask 523648
    %35 = vst.msk [vmem:[#allocation0] sm:$0x1] %vm34, %v33
    %s36 = scalar_lea.vmem %s0, 2
    %v37 = vld [vmem:[%s36] sm:$0x1]
    %38 = vrot.lane.b32.xlu0 %v37, 32
    %v39 = vpop.permute.xlu0 %38
    %vm40 = vcmask 392448
    %41 = vst.msk [vmem:[#allocation0] sm:$0x1] %vm40, %v39
    %s42 = scalar_lea.vmem %s0, 1
    %v43 = vld [vmem:[%s42] sm:$0x1]
    %44 = vrot.lane.b32.xlu0 %v43, 16
    %v45 = vpop.permute.xlu0 %44
    %vm46 = vcmask 261248
    %47 = vst.msk [vmem:[#allocation0] sm:$0x1] %vm46, %v45
    %s49 = ssub.s32 2, 1
    %v50 = vld [vmem:[#allocation0] sm:%s49]
    %s52 = ssub.s32 2, 1
    %53 = vst [vmem:[%s1] sm:%s52] %v50
    %s54 = scalar_lea.vmem [#allocation0], 8
    %v55 = vld [vmem:[%s54] sm:%s49]
    %s57 = ssub.s32 2, 1
    %s58 = scalar_lea.vmem %s1, 1
    %59 = vst [vmem:[%s58] sm:%s57] %v55

// kernel: forward.21
$region0: #{forward.21}
  #allocation0 [shape = 'u32[]', space=smem, size = 0x4, offset = 0x4, fixed_abs, tag = 'smem constant byte address 0x4 - core index']
  #allocation1 [shape = 'u32[72,128]{1,0:T(1,128)}', space=vmem, size = 0x9000, scoped, tag = 'internal scratch']
  %s0 = inlined_call_operand.vmem [shape: f32[128,288], index: 0, kind: input, shape index: {}]
  %s1 = inlined_call_operand.vmem [shape: bf16[288,32], index: 1, kind: input, shape index: {}]
  %s2 = inlined_call_operand.vmem [shape: f32[1,288], index: 2, kind: input, shape index: {}]
  %s3 = inlined_call_operand.vmem [shape: f32[1,288], index: 3, kind: input, shape index: {}]
  %s4 = inlined_call_operand.vmem [shape: f32[128,32], index: 4, kind: output, shape index: {0}]
  %s5 = inlined_call_operand.vmem [shape: f32[1,32], index: 5, kind: output, shape index: {1}]
  %s6 = inlined_call_operand.vmem [shape: f32[1,32], index: 6, kind: output, shape index: {2}]
  %7 = xla_tuple %s4, %s5, %s6
  %s8 = sld [smem:[#allocation0]]
  $region42: #{forward.21} parent=0
    _
  %s10 = ssub.s32 1, %s8
  %s11 = scalar_select 0, %s10, %s8
  // Predicated region
  $region2: #{forward.21} parent=0 // pred_check
    _
  $region3: #{forward.21} parent=0 // pred_check_branch
    %13 = sbr.rel (0) target = $region5
  $region4: #{forward.21} parent=0 // pred_region
    _
  $region5: #{forward.21} parent=0 // pred_fallthru
    _
  // Predicated region
  $region6: #{forward.21} parent=0 // pred_check
    _
  $region7: #{forward.21} parent=0 // pred_check_branch
    %15 = sbr.rel (0) target = $region9
  $region8: #{forward.21} parent=0 // pred_region
    _
  $region9: #{forward.21} parent=0 // pred_fallthru
    _
  // Predicated region
  $region10: #{forward.21} parent=0 // pred_check
    _
  $region11: #{forward.21} parent=0 // pred_check_branch
    %17 = sbr.rel (0) target = $region13
  $region12: #{forward.21} parent=0 // pred_region
    _
  $region13: #{forward.21} parent=0 // pred_fallthru
    _
  // Predicated region
  $region14: #{forward.21} parent=0 // pred_check
    _
  $region15: #{forward.21} parent=0 // pred_check_branch
    %19 = sbr.rel (0) target = $region17
  $region16: #{forward.21} parent=0 // pred_region
    _
  $region17: #{forward.21} parent=0 // pred_fallthru
    _
  %v21 = vld [vmem:[%s0] sm:$0xff]
  %v22 = vld [vmem:[%s0 + $0x8] sm:$0xff]
  %v23 = vld [vmem:[%s0 + $0x10] sm:$0xff]
  %v24 = vld [vmem:[%s0 + $0x18] sm:$0xff]
  %v25 = vld [vmem:[%s0 + $0x20] sm:$0xff]
  %v26 = vld [vmem:[%s0 + $0x28] sm:$0xff]
  %v27 = vld [vmem:[%s0 + $0x30] sm:$0xff]
  %v28 = vld [vmem:[%s0 + $0x38] sm:$0xff]
  %v29 = vld [vmem:[%s0 + $0x40] sm:$0xff]
  %v30 = vld [vmem:[%s0 + $0x48] sm:$0xff]
  %v31 = vld [vmem:[%s0 + $0x50] sm:$0xff]
  %v32 = vld [vmem:[%s0 + $0x58] sm:$0xff]
  %v33 = vld [vmem:[%s0 + $0x60] sm:$0xff]
  %v34 = vld [vmem:[%s0 + $0x68] sm:$0xff]
  %v35 = vld [vmem:[%s0 + $0x70] sm:$0xff]
  %v36 = vld [vmem:[%s0 + $0x78] sm:$0xff]
  %v37 = vld [vmem:[%s0 + $0x80] sm:$0xff]
  %v38 = vld [vmem:[%s0 + $0x88] sm:$0xff]
  %v39 = vld [vmem:[%s0 + $0x90] sm:$0xff]
  %v40 = vld [vmem:[%s0 + $0x98] sm:$0xff]
  %v41 = vld [vmem:[%s0 + $0xa0] sm:$0xff]
  %v42 = vld [vmem:[%s0 + $0xa8] sm:$0xff]
  %v43 = vld [vmem:[%s0 + $0xb0] sm:$0xff]
  %v44 = vld [vmem:[%s0 + $0xb8] sm:$0xff]
  %v45 = vld [vmem:[%s0 + $0xc0] sm:$0xff]
  %v46 = vld [vmem:[%s0 + $0xc8] sm:$0xff]
  %v47 = vld [vmem:[%s0 + $0xd0] sm:$0xff]
  %v48 = vld [vmem:[%s0 + $0xd8] sm:$0xff]
  %v49 = vld [vmem:[%s0 + $0xe0] sm:$0xff]
  %v50 = vld [vmem:[%s0 + $0xe8] sm:$0xff]
  %v51 = vld [vmem:[%s0 + $0xf0] sm:$0xff]
  %v52 = vld [vmem:[%s0 + $0xf8] sm:$0xff]
  %v53 = vld [vmem:[%s0 + $0x100] sm:$0xff]
  %v54 = vld [vmem:[%s0 + $0x108] sm:$0xff]
  %v55 = vld [vmem:[%s0 + $0x110] sm:$0xff]
  %v56 = vld [vmem:[%s0 + $0x118] sm:$0xff]
  %v57 = vld [vmem:[%s0 + $0x120] sm:$0xff]
  %v58 = vld [vmem:[%s0 + $0x128] sm:$0xff]
  %v59 = vld [vmem:[%s0 + $0x130] sm:$0xff]
  %v60 = vld [vmem:[%s0 + $0x138] sm:$0xff]
  %v61 = vld [vmem:[%s0 + $0x140] sm:$0xff]
  %v62 = vld [vmem:[%s0 + $0x148] sm:$0xff]
  %v63 = vld [vmem:[%s0 + $0x150] sm:$0xff]
  %v64 = vld [vmem:[%s0 + $0x158] sm:$0xff]
  %v65 = vld [vmem:[%s0 + $0x160] sm:$0xff]
  %v66 = vld [vmem:[%s0 + $0x168] sm:$0xff]
  %v67 = vld [vmem:[%s0 + $0x170] sm:$0xff]
  %v68 = vld [vmem:[%s0 + $0x178] sm:$0xff]
  %v69 = vld [vmem:[%s2] sm:$0x7]
  %v71 = vperm.slane %v69, 0
  %v72 = vperm.slane %v69, 1
  %v73 = vperm.slane %v69, 2
  %v77 = vmul.f32 %v21, %v71
  %v78 = vmul.f32 %v22, %v72
  %v79 = vmul.f32 %v23, %v73
  %v80 = vmul.f32 %v24, %v71
  %v81 = vmul.f32 %v25, %v72
  %v82 = vmul.f32 %v26, %v73
  %v83 = vmul.f32 %v27, %v71
  %v84 = vmul.f32 %v28, %v72
  %v85 = vmul.f32 %v29, %v73
  %v86 = vmul.f32 %v30, %v71
  %v87 = vmul.f32 %v31, %v72
  %v88 = vmul.f32 %v32, %v73
  %v89 = vmul.f32 %v33, %v71
  %v90 = vmul.f32 %v34, %v72
  %v91 = vmul.f32 %v35, %v73
  %v92 = vmul.f32 %v36, %v71
  %v93 = vmul.f32 %v37, %v72
  %v94 = vmul.f32 %v38, %v73
  %v95 = vmul.f32 %v39, %v71
  %v96 = vmul.f32 %v40, %v72
  %v97 = vmul.f32 %v41, %v73
  %v98 = vmul.f32 %v42, %v71
  %v99 = vmul.f32 %v43, %v72
  %v100 = vmul.f32 %v44, %v73
  %v101 = vmul.f32 %v45, %v71
  %v102 = vmul.f32 %v46, %v72
  %v103 = vmul.f32 %v47, %v73
  %v104 = vmul.f32 %v48, %v71
  %v105 = vmul.f32 %v49, %v72
  %v106 = vmul.f32 %v50, %v73
  %v107 = vmul.f32 %v51, %v71
  %v108 = vmul.f32 %v52, %v72
  %v109 = vmul.f32 %v53, %v73
  %v110 = vmul.f32 %v54, %v71
  %v111 = vmul.f32 %v55, %v72
  %v112 = vmul.f32 %v56, %v73
  %v113 = vmul.f32 %v57, %v71
  %v114 = vmul.f32 %v58, %v72
  %v115 = vmul.f32 %v59, %v73
  %v116 = vmul.f32 %v60, %v71
  %v117 = vmul.f32 %v61, %v72
  %v118 = vmul.f32 %v62, %v73
  %v119 = vmul.f32 %v63, %v71
  %v120 = vmul.f32 %v64, %v72
  %v121 = vmul.f32 %v65, %v73
  %v122 = vmul.f32 %v66, %v71
  %v123 = vmul.f32 %v67, %v72
  %v124 = vmul.f32 %v68, %v73
  %v125 = vld [vmem:[%s3] sm:$0x7]
  %v127 = vperm.slane %v125, 0
  %v128 = vperm.slane %v125, 1
  %v129 = vperm.slane %v125, 2
  %v133 = vadd.f32 %v77, %v127
  %v134 = vadd.f32 %v78, %v128
  %v135 = vadd.f32 %v79, %v129
  %v136 = vadd.f32 %v80, %v127
  %v137 = vadd.f32 %v81, %v128
  %v138 = vadd.f32 %v82, %v129
  %v139 = vadd.f32 %v83, %v127
  %v140 = vadd.f32 %v84, %v128
  %v141 = vadd.f32 %v85, %v129
  %v142 = vadd.f32 %v86, %v127
  %v143 = vadd.f32 %v87, %v128
  %v144 = vadd.f32 %v88, %v129
  %v145 = vadd.f32 %v89, %v127
  %v146 = vadd.f32 %v90, %v128
  %v147 = vadd.f32 %v91, %v129
  %v148 = vadd.f32 %v92, %v127
  %v149 = vadd.f32 %v93, %v128
  %v150 = vadd.f32 %v94, %v129
  %v151 = vadd.f32 %v95, %v127
  %v152 = vadd.f32 %v96, %v128
  %v153 = vadd.f32 %v97, %v129
  %v154 = vadd.f32 %v98, %v127
  %v155 = vadd.f32 %v99, %v128
  %v156 = vadd.f32 %v100, %v129
  %v157 = vadd.f32 %v101, %v127
  %v158 = vadd.f32 %v102, %v128
  %v159 = vadd.f32 %v103, %v129
  %v160 = vadd.f32 %v104, %v127
  %v161 = vadd.f32 %v105, %v128
  %v162 = vadd.f32 %v106, %v129
  %v163 = vadd.f32 %v107, %v127
  %v164 = vadd.f32 %v108, %v128
  %v165 = vadd.f32 %v109, %v129
  %v166 = vadd.f32 %v110, %v127
  %v167 = vadd.f32 %v111, %v128
  %v168 = vadd.f32 %v112, %v129
  %v169 = vadd.f32 %v113, %v127
  %v170 = vadd.f32 %v114, %v128
  %v171 = vadd.f32 %v115, %v129
  %v172 = vadd.f32 %v116, %v127
  %v173 = vadd.f32 %v117, %v128
  %v174 = vadd.f32 %v118, %v129
  %v175 = vadd.f32 %v119, %v127
  %v176 = vadd.f32 %v120, %v128
  %v177 = vadd.f32 %v121, %v129
  %v178 = vadd.f32 %v122, %v127
  %v179 = vadd.f32 %v123, %v128
  %v180 = vadd.f32 %v124, %v129
  %v181 = vmax.f32 %v133, 0.0
  %v182 = vmax.f32 %v134, 0.0
  %v183 = vmax.f32 %v135, 0.0
  %v184 = vmax.f32 %v136, 0.0
  %v185 = vmax.f32 %v137, 0.0
  %v186 = vmax.f32 %v138, 0.0
  %v187 = vmax.f32 %v139, 0.0
  %v188 = vmax.f32 %v140, 0.0
  %v189 = vmax.f32 %v141, 0.0
  %v190 = vmax.f32 %v142, 0.0
  %v191 = vmax.f32 %v143, 0.0
  %v192 = vmax.f32 %v144, 0.0
  %v193 = vmax.f32 %v145, 0.0
  %v194 = vmax.f32 %v146, 0.0
  %v195 = vmax.f32 %v147, 0.0
  %v196 = vmax.f32 %v148, 0.0
  %v197 = vmax.f32 %v149, 0.0
  %v198 = vmax.f32 %v150, 0.0
  %v199 = vmax.f32 %v151, 0.0
  %v200 = vmax.f32 %v152, 0.0
  %v201 = vmax.f32 %v153, 0.0
  %v202 = vmax.f32 %v154, 0.0
  %v203 = vmax.f32 %v155, 0.0
  %v204 = vmax.f32 %v156, 0.0
  %v205 = vmax.f32 %v157, 0.0
  %v206 = vmax.f32 %v158, 0.0
  %v207 = vmax.f32 %v159, 0.0
  %v208 = vmax.f32 %v160, 0.0
  %v209 = vmax.f32 %v161, 0.0
  %v210 = vmax.f32 %v162, 0.0
  %v211 = vmax.f32 %v163, 0.0
  %v212 = vmax.f32 %v164, 0.0
  %v213 = vmax.f32 %v165, 0.0
  %v214 = vmax.f32 %v166, 0.0
  %v215 = vmax.f32 %v167, 0.0
  %v216 = vmax.f32 %v168, 0.0
  %v217 = vmax.f32 %v169, 0.0
  %v218 = vmax.f32 %v170, 0.0
  %v219 = vmax.f32 %v171, 0.0
  %v220 = vmax.f32 %v172, 0.0
  %v221 = vmax.f32 %v173, 0.0
  %v222 = vmax.f32 %v174, 0.0
  %v223 = vmax.f32 %v175, 0.0
  %v224 = vmax.f32 %v176, 0.0
  %v225 = vmax.f32 %v177, 0.0
  %v226 = vmax.f32 %v178, 0.0
  %v227 = vmax.f32 %v179, 0.0
  %v228 = vmax.f32 %v180, 0.0
  %v229 = vpack.c.bf16 %v184, %v181
  %v230 = vpack.c.bf16 %v185, %v182
  %v231 = vpack.c.bf16 %v186, %v183
  %v232 = vpack.c.bf16 %v190, %v187
  %v233 = vpack.c.bf16 %v191, %v188
  %v234 = vpack.c.bf16 %v192, %v189
  %v235 = vpack.c.bf16 %v196, %v193
  %v236 = vpack.c.bf16 %v197, %v194
  %v237 = vpack.c.bf16 %v198, %v195
  %v238 = vpack.c.bf16 %v202, %v199
  %v239 = vpack.c.bf16 %v203, %v200
  %v240 = vpack.c.bf16 %v204, %v201
  %v241 = vpack.c.bf16 %v208, %v205
  %v242 = vpack.c.bf16 %v209, %v206
  %v243 = vpack.c.bf16 %v210, %v207
  %v244 = vpack.c.bf16 %v214, %v211
  %v245 = vpack.c.bf16 %v215, %v212
  %v246 = vpack.c.bf16 %v216, %v213
  %v247 = vpack.c.bf16 %v220, %v217
  %v248 = vpack.c.bf16 %v221, %v218
  %v249 = vpack.c.bf16 %v222, %v219
  %v250 = vpack.c.bf16 %v226, %v223
  %v251 = vpack.c.bf16 %v227, %v224
  %v252 = vpack.c.bf16 %v228, %v225
  %v253 = vld [vmem:[%s1] sm:$0xf]
  %v254 = vld [vmem:[%s1 + $0x4] sm:$0xf]
  %v255 = vld [vmem:[%s1 + $0x8] sm:$0xf]
  %v256 = vld [vmem:[%s1 + $0xc] sm:$0xf]
  %v257 = vld [vmem:[%s1 + $0x10] sm:$0xf]
  %v258 = vld [vmem:[%s1 + $0x14] sm:$0xf]
  %v259 = vld [vmem:[%s1 + $0x18] sm:$0xf]
  %v260 = vld [vmem:[%s1 + $0x1c] sm:$0xf]
  %v261 = vld [vmem:[%s1 + $0x20] sm:$0xf]
  %v262 = vld [vmem:[%s1 + $0x24] sm:$0xf]
  %v263 = vld [vmem:[%s1 + $0x28] sm:$0xf]
  %v264 = vld [vmem:[%s1 + $0x2c] sm:$0xf]
  %v265 = vld [vmem:[%s1 + $0x30] sm:$0xf]
  %v266 = vld [vmem:[%s1 + $0x34] sm:$0xf]
  %v267 = vld [vmem:[%s1 + $0x38] sm:$0xf]
  %v268 = vld [vmem:[%s1 + $0x3c] sm:$0xf]
  %v269 = vld [vmem:[%s1 + $0x40] sm:$0xf]
  %v270 = vld [vmem:[%s1 + $0x44] sm:$0xf]
  %v271 = vld [vmem:[%s1 + $0x48] sm:$0xf]
  %v272 = vld [vmem:[%s1 + $0x4c] sm:$0xf]
  %v273 = vld [vmem:[%s1 + $0x50] sm:$0xf]
  %v274 = vld [vmem:[%s1 + $0x54] sm:$0xf]
  %v275 = vld [vmem:[%s1 + $0x58] sm:$0xf]
  %v276 = vld [vmem:[%s1 + $0x5c] sm:$0xf]
  %v277 = vld [vmem:[%s1 + $0x60] sm:$0xf]
  %v278 = vld [vmem:[%s1 + $0x64] sm:$0xf]
  %v279 = vld [vmem:[%s1 + $0x68] sm:$0xf]
  %v280 = vld [vmem:[%s1 + $0x6c] sm:$0xf]
  %v281 = vld [vmem:[%s1 + $0x70] sm:$0xf]
  %v282 = vld [vmem:[%s1 + $0x74] sm:$0xf]
  %v283 = vld [vmem:[%s1 + $0x78] sm:$0xf]
  %v284 = vld [vmem:[%s1 + $0x7c] sm:$0xf]
  %v285 = vld [vmem:[%s1 + $0x80] sm:$0xf]
  %v286 = vld [vmem:[%s1 + $0x84] sm:$0xf]
  %v287 = vld [vmem:[%s1 + $0x88] sm:$0xf]
  %v288 = vld [vmem:[%s1 + $0x8c] sm:$0xf]
  %v325 = vunpack.c.l.b16 %v253
  %v326 = vunpack.c.l.b16 %v254
  %v327 = vunpack.c.l.b16 %v255
  %v328 = vunpack.c.l.b16 %v256
  %v329 = vunpack.c.l.b16 %v257
  %v330 = vunpack.c.l.b16 %v258
  %v331 = vunpack.c.l.b16 %v259
  %v332 = vunpack.c.l.b16 %v260
  %v333 = vunpack.c.l.b16 %v261
  %v334 = vunpack.c.l.b16 %v262
  %v335 = vunpack.c.l.b16 %v263
  %v336 = vunpack.c.l.b16 %v264
  %v337 = vunpack.c.l.b16 %v265
  %v338 = vunpack.c.l.b16 %v266
  %v339 = vunpack.c.l.b16 %v267
  %v340 = vunpack.c.l.b16 %v268
  %v341 = vunpack.c.l.b16 %v269
  %v342 = vunpack.c.l.b16 %v270
  %v343 = vunpack.c.l.b16 %v271
  %v344 = vunpack.c.l.b16 %v272
  %v345 = vunpack.c.l.b16 %v273
  %v346 = vunpack.c.l.b16 %v274
  %v347 = vunpack.c.l.b16 %v275
  %v348 = vunpack.c.l.b16 %v276
  %v349 = vunpack.c.l.b16 %v277
  %v350 = vunpack.c.l.b16 %v278
  %v351 = vunpack.c.l.b16 %v279
  %v352 = vunpack.c.l.b16 %v280
  %v353 = vunpack.c.l.b16 %v281
  %v354 = vunpack.c.l.b16 %v282
  %v355 = vunpack.c.l.b16 %v283
  %v356 = vunpack.c.l.b16 %v284
  %v357 = vunpack.c.l.b16 %v285
  %v358 = vunpack.c.l.b16 %v286
  %v359 = vunpack.c.l.b16 %v287
  %v360 = vunpack.c.l.b16 %v288
  %v361 = vpack.c.b16 %v326, %v325
  %v362 = vpack.c.b16 %v328, %v327
  %v363 = vpack.c.b16 %v330, %v329
  %v364 = vpack.c.b16 %v332, %v331
  %v365 = vpack.c.b16 %v334, %v333
  %v366 = vpack.c.b16 %v336, %v335
  %v367 = vpack.c.b16 %v338, %v337
  %v368 = vpack.c.b16 %v340, %v339
  %v369 = vpack.c.b16 %v342, %v341
  %v370 = vpack.c.b16 %v344, %v343
  %v371 = vpack.c.b16 %v346, %v345
  %v372 = vpack.c.b16 %v348, %v347
  %v373 = vpack.c.b16 %v350, %v349
  %v374 = vpack.c.b16 %v352, %v351
  %v375 = vpack.c.b16 %v354, %v353
  %v376 = vpack.c.b16 %v356, %v355
  %v377 = vpack.c.b16 %v358, %v357
  %v378 = vpack.c.b16 %v360, %v359
  %vm397 = vcmask 261120
  %v399 = vsel %vm397, %v231, 0
  %v402 = vsel %vm397, %v234, 0
  %v405 = vsel %vm397, %v237, 0
  %v408 = vsel %vm397, %v240, 0
  %v411 = vsel %vm397, %v243, 0
  %v414 = vsel %vm397, %v246, 0
  %v417 = vsel %vm397, %v249, 0
  %v420 = vsel %vm397, %v252, 0
  %422 = vmatpush.bf16.msra.mxu0 %v368
  %423 = vmatpush.bf16.msra.mxu0 %v367
  %424 = vmatpush.bf16.msra.mxu0 %v366
  %425 = vmatpush.bf16.msra.mxu0 %v365
  %426 = vmatpush.bf16.msra.mxu0 %v364
  %427 = vmatpush.bf16.msra.mxu0 %v363
  %428 = vmatpush.bf16.msra.mxu0 %v362
  %429 = vmatpush.bf16.msra.mxu0 %v361
  %430 = vmatmul.bf16.gmra.mxu0 %v229
  %v431 = vpop.f32.mrf.mxu0
  %v432 = vadd.f32 0.0, %v431
  %v433 = vpop.f32.mrf.mxu0
  %v434 = vadd.f32 0.0, %v433
  %435 = vmatmul.bf16.gmra.mxu0 %v232
  %v436 = vpop.f32.mrf.mxu0
  %v437 = vadd.f32 0.0, %v436
  %v438 = vpop.f32.mrf.mxu0
  %v439 = vadd.f32 0.0, %v438
  %440 = vmatmul.bf16.gmra.mxu0 %v235
  %v441 = vpop.f32.mrf.mxu0
  %v442 = vadd.f32 0.0, %v441
  %v443 = vpop.f32.mrf.mxu0
  %v444 = vadd.f32 0.0, %v443
  %445 = vmatmul.bf16.gmra.mxu0 %v238
  %v446 = vpop.f32.mrf.mxu0
  %v447 = vadd.f32 0.0, %v446
  %v448 = vpop.f32.mrf.mxu0
  %v449 = vadd.f32 0.0, %v448
  %450 = vmatmul.bf16.gmra.mxu0 %v241
  %v451 = vpop.f32.mrf.mxu0
  %v452 = vadd.f32 0.0, %v451
  %v453 = vpop.f32.mrf.mxu0
  %v454 = vadd.f32 0.0, %v453
  %455 = vmatmul.bf16.gmra.mxu0 %v244
  %v456 = vpop.f32.mrf.mxu0
  %v457 = vadd.f32 0.0, %v456
  %v458 = vpop.f32.mrf.mxu0
  %v459 = vadd.f32 0.0, %v458
  %460 = vmatmul.bf16.gmra.mxu0 %v247
  %v461 = vpop.f32.mrf.mxu0
  %v462 = vadd.f32 0.0, %v461
  %v463 = vpop.f32.mrf.mxu0
  %v464 = vadd.f32 0.0, %v463
  %465 = vmatmul.bf16.gmra.mxu0 %v250
  %v466 = vpop.f32.mrf.mxu0
  %v467 = vadd.f32 0.0, %v466
  %v468 = vpop.f32.mrf.mxu0
  %v469 = vadd.f32 0.0, %v468
  %470 = vdwg.mxu0
  %471 = vmatpush.bf16.msra.mxu0 %v376
  %472 = vmatpush.bf16.msra.mxu0 %v375
  %473 = vmatpush.bf16.msra.mxu0 %v374
  %474 = vmatpush.bf16.msra.mxu0 %v373
  %475 = vmatpush.bf16.msra.mxu0 %v372
  %476 = vmatpush.bf16.msra.mxu0 %v371
  %477 = vmatpush.bf16.msra.mxu0 %v370
  %478 = vmatpush.bf16.msra.mxu0 %v369
  %479 = vmatmul.bf16.gmra.mxu0 %v230
  %v480 = vpop.f32.mrf.mxu0
  %v481 = vadd.f32 %v432, %v480
  %v482 = vpop.f32.mrf.mxu0
  %v483 = vadd.f32 %v434, %v482
  %484 = vmatmul.bf16.gmra.mxu0 %v233
  %v485 = vpop.f32.mrf.mxu0
  %v486 = vadd.f32 %v437, %v485
  %v487 = vpop.f32.mrf.mxu0
  %v488 = vadd.f32 %v439, %v487
  %489 = vmatmul.bf16.gmra.mxu0 %v236
  %v490 = vpop.f32.mrf.mxu0
  %v491 = vadd.f32 %v442, %v490
  %v492 = vpop.f32.mrf.mxu0
  %v493 = vadd.f32 %v444, %v492
  %494 = vmatmul.bf16.gmra.mxu0 %v239
  %v495 = vpop.f32.mrf.mxu0
  %v496 = vadd.f32 %v447, %v495
  %v497 = vpop.f32.mrf.mxu0
  %v498 = vadd.f32 %v449, %v497
  %499 = vmatmul.bf16.gmra.mxu0 %v242
  %v500 = vpop.f32.mrf.mxu0
  %v501 = vadd.f32 %v452, %v500
  %v502 = vpop.f32.mrf.mxu0
  %v503 = vadd.f32 %v454, %v502
  %504 = vmatmul.bf16.gmra.mxu0 %v245
  %v505 = vpop.f32.mrf.mxu0
  %v506 = vadd.f32 %v457, %v505
  %v507 = vpop.f32.mrf.mxu0
  %v508 = vadd.f32 %v459, %v507
  %509 = vmatmul.bf16.gmra.mxu0 %v248
  %v510 = vpop.f32.mrf.mxu0
  %v511 = vadd.f32 %v462, %v510
  %v512 = vpop.f32.mrf.mxu0
  %v513 = vadd.f32 %v464, %v512
  %514 = vmatmul.bf16.gmra.mxu0 %v251
  %v515 = vpop.f32.mrf.mxu0
  %v516 = vadd.f32 %v467, %v515
  %v517 = vpop.f32.mrf.mxu0
  %v518 = vadd.f32 %v469, %v517
  %519 = vdwg.mxu0
  %520 = vmatpush.bf16.msra.mxu0 0
  %521 = vmatpush.bf16.msra.mxu0 0
  %522 = vmatpush.bf16.msra.mxu0 0
  %523 = vmatpush.bf16.msra.mxu0 0
  %524 = vmatpush.bf16.msra.mxu0 0
  %525 = vmatpush.bf16.msra.mxu0 0
  %526 = vmatpush.bf16.msra.mxu0 %v378
  %527 = vmatpush.bf16.msra.mxu0 %v377
  %528 = vmatmul.bf16.gmra.mxu0 %v399
  %v529 = vpop.f32.mrf.mxu0
  %v530 = vadd.f32 %v481, %v529
  %v531 = vpop.f32.mrf.mxu0
  %v532 = vadd.f32 %v483, %v531
  %533 = vmatmul.bf16.gmra.mxu0 %v402
  %v534 = vpop.f32.mrf.mxu0
  %v535 = vadd.f32 %v486, %v534
  %v536 = vpop.f32.mrf.mxu0
  %v537 = vadd.f32 %v488, %v536
  %538 = vmatmul.bf16.gmra.mxu0 %v405
  %v539 = vpop.f32.mrf.mxu0
  %v540 = vadd.f32 %v491, %v539
  %v541 = vpop.f32.mrf.mxu0
  %v542 = vadd.f32 %v493, %v541
  %543 = vmatmul.bf16.gmra.mxu0 %v408
  %v544 = vpop.f32.mrf.mxu0
  %v545 = vadd.f32 %v496, %v544
  %v546 = vpop.f32.mrf.mxu0
  %v547 = vadd.f32 %v498, %v546
  %548 = vmatmul.bf16.gmra.mxu0 %v411
  %v549 = vpop.f32.mrf.mxu0
  %v550 = vadd.f32 %v501, %v549
  %v551 = vpop.f32.mrf.mxu0
  %v552 = vadd.f32 %v503, %v551
  %553 = vmatmul.bf16.gmra.mxu0 %v414
  %v554 = vpop.f32.mrf.mxu0
  %v555 = vadd.f32 %v506, %v554
  %v556 = vpop.f32.mrf.mxu0
  %v557 = vadd.f32 %v508, %v556
  %558 = vmatmul.bf16.gmra.mxu0 %v417
  %v559 = vpop.f32.mrf.mxu0
  %v560 = vadd.f32 %v511, %v559
  %v561 = vpop.f32.mrf.mxu0
  %v562 = vadd.f32 %v513, %v561
  %563 = vmatmul.bf16.gmra.mxu0 %v420
  %v564 = vpop.f32.mrf.mxu0
  %v565 = vadd.f32 %v516, %v564
  %v566 = vpop.f32.mrf.mxu0
  %v567 = vadd.f32 %v518, %v566
  %568 = vdwg.mxu0
  %v569 = vsel %vm397, %v530, 0.0
  %v570 = vsel %vm397, %v532, 0.0
  %v571 = vadd.f32 %v569, %v570
  %v572 = vsel %vm397, %v535, 0.0
  %v573 = vadd.f32 %v571, %v572
  %v574 = vsel %vm397, %v537, 0.0
  %v575 = vadd.f32 %v573, %v574
  %v576 = vsel %vm397, %v540, 0.0
  %v577 = vadd.f32 %v575, %v576
  %v578 = vsel %vm397, %v542, 0.0
  %v579 = vadd.f32 %v577, %v578
  %v580 = vsel %vm397, %v545, 0.0
  %v581 = vadd.f32 %v579, %v580
  %v582 = vsel %vm397, %v547, 0.0
  %v583 = vadd.f32 %v581, %v582
  %v584 = vsel %vm397, %v550, 0.0
  %v585 = vadd.f32 %v583, %v584
  %v586 = vsel %vm397, %v552, 0.0
  %v587 = vadd.f32 %v585, %v586
  %v588 = vsel %vm397, %v555, 0.0
  %v589 = vadd.f32 %v587, %v588
  %v590 = vsel %vm397, %v557, 0.0
  %v591 = vadd.f32 %v589, %v590
  %v592 = vsel %vm397, %v560, 0.0
  %v593 = vadd.f32 %v591, %v592
  %v594 = vsel %vm397, %v562, 0.0
  %v595 = vadd.f32 %v593, %v594
  %v596 = vsel %vm397, %v565, 0.0
  %v597 = vadd.f32 %v595, %v596
  %v598 = vsel %vm397, %v567, 0.0
  %v599 = vadd.f32 %v597, %v598
  %v600 = vrot.slane %v599, 4
  %v601 = vadd.f32 %v599, %v600
  %v602 = vrot.slane %v601, 2
  %v603 = vadd.f32 %v601, %v602
  %v604 = vrot.slane %v603, 1
  %v605 = vadd.f32 %v603, %v604
  %vm606 = vcmask 253952
  %607 = vst.msk [vmem:[%s5] sm:$0x1] %vm606, %v605
  %v608 = vmul.f32 %v530, %v530
  %v609 = vmul.f32 %v532, %v532
  %v610 = vmul.f32 %v535, %v535
  %v611 = vmul.f32 %v537, %v537
  %v612 = vmul.f32 %v540, %v540
  %v613 = vmul.f32 %v542, %v542
  %v614 = vmul.f32 %v545, %v545
  %v615 = vmul.f32 %v547, %v547
  %v616 = vmul.f32 %v550, %v550
  %v617 = vmul.f32 %v552, %v552
  %v618 = vmul.f32 %v555, %v555
  %v619 = vmul.f32 %v557, %v557
  %v620 = vmul.f32 %v560, %v560
  %v621 = vmul.f32 %v562, %v562
  %v622 = vmul.f32 %v565, %v565
  %v623 = vmul.f32 %v567, %v567
  %v624 = vsel %vm397, %v608, 0.0
  %v625 = vsel %vm397, %v609, 0.0
  %v626 = vadd.f32 %v624, %v625
  %v627 = vsel %vm397, %v610, 0.0
  %v628 = vadd.f32 %v626, %v627
  %v629 = vsel %vm397, %v611, 0.0
  %v630 = vadd.f32 %v628, %v629
  %v631 = vsel %vm397, %v612, 0.0
  %v632 = vadd.f32 %v630, %v631
  %v633 = vsel %vm397, %v613, 0.0
  %v634 = vadd.f32 %v632, %v633
  %v635 = vsel %vm397, %v614, 0.0
  %v636 = vadd.f32 %v634, %v635
  %v637 = vsel %vm397, %v615, 0.0
  %v638 = vadd.f32 %v636, %v637
  %v639 = vsel %vm397, %v616, 0.0
  %v640 = vadd.f32 %v638, %v639
  %v641 = vsel %vm397, %v617, 0.0
  %v642 = vadd.f32 %v640, %v641
  %v643 = vsel %vm397, %v618, 0.0
  %v644 = vadd.f32 %v642, %v643
  %v645 = vsel %vm397, %v619, 0.0
  %v646 = vadd.f32 %v644, %v645
  %v647 = vsel %vm397, %v620, 0.0
  %v648 = vadd.f32 %v646, %v647
  %v649 = vsel %vm397, %v621, 0.0
  %v650 = vadd.f32 %v648, %v649
  %v651 = vsel %vm397, %v622, 0.0
  %v652 = vadd.f32 %v650, %v651
  %v653 = vsel %vm397, %v623, 0.0
  %v654 = vadd.f32 %v652, %v653
  %v655 = vrot.slane %v654, 4
  %v656 = vadd.f32 %v654, %v655
  %v657 = vrot.slane %v656, 2
  %v658 = vadd.f32 %v656, %v657
  %v659 = vrot.slane %v658, 1
  %v660 = vadd.f32 %v658, %v659
  %661 = vst.msk [vmem:[%s6] sm:$0x1] %vm606, %v660
  %662 = vst.msk [vmem:[%s4] sm:$0xff] %vm397, %v530
  %663 = vst.msk [vmem:[%s4 + $0x8] sm:$0xff] %vm397, %v532
  %664 = vst.msk [vmem:[%s4 + $0x10] sm:$0xff] %vm397, %v535
  %665 = vst.msk [vmem:[%s4 + $0x18] sm:$0xff] %vm397, %v537
  %666 = vst.msk [vmem:[%s4 + $0x20] sm:$0xff] %vm397, %v540
  %667 = vst.msk [vmem:[%s4 + $0x28] sm:$0xff] %vm397, %v542
  %668 = vst.msk [vmem:[%s4 + $0x30] sm:$0xff] %vm397, %v545
  %669 = vst.msk [vmem:[%s4 + $0x38] sm:$0xff] %vm397, %v547
  %670 = vst.msk [vmem:[%s4 + $0x40] sm:$0xff] %vm397, %v550
  %671 = vst.msk [vmem:[%s4 + $0x48] sm:$0xff] %vm397, %v552
  %672 = vst.msk [vmem:[%s4 + $0x50] sm:$0xff] %vm397, %v555
  %673 = vst.msk [vmem:[%s4 + $0x58] sm:$0xff] %vm397, %v557
  %674 = vst.msk [vmem:[%s4 + $0x60] sm:$0xff] %vm397, %v560
  %675 = vst.msk [vmem:[%s4 + $0x68] sm:$0xff] %vm397, %v562
  %676 = vst.msk [vmem:[%s4 + $0x70] sm:$0xff] %vm397, %v565
  %677 = vst.msk [vmem:[%s4 + $0x78] sm:$0xff] %vm397, %v567
  // Predicated region
  $region18: #{forward.21} parent=0 // pred_check
    _
  $region19: #{forward.21} parent=0 // pred_check_branch
    %679 = sbr.rel (0) target = $region21
  $region20: #{forward.21} parent=0 // pred_region
    _
  $region21: #{forward.21} parent=0 // pred_fallthru
    _
  // Predicated region
  $region22: #{forward.21} parent=0 // pred_check
    _
  $region23: #{forward.21} parent=0 // pred_check_branch
    %681 = sbr.rel (0) target = $region25
  $region24: #{forward.21} parent=0 // pred_region
    _
  $region25: #{forward.21} parent=0 // pred_fallthru
    _
  // Predicated region
  $region26: #{forward.21} parent=0 // pred_check
    _
  $region27: #{forward.21} parent=0 // pred_check_branch
    %683 = sbr.rel (0) target = $region29
  $region28: #{forward.21} parent=0 // pred_region
    _
  $region29: #{forward.21} parent=0 // pred_fallthru
    _
  // Predicated region
  $region30: #{forward.21} parent=0 // pred_check
    _
  $region31: #{forward.21} parent=0 // pred_check_branch
    %685 = sbr.rel (0) target = $region33
  $region32: #{forward.21} parent=0 // pred_region
    _
  $region33: #{forward.21} parent=0 // pred_fallthru
    _
  // Predicated region
  $region34: #{forward.21} parent=0 // pred_check
    _
  $region35: #{forward.21} parent=0 // pred_check_branch
    %687 = sbr.rel (0) target = $region37
  $region36: #{forward.21} parent=0 // pred_region
    _
  $region37: #{forward.21} parent=0 // pred_fallthru
    _
  // Predicated region
  $region38: #{forward.21} parent=0 // pred_check
    _
  $region39: #{forward.21} parent=0 // pred_check_branch
    %689 = sbr.rel (0) target = $region41
  $region40: #{forward.21} parent=0 // pred_region
    _
  $region41: #{forward.21} parent=0 // pred_fallthru
    _

// kernel: forward.22
$region0: #{forward.22}
  #allocation0 [shape = 'u32[]', space=smem, size = 0x4, offset = 0x4, fixed_abs, tag = 'smem constant byte address 0x4 - core index']
  #allocation1 [shape = 'u32[72,128]{1,0:T(1,128)}', space=vmem, size = 0x9000, scoped, tag = 'internal scratch']
  %s0 = inlined_call_operand.vmem [shape: f32[512,144], index: 0, kind: input, shape index: {}]
  %s1 = inlined_call_operand.vmem [shape: bf16[144,12], index: 1, kind: input, shape index: {}]
  %s2 = inlined_call_operand.vmem [shape: f32[1,144], index: 2, kind: input, shape index: {}]
  %s3 = inlined_call_operand.vmem [shape: f32[1,144], index: 3, kind: input, shape index: {}]
  %s4 = inlined_call_operand.vmem [shape: f32[1,12], index: 4, kind: input, shape index: {}]
  %s5 = inlined_call_operand.vmem [shape: f32[512,12], index: 5, kind: output, shape index: {}]
  %s6 = sld [smem:[#allocation0]]
  $region30: #{forward.22} parent=0
    _
  %s8 = ssub.s32 1, %s6
  %s9 = scalar_select 0, %s8, %s6
  // Predicated region
  $region2: #{forward.22} parent=0 // pred_check
    _
  $region3: #{forward.22} parent=0 // pred_check_branch
    %11 = sbr.rel (0) target = $region5
  $region4: #{forward.22} parent=0 // pred_region
    _
  $region5: #{forward.22} parent=0 // pred_fallthru
    _
  // Predicated region
  $region6: #{forward.22} parent=0 // pred_check
    _
  $region7: #{forward.22} parent=0 // pred_check_branch
    %13 = sbr.rel (0) target = $region9
  $region8: #{forward.22} parent=0 // pred_region
    _
  $region9: #{forward.22} parent=0 // pred_fallthru
    _
  // Predicated region
  $region10: #{forward.22} parent=0 // pred_check
    _
  $region11: #{forward.22} parent=0 // pred_check_branch
    %15 = sbr.rel (0) target = $region13
  $region12: #{forward.22} parent=0 // pred_region
    _
  $region13: #{forward.22} parent=0 // pred_fallthru
    _
  // Predicated region
  $region14: #{forward.22} parent=0 // pred_check
    _
  $region15: #{forward.22} parent=0 // pred_check_branch
    %17 = sbr.rel (0) target = $region17
  $region16: #{forward.22} parent=0 // pred_region
    _
  $region17: #{forward.22} parent=0 // pred_fallthru
    _
  // Predicated region
  $region18: #{forward.22} parent=0 // pred_check
    _
  $region19: #{forward.22} parent=0 // pred_check_branch
    %19 = sbr.rel (0) target = $region21
  $region20: #{forward.22} parent=0 // pred_region
    _
  $region21: #{forward.22} parent=0 // pred_fallthru
    _
  %v21 = vld [vmem:[%s0] sm:$0xff]
  %v22 = vld [vmem:[%s0 + $0x8] sm:$0xff]
  %v23 = vld [vmem:[%s0 + $0x10] sm:$0xff]
  %v24 = vld [vmem:[%s0 + $0x18] sm:$0xff]
  %v25 = vld [vmem:[%s0 + $0x20] sm:$0xff]
  %v26 = vld [vmem:[%s0 + $0x28] sm:$0xff]
  %v27 = vld [vmem:[%s0 + $0x30] sm:$0xff]
  %v28 = vld [vmem:[%s0 + $0x38] sm:$0xff]
  %v29 = vld [vmem:[%s0 + $0x40] sm:$0xff]
  %v30 = vld [vmem:[%s0 + $0x48] sm:$0xff]
  %v31 = vld [vmem:[%s0 + $0x50] sm:$0xff]
  %v32 = vld [vmem:[%s0 + $0x58] sm:$0xff]
  %v33 = vld [vmem:[%s0 + $0x60] sm:$0xff]
  %v34 = vld [vmem:[%s0 + $0x68] sm:$0xff]
  %v35 = vld [vmem:[%s0 + $0x70] sm:$0xff]
  %v36 = vld [vmem:[%s0 + $0x78] sm:$0xff]
  %v37 = vld [vmem:[%s0 + $0x80] sm:$0xff]
  %v38 = vld [vmem:[%s0 + $0x88] sm:$0xff]
  %v39 = vld [vmem:[%s0 + $0x90] sm:$0xff]
  %v40 = vld [vmem:[%s0 + $0x98] sm:$0xff]
  %v41 = vld [vmem:[%s0 + $0xa0] sm:$0xff]
  %v42 = vld [vmem:[%s0 + $0xa8] sm:$0xff]
  %v43 = vld [vmem:[%s0 + $0xb0] sm:$0xff]
  %v44 = vld [vmem:[%s0 + $0xb8] sm:$0xff]
  %v45 = vld [vmem:[%s0 + $0xc0] sm:$0xff]
  %v46 = vld [vmem:[%s0 + $0xc8] sm:$0xff]
  %v47 = vld [vmem:[%s0 + $0xd0] sm:$0xff]
  %v48 = vld [vmem:[%s0 + $0xd8] sm:$0xff]
  %v49 = vld [vmem:[%s0 + $0xe0] sm:$0xff]
  %v50 = vld [vmem:[%s0 + $0xe8] sm:$0xff]
  %v51 = vld [vmem:[%s0 + $0xf0] sm:$0xff]
  %v52 = vld [vmem:[%s0 + $0xf8] sm:$0xff]
  %v53 = vld [vmem:[%s0 + $0x100] sm:$0xff]
  %v54 = vld [vmem:[%s0 + $0x108] sm:$0xff]
  %v55 = vld [vmem:[%s0 + $0x110] sm:$0xff]
  %v56 = vld [vmem:[%s0 + $0x118] sm:$0xff]
  %v57 = vld [vmem:[%s0 + $0x120] sm:$0xff]
  %v58 = vld [vmem:[%s0 + $0x128] sm:$0xff]
  %v59 = vld [vmem:[%s0 + $0x130] sm:$0xff]
  %v60 = vld [vmem:[%s0 + $0x138] sm:$0xff]
  %v61 = vld [vmem:[%s0 + $0x140] sm:$0xff]
  %v62 = vld [vmem:[%s0 + $0x148] sm:$0xff]
  %v63 = vld [vmem:[%s0 + $0x150] sm:$0xff]
  %v64 = vld [vmem:[%s0 + $0x158] sm:$0xff]
  %v65 = vld [vmem:[%s0 + $0x160] sm:$0xff]
  %v66 = vld [vmem:[%s0 + $0x168] sm:$0xff]
  %v67 = vld [vmem:[%s0 + $0x170] sm:$0xff]
  %v68 = vld [vmem:[%s0 + $0x178] sm:$0xff]
  %v69 = vld [vmem:[%s0 + $0x180] sm:$0xff]
  %v70 = vld [vmem:[%s0 + $0x188] sm:$0xff]
  %v71 = vld [vmem:[%s0 + $0x190] sm:$0xff]
  %v72 = vld [vmem:[%s0 + $0x198] sm:$0xff]
  %v73 = vld [vmem:[%s0 + $0x1a0] sm:$0xff]
  %v74 = vld [vmem:[%s0 + $0x1a8] sm:$0xff]
  %v75 = vld [vmem:[%s0 + $0x1b0] sm:$0xff]
  %v76 = vld [vmem:[%s0 + $0x1b8] sm:$0xff]
  %v77 = vld [vmem:[%s0 + $0x1c0] sm:$0xff]
  %v78 = vld [vmem:[%s0 + $0x1c8] sm:$0xff]
  %v79 = vld [vmem:[%s0 + $0x1d0] sm:$0xff]
  %v80 = vld [vmem:[%s0 + $0x1d8] sm:$0xff]
  %v81 = vld [vmem:[%s0 + $0x1e0] sm:$0xff]
  %v82 = vld [vmem:[%s0 + $0x1e8] sm:$0xff]
  %v83 = vld [vmem:[%s0 + $0x1f0] sm:$0xff]
  %v84 = vld [vmem:[%s0 + $0x1f8] sm:$0xff]
  %v85 = vld [vmem:[%s0 + $0x200] sm:$0xff]
  %v86 = vld [vmem:[%s0 + $0x208] sm:$0xff]
  %v87 = vld [vmem:[%s0 + $0x210] sm:$0xff]
  %v88 = vld [vmem:[%s0 + $0x218] sm:$0xff]
  %v89 = vld [vmem:[%s0 + $0x220] sm:$0xff]
  %v90 = vld [vmem:[%s0 + $0x228] sm:$0xff]
  %v91 = vld [vmem:[%s0 + $0x230] sm:$0xff]
  %v92 = vld [vmem:[%s0 + $0x238] sm:$0xff]
  %v93 = vld [vmem:[%s0 + $0x240] sm:$0xff]
  %v94 = vld [vmem:[%s0 + $0x248] sm:$0xff]
  %v95 = vld [vmem:[%s0 + $0x250] sm:$0xff]
  %v96 = vld [vmem:[%s0 + $0x258] sm:$0xff]
  %v97 = vld [vmem:[%s0 + $0x260] sm:$0xff]
  %v98 = vld [vmem:[%s0 + $0x268] sm:$0xff]
  %v99 = vld [vmem:[%s0 + $0x270] sm:$0xff]
  %v100 = vld [vmem:[%s0 + $0x278] sm:$0xff]
  %v101 = vld [vmem:[%s0 + $0x280] sm:$0xff]
  %v102 = vld [vmem:[%s0 + $0x288] sm:$0xff]
  %v103 = vld [vmem:[%s0 + $0x290] sm:$0xff]
  %v104 = vld [vmem:[%s0 + $0x298] sm:$0xff]
  %v105 = vld [vmem:[%s0 + $0x2a0] sm:$0xff]
  %v106 = vld [vmem:[%s0 + $0x2a8] sm:$0xff]
  %v107 = vld [vmem:[%s0 + $0x2b0] sm:$0xff]
  %v108 = vld [vmem:[%s0 + $0x2b8] sm:$0xff]
  %v109 = vld [vmem:[%s0 + $0x2c0] sm:$0xff]
  %v110 = vld [vmem:[%s0 + $0x2c8] sm:$0xff]
  %v111 = vld [vmem:[%s0 + $0x2d0] sm:$0xff]
  %v112 = vld [vmem:[%s0 + $0x2d8] sm:$0xff]
  %v113 = vld [vmem:[%s0 + $0x2e0] sm:$0xff]
  %v114 = vld [vmem:[%s0 + $0x2e8] sm:$0xff]
  %v115 = vld [vmem:[%s0 + $0x2f0] sm:$0xff]
  %v116 = vld [vmem:[%s0 + $0x2f8] sm:$0xff]
  %v117 = vld [vmem:[%s0 + $0x300] sm:$0xff]
  %v118 = vld [vmem:[%s0 + $0x308] sm:$0xff]
  %v119 = vld [vmem:[%s0 + $0x310] sm:$0xff]
  %v120 = vld [vmem:[%s0 + $0x318] sm:$0xff]
  %v121 = vld [vmem:[%s0 + $0x320] sm:$0xff]
  %v122 = vld [vmem:[%s0 + $0x328] sm:$0xff]
  %v123 = vld [vmem:[%s0 + $0x330] sm:$0xff]
  %v124 = vld [vmem:[%s0 + $0x338] sm:$0xff]
  %v125 = vld [vmem:[%s0 + $0x340] sm:$0xff]
  %v126 = vld [vmem:[%s0 + $0x348] sm:$0xff]
  %v127 = vld [vmem:[%s0 + $0x350] sm:$0xff]
  %v128 = vld [vmem:[%s0 + $0x358] sm:$0xff]
  %v129 = vld [vmem:[%s0 + $0x360] sm:$0xff]
  %v130 = vld [vmem:[%s0 + $0x368] sm:$0xff]
  %v131 = vld [vmem:[%s0 + $0x370] sm:$0xff]
  %v132 = vld [vmem:[%s0 + $0x378] sm:$0xff]
  %v133 = vld [vmem:[%s0 + $0x380] sm:$0xff]
  %v134 = vld [vmem:[%s0 + $0x388] sm:$0xff]
  %v135 = vld [vmem:[%s0 + $0x390] sm:$0xff]
  %v136 = vld [vmem:[%s0 + $0x398] sm:$0xff]
  %v137 = vld [vmem:[%s0 + $0x3a0] sm:$0xff]
  %v138 = vld [vmem:[%s0 + $0x3a8] sm:$0xff]
  %v139 = vld [vmem:[%s0 + $0x3b0] sm:$0xff]
  %v140 = vld [vmem:[%s0 + $0x3b8] sm:$0xff]
  %v141 = vld [vmem:[%s0 + $0x3c0] sm:$0xff]
  %v142 = vld [vmem:[%s0 + $0x3c8] sm:$0xff]
  %v143 = vld [vmem:[%s0 + $0x3d0] sm:$0xff]
  %v144 = vld [vmem:[%s0 + $0x3d8] sm:$0xff]
  %v145 = vld [vmem:[%s0 + $0x3e0] sm:$0xff]
  %v146 = vld [vmem:[%s0 + $0x3e8] sm:$0xff]
  %v147 = vld [vmem:[%s0 + $0x3f0] sm:$0xff]
  %v148 = vld [vmem:[%s0 + $0x3f8] sm:$0xff]
  %v149 = vld [vmem:[%s2] sm:$0x3]
  %v151 = vperm.slane %v149, 0
  %v152 = vperm.slane %v149, 1
  %v155 = vmul.f32 %v21, %v151
  %v156 = vmul.f32 %v22, %v152
  %v157 = vmul.f32 %v23, %v151
  %v158 = vmul.f32 %v24, %v152
  %v159 = vmul.f32 %v25, %v151
  %v160 = vmul.f32 %v26, %v152
  %v161 = vmul.f32 %v27, %v151
  %v162 = vmul.f32 %v28, %v152
  %v163 = vmul.f32 %v29, %v151
  %v164 = vmul.f32 %v30, %v152
  %v165 = vmul.f32 %v31, %v151
  %v166 = vmul.f32 %v32, %v152
  %v167 = vmul.f32 %v33, %v151
  %v168 = vmul.f32 %v34, %v152
  %v169 = vmul.f32 %v35, %v151
  %v170 = vmul.f32 %v36, %v152
  %v171 = vmul.f32 %v37, %v151
  %v172 = vmul.f32 %v38, %v152
  %v173 = vmul.f32 %v39, %v151
  %v174 = vmul.f32 %v40, %v152
  %v175 = vmul.f32 %v41, %v151
  %v176 = vmul.f32 %v42, %v152
  %v177 = vmul.f32 %v43, %v151
  %v178 = vmul.f32 %v44, %v152
  %v179 = vmul.f32 %v45, %v151
  %v180 = vmul.f32 %v46, %v152
  %v181 = vmul.f32 %v47, %v151
  %v182 = vmul.f32 %v48, %v152
  %v183 = vmul.f32 %v49, %v151
  %v184 = vmul.f32 %v50, %v152
  %v185 = vmul.f32 %v51, %v151
  %v186 = vmul.f32 %v52, %v152
  %v187 = vmul.f32 %v53, %v151
  %v188 = vmul.f32 %v54, %v152
  %v189 = vmul.f32 %v55, %v151
  %v190 = vmul.f32 %v56, %v152
  %v191 = vmul.f32 %v57, %v151
  %v192 = vmul.f32 %v58, %v152
  %v193 = vmul.f32 %v59, %v151
  %v194 = vmul.f32 %v60, %v152
  %v195 = vmul.f32 %v61, %v151
  %v196 = vmul.f32 %v62, %v152
  %v197 = vmul.f32 %v63, %v151
  %v198 = vmul.f32 %v64, %v152
  %v199 = vmul.f32 %v65, %v151
  %v200 = vmul.f32 %v66, %v152
  %v201 = vmul.f32 %v67, %v151
  %v202 = vmul.f32 %v68, %v152
  %v203 = vmul.f32 %v69, %v151
  %v204 = vmul.f32 %v70, %v152
  %v205 = vmul.f32 %v71, %v151
  %v206 = vmul.f32 %v72, %v152
  %v207 = vmul.f32 %v73, %v151
  %v208 = vmul.f32 %v74, %v152
  %v209 = vmul.f32 %v75, %v151
  %v210 = vmul.f32 %v76, %v152
  %v211 = vmul.f32 %v77, %v151
  %v212 = vmul.f32 %v78, %v152
  %v213 = vmul.f32 %v79, %v151
  %v214 = vmul.f32 %v80, %v152
  %v215 = vmul.f32 %v81, %v151
  %v216 = vmul.f32 %v82, %v152
  %v217 = vmul.f32 %v83, %v151
  %v218 = vmul.f32 %v84, %v152
  %v219 = vmul.f32 %v85, %v151
  %v220 = vmul.f32 %v86, %v152
  %v221 = vmul.f32 %v87, %v151
  %v222 = vmul.f32 %v88, %v152
  %v223 = vmul.f32 %v89, %v151
  %v224 = vmul.f32 %v90, %v152
  %v225 = vmul.f32 %v91, %v151
  %v226 = vmul.f32 %v92, %v152
  %v227 = vmul.f32 %v93, %v151
  %v228 = vmul.f32 %v94, %v152
  %v229 = vmul.f32 %v95, %v151
  %v230 = vmul.f32 %v96, %v152
  %v231 = vmul.f32 %v97, %v151
  %v232 = vmul.f32 %v98, %v152
  %v233 = vmul.f32 %v99, %v151
  %v234 = vmul.f32 %v100, %v152
  %v235 = vmul.f32 %v101, %v151
  %v236 = vmul.f32 %v102, %v152
  %v237 = vmul.f32 %v103, %v151
  %v238 = vmul.f32 %v104, %v152
  %v239 = vmul.f32 %v105, %v151
  %v240 = vmul.f32 %v106, %v152
  %v241 = vmul.f32 %v107, %v151
  %v242 = vmul.f32 %v108, %v152
  %v243 = vmul.f32 %v109, %v151
  %v244 = vmul.f32 %v110, %v152
  %v245 = vmul.f32 %v111, %v151
  %v246 = vmul.f32 %v112, %v152
  %v247 = vmul.f32 %v113, %v151
  %v248 = vmul.f32 %v114, %v152
  %v249 = vmul.f32 %v115, %v151
  %v250 = vmul.f32 %v116, %v152
  %v251 = vmul.f32 %v117, %v151
  %v252 = vmul.f32 %v118, %v152
  %v253 = vmul.f32 %v119, %v151
  %v254 = vmul.f32 %v120, %v152
  %v255 = vmul.f32 %v121, %v151
  %v256 = vmul.f32 %v122, %v152
  %v257 = vmul.f32 %v123, %v151
  %v258 = vmul.f32 %v124, %v152
  %v259 = vmul.f32 %v125, %v151
  %v260 = vmul.f32 %v126, %v152
  %v261 = vmul.f32 %v127, %v151
  %v262 = vmul.f32 %v128, %v152
  %v263 = vmul.f32 %v129, %v151
  %v264 = vmul.f32 %v130, %v152
  %v265 = vmul.f32 %v131, %v151
  %v266 = vmul.f32 %v132, %v152
  %v267 = vmul.f32 %v133, %v151
  %v268 = vmul.f32 %v134, %v152
  %v269 = vmul.f32 %v135, %v151
  %v270 = vmul.f32 %v136, %v152
  %v271 = vmul.f32 %v137, %v151
  %v272 = vmul.f32 %v138, %v152
  %v273 = vmul.f32 %v139, %v151
  %v274 = vmul.f32 %v140, %v152
  %v275 = vmul.f32 %v141, %v151
  %v276 = vmul.f32 %v142, %v152
  %v277 = vmul.f32 %v143, %v151
  %v278 = vmul.f32 %v144, %v152
  %v279 = vmul.f32 %v145, %v151
  %v280 = vmul.f32 %v146, %v152
  %v281 = vmul.f32 %v147, %v151
  %v282 = vmul.f32 %v148, %v152
  %v283 = vld [vmem:[%s3] sm:$0x3]
  %v285 = vperm.slane %v283, 0
  %v286 = vperm.slane %v283, 1
  %v289 = vadd.f32 %v155, %v285
  %v290 = vadd.f32 %v156, %v286
  %v291 = vadd.f32 %v157, %v285
  %v292 = vadd.f32 %v158, %v286
  %v293 = vadd.f32 %v159, %v285
  %v294 = vadd.f32 %v160, %v286
  %v295 = vadd.f32 %v161, %v285
  %v296 = vadd.f32 %v162, %v286
  %v297 = vadd.f32 %v163, %v285
  %v298 = vadd.f32 %v164, %v286
  %v299 = vadd.f32 %v165, %v285
  %v300 = vadd.f32 %v166, %v286
  %v301 = vadd.f32 %v167, %v285
  %v302 = vadd.f32 %v168, %v286
  %v303 = vadd.f32 %v169, %v285
  %v304 = vadd.f32 %v170, %v286
  %v305 = vadd.f32 %v171, %v285
  %v306 = vadd.f32 %v172, %v286
  %v307 = vadd.f32 %v173, %v285
  %v308 = vadd.f32 %v174, %v286
  %v309 = vadd.f32 %v175, %v285
  %v310 = vadd.f32 %v176, %v286
  %v311 = vadd.f32 %v177, %v285
  %v312 = vadd.f32 %v178, %v286
  %v313 = vadd.f32 %v179, %v285
  %v314 = vadd.f32 %v180, %v286
  %v315 = vadd.f32 %v181, %v285
  %v316 = vadd.f32 %v182, %v286
  %v317 = vadd.f32 %v183, %v285
  %v318 = vadd.f32 %v184, %v286
  %v319 = vadd.f32 %v185, %v285
  %v320 = vadd.f32 %v186, %v286
  %v321 = vadd.f32 %v187, %v285
  %v322 = vadd.f32 %v188, %v286
  %v323 = vadd.f32 %v189, %v285
  %v324 = vadd.f32 %v190, %v286
  %v325 = vadd.f32 %v191, %v285
  %v326 = vadd.f32 %v192, %v286
  %v327 = vadd.f32 %v193, %v285
  %v328 = vadd.f32 %v194, %v286
  %v329 = vadd.f32 %v195, %v285
  %v330 = vadd.f32 %v196, %v286
  %v331 = vadd.f32 %v197, %v285
  %v332 = vadd.f32 %v198, %v286
  %v333 = vadd.f32 %v199, %v285
  %v334 = vadd.f32 %v200, %v286
  %v335 = vadd.f32 %v201, %v285
  %v336 = vadd.f32 %v202, %v286
  %v337 = vadd.f32 %v203, %v285
  %v338 = vadd.f32 %v204, %v286
  %v339 = vadd.f32 %v205, %v285
  %v340 = vadd.f32 %v206, %v286
  %v341 = vadd.f32 %v207, %v285
  %v342 = vadd.f32 %v208, %v286
  %v343 = vadd.f32 %v209, %v285
  %v344 = vadd.f32 %v210, %v286
  %v345 = vadd.f32 %v211, %v285
  %v346 = vadd.f32 %v212, %v286
  %v347 = vadd.f32 %v213, %v285
  %v348 = vadd.f32 %v214, %v286
  %v349 = vadd.f32 %v215, %v285
  %v350 = vadd.f32 %v216, %v286
  %v351 = vadd.f32 %v217, %v285
  %v352 = vadd.f32 %v218, %v286
  %v353 = vadd.f32 %v219, %v285
  %v354 = vadd.f32 %v220, %v286
  %v355 = vadd.f32 %v221, %v285
  %v356 = vadd.f32 %v222, %v286
  %v357 = vadd.f32 %v223, %v285
  %v358 = vadd.f32 %v224, %v286
  %v359 = vadd.f32 %v225, %v285
  %v360 = vadd.f32 %v226, %v286
  %v361 = vadd.f32 %v227, %v285
  %v362 = vadd.f32 %v228, %v286
  %v363 = vadd.f32 %v229, %v285
  %v364 = vadd.f32 %v230, %v286
  %v365 = vadd.f32 %v231, %v285
  %v366 = vadd.f32 %v232, %v286
  %v367 = vadd.f32 %v233, %v285
  %v368 = vadd.f32 %v234, %v286
  %v369 = vadd.f32 %v235, %v285
  %v370 = vadd.f32 %v236, %v286
  %v371 = vadd.f32 %v237, %v285
  %v372 = vadd.f32 %v238, %v286
  %v373 = vadd.f32 %v239, %v285
  %v374 = vadd.f32 %v240, %v286
  %v375 = vadd.f32 %v241, %v285
  %v376 = vadd.f32 %v242, %v286
  %v377 = vadd.f32 %v243, %v285
  %v378 = vadd.f32 %v244, %v286
  %v379 = vadd.f32 %v245, %v285
  %v380 = vadd.f32 %v246, %v286
  %v381 = vadd.f32 %v247, %v285
  %v382 = vadd.f32 %v248, %v286
  %v383 = vadd.f32 %v249, %v285
  %v384 = vadd.f32 %v250, %v286
  %v385 = vadd.f32 %v251, %v285
  %v386 = vadd.f32 %v252, %v286
  %v387 = vadd.f32 %v253, %v285
  %v388 = vadd.f32 %v254, %v286
  %v389 = vadd.f32 %v255, %v285
  %v390 = vadd.f32 %v256, %v286
  %v391 = vadd.f32 %v257, %v285
  %v392 = vadd.f32 %v258, %v286
  %v393 = vadd.f32 %v259, %v285
  %v394 = vadd.f32 %v260, %v286
  %v395 = vadd.f32 %v261, %v285
  %v396 = vadd.f32 %v262, %v286
  %v397 = vadd.f32 %v263, %v285
  %v398 = vadd.f32 %v264, %v286
  %v399 = vadd.f32 %v265, %v285
  %v400 = vadd.f32 %v266, %v286
  %v401 = vadd.f32 %v267, %v285
  %v402 = vadd.f32 %v268, %v286
  %v403 = vadd.f32 %v269, %v285
  %v404 = vadd.f32 %v270, %v286
  %v405 = vadd.f32 %v271, %v285
  %v406 = vadd.f32 %v272, %v286
  %v407 = vadd.f32 %v273, %v285
  %v408 = vadd.f32 %v274, %v286
  %v409 = vadd.f32 %v275, %v285
  %v410 = vadd.f32 %v276, %v286
  %v411 = vadd.f32 %v277, %v285
  %v412 = vadd.f32 %v278, %v286
  %v413 = vadd.f32 %v279, %v285
  %v414 = vadd.f32 %v280, %v286
  %v415 = vadd.f32 %v281, %v285
  %v416 = vadd.f32 %v282, %v286
  %v417 = vmax.f32 %v289, 0.0
  %v418 = vmax.f32 %v290, 0.0
  %v419 = vmax.f32 %v291, 0.0
  %v420 = vmax.f32 %v292, 0.0
  %v421 = vmax.f32 %v293, 0.0
  %v422 = vmax.f32 %v294, 0.0
  %v423 = vmax.f32 %v295, 0.0
  %v424 = vmax.f32 %v296, 0.0
  %v425 = vmax.f32 %v297, 0.0
  %v426 = vmax.f32 %v298, 0.0
  %v427 = vmax.f32 %v299, 0.0
  %v428 = vmax.f32 %v300, 0.0
  %v429 = vmax.f32 %v301, 0.0
  %v430 = vmax.f32 %v302, 0.0
  %v431 = vmax.f32 %v303, 0.0
  %v432 = vmax.f32 %v304, 0.0
  %v433 = vmax.f32 %v305, 0.0
  %v434 = vmax.f32 %v306, 0.0
  %v435 = vmax.f32 %v307, 0.0
  %v436 = vmax.f32 %v308, 0.0
  %v437 = vmax.f32 %v309, 0.0
  %v438 = vmax.f32 %v310, 0.0
  %v439 = vmax.f32 %v311, 0.0
  %v440 = vmax.f32 %v312, 0.0
  %v441 = vmax.f32 %v313, 0.0
  %v442 = vmax.f32 %v314, 0.0
  %v443 = vmax.f32 %v315, 0.0
  %v444 = vmax.f32 %v316, 0.0
  %v445 = vmax.f32 %v317, 0.0
  %v446 = vmax.f32 %v318, 0.0
  %v447 = vmax.f32 %v319, 0.0
  %v448 = vmax.f32 %v320, 0.0
  %v449 = vmax.f32 %v321, 0.0
  %v450 = vmax.f32 %v322, 0.0
  %v451 = vmax.f32 %v323, 0.0
  %v452 = vmax.f32 %v324, 0.0
  %v453 = vmax.f32 %v325, 0.0
  %v454 = vmax.f32 %v326, 0.0
  %v455 = vmax.f32 %v327, 0.0
  %v456 = vmax.f32 %v328, 0.0
  %v457 = vmax.f32 %v329, 0.0
  %v458 = vmax.f32 %v330, 0.0
  %v459 = vmax.f32 %v331, 0.0
  %v460 = vmax.f32 %v332, 0.0
  %v461 = vmax.f32 %v333, 0.0
  %v462 = vmax.f32 %v334, 0.0
  %v463 = vmax.f32 %v335, 0.0
  %v464 = vmax.f32 %v336, 0.0
  %v465 = vmax.f32 %v337, 0.0
  %v466 = vmax.f32 %v338, 0.0
  %v467 = vmax.f32 %v339, 0.0
  %v468 = vmax.f32 %v340, 0.0
  %v469 = vmax.f32 %v341, 0.0
  %v470 = vmax.f32 %v342, 0.0
  %v471 = vmax.f32 %v343, 0.0
  %v472 = vmax.f32 %v344, 0.0
  %v473 = vmax.f32 %v345, 0.0
  %v474 = vmax.f32 %v346, 0.0
  %v475 = vmax.f32 %v347, 0.0
  %v476 = vmax.f32 %v348, 0.0
  %v477 = vmax.f32 %v349, 0.0
  %v478 = vmax.f32 %v350, 0.0
  %v479 = vmax.f32 %v351, 0.0
  %v480 = vmax.f32 %v352, 0.0
  %v481 = vmax.f32 %v353, 0.0
  %v482 = vmax.f32 %v354, 0.0
  %v483 = vmax.f32 %v355, 0.0
  %v484 = vmax.f32 %v356, 0.0
  %v485 = vmax.f32 %v357, 0.0
  %v486 = vmax.f32 %v358, 0.0
  %v487 = vmax.f32 %v359, 0.0
  %v488 = vmax.f32 %v360, 0.0
  %v489 = vmax.f32 %v361, 0.0
  %v490 = vmax.f32 %v362, 0.0
  %v491 = vmax.f32 %v363, 0.0
  %v492 = vmax.f32 %v364, 0.0
  %v493 = vmax.f32 %v365, 0.0
  %v494 = vmax.f32 %v366, 0.0
  %v495 = vmax.f32 %v367, 0.0
  %v496 = vmax.f32 %v368, 0.0
  %v497 = vmax.f32 %v369, 0.0
  %v498 = vmax.f32 %v370, 0.0
  %v499 = vmax.f32 %v371, 0.0
  %v500 = vmax.f32 %v372, 0.0
  %v501 = vmax.f32 %v373, 0.0
  %v502 = vmax.f32 %v374, 0.0
  %v503 = vmax.f32 %v375, 0.0
  %v504 = vmax.f32 %v376, 0.0
  %v505 = vmax.f32 %v377, 0.0
  %v506 = vmax.f32 %v378, 0.0
  %v507 = vmax.f32 %v379, 0.0
  %v508 = vmax.f32 %v380, 0.0
  %v509 = vmax.f32 %v381, 0.0
  %v510 = vmax.f32 %v382, 0.0
  %v511 = vmax.f32 %v383, 0.0
  %v512 = vmax.f32 %v384, 0.0
  %v513 = vmax.f32 %v385, 0.0
  %v514 = vmax.f32 %v386, 0.0
  %v515 = vmax.f32 %v387, 0.0
  %v516 = vmax.f32 %v388, 0.0
  %v517 = vmax.f32 %v389, 0.0
  %v518 = vmax.f32 %v390, 0.0
  %v519 = vmax.f32 %v391, 0.0
  %v520 = vmax.f32 %v392, 0.0
  %v521 = vmax.f32 %v393, 0.0
  %v522 = vmax.f32 %v394, 0.0
  %v523 = vmax.f32 %v395, 0.0
  %v524 = vmax.f32 %v396, 0.0
  %v525 = vmax.f32 %v397, 0.0
  %v526 = vmax.f32 %v398, 0.0
  %v527 = vmax.f32 %v399, 0.0
  %v528 = vmax.f32 %v400, 0.0
  %v529 = vmax.f32 %v401, 0.0
  %v530 = vmax.f32 %v402, 0.0
  %v531 = vmax.f32 %v403, 0.0
  %v532 = vmax.f32 %v404, 0.0
  %v533 = vmax.f32 %v405, 0.0
  %v534 = vmax.f32 %v406, 0.0
  %v535 = vmax.f32 %v407, 0.0
  %v536 = vmax.f32 %v408, 0.0
  %v537 = vmax.f32 %v409, 0.0
  %v538 = vmax.f32 %v410, 0.0
  %v539 = vmax.f32 %v411, 0.0
  %v540 = vmax.f32 %v412, 0.0
  %v541 = vmax.f32 %v413, 0.0
  %v542 = vmax.f32 %v414, 0.0
  %v543 = vmax.f32 %v415, 0.0
  %v544 = vmax.f32 %v416, 0.0
  %v545 = vpack.c.bf16 %v419, %v417
  %v546 = vpack.c.bf16 %v420, %v418
  %v547 = vpack.c.bf16 %v423, %v421
  %v548 = vpack.c.bf16 %v424, %v422
  %v549 = vpack.c.bf16 %v427, %v425
  %v550 = vpack.c.bf16 %v428, %v426
  %v551 = vpack.c.bf16 %v431, %v429
  %v552 = vpack.c.bf16 %v432, %v430
  %v553 = vpack.c.bf16 %v435, %v433
  %v554 = vpack.c.bf16 %v436, %v434
  %v555 = vpack.c.bf16 %v439, %v437
  %v556 = vpack.c.bf16 %v440, %v438
  %v557 = vpack.c.bf16 %v443, %v441
  %v558 = vpack.c.bf16 %v444, %v442
  %v559 = vpack.c.bf16 %v447, %v445
  %v560 = vpack.c.bf16 %v448, %v446
  %v561 = vpack.c.bf16 %v451, %v449
  %v562 = vpack.c.bf16 %v452, %v450
  %v563 = vpack.c.bf16 %v455, %v453
  %v564 = vpack.c.bf16 %v456, %v454
  %v565 = vpack.c.bf16 %v459, %v457
  %v566 = vpack.c.bf16 %v460, %v458
  %v567 = vpack.c.bf16 %v463, %v461
  %v568 = vpack.c.bf16 %v464, %v462
  %v569 = vpack.c.bf16 %v467, %v465
  %v570 = vpack.c.bf16 %v468, %v466
  %v571 = vpack.c.bf16 %v471, %v469
  %v572 = vpack.c.bf16 %v472, %v470
  %v573 = vpack.c.bf16 %v475, %v473
  %v574 = vpack.c.bf16 %v476, %v474
  %v575 = vpack.c.bf16 %v479, %v477
  %v576 = vpack.c.bf16 %v480, %v478
  %v577 = vpack.c.bf16 %v483, %v481
  %v578 = vpack.c.bf16 %v484, %v482
  %v579 = vpack.c.bf16 %v487, %v485
  %v580 = vpack.c.bf16 %v488, %v486
  %v581 = vpack.c.bf16 %v491, %v489
  %v582 = vpack.c.bf16 %v492, %v490
  %v583 = vpack.c.bf16 %v495, %v493
  %v584 = vpack.c.bf16 %v496, %v494
  %v585 = vpack.c.bf16 %v499, %v497
  %v586 = vpack.c.bf16 %v500, %v498
  %v587 = vpack.c.bf16 %v503, %v501
  %v588 = vpack.c.bf16 %v504, %v502
  %v589 = vpack.c.bf16 %v507, %v505
  %v590 = vpack.c.bf16 %v508, %v506
  %v591 = vpack.c.bf16 %v511, %v509
  %v592 = vpack.c.bf16 %v512, %v510
  %v593 = vpack.c.bf16 %v515, %v513
  %v594 = vpack.c.bf16 %v516, %v514
  %v595 = vpack.c.bf16 %v519, %v517
  %v596 = vpack.c.bf16 %v520, %v518
  %v597 = vpack.c.bf16 %v523, %v521
  %v598 = vpack.c.bf16 %v524, %v522
  %v599 = vpack.c.bf16 %v527, %v525
  %v600 = vpack.c.bf16 %v528, %v526
  %v601 = vpack.c.bf16 %v531, %v529
  %v602 = vpack.c.bf16 %v532, %v530
  %v603 = vpack.c.bf16 %v535, %v533
  %v604 = vpack.c.bf16 %v536, %v534
  %v605 = vpack.c.bf16 %v539, %v537
  %v606 = vpack.c.bf16 %v540, %v538
  %v607 = vpack.c.bf16 %v543, %v541
  %v608 = vpack.c.bf16 %v544, %v542
  %v609 = vld [vmem:[%s1] sm:$0xf]
  %v610 = vld [vmem:[%s1 + $0x4] sm:$0xf]
  %v611 = vld [vmem:[%s1 + $0x8] sm:$0xf]
  %v612 = vld [vmem:[%s1 + $0xc] sm:$0xf]
  %v613 = vld [vmem:[%s1 + $0x10] sm:$0xf]
  %v614 = vld [vmem:[%s1 + $0x14] sm:$0xf]
  %v615 = vld [vmem:[%s1 + $0x18] sm:$0xf]
  %v616 = vld [vmem:[%s1 + $0x1c] sm:$0xf]
  %v617 = vld [vmem:[%s1 + $0x20] sm:$0xf]
  %v618 = vld [vmem:[%s1 + $0x24] sm:$0xf]
  %v619 = vld [vmem:[%s1 + $0x28] sm:$0xf]
  %v620 = vld [vmem:[%s1 + $0x2c] sm:$0xf]
  %v621 = vld [vmem:[%s1 + $0x30] sm:$0xf]
  %v622 = vld [vmem:[%s1 + $0x34] sm:$0xf]
  %v623 = vld [vmem:[%s1 + $0x38] sm:$0xf]
  %v624 = vld [vmem:[%s1 + $0x3c] sm:$0xf]
  %v625 = vld [vmem:[%s1 + $0x40] sm:$0xf]
  %v626 = vld [vmem:[%s1 + $0x44] sm:$0xf]
  %v627 = vld [vmem:[%s4] sm:$0x1]
  %v629 = vperm.slane %v627, 0
  %v649 = vunpack.c.l.b16 %v609
  %v650 = vunpack.c.l.b16 %v610
  %v651 = vunpack.c.l.b16 %v611
  %v652 = vunpack.c.l.b16 %v612
  %v653 = vunpack.c.l.b16 %v613
  %v654 = vunpack.c.l.b16 %v614
  %v655 = vunpack.c.l.b16 %v615
  %v656 = vunpack.c.l.b16 %v616
  %v657 = vunpack.c.l.b16 %v617
  %v658 = vunpack.c.l.b16 %v618
  %v659 = vunpack.c.l.b16 %v619
  %v660 = vunpack.c.l.b16 %v620
  %v661 = vunpack.c.l.b16 %v621
  %v662 = vunpack.c.l.b16 %v622
  %v663 = vunpack.c.l.b16 %v623
  %v664 = vunpack.c.l.b16 %v624
  %v665 = vunpack.c.l.b16 %v625
  %v666 = vunpack.c.l.b16 %v626
  %v667 = vpack.c.b16 %v650, %v649
  %v668 = vpack.c.b16 %v652, %v651
  %v669 = vpack.c.b16 %v654, %v653
  %v670 = vpack.c.b16 %v656, %v655
  %v671 = vpack.c.b16 %v658, %v657
  %v672 = vpack.c.b16 %v660, %v659
  %v673 = vpack.c.b16 %v662, %v661
  %v674 = vpack.c.b16 %v664, %v663
  %v675 = vpack.c.b16 %v666, %v665
  %vm685 = vcmask 130048
  %v687 = vsel %vm685, %v546, 0
  %v690 = vsel %vm685, %v548, 0
  %v693 = vsel %vm685, %v550, 0
  %v696 = vsel %vm685, %v552, 0
  %v699 = vsel %vm685, %v554, 0
  %v702 = vsel %vm685, %v556, 0
  %v705 = vsel %vm685, %v558, 0
  %v708 = vsel %vm685, %v560, 0
  %v711 = vsel %vm685, %v562, 0
  %v714 = vsel %vm685, %v564, 0
  %v717 = vsel %vm685, %v566, 0
  %v720 = vsel %vm685, %v568, 0
  %v723 = vsel %vm685, %v570, 0
  %v726 = vsel %vm685, %v572, 0
  %v729 = vsel %vm685, %v574, 0
  %v732 = vsel %vm685, %v576, 0
  %v735 = vsel %vm685, %v578, 0
  %v738 = vsel %vm685, %v580, 0
  %v741 = vsel %vm685, %v582, 0
  %v744 = vsel %vm685, %v584, 0
  %v747 = vsel %vm685, %v586, 0
  %v750 = vsel %vm685, %v588, 0
  %v753 = vsel %vm685, %v590, 0
  %v756 = vsel %vm685, %v592, 0
  %v759 = vsel %vm685, %v594, 0
  %v762 = vsel %vm685, %v596, 0
  %v765 = vsel %vm685, %v598, 0
  %v768 = vsel %vm685, %v600, 0
  %v771 = vsel %vm685, %v602, 0
  %v774 = vsel %vm685, %v604, 0
  %v777 = vsel %vm685, %v606, 0
  %v780 = vsel %vm685, %v608, 0
  %782 = vmatpush.bf16.msra.mxu0 %v674
  %783 = vmatpush.bf16.msra.mxu0 %v673
  %784 = vmatpush.bf16.msra.mxu0 %v672
  %785 = vmatpush.bf16.msra.mxu0 %v671
  %786 = vmatpush.bf16.msra.mxu0 %v670
  %787 = vmatpush.bf16.msra.mxu0 %v669
  %788 = vmatpush.bf16.msra.mxu0 %v668
  %789 = vmatpush.bf16.msra.mxu0 %v667
  %790 = vmatmul.bf16.gmra.mxu0 %v545
  %v791 = vpop.f32.mrf.mxu0
  %v792 = vadd.f32 %v629, %v791
  %v793 = vpop.f32.mrf.mxu0
  %v794 = vadd.f32 %v629, %v793
  %795 = vmatmul.bf16.gmra.mxu0 %v547
  %v796 = vpop.f32.mrf.mxu0
  %v797 = vadd.f32 %v629, %v796
  %v798 = vpop.f32.mrf.mxu0
  %v799 = vadd.f32 %v629, %v798
  %800 = vmatmul.bf16.gmra.mxu0 %v549
  %v801 = vpop.f32.mrf.mxu0
  %v802 = vadd.f32 %v629, %v801
  %v803 = vpop.f32.mrf.mxu0
  %v804 = vadd.f32 %v629, %v803
  %805 = vmatmul.bf16.gmra.mxu0 %v551
  %v806 = vpop.f32.mrf.mxu0
  %v807 = vadd.f32 %v629, %v806
  %v808 = vpop.f32.mrf.mxu0
  %v809 = vadd.f32 %v629, %v808
  %810 = vmatmul.bf16.gmra.mxu0 %v553
  %v811 = vpop.f32.mrf.mxu0
  %v812 = vadd.f32 %v629, %v811
  %v813 = vpop.f32.mrf.mxu0
  %v814 = vadd.f32 %v629, %v813
  %815 = vmatmul.bf16.gmra.mxu0 %v555
  %v816 = vpop.f32.mrf.mxu0
  %v817 = vadd.f32 %v629, %v816
  %v818 = vpop.f32.mrf.mxu0
  %v819 = vadd.f32 %v629, %v818
  %820 = vmatmul.bf16.gmra.mxu0 %v557
  %v821 = vpop.f32.mrf.mxu0
  %v822 = vadd.f32 %v629, %v821
  %v823 = vpop.f32.mrf.mxu0
  %v824 = vadd.f32 %v629, %v823
  %825 = vmatmul.bf16.gmra.mxu0 %v559
  %v826 = vpop.f32.mrf.mxu0
  %v827 = vadd.f32 %v629, %v826
  %v828 = vpop.f32.mrf.mxu0
  %v829 = vadd.f32 %v629, %v828
  %830 = vmatmul.bf16.gmra.mxu0 %v561
  %v831 = vpop.f32.mrf.mxu0
  %v832 = vadd.f32 %v629, %v831
  %v833 = vpop.f32.mrf.mxu0
  %v834 = vadd.f32 %v629, %v833
  %835 = vmatmul.bf16.gmra.mxu0 %v563
  %v836 = vpop.f32.mrf.mxu0
  %v837 = vadd.f32 %v629, %v836
  %v838 = vpop.f32.mrf.mxu0
  %v839 = vadd.f32 %v629, %v838
  %840 = vmatmul.bf16.gmra.mxu0 %v565
  %v841 = vpop.f32.mrf.mxu0
  %v842 = vadd.f32 %v629, %v841
  %v843 = vpop.f32.mrf.mxu0
  %v844 = vadd.f32 %v629, %v843
  %845 = vmatmul.bf16.gmra.mxu0 %v567
  %v846 = vpop.f32.mrf.mxu0
  %v847 = vadd.f32 %v629, %v846
  %v848 = vpop.f32.mrf.mxu0
  %v849 = vadd.f32 %v629, %v848
  %850 = vmatmul.bf16.gmra.mxu0 %v569
  %v851 = vpop.f32.mrf.mxu0
  %v852 = vadd.f32 %v629, %v851
  %v853 = vpop.f32.mrf.mxu0
  %v854 = vadd.f32 %v629, %v853
  %855 = vmatmul.bf16.gmra.mxu0 %v571
  %v856 = vpop.f32.mrf.mxu0
  %v857 = vadd.f32 %v629, %v856
  %v858 = vpop.f32.mrf.mxu0
  %v859 = vadd.f32 %v629, %v858
  %860 = vmatmul.bf16.gmra.mxu0 %v573
  %v861 = vpop.f32.mrf.mxu0
  %v862 = vadd.f32 %v629, %v861
  %v863 = vpop.f32.mrf.mxu0
  %v864 = vadd.f32 %v629, %v863
  %865 = vmatmul.bf16.gmra.mxu0 %v575
  %v866 = vpop.f32.mrf.mxu0
  %v867 = vadd.f32 %v629, %v866
  %v868 = vpop.f32.mrf.mxu0
  %v869 = vadd.f32 %v629, %v868
  %870 = vmatmul.bf16.gmra.mxu0 %v577
  %v871 = vpop.f32.mrf.mxu0
  %v872 = vadd.f32 %v629, %v871
  %v873 = vpop.f32.mrf.mxu0
  %v874 = vadd.f32 %v629, %v873
  %875 = vmatmul.bf16.gmra.mxu0 %v579
  %v876 = vpop.f32.mrf.mxu0
  %v877 = vadd.f32 %v629, %v876
  %v878 = vpop.f32.mrf.mxu0
  %v879 = vadd.f32 %v629, %v878
  %880 = vmatmul.bf16.gmra.mxu0 %v581
  %v881 = vpop.f32.mrf.mxu0
  %v882 = vadd.f32 %v629, %v881
  %v883 = vpop.f32.mrf.mxu0
  %v884 = vadd.f32 %v629, %v883
  %885 = vmatmul.bf16.gmra.mxu0 %v583
  %v886 = vpop.f32.mrf.mxu0
  %v887 = vadd.f32 %v629, %v886
  %v888 = vpop.f32.mrf.mxu0
  %v889 = vadd.f32 %v629, %v888
  %890 = vmatmul.bf16.gmra.mxu0 %v585
  %v891 = vpop.f32.mrf.mxu0
  %v892 = vadd.f32 %v629, %v891
  %v893 = vpop.f32.mrf.mxu0
  %v894 = vadd.f32 %v629, %v893
  %895 = vmatmul.bf16.gmra.mxu0 %v587
  %v896 = vpop.f32.mrf.mxu0
  %v897 = vadd.f32 %v629, %v896
  %v898 = vpop.f32.mrf.mxu0
  %v899 = vadd.f32 %v629, %v898
  %900 = vmatmul.bf16.gmra.mxu0 %v589
  %v901 = vpop.f32.mrf.mxu0
  %v902 = vadd.f32 %v629, %v901
  %v903 = vpop.f32.mrf.mxu0
  %v904 = vadd.f32 %v629, %v903
  %905 = vmatmul.bf16.gmra.mxu0 %v591
  %v906 = vpop.f32.mrf.mxu0
  %v907 = vadd.f32 %v629, %v906
  %v908 = vpop.f32.mrf.mxu0
  %v909 = vadd.f32 %v629, %v908
  %910 = vmatmul.bf16.gmra.mxu0 %v593
  %v911 = vpop.f32.mrf.mxu0
  %v912 = vadd.f32 %v629, %v911
  %v913 = vpop.f32.mrf.mxu0
  %v914 = vadd.f32 %v629, %v913
  %915 = vmatmul.bf16.gmra.mxu0 %v595
  %v916 = vpop.f32.mrf.mxu0
  %v917 = vadd.f32 %v629, %v916
  %v918 = vpop.f32.mrf.mxu0
  %v919 = vadd.f32 %v629, %v918
  %920 = vmatmul.bf16.gmra.mxu0 %v597
  %v921 = vpop.f32.mrf.mxu0
  %v922 = vadd.f32 %v629, %v921
  %v923 = vpop.f32.mrf.mxu0
  %v924 = vadd.f32 %v629, %v923
  %925 = vmatmul.bf16.gmra.mxu0 %v599
  %v926 = vpop.f32.mrf.mxu0
  %v927 = vadd.f32 %v629, %v926
  %v928 = vpop.f32.mrf.mxu0
  %v929 = vadd.f32 %v629, %v928
  %930 = vmatmul.bf16.gmra.mxu0 %v601
  %v931 = vpop.f32.mrf.mxu0
  %v932 = vadd.f32 %v629, %v931
  %v933 = vpop.f32.mrf.mxu0
  %v934 = vadd.f32 %v629, %v933
  %935 = vmatmul.bf16.gmra.mxu0 %v603
  %v936 = vpop.f32.mrf.mxu0
  %v937 = vadd.f32 %v629, %v936
  %v938 = vpop.f32.mrf.mxu0
  %v939 = vadd.f32 %v629, %v938
  %940 = vmatmul.bf16.gmra.mxu0 %v605
  %v941 = vpop.f32.mrf.mxu0
  %v942 = vadd.f32 %v629, %v941
  %v943 = vpop.f32.mrf.mxu0
  %v944 = vadd.f32 %v629, %v943
  %945 = vmatmul.bf16.gmra.mxu0 %v607
  %v946 = vpop.f32.mrf.mxu0
  %v947 = vadd.f32 %v629, %v946
  %v948 = vpop.f32.mrf.mxu0
  %v949 = vadd.f32 %v629, %v948
  %950 = vdwg.mxu0
  %951 = vmatpush.bf16.msra.mxu0 0
  %952 = vmatpush.bf16.msra.mxu0 0
  %953 = vmatpush.bf16.msra.mxu0 0
  %954 = vmatpush.bf16.msra.mxu0 0
  %955 = vmatpush.bf16.msra.mxu0 0
  %956 = vmatpush.bf16.msra.mxu0 0
  %957 = vmatpush.bf16.msra.mxu0 0
  %958 = vmatpush.bf16.msra.mxu0 %v675
  %959 = vmatmul.bf16.gmra.mxu0 %v687
  %v960 = vpop.f32.mrf.mxu0
  %v961 = vadd.f32 %v792, %v960
  %v962 = vpop.f32.mrf.mxu0
  %v963 = vadd.f32 %v794, %v962
  %964 = vmatmul.bf16.gmra.mxu0 %v690
  %v965 = vpop.f32.mrf.mxu0
  %v966 = vadd.f32 %v797, %v965
  %v967 = vpop.f32.mrf.mxu0
  %v968 = vadd.f32 %v799, %v967
  %969 = vmatmul.bf16.gmra.mxu0 %v693
  %v970 = vpop.f32.mrf.mxu0
  %v971 = vadd.f32 %v802, %v970
  %v972 = vpop.f32.mrf.mxu0
  %v973 = vadd.f32 %v804, %v972
  %974 = vmatmul.bf16.gmra.mxu0 %v696
  %v975 = vpop.f32.mrf.mxu0
  %v976 = vadd.f32 %v807, %v975
  %v977 = vpop.f32.mrf.mxu0
  %v978 = vadd.f32 %v809, %v977
  %979 = vmatmul.bf16.gmra.mxu0 %v699
  %v980 = vpop.f32.mrf.mxu0
  %v981 = vadd.f32 %v812, %v980
  %v982 = vpop.f32.mrf.mxu0
  %v983 = vadd.f32 %v814, %v982
  %984 = vmatmul.bf16.gmra.mxu0 %v702
  %v985 = vpop.f32.mrf.mxu0
  %v986 = vadd.f32 %v817, %v985
  %v987 = vpop.f32.mrf.mxu0
  %v988 = vadd.f32 %v819, %v987
  %989 = vmatmul.bf16.gmra.mxu0 %v705
  %v990 = vpop.f32.mrf.mxu0
  %v991 = vadd.f32 %v822, %v990
  %v992 = vpop.f32.mrf.mxu0
  %v993 = vadd.f32 %v824, %v992
  %994 = vmatmul.bf16.gmra.mxu0 %v708
  %v995 = vpop.f32.mrf.mxu0
  %v996 = vadd.f32 %v827, %v995
  %v997 = vpop.f32.mrf.mxu0
  %v998 = vadd.f32 %v829, %v997
  %999 = vmatmul.bf16.gmra.mxu0 %v711
  %v1000 = vpop.f32.mrf.mxu0
  %v1001 = vadd.f32 %v832, %v1000
  %v1002 = vpop.f32.mrf.mxu0
  %v1003 = vadd.f32 %v834, %v1002
  %1004 = vmatmul.bf16.gmra.mxu0 %v714
  %v1005 = vpop.f32.mrf.mxu0
  %v1006 = vadd.f32 %v837, %v1005
  %v1007 = vpop.f32.mrf.mxu0
  %v1008 = vadd.f32 %v839, %v1007
  %1009 = vmatmul.bf16.gmra.mxu0 %v717
  %v1010 = vpop.f32.mrf.mxu0
  %v1011 = vadd.f32 %v842, %v1010
  %v1012 = vpop.f32.mrf.mxu0
  %v1013 = vadd.f32 %v844, %v1012
  %1014 = vmatmul.bf16.gmra.mxu0 %v720
  %v1015 = vpop.f32.mrf.mxu0
  %v1016 = vadd.f32 %v847, %v1015
  %v1017 = vpop.f32.mrf.mxu0
  %v1018 = vadd.f32 %v849, %v1017
  %1019 = vmatmul.bf16.gmra.mxu0 %v723
  %v1020 = vpop.f32.mrf.mxu0
  %v1021 = vadd.f32 %v852, %v1020
  %v1022 = vpop.f32.mrf.mxu0
  %v1023 = vadd.f32 %v854, %v1022
  %1024 = vmatmul.bf16.gmra.mxu0 %v726
  %v1025 = vpop.f32.mrf.mxu0
  %v1026 = vadd.f32 %v857, %v1025
  %v1027 = vpop.f32.mrf.mxu0
  %v1028 = vadd.f32 %v859, %v1027
  %1029 = vmatmul.bf16.gmra.mxu0 %v729
  %v1030 = vpop.f32.mrf.mxu0
  %v1031 = vadd.f32 %v862, %v1030
  %v1032 = vpop.f32.mrf.mxu0
  %v1033 = vadd.f32 %v864, %v1032
  %1034 = vmatmul.bf16.gmra.mxu0 %v732
  %v1035 = vpop.f32.mrf.mxu0
  %v1036 = vadd.f32 %v867, %v1035
  %v1037 = vpop.f32.mrf.mxu0
  %v1038 = vadd.f32 %v869, %v1037
  %1039 = vmatmul.bf16.gmra.mxu0 %v735
  %v1040 = vpop.f32.mrf.mxu0
  %v1041 = vadd.f32 %v872, %v1040
  %v1042 = vpop.f32.mrf.mxu0
  %v1043 = vadd.f32 %v874, %v1042
  %1044 = vmatmul.bf16.gmra.mxu0 %v738
  %v1045 = vpop.f32.mrf.mxu0
  %v1046 = vadd.f32 %v877, %v1045
  %v1047 = vpop.f32.mrf.mxu0
  %v1048 = vadd.f32 %v879, %v1047
  %1049 = vmatmul.bf16.gmra.mxu0 %v741
  %v1050 = vpop.f32.mrf.mxu0
  %v1051 = vadd.f32 %v882, %v1050
  %v1052 = vpop.f32.mrf.mxu0
  %v1053 = vadd.f32 %v884, %v1052
  %1054 = vmatmul.bf16.gmra.mxu0 %v744
  %v1055 = vpop.f32.mrf.mxu0
  %v1056 = vadd.f32 %v887, %v1055
  %v1057 = vpop.f32.mrf.mxu0
  %v1058 = vadd.f32 %v889, %v1057
  %1059 = vmatmul.bf16.gmra.mxu0 %v747
  %v1060 = vpop.f32.mrf.mxu0
  %v1061 = vadd.f32 %v892, %v1060
  %v1062 = vpop.f32.mrf.mxu0
  %v1063 = vadd.f32 %v894, %v1062
  %1064 = vmatmul.bf16.gmra.mxu0 %v750
  %v1065 = vpop.f32.mrf.mxu0
  %v1066 = vadd.f32 %v897, %v1065
  %v1067 = vpop.f32.mrf.mxu0
  %v1068 = vadd.f32 %v899, %v1067
  %1069 = vmatmul.bf16.gmra.mxu0 %v753
  %v1070 = vpop.f32.mrf.mxu0
  %v1071 = vadd.f32 %v902, %v1070
  %v1072 = vpop.f32.mrf.mxu0
  %v1073 = vadd.f32 %v904, %v1072
  %1074 = vmatmul.bf16.gmra.mxu0 %v756
  %v1075 = vpop.f32.mrf.mxu0
  %v1076 = vadd.f32 %v907, %v1075
  %v1077 = vpop.f32.mrf.mxu0
  %v1078 = vadd.f32 %v909, %v1077
  %1079 = vmatmul.bf16.gmra.mxu0 %v759
  %v1080 = vpop.f32.mrf.mxu0
  %v1081 = vadd.f32 %v912, %v1080
  %v1082 = vpop.f32.mrf.mxu0
  %v1083 = vadd.f32 %v914, %v1082
  %1084 = vmatmul.bf16.gmra.mxu0 %v762
  %v1085 = vpop.f32.mrf.mxu0
  %v1086 = vadd.f32 %v917, %v1085
  %v1087 = vpop.f32.mrf.mxu0
  %v1088 = vadd.f32 %v919, %v1087
  %1089 = vmatmul.bf16.gmra.mxu0 %v765
  %v1090 = vpop.f32.mrf.mxu0
  %v1091 = vadd.f32 %v922, %v1090
  %v1092 = vpop.f32.mrf.mxu0
  %v1093 = vadd.f32 %v924, %v1092
  %1094 = vmatmul.bf16.gmra.mxu0 %v768
  %v1095 = vpop.f32.mrf.mxu0
  %v1096 = vadd.f32 %v927, %v1095
  %v1097 = vpop.f32.mrf.mxu0
  %v1098 = vadd.f32 %v929, %v1097
  %1099 = vmatmul.bf16.gmra.mxu0 %v771
  %v1100 = vpop.f32.mrf.mxu0
  %v1101 = vadd.f32 %v932, %v1100
  %v1102 = vpop.f32.mrf.mxu0
  %v1103 = vadd.f32 %v934, %v1102
  %1104 = vmatmul.bf16.gmra.mxu0 %v774
  %v1105 = vpop.f32.mrf.mxu0
  %v1106 = vadd.f32 %v937, %v1105
  %v1107 = vpop.f32.mrf.mxu0
  %v1108 = vadd.f32 %v939, %v1107
  %1109 = vmatmul.bf16.gmra.mxu0 %v777
  %v1110 = vpop.f32.mrf.mxu0
  %v1111 = vadd.f32 %v942, %v1110
  %v1112 = vpop.f32.mrf.mxu0
  %v1113 = vadd.f32 %v944, %v1112
  %1114 = vmatmul.bf16.gmra.mxu0 %v780
  %v1115 = vpop.f32.mrf.mxu0
  %v1116 = vadd.f32 %v947, %v1115
  %v1117 = vpop.f32.mrf.mxu0
  %v1118 = vadd.f32 %v949, %v1117
  %1119 = vdwg.mxu0
  %v1120 = vtanh.pop %v961
  %v1121 = vtanh.pop %v963
  %v1122 = vtanh.pop %v966
  %v1123 = vtanh.pop %v968
  %v1124 = vtanh.pop %v971
  %v1125 = vtanh.pop %v973
  %v1126 = vtanh.pop %v976
  %v1127 = vtanh.pop %v978
  %v1128 = vtanh.pop %v981
  %v1129 = vtanh.pop %v983
  %v1130 = vtanh.pop %v986
  %v1131 = vtanh.pop %v988
  %v1132 = vtanh.pop %v991
  %v1133 = vtanh.pop %v993
  %v1134 = vtanh.pop %v996
  %v1135 = vtanh.pop %v998
  %v1136 = vtanh.pop %v1001
  %v1137 = vtanh.pop %v1003
  %v1138 = vtanh.pop %v1006
  %v1139 = vtanh.pop %v1008
  %v1140 = vtanh.pop %v1011
  %v1141 = vtanh.pop %v1013
  %v1142 = vtanh.pop %v1016
  %v1143 = vtanh.pop %v1018
  %v1144 = vtanh.pop %v1021
  %v1145 = vtanh.pop %v1023
  %v1146 = vtanh.pop %v1026
  %v1147 = vtanh.pop %v1028
  %v1148 = vtanh.pop %v1031
  %v1149 = vtanh.pop %v1033
  %v1150 = vtanh.pop %v1036
  %v1151 = vtanh.pop %v1038
  %v1152 = vtanh.pop %v1041
  %v1153 = vtanh.pop %v1043
  %v1154 = vtanh.pop %v1046
  %v1155 = vtanh.pop %v1048
  %v1156 = vtanh.pop %v1051
  %v1157 = vtanh.pop %v1053
  %v1158 = vtanh.pop %v1056
  %v1159 = vtanh.pop %v1058
  %v1160 = vtanh.pop %v1061
  %v1161 = vtanh.pop %v1063
  %v1162 = vtanh.pop %v1066
  %v1163 = vtanh.pop %v1068
  %v1164 = vtanh.pop %v1071
  %v1165 = vtanh.pop %v1073
  %v1166 = vtanh.pop %v1076
  %v1167 = vtanh.pop %v1078
  %v1168 = vtanh.pop %v1081
  %v1169 = vtanh.pop %v1083
  %v1170 = vtanh.pop %v1086
  %v1171 = vtanh.pop %v1088
  %v1172 = vtanh.pop %v1091
  %v1173 = vtanh.pop %v1093
  %v1174 = vtanh.pop %v1096
  %v1175 = vtanh.pop %v1098
  %v1176 = vtanh.pop %v1101
  %v1177 = vtanh.pop %v1103
  %v1178 = vtanh.pop %v1106
  %v1179 = vtanh.pop %v1108
  %v1180 = vtanh.pop %v1111
  %v1181 = vtanh.pop %v1113
  %v1182 = vtanh.pop %v1116
  %v1183 = vtanh.pop %v1118
  %vm1184 = vcmask 97280
  %1185 = vst.msk [vmem:[%s5] sm:$0xff] %vm1184, %v1120
  %1186 = vst.msk [vmem:[%s5 + $0x8] sm:$0xff] %vm1184, %v1121
  %1187 = vst.msk [vmem:[%s5 + $0x10] sm:$0xff] %vm1184, %v1122
  %1188 = vst.msk [vmem:[%s5 + $0x18] sm:$0xff] %vm1184, %v1123
  %1189 = vst.msk [vmem:[%s5 + $0x20] sm:$0xff] %vm1184, %v1124
  %1190 = vst.msk [vmem:[%s5 + $0x28] sm:$0xff] %vm1184, %v1125
  %1191 = vst.msk [vmem:[%s5 + $0x30] sm:$0xff] %vm1184, %v1126
  %1192 = vst.msk [vmem:[%s5 + $0x38] sm:$0xff] %vm1184, %v1127
  %1193 = vst.msk [vmem:[%s5 + $0x40] sm:$0xff] %vm1184, %v1128
  %1194 = vst.msk [vmem:[%s5 + $0x48] sm:$0xff] %vm1184, %v1129
  %1195 = vst.msk [vmem:[%s5 + $0x50] sm:$0xff] %vm1184, %v1130
  %1196 = vst.msk [vmem:[%s5 + $0x58] sm:$0xff] %vm1184, %v1131
  %1197 = vst.msk [vmem:[%s5 + $0x60] sm:$0xff] %vm1184, %v1132
  %1198 = vst.msk [vmem:[%s5 + $0x68] sm:$0xff] %vm1184, %v1133
  %1199 = vst.msk [vmem:[%s5 + $0x70] sm:$0xff] %vm1184, %v1134
  %1200 = vst.msk [vmem:[%s5 + $0x78] sm:$0xff] %vm1184, %v1135
  %1201 = vst.msk [vmem:[%s5 + $0x80] sm:$0xff] %vm1184, %v1136
  %1202 = vst.msk [vmem:[%s5 + $0x88] sm:$0xff] %vm1184, %v1137
  %1203 = vst.msk [vmem:[%s5 + $0x90] sm:$0xff] %vm1184, %v1138
  %1204 = vst.msk [vmem:[%s5 + $0x98] sm:$0xff] %vm1184, %v1139
  %1205 = vst.msk [vmem:[%s5 + $0xa0] sm:$0xff] %vm1184, %v1140
  %1206 = vst.msk [vmem:[%s5 + $0xa8] sm:$0xff] %vm1184, %v1141
  %1207 = vst.msk [vmem:[%s5 + $0xb0] sm:$0xff] %vm1184, %v1142
  %1208 = vst.msk [vmem:[%s5 + $0xb8] sm:$0xff] %vm1184, %v1143
  %1209 = vst.msk [vmem:[%s5 + $0xc0] sm:$0xff] %vm1184, %v1144
  %1210 = vst.msk [vmem:[%s5 + $0xc8] sm:$0xff] %vm1184, %v1145
  %1211 = vst.msk [vmem:[%s5 + $0xd0] sm:$0xff] %vm1184, %v1146
  %1212 = vst.msk [vmem:[%s5 + $0xd8] sm:$0xff] %vm1184, %v1147
  %1213 = vst.msk [vmem:[%s5 + $0xe0] sm:$0xff] %vm1184, %v1148
  %1214 = vst.msk [vmem:[%s5 + $0xe8] sm:$0xff] %vm1184, %v1149
  %1215 = vst.msk [vmem:[%s5 + $0xf0] sm:$0xff] %vm1184, %v1150
  %1216 = vst.msk [vmem:[%s5 + $0xf8] sm:$0xff] %vm1184, %v1151
  %1217 = vst.msk [vmem:[%s5 + $0x100] sm:$0xff] %vm1184, %v1152
  %1218 = vst.msk [vmem:[%s5 + $0x108] sm:$0xff] %vm1184, %v1153
  %1219 = vst.msk [vmem:[%s5 + $0x110] sm:$0xff] %vm1184, %v1154
  %1220 = vst.msk [vmem:[%s5 + $0x118] sm:$0xff] %vm1184, %v1155
  %1221 = vst.msk [vmem:[%s5 + $0x120] sm:$0xff] %vm1184, %v1156
  %1222 = vst.msk [vmem:[%s5 + $0x128] sm:$0xff] %vm1184, %v1157
  %1223 = vst.msk [vmem:[%s5 + $0x130] sm:$0xff] %vm1184, %v1158
  %1224 = vst.msk [vmem:[%s5 + $0x138] sm:$0xff] %vm1184, %v1159
  %1225 = vst.msk [vmem:[%s5 + $0x140] sm:$0xff] %vm1184, %v1160
  %1226 = vst.msk [vmem:[%s5 + $0x148] sm:$0xff] %vm1184, %v1161
  %1227 = vst.msk [vmem:[%s5 + $0x150] sm:$0xff] %vm1184, %v1162
  %1228 = vst.msk [vmem:[%s5 + $0x158] sm:$0xff] %vm1184, %v1163
  %1229 = vst.msk [vmem:[%s5 + $0x160] sm:$0xff] %vm1184, %v1164
  %1230 = vst.msk [vmem:[%s5 + $0x168] sm:$0xff] %vm1184, %v1165
  %1231 = vst.msk [vmem:[%s5 + $0x170] sm:$0xff] %vm1184, %v1166
  %1232 = vst.msk [vmem:[%s5 + $0x178] sm:$0xff] %vm1184, %v1167
  %1233 = vst.msk [vmem:[%s5 + $0x180] sm:$0xff] %vm1184, %v1168
  %1234 = vst.msk [vmem:[%s5 + $0x188] sm:$0xff] %vm1184, %v1169
  %1235 = vst.msk [vmem:[%s5 + $0x190] sm:$0xff] %vm1184, %v1170
  %1236 = vst.msk [vmem:[%s5 + $0x198] sm:$0xff] %vm1184, %v1171
  %1237 = vst.msk [vmem:[%s5 + $0x1a0] sm:$0xff] %vm1184, %v1172
  %1238 = vst.msk [vmem:[%s5 + $0x1a8] sm:$0xff] %vm1184, %v1173
  %1239 = vst.msk [vmem:[%s5 + $0x1b0] sm:$0xff] %vm1184, %v1174
  %1240 = vst.msk [vmem:[%s5 + $0x1b8] sm:$0xff] %vm1184, %v1175
  %1241 = vst.msk [vmem:[%s5 + $0x1c0] sm:$0xff] %vm1184, %v1176
  %1242 = vst.msk [vmem:[%s5 + $0x1c8] sm:$0xff] %vm1184, %v1177
  %1243 = vst.msk [vmem:[%s5 + $0x1d0] sm:$0xff] %vm1184, %v1178
  %1244 = vst.msk [vmem:[%s5 + $0x1d8] sm:$0xff] %vm1184, %v1179
  %1245 = vst.msk [vmem:[%s5 + $0x1e0] sm:$0xff] %vm1184, %v1180
  %1246 = vst.msk [vmem:[%s5 + $0x1e8] sm:$0xff] %vm1184, %v1181
  %1247 = vst.msk [vmem:[%s5 + $0x1f0] sm:$0xff] %vm1184, %v1182
  %1248 = vst.msk [vmem:[%s5 + $0x1f8] sm:$0xff] %vm1184, %v1183
  // Predicated region
  $region22: #{forward.22} parent=0 // pred_check
    _
  $region23: #{forward.22} parent=0 // pred_check_branch
    %1250 = sbr.rel (0) target = $region25
  $region24: #{forward.22} parent=0 // pred_region
    _
  $region25: #{forward.22} parent=0 // pred_fallthru
    _
  // Predicated region
  $region26: #{forward.22} parent=0 // pred_check
    _
  $region27: #{forward.22} parent=0 // pred_check_branch
    %1252 = sbr.rel (0) target = $region29
  $region28: #{forward.22} parent=0 // pred_region
    _
  $region29: #{forward.22} parent=0 // pred_fallthru
    _

// kernel: forward.23
$region0: #{forward.23}
  #allocation0 [shape = 'u32[]', space=smem, size = 0x4, offset = 0x4, fixed_abs, tag = 'smem constant byte address 0x4 - core index']
  #allocation1 [shape = 'u32[72,128]{1,0:T(1,128)}', space=vmem, size = 0x9000, scoped, tag = 'internal scratch']
  %s0 = inlined_call_operand.vmem [shape: f32[2,1], index: 0, kind: input, shape index: {}]
  %s1 = inlined_call_operand.vmem [shape: f32[2,3072], index: 1, kind: input, shape index: {}]
  %s2 = inlined_call_operand.vmem [shape: f32[2,1], index: 2, kind: input, shape index: {}]
  %s3 = inlined_call_operand.vmem [shape: f32[2,3072], index: 3, kind: input, shape index: {}]
  %s4 = inlined_call_operand.vmem [shape: f32[2,3072], index: 4, kind: input, shape index: {}]
  %s5 = inlined_call_operand.vmem [shape: f32[2,3072], index: 5, kind: output, shape index: {0}]
  %s6 = inlined_call_operand.hbm [shape: f32[1,1], index: 6, kind: output, shape index: {1}]
  %7 = xla_tuple %s5, %s6
  %s8 = sld [smem:[#allocation0]]
  $region38: #{forward.23} parent=0
    _
  %s10 = ssub.s32 1, %s8
  %s11 = scalar_select 0, %s10, %s8
  $region1: #{forward.23} parent=0
    #allocation2 [shape = 'u8[512]{0}', space=vmem, size = 0x400, scoped, tag = 'output window, operand 1, single buffered']
    #allocation3 [shape = 's32[1]{0}', space=sflag, size = 0x4, scoped, tag = 'scoped memory for forward.23']
    %12 = vsyncpa [#allocation3], 0
    // Predicated region
    $region2: #{forward.23} parent=1 // pred_check
      _
    $region3: #{forward.23} parent=1 // pred_check_branch
      %14 = sbr.rel (0) target = $region5
    $region4: #{forward.23} parent=1 // pred_region
      _
    $region5: #{forward.23} parent=1 // pred_fallthru
      _
    // Predicated region
    $region6: #{forward.23} parent=1 // pred_check
      _
    $region7: #{forward.23} parent=1 // pred_check_branch
      %16 = sbr.rel (0) target = $region9
    $region8: #{forward.23} parent=1 // pred_region
      _
    $region9: #{forward.23} parent=1 // pred_fallthru
      _
    // Predicated region
    $region10: #{forward.23} parent=1 // pred_check
      _
    $region11: #{forward.23} parent=1 // pred_check_branch
      %18 = sbr.rel (0) target = $region13
    $region12: #{forward.23} parent=1 // pred_region
      _
    $region13: #{forward.23} parent=1 // pred_fallthru
      _
    // Predicated region
    $region14: #{forward.23} parent=1 // pred_check
      _
    $region15: #{forward.23} parent=1 // pred_check_branch
      %20 = sbr.rel (0) target = $region17
    $region16: #{forward.23} parent=1 // pred_region
      _
    $region17: #{forward.23} parent=1 // pred_fallthru
      _
    // Predicated region
    $region18: #{forward.23} parent=1 // pred_check
      _
    $region19: #{forward.23} parent=1 // pred_check_branch
      %22 = sbr.rel (0) target = $region21
    $region20: #{forward.23} parent=1 // pred_region
      _
    $region21: #{forward.23} parent=1 // pred_fallthru
      _
    %v23 = vld [vmem:[%s3] sm:$0xff]
    %v24 = vld [vmem:[%s3 + $0x8] sm:$0xff]
    %v25 = vld [vmem:[%s3 + $0x10] sm:$0xff]
    %v26 = vld [vmem:[%s3 + $0x18] sm:$0xff]
    %v27 = vld [vmem:[%s3 + $0x20] sm:$0xff]
    %v28 = vld [vmem:[%s3 + $0x28] sm:$0xff]
    %v29 = vld [vmem:[%s4] sm:$0xff]
    %v30 = vld [vmem:[%s4 + $0x8] sm:$0xff]
    %v31 = vld [vmem:[%s4 + $0x10] sm:$0xff]
    %v32 = vld [vmem:[%s4 + $0x18] sm:$0xff]
    %v33 = vld [vmem:[%s4 + $0x20] sm:$0xff]
    %v34 = vld [vmem:[%s4 + $0x28] sm:$0xff]
    %v35 = vsub.f32 %v23, %v29
    %v36 = vsub.f32 %v24, %v30
    %v37 = vsub.f32 %v25, %v31
    %v38 = vsub.f32 %v26, %v32
    %v39 = vsub.f32 %v27, %v33
    %v40 = vsub.f32 %v28, %v34
    %v41 = vmul.f32 %v35, %v35
    %v42 = vmul.f32 %v36, %v36
    %v43 = vmul.f32 %v37, %v37
    %v44 = vmul.f32 %v38, %v38
    %v45 = vmul.f32 %v39, %v39
    %v46 = vmul.f32 %v40, %v40
    %53 = vst [vmem:[#allocation1] ss:$4 sm:$0xff] %v41
    %s54 = scalar_lea.vmem [#allocation1], 32
    %55 = vst [vmem:[%s54] ss:$4 sm:$0xff] %v42
    %v56 = vld.sshfl [vmem:[#allocation1] sm:$0xff pattern:$0x73625140]
    %v57 = vld.sshfl [vmem:[#allocation1 + $0x8] sm:$0xff pattern:$0x73625140]
    %v58 = vld.sshfl [vmem:[#allocation1 + $0x10] sm:$0xff pattern:$0x73625140]
    %v59 = vld.sshfl [vmem:[#allocation1 + $0x18] sm:$0xff pattern:$0x73625140]
    %v60 = vld.sshfl [vmem:[#allocation1 + $0x20] sm:$0xff pattern:$0x73625140]
    %v61 = vld.sshfl [vmem:[#allocation1 + $0x28] sm:$0xff pattern:$0x73625140]
    %v62 = vld.sshfl [vmem:[#allocation1 + $0x30] sm:$0xff pattern:$0x73625140]
    %v63 = vld.sshfl [vmem:[#allocation1 + $0x38] sm:$0xff pattern:$0x73625140]
    %64 = vst [vmem:[#allocation1] ss:$4 sm:$0xff] %v43
    %65 = vst [vmem:[%s54] ss:$4 sm:$0xff] %v44
    %v66 = vld.sshfl [vmem:[#allocation1] sm:$0xff pattern:$0x73625140]
    %v67 = vld.sshfl [vmem:[#allocation1 + $0x8] sm:$0xff pattern:$0x73625140]
    %v68 = vld.sshfl [vmem:[#allocation1 + $0x10] sm:$0xff pattern:$0x73625140]
    %v69 = vld.sshfl [vmem:[#allocation1 + $0x18] sm:$0xff pattern:$0x73625140]
    %v70 = vld.sshfl [vmem:[#allocation1 + $0x20] sm:$0xff pattern:$0x73625140]
    %v71 = vld.sshfl [vmem:[#allocation1 + $0x28] sm:$0xff pattern:$0x73625140]
    %v72 = vld.sshfl [vmem:[#allocation1 + $0x30] sm:$0xff pattern:$0x73625140]
    %v73 = vld.sshfl [vmem:[#allocation1 + $0x38] sm:$0xff pattern:$0x73625140]
    %74 = vst [vmem:[#allocation1] ss:$4 sm:$0xff] %v45
    %75 = vst [vmem:[%s54] ss:$4 sm:$0xff] %v46
    %v76 = vld.sshfl [vmem:[#allocation1] sm:$0xff pattern:$0x73625140]
    %v77 = vld.sshfl [vmem:[#allocation1 + $0x8] sm:$0xff pattern:$0x73625140]
    %v78 = vld.sshfl [vmem:[#allocation1 + $0x10] sm:$0xff pattern:$0x73625140]
    %v79 = vld.sshfl [vmem:[#allocation1 + $0x18] sm:$0xff pattern:$0x73625140]
    %v80 = vld.sshfl [vmem:[#allocation1 + $0x20] sm:$0xff pattern:$0x73625140]
    %v81 = vld.sshfl [vmem:[#allocation1 + $0x28] sm:$0xff pattern:$0x73625140]
    %v82 = vld.sshfl [vmem:[#allocation1 + $0x30] sm:$0xff pattern:$0x73625140]
    %v83 = vld.sshfl [vmem:[#allocation1 + $0x38] sm:$0xff pattern:$0x73625140]
    %vm108 = vcmask 1041408
    %v109 = vsel %vm108, %v56, 0.0
    %v110 = vsel %vm108, %v57, 0.0
    %v111 = vadd.f32 %v109, %v110
    %v112 = vsel %vm108, %v58, 0.0
    %v113 = vadd.f32 %v111, %v112
    %v114 = vsel %vm108, %v59, 0.0
    %v115 = vadd.f32 %v113, %v114
    %v116 = vsel %vm108, %v60, 0.0
    %v117 = vadd.f32 %v115, %v116
    %v118 = vsel %vm108, %v61, 0.0
    %v119 = vadd.f32 %v117, %v118
    %v120 = vsel %vm108, %v62, 0.0
    %v121 = vadd.f32 %v119, %v120
    %v122 = vsel %vm108, %v63, 0.0
    %v123 = vadd.f32 %v121, %v122
    %v124 = vsel %vm108, %v66, 0.0
    %v125 = vadd.f32 %v123, %v124
    %v126 = vsel %vm108, %v67, 0.0
    %v127 = vadd.f32 %v125, %v126
    %v128 = vsel %vm108, %v68, 0.0
    %v129 = vadd.f32 %v127, %v128
    %v130 = vsel %vm108, %v69, 0.0
    %v131 = vadd.f32 %v129, %v130
    %v132 = vsel %vm108, %v70, 0.0
    %v133 = vadd.f32 %v131, %v132
    %v134 = vsel %vm108, %v71, 0.0
    %v135 = vadd.f32 %v133, %v134
    %v136 = vsel %vm108, %v72, 0.0
    %v137 = vadd.f32 %v135, %v136
    %v138 = vsel %vm108, %v73, 0.0
    %v139 = vadd.f32 %v137, %v138
    %v140 = vsel %vm108, %v76, 0.0
    %v141 = vadd.f32 %v139, %v140
    %v142 = vsel %vm108, %v77, 0.0
    %v143 = vadd.f32 %v141, %v142
    %v144 = vsel %vm108, %v78, 0.0
    %v145 = vadd.f32 %v143, %v144
    %v146 = vsel %vm108, %v79, 0.0
    %v147 = vadd.f32 %v145, %v146
    %v148 = vsel %vm108, %v80, 0.0
    %v149 = vadd.f32 %v147, %v148
    %v150 = vsel %vm108, %v81, 0.0
    %v151 = vadd.f32 %v149, %v150
    %v152 = vsel %vm108, %v82, 0.0
    %v153 = vadd.f32 %v151, %v152
    %v154 = vsel %vm108, %v83, 0.0
    %v155 = vadd.f32 %v153, %v154
    %156 = vadd.xlane.f32.xlu0 %v155
    %v157 = vpop.xlane.xlu0 %156
    %v158 = vrot.slane %v157, 4
    %v159 = vadd.f32 %v157, %v158
    %v160 = vrot.slane %v159, 2
    %v161 = vadd.f32 %v159, %v160
    %v162 = vrot.slane %v161, 1
    %v163 = vadd.f32 %v161, %v162
    %s164 = vtos %v163
    %v165 = vstv %s164
    %vm166 = vcmask 0
    %167 = vst.msk [vmem:[#allocation2] sm:$0x1] %vm166, %v165
    %v168 = vld [vmem:[%s0] sm:$0x3]
    %v169 = vld [vmem:[%s1] sm:$0xff]
    %v170 = vld [vmem:[%s1 + $0x8] sm:$0xff]
    %v171 = vld [vmem:[%s1 + $0x10] sm:$0xff]
    %v172 = vld [vmem:[%s1 + $0x18] sm:$0xff]
    %v173 = vld [vmem:[%s1 + $0x20] sm:$0xff]
    %v174 = vld [vmem:[%s1 + $0x28] sm:$0xff]
    %176 = vset.pattern.permute.xlu0 0
    %177 = vperm.xlu0 %176, %v168
    %v178 = vpop.permute.xlu0 %177
    %186 = vst [vmem:[#allocation1] ss:$4 sm:$0xff] %v169
    %s187 = scalar_lea.vmem [#allocation1], 32
    %188 = vst [vmem:[%s187] ss:$4 sm:$0xff] %v170
    %v189 = vld.sshfl [vmem:[#allocation1] sm:$0xff pattern:$0x73625140]
    %v190 = vld.sshfl [vmem:[#allocation1 + $0x8] sm:$0xff pattern:$0x73625140]
    %v191 = vld.sshfl [vmem:[#allocation1 + $0x10] sm:$0xff pattern:$0x73625140]
    %v192 = vld.sshfl [vmem:[#allocation1 + $0x18] sm:$0xff pattern:$0x73625140]
    %v193 = vld.sshfl [vmem:[#allocation1 + $0x20] sm:$0xff pattern:$0x73625140]
    %v194 = vld.sshfl [vmem:[#allocation1 + $0x28] sm:$0xff pattern:$0x73625140]
    %v195 = vld.sshfl [vmem:[#allocation1 + $0x30] sm:$0xff pattern:$0x73625140]
    %v196 = vld.sshfl [vmem:[#allocation1 + $0x38] sm:$0xff pattern:$0x73625140]
    %197 = vst [vmem:[#allocation1] ss:$4 sm:$0xff] %v171
    %198 = vst [vmem:[%s187] ss:$4 sm:$0xff] %v172
    %v199 = vld.sshfl [vmem:[#allocation1] sm:$0xff pattern:$0x73625140]
    %v200 = vld.sshfl [vmem:[#allocation1 + $0x8] sm:$0xff pattern:$0x73625140]
    %v201 = vld.sshfl [vmem:[#allocation1 + $0x10] sm:$0xff pattern:$0x73625140]
    %v202 = vld.sshfl [vmem:[#allocation1 + $0x18] sm:$0xff pattern:$0x73625140]
    %v203 = vld.sshfl [vmem:[#allocation1 + $0x20] sm:$0xff pattern:$0x73625140]
    %v204 = vld.sshfl [vmem:[#allocation1 + $0x28] sm:$0xff pattern:$0x73625140]
    %v205 = vld.sshfl [vmem:[#allocation1 + $0x30] sm:$0xff pattern:$0x73625140]
    %v206 = vld.sshfl [vmem:[#allocation1 + $0x38] sm:$0xff pattern:$0x73625140]
    %207 = vst [vmem:[#allocation1] ss:$4 sm:$0xff] %v173
    %208 = vst [vmem:[%s187] ss:$4 sm:$0xff] %v174
    %v209 = vld.sshfl [vmem:[#allocation1] sm:$0xff pattern:$0x73625140]
    %v210 = vld.sshfl [vmem:[#allocation1 + $0x8] sm:$0xff pattern:$0x73625140]
    %v211 = vld.sshfl [vmem:[#allocation1 + $0x10] sm:$0xff pattern:$0x73625140]
    %v212 = vld.sshfl [vmem:[#allocation1 + $0x18] sm:$0xff pattern:$0x73625140]
    %v213 = vld.sshfl [vmem:[#allocation1 + $0x20] sm:$0xff pattern:$0x73625140]
    %v214 = vld.sshfl [vmem:[#allocation1 + $0x28] sm:$0xff pattern:$0x73625140]
    %v215 = vld.sshfl [vmem:[#allocation1 + $0x30] sm:$0xff pattern:$0x73625140]
    %v216 = vld.sshfl [vmem:[#allocation1 + $0x38] sm:$0xff pattern:$0x73625140]
    %v241 = vmul.f32 %v178, %v189
    %v242 = vmul.f32 %v178, %v190
    %v243 = vmul.f32 %v178, %v191
    %v244 = vmul.f32 %v178, %v192
    %v245 = vmul.f32 %v178, %v193
    %v246 = vmul.f32 %v178, %v194
    %v247 = vmul.f32 %v178, %v195
    %v248 = vmul.f32 %v178, %v196
    %v249 = vmul.f32 %v178, %v199
    %v250 = vmul.f32 %v178, %v200
    %v251 = vmul.f32 %v178, %v201
    %v252 = vmul.f32 %v178, %v202
    %v253 = vmul.f32 %v178, %v203
    %v254 = vmul.f32 %v178, %v204
    %v255 = vmul.f32 %v178, %v205
    %v256 = vmul.f32 %v178, %v206
    %v257 = vmul.f32 %v178, %v209
    %v258 = vmul.f32 %v178, %v210
    %v259 = vmul.f32 %v178, %v211
    %v260 = vmul.f32 %v178, %v212
    %v261 = vmul.f32 %v178, %v213
    %v262 = vmul.f32 %v178, %v214
    %v263 = vmul.f32 %v178, %v215
    %v264 = vmul.f32 %v178, %v216
    %v265 = vld [vmem:[%s2] sm:$0x3]
    %267 = vset.pattern.permute.xlu0 0
    %268 = vperm.xlu0 %267, %v265
    %v269 = vpop.permute.xlu0 %268
    %277 = vst [vmem:[#allocation1] ss:$4 sm:$0xff] %v23
    %s278 = scalar_lea.vmem [#allocation1], 32
    %279 = vst [vmem:[%s278] ss:$4 sm:$0xff] %v24
    %v280 = vld.sshfl [vmem:[#allocation1] sm:$0xff pattern:$0x73625140]
    %v281 = vld.sshfl [vmem:[#allocation1 + $0x8] sm:$0xff pattern:$0x73625140]
    %v282 = vld.sshfl [vmem:[#allocation1 + $0x10] sm:$0xff pattern:$0x73625140]
    %v283 = vld.sshfl [vmem:[#allocation1 + $0x18] sm:$0xff pattern:$0x73625140]
    %v284 = vld.sshfl [vmem:[#allocation1 + $0x20] sm:$0xff pattern:$0x73625140]
    %v285 = vld.sshfl [vmem:[#allocation1 + $0x28] sm:$0xff pattern:$0x73625140]
    %v286 = vld.sshfl [vmem:[#allocation1 + $0x30] sm:$0xff pattern:$0x73625140]
    %v287 = vld.sshfl [vmem:[#allocation1 + $0x38] sm:$0xff pattern:$0x73625140]
    %288 = vst [vmem:[#allocation1] ss:$4 sm:$0xff] %v25
    %289 = vst [vmem:[%s278] ss:$4 sm:$0xff] %v26
    %v290 = vld.sshfl [vmem:[#allocation1] sm:$0xff pattern:$0x73625140]
    %v291 = vld.sshfl [vmem:[#allocation1 + $0x8] sm:$0xff pattern:$0x73625140]
    %v292 = vld.sshfl [vmem:[#allocation1 + $0x10] sm:$0xff pattern:$0x73625140]
    %v293 = vld.sshfl [vmem:[#allocation1 + $0x18] sm:$0xff pattern:$0x73625140]
    %v294 = vld.sshfl [vmem:[#allocation1 + $0x20] sm:$0xff pattern:$0x73625140]
    %v295 = vld.sshfl [vmem:[#allocation1 + $0x28] sm:$0xff pattern:$0x73625140]
    %v296 = vld.sshfl [vmem:[#allocation1 + $0x30] sm:$0xff pattern:$0x73625140]
    %v297 = vld.sshfl [vmem:[#allocation1 + $0x38] sm:$0xff pattern:$0x73625140]
    %298 = vst [vmem:[#allocation1] ss:$4 sm:$0xff] %v27
    %299 = vst [vmem:[%s278] ss:$4 sm:$0xff] %v28
    %v300 = vld.sshfl [vmem:[#allocation1] sm:$0xff pattern:$0x73625140]
    %v301 = vld.sshfl [vmem:[#allocation1 + $0x8] sm:$0xff pattern:$0x73625140]
    %v302 = vld.sshfl [vmem:[#allocation1 + $0x10] sm:$0xff pattern:$0x73625140]
    %v303 = vld.sshfl [vmem:[#allocation1 + $0x18] sm:$0xff pattern:$0x73625140]
    %v304 = vld.sshfl [vmem:[#allocation1 + $0x20] sm:$0xff pattern:$0x73625140]
    %v305 = vld.sshfl [vmem:[#allocation1 + $0x28] sm:$0xff pattern:$0x73625140]
    %v306 = vld.sshfl [vmem:[#allocation1 + $0x30] sm:$0xff pattern:$0x73625140]
    %v307 = vld.sshfl [vmem:[#allocation1 + $0x38] sm:$0xff pattern:$0x73625140]
    %v332 = vmul.f32 %v269, %v280
    %v333 = vmul.f32 %v269, %v281
    %v334 = vmul.f32 %v269, %v282
    %v335 = vmul.f32 %v269, %v283
    %v336 = vmul.f32 %v269, %v284
    %v337 = vmul.f32 %v269, %v285
    %v338 = vmul.f32 %v269, %v286
    %v339 = vmul.f32 %v269, %v287
    %v340 = vmul.f32 %v269, %v290
    %v341 = vmul.f32 %v269, %v291
    %v342 = vmul.f32 %v269, %v292
    %v343 = vmul.f32 %v269, %v293
    %v344 = vmul.f32 %v269, %v294
    %v345 = vmul.f32 %v269, %v295
    %v346 = vmul.f32 %v269, %v296
    %v347 = vmul.f32 %v269, %v297
    %v348 = vmul.f32 %v269, %v300
    %v349 = vmul.f32 %v269, %v301
    %v350 = vmul.f32 %v269, %v302
    %v351 = vmul.f32 %v269, %v303
    %v352 = vmul.f32 %v269, %v304
    %v353 = vmul.f32 %v269, %v305
    %v354 = vmul.f32 %v269, %v306
    %v355 = vmul.f32 %v269, %v307
    %v356 = vadd.f32 %v241, %v332
    %v357 = vadd.f32 %v242, %v333
    %v358 = vadd.f32 %v243, %v334
    %v359 = vadd.f32 %v244, %v335
    %v360 = vadd.f32 %v245, %v336
    %v361 = vadd.f32 %v246, %v337
    %v362 = vadd.f32 %v247, %v338
    %v363 = vadd.f32 %v248, %v339
    %v364 = vadd.f32 %v249, %v340
    %v365 = vadd.f32 %v250, %v341
    %v366 = vadd.f32 %v251, %v342
    %v367 = vadd.f32 %v252, %v343
    %v368 = vadd.f32 %v253, %v344
    %v369 = vadd.f32 %v254, %v345
    %v370 = vadd.f32 %v255, %v346
    %v371 = vadd.f32 %v256, %v347
    %v372 = vadd.f32 %v257, %v348
    %v373 = vadd.f32 %v258, %v349
    %v374 = vadd.f32 %v259, %v350
    %v375 = vadd.f32 %v260, %v351
    %v376 = vadd.f32 %v261, %v352
    %v377 = vadd.f32 %v262, %v353
    %v378 = vadd.f32 %v263, %v354
    %v379 = vadd.f32 %v264, %v355
    %v404 = vrot.slane %v357, 6
    %v405 = vrot.slane %v358, 4
    %v406 = vrot.slane %v359, 2
    %v407 = vrot.slane %v361, 6
    %v408 = vrot.slane %v362, 4
    %v409 = vrot.slane %v363, 2
    %v410 = vrot.slane %v365, 6
    %v411 = vrot.slane %v366, 4
    %v412 = vrot.slane %v367, 2
    %v413 = vrot.slane %v369, 6
    %v414 = vrot.slane %v370, 4
    %v415 = vrot.slane %v371, 2
    %v416 = vrot.slane %v373, 6
    %v417 = vrot.slane %v374, 4
    %v418 = vrot.slane %v375, 2
    %v419 = vrot.slane %v377, 6
    %v420 = vrot.slane %v378, 4
    %v421 = vrot.slane %v379, 2
    %v422 = vsel %vm108, %v356, %v404
    %vm423 = vcmask 1045508
    %v424 = vsel %vm423, %v405, %v406
    %vm425 = vcmask 1043456
    %v426 = vsel %vm425, %v422, %v424
    %v427 = vsel %vm108, %v360, %v407
    %v428 = vsel %vm423, %v408, %v409
    %v429 = vsel %vm425, %v427, %v428
    %v430 = vsel %vm108, %v364, %v410
    %v431 = vsel %vm423, %v411, %v412
    %v432 = vsel %vm425, %v430, %v431
    %v433 = vsel %vm108, %v368, %v413
    %v434 = vsel %vm423, %v414, %v415
    %v435 = vsel %vm425, %v433, %v434
    %v436 = vsel %vm108, %v372, %v416
    %v437 = vsel %vm423, %v417, %v418
    %v438 = vsel %vm425, %v436, %v437
    %v439 = vsel %vm108, %v376, %v419
    %v440 = vsel %vm423, %v420, %v421
    %v441 = vsel %vm425, %v439, %v440
    %448 = vst [vmem:[%s5] sm:$0xff] %v426
    %449 = vst [vmem:[%s5 + $0x8] sm:$0xff] %v429
    %450 = vst [vmem:[%s5 + $0x10] sm:$0xff] %v432
    %451 = vst [vmem:[%s5 + $0x18] sm:$0xff] %v435
    %452 = vst [vmem:[%s5 + $0x20] sm:$0xff] %v438
    %453 = vst [vmem:[%s5 + $0x28] sm:$0xff] %v441
    // Predicated region
    $region22: #{forward.23} parent=1 // pred_check
      _
    $region23: #{forward.23} parent=1 // pred_check_branch
      %455 = sbr.rel (0) target = $region25
    $region24: #{forward.23} parent=1 // pred_region
      _
    $region25: #{forward.23} parent=1 // pred_fallthru
      _
    // Predicated region
    $region26: #{forward.23} parent=1 // pred_check
      _
    $region27: #{forward.23} parent=1 // pred_check_branch
      %457 = sbr.rel (0) target = $region29
    $region28: #{forward.23} parent=1 // pred_region
      %459 = vsyncadd [#allocation3], 0
      %s461 = sshll.u32 [#allocation2], 4
      %s462 = int_to_ptr.vmem [resolvable:$true] %s461
      %s463 = sshll.u32 %s6, 4
      %s464 = int_to_ptr.hbm [resolvable:$true] %s463
      %466 = dma.vmem_to_hbm [thread:$0]  %s462, 16, %s464, [#allocation3]
    $region29: #{forward.23} parent=1 // pred_fallthru
      _
    // Predicated region
    $region30: #{forward.23} parent=1 // pred_check
      _
    $region31: #{forward.23} parent=1 // pred_check_branch
      %468 = sbr.rel (0) target = $region33
    $region32: #{forward.23} parent=1 // pred_region
      _
    $region33: #{forward.23} parent=1 // pred_fallthru
      _
    // Predicated region
    $region34: #{forward.23} parent=1 // pred_check
      _
    $region35: #{forward.23} parent=1 // pred_check_branch
      %470 = sbr.rel (0) target = $region37
    $region36: #{forward.23} parent=1 // pred_region
      %472 = dma.done [#allocation3], 16
    $region37: #{forward.23} parent=1 // pred_fallthru
      _
    %473 = vsyncpa [#allocation3], 1

</llo_original>
